<compile_context>
chip_gen: v7x
topology: tpu7x:2x2x1
jax: 0.10.0
libtpu: 0.0.40
codegen_flags: <defaults>
</compile_context>

<pallas_src>
import functools
import math

import jax
import jax.numpy as jnp
from jax.experimental import pallas as pl
from jax.experimental.pallas import tpu as pltpu

VMEM_LIMIT = 32 * 1024 * 1024


# --------------------------------------------------------------------------
# Tiling helpers (avoid padding whenever the dims already cooperate)
# --------------------------------------------------------------------------
def _round_up(x, m):
    return ((x + m - 1) // m) * m


def _tile_for(dim, pref, align):
    """Return (tile, padded_dim).  Full dim if small; else a divisor that is a
    multiple of `align`; else fall back to `pref` with zero padding."""
    if dim <= pref:
        return dim, dim
    t = pref
    while t >= align:
        if dim % t == 0:
            return t, dim
        t //= 2
    return pref, _round_up(dim, pref)


# --------------------------------------------------------------------------
# Pallas kernels
# --------------------------------------------------------------------------
def _mm_bn_kernel(x_ref, w_ref, s_ref, b_ref, o_ref, acc_ref, *, relu):
    @pl.when(pl.program_id(2) == 0)
    def _():
        acc_ref[...] = jnp.zeros_like(acc_ref)

    acc_ref[...] += jnp.dot(x_ref[...], w_ref[...],
                            preferred_element_type=jnp.float32)

    @pl.when(pl.program_id(2) == pl.num_programs(2) - 1)
    def _():
        y = acc_ref[...] * s_ref[...] + b_ref[...]
        if relu:
            y = jnp.maximum(y, 0.0)
        o_ref[...] = y.astype(o_ref.dtype)


def _mm_bn_res_kernel(x_ref, w_ref, s_ref, b_ref, r_ref, o_ref, acc_ref, *, relu):
    @pl.when(pl.program_id(2) == 0)
    def _():
        acc_ref[...] = jnp.zeros_like(acc_ref)

    acc_ref[...] += jnp.dot(x_ref[...], w_ref[...],
                            preferred_element_type=jnp.float32)

    @pl.when(pl.program_id(2) == pl.num_programs(2) - 1)
    def _():
        y = acc_ref[...] * s_ref[...] + b_ref[...] + r_ref[...].astype(jnp.float32)
        if relu:
            y = jnp.maximum(y, 0.0)
        o_ref[...] = y.astype(o_ref.dtype)


def _conv3x3_kernel(x_ref, w_ref, s_ref, b_ref, o_ref, acc_ref, *, H, W, Wp):
    """9-tap accumulation over a flattened, spatially padded image strip.

    x_ref  : (1, (H+3)*Wp, Cin)  bf16 (padded image, flattened row-major)
    w_ref  : (9, Cin, Cout)      bf16 (taps in kh*3+kw order)
    o_ref  : (1, H*Wp, Cout)     (junk columns w>=W are stripped outside)
    """
    del W  # valid-column selection happens outside the kernel
    acc_ref[...] = jnp.zeros_like(acc_ref)
    rows = acc_ref.shape[0]  # H * Wp
    for kh in range(3):
        for kw in range(3):
            p0 = kh * Wp + kw
            xs = x_ref[0, p0:p0 + rows, :]
            acc_ref[...] += jnp.dot(xs, w_ref[kh * 3 + kw],
                                    preferred_element_type=jnp.float32)
    y = jnp.maximum(acc_ref[...] * s_ref[...] + b_ref[...], 0.0)
    o_ref[0] = y.astype(o_ref.dtype)


# --------------------------------------------------------------------------
# Kernel wrappers
# --------------------------------------------------------------------------
def fused_matmul_bn(x, w, scale, bias, residual=None, relu=False,
                    out_dtype=jnp.bfloat16):
    """y = [relu]((x @ w) * scale + bias [+ residual]) with bf16 MXU operands
    and f32 accumulation over K tiles in a VMEM scratch."""
    M, K = x.shape
    K2, Nn = w.shape
    assert K == K2 and scale.shape == (Nn,) and bias.shape == (Nn,)

    x = x.astype(jnp.bfloat16)
    w = w.astype(jnp.bfloat16)
    scale = scale.astype(jnp.float32).reshape(1, Nn)
    bias = bias.astype(jnp.float32).reshape(1, Nn)

    tm, Mp = _tile_for(M, 256, 8)
    tk, Kp = _tile_for(K, 512, 128)
    tn, Np = _tile_for(Nn, 512, 128)

    if Mp != M:
        x = jnp.pad(x, ((0, Mp - M), (0, 0)))
        if residual is not None:
            residual = jnp.pad(residual, ((0, Mp - M), (0, 0)))
    if Kp != K:
        x = jnp.pad(x, ((0, 0), (0, Kp - K)))
        w = jnp.pad(w, ((0, Kp - K), (0, 0)))
    if Np != Nn:
        w = jnp.pad(w, ((0, 0), (0, Np - Nn)))
        scale = jnp.pad(scale, ((0, 0), (0, Np - Nn)))
        bias = jnp.pad(bias, ((0, 0), (0, Np - Nn)))
        if residual is not None:
            residual = jnp.pad(residual, ((0, 0), (0, Np - Nn)))

    grid = (Mp // tm, Np // tn, Kp // tk)
    in_specs = [
        pl.BlockSpec((tm, tk), lambda i, j, k: (i, k)),
        pl.BlockSpec((tk, tn), lambda i, j, k: (k, j)),
        pl.BlockSpec((1, tn), lambda i, j, k: (0, j)),
        pl.BlockSpec((1, tn), lambda i, j, k: (0, j)),
    ]
    args = [x, w, scale, bias]
    if residual is not None:
        in_specs.append(pl.BlockSpec((tm, tn), lambda i, j, k: (i, j)))
        args.append(residual.astype(jnp.bfloat16))
        kern = functools.partial(_mm_bn_res_kernel, relu=relu)
    else:
        kern = functools.partial(_mm_bn_kernel, relu=relu)

    out = pl.pallas_call(
        kern,
        out_shape=jax.ShapeDtypeStruct((Mp, Np), out_dtype),
        grid=grid,
        in_specs=in_specs,
        out_specs=pl.BlockSpec((tm, tn), lambda i, j, k: (i, j)),
        scratch_shapes=[pltpu.VMEM((tm, tn), jnp.float32)],
        compiler_params=pltpu.CompilerParams(
            dimension_semantics=("parallel", "parallel", "arbitrary"),
            vmem_limit_bytes=VMEM_LIMIT,
        ),
    )(*args)

    if Mp != M or Np != Nn:
        out = out[:M, :Nn]
    return out


def conv3x3_bn_relu(x, w9, scale, bias):
    """3x3 conv (padding=1, stride=1) + frozen BN + ReLU without HBM im2col."""
    N, H, W, C = x.shape
    Cout = w9.shape[-1]
    Wp = W + 2
    # pad: 1 top, 2 bottom (extra zero row keeps every shifted flat strip in
    # bounds), 1 left / right; flatten spatial dims row-major.
    xp = jnp.pad(x, ((0, 0), (1, 2), (1, 1), (0, 0)))
    xf = xp.reshape(N, (H + 3) * Wp, C)
    rows = H * Wp

    kern = functools.partial(_conv3x3_kernel, H=H, W=W, Wp=Wp)
    out = pl.pallas_call(
        kern,
        out_shape=jax.ShapeDtypeStruct((N, rows, Cout), jnp.bfloat16),
        grid=(N,),
        in_specs=[
            pl.BlockSpec((1, (H + 3) * Wp, C), lambda n: (n, 0, 0)),
            pl.BlockSpec((9, C, Cout), lambda n: (0, 0, 0)),
            pl.BlockSpec((1, Cout), lambda n: (0, 0)),
            pl.BlockSpec((1, Cout), lambda n: (0, 0)),
        ],
        out_specs=pl.BlockSpec((1, rows, Cout), lambda n: (n, 0, 0)),
        scratch_shapes=[pltpu.VMEM((rows, Cout), jnp.float32)],
        compiler_params=pltpu.CompilerParams(
            dimension_semantics=("parallel",),
            vmem_limit_bytes=VMEM_LIMIT,
        ),
    )(xf, w9.astype(jnp.bfloat16),
      scale.astype(jnp.float32).reshape(1, Cout),
      bias.astype(jnp.float32).reshape(1, Cout))

    # drop the 2 junk (horizontal-padding) columns per output row
    return out.reshape(N, H, Wp, Cout)[:, :, :W, :]


# --------------------------------------------------------------------------
# Plain-JAX glue
# --------------------------------------------------------------------------
def bn_scale_bias(bn):
    scale = bn['gamma'] * jax.lax.rsqrt(bn['var'] + bn['eps'])
    return scale, bn['beta'] - bn['mean'] * scale


def avg_pool(x, k):
    N, H, W, C = x.shape
    dt = x.dtype
    y = x.reshape(N, H // k, k, W // k, k, C).astype(jnp.float32)
    return jnp.mean(y, axis=(2, 4)).astype(dt)


def bottleneck_forward(params, x_nchw):
    """Matches Bottleneck.forward (eval-mode BN).  Input/output are NCHW."""
    stride = params['stride']
    x = jnp.transpose(x_nchw, (0, 2, 3, 1)).astype(jnp.bfloat16)  # NHWC bf16
    N, H, W, Cin = x.shape
    planes = params['conv1'].shape[1]

    # conv1 (1x1) + bn1 + relu1
    s1, b1 = bn_scale_bias(params['bn1'])
    out = fused_matmul_bn(x.reshape(N * H * W, Cin), params['conv1'], s1, b1,
                          relu=True, out_dtype=jnp.bfloat16)
    out = out.reshape(N, H, W, planes)

    # conv2 (3x3, pad 1) + bn2 + relu2  (9-tap in-kernel accumulation)
    s2, b2 = bn_scale_bias(params['bn2'])
    out = conv3x3_bn_relu(out, params['conv2'], s2, b2)

    # avgpool (main path)
    if stride > 1:
        out = avg_pool(out, stride)
    _, Ho, Wo, _ = out.shape

    # identity / downsample path
    if 'down_conv' in params:
        idn = avg_pool(x, stride) if stride > 1 else x
        sd, bd = bn_scale_bias(params['down_bn'])
        idn = fused_matmul_bn(idn.reshape(N * Ho * Wo, Cin), params['down_conv'],
                              sd, bd, relu=False, out_dtype=jnp.bfloat16)
    else:
        idn = x.reshape(N * H * W, Cin)

    # conv3 (1x1) + bn3 + residual add + relu3, fused in one kernel epilogue
    s3, b3 = bn_scale_bias(params['bn3'])
    y = fused_matmul_bn(out.reshape(N * Ho * Wo, planes), params['conv3'], s3, b3,
                        residual=idn, relu=True, out_dtype=jnp.float32)
    y = y.reshape(N, Ho, Wo, planes * 4)
    return jnp.transpose(y, (0, 3, 1, 2))


# --------------------------------------------------------------------------
# Pure-JAX (f32) reference for correctness checking
# --------------------------------------------------------------------------
def reference_forward(params, x_nchw):
    stride = params['stride']
    x = jnp.transpose(x_nchw, (0, 2, 3, 1)).astype(jnp.bfloat16).astype(jnp.float32)
    planes = params['conv1'].shape[1]
    hi = jax.lax.Precision.HIGHEST

    s1, b1 = bn_scale_bias(params['bn1'])
    out = jnp.einsum('nhwc,cd->nhwd', x, params['conv1'].astype(jnp.float32),
                     precision=hi) * s1 + b1
    out = jnp.maximum(out, 0.0)

    s2, b2 = bn_scale_bias(params['bn2'])
    w2 = params['conv2'].astype(jnp.float32).reshape(3, 3, planes, planes)
    out = jax.lax.conv_general_dilated(
        out, w2, (1, 1), ((1, 1), (1, 1)),
        dimension_numbers=('NHWC', 'HWIO', 'NHWC'), precision=hi)
    out = jnp.maximum(out * s2 + b2, 0.0)

    if stride > 1:
        out = avg_pool(out, stride)

    s3, b3 = bn_scale_bias(params['bn3'])
    out = jnp.einsum('nhwc,cd->nhwd', out, params['conv3'].astype(jnp.float32),
                     precision=hi) * s3 + b3

    if 'down_conv' in params:
        idn = avg_pool(x, stride) if stride > 1 else x
        sd, bd = bn_scale_bias(params['down_bn'])
        idn = jnp.einsum('nhwc,cd->nhwd', idn,
                         params['down_conv'].astype(jnp.float32),
                         precision=hi) * sd + bd
    else:
        idn = x

    y = jnp.maximum(out + idn, 0.0)
    return jnp.transpose(y, (0, 3, 1, 2))


# --------------------------------------------------------------------------
# Deterministic parameter init (shapes follow Bottleneck.__init__)
# --------------------------------------------------------------------------
def init_bn(key, c):
    k1, k2, k3, k4 = jax.random.split(key, 4)
    return dict(
        gamma=jax.random.uniform(k1, (c,), jnp.float32, 0.5, 1.5),
        beta=jax.random.normal(k2, (c,), jnp.float32) * 0.1,
        mean=jax.random.normal(k3, (c,), jnp.float32) * 0.1,
        var=jax.random.uniform(k4, (c,), jnp.float32, 0.5, 1.5),
        eps=jnp.float32(1e-5),
    )


def init_conv1x1(key, cin, cout):
    w = jax.random.normal(key, (cin, cout), jnp.float32) / math.sqrt(cin)
    return w.astype(jnp.bfloat16)


def init_conv3x3(key, cin, cout):
    w = jax.random.normal(key, (3, 3, cin, cout), jnp.float32) / math.sqrt(9 * cin)
    return w.reshape(9, cin, cout).astype(jnp.bfloat16)   # taps in kh*3+kw order


def init_bottleneck(key, inplanes, planes, stride):
    ks = jax.random.split(key, 8)
    p = dict(
        stride=stride,
        conv1=init_conv1x1(ks[0], inplanes, planes), bn1=init_bn(ks[1], planes),
        conv2=init_conv3x3(ks[2], planes, planes), bn2=init_bn(ks[3], planes),
        conv3=init_conv1x1(ks[4], planes, planes * 4), bn3=init_bn(ks[5], planes * 4),
    )
    if stride > 1 or inplanes != planes * 4:
        p['down_conv'] = init_conv1x1(ks[6], inplanes, planes * 4)
        p['down_bn'] = init_bn(ks[7], planes * 4)
    return p


if __name__ == "__main__":
    key = jax.random.PRNGKey(0)
    kx, kb1, kb2 = jax.random.split(key, 3)

    N, H, W = 2, 16, 16
    inplanes, planes, stride = 16, 8, 2

    block1 = init_bottleneck(kb1, inplanes, planes, stride)   # with downsample
    block2 = init_bottleneck(kb2, planes * 4, planes, 1)      # identity shortcut

    x = jax.random.normal(kx, (N, inplanes, H, W), jnp.float32)

    fwd = jax.jit(lambda inp: bottleneck_forward(block2, bottleneck_forward(block1, inp)))
    out = jax.block_until_ready(fwd(x))

    ref = reference_forward(block2, reference_forward(block1, x))

    assert out.shape == (N, planes * 4, H // stride, W // stride)
    assert bool(jnp.all(jnp.isfinite(out)))
    err = float(jnp.max(jnp.abs(out.astype(jnp.float32) - ref)))
    assert err < 2e-1, f"max abs err {err}"
    print("KERNEL_OK")
</pallas_src>

<mosaic_0001>
module attributes {stable_mosaic.version = 11 : i64} {
  func.func @_mm_bn_kernel(%arg0: i32, %arg1: i32, %arg2: i32, %arg3: memref<256x16xbf16, #tpu.memory_space<vmem>>, %arg4: memref<16x8xbf16, #tpu.memory_space<vmem>>, %arg5: memref<1x8xf32, #tpu.memory_space<vmem>>, %arg6: memref<1x8xf32, #tpu.memory_space<vmem>>, %arg7: memref<256x8xbf16, #tpu.memory_space<vmem>>, %arg8: memref<256x8xf32, #tpu.memory_space<vmem>>) attributes {dimension_semantics = [#tpu.dimension_semantics<parallel>, #tpu.dimension_semantics<parallel>, #tpu.dimension_semantics<arbitrary>], iteration_bounds = array<i64: 2, 1, 1>, scalar_prefetch = 0 : i64, scratch_operands = 1 : i64, tpu.core_type = #tpu.core_type<tc>, window_params = [{transform_indices = @transform_0, window_bounds = array<i64: 256, 16>}, {transform_indices = @transform_1, window_bounds = array<i64: 16, 8>}, {transform_indices = @transform_2, window_bounds = array<i64: 1, 8>}, {transform_indices = @transform_3, window_bounds = array<i64: 1, 8>}, {transform_indices = @transform_4, window_bounds = array<i64: 256, 8>}]} {
    %c0_i32 = arith.constant 0 : i32
    %0 = arith.cmpi eq, %arg2, %c0_i32 : i32
    %1 = arith.extui %0 : i1 to i32
    %c0_i32_0 = arith.constant 0 : i32
    %2 = arith.cmpi ne, %1, %c0_i32_0 : i32
    scf.if %2 {
      %cst_10 = arith.constant 0.000000e+00 : f32
      %12 = vector.broadcast %cst_10 : f32 to vector<256x8xf32>
      %c0_11 = arith.constant 0 : index
      %c0_12 = arith.constant 0 : index
      %13 = vector.load %arg8[%c0_11, %c0_12] : memref<256x8xf32, #tpu.memory_space<vmem>>, vector<256x8xf32>
      tpu.vector_store %arg8[%c0_11, %c0_12], %12 {strides = array<i32>} : memref<256x8xf32, #tpu.memory_space<vmem>>, vector<256x8xf32>,
    } else {
    }
    %c0 = arith.constant 0 : index
    %c0_1 = arith.constant 0 : index
    %3 = vector.load %arg8[%c0, %c0_1] : memref<256x8xf32, #tpu.memory_space<vmem>>, vector<256x8xf32>
    %c0_2 = arith.constant 0 : index
    %c0_3 = arith.constant 0 : index
    %4 = vector.load %arg3[%c0_2, %c0_3] : memref<256x16xbf16, #tpu.memory_space<vmem>>, vector<256x16xbf16>
    %c0_4 = arith.constant 0 : index
    %c0_5 = arith.constant 0 : index
    %5 = vector.load %arg4[%c0_4, %c0_5] : memref<16x8xbf16, #tpu.memory_space<vmem>>, vector<16x8xbf16>
    %cst = arith.constant dense<0.000000e+00> : vector<256x8xf32>
    %6 = tpu.matmul %4, %5, %cst {dimension_numbers = #tpu.dot_dimension_numbers<[1], [0], [0], [1], [0, 0, 1, 1], [], []>} : vector<256x16xbf16>, vector<16x8xbf16>, vector<256x8xf32> -> vector<256x8xf32>
    %7 = arith.addf %3, %6 : vector<256x8xf32>
    %c0_6 = arith.constant 0 : index
    %c0_7 = arith.constant 0 : index
    %8 = vector.load %arg8[%c0_6, %c0_7] : memref<256x8xf32, #tpu.memory_space<vmem>>, vector<256x8xf32>
    tpu.vector_store %arg8[%c0_6, %c0_7], %7 {strides = array<i32>} : memref<256x8xf32, #tpu.memory_space<vmem>>, vector<256x8xf32>,
    %c0_i32_8 = arith.constant 0 : i32
    %9 = arith.cmpi eq, %arg2, %c0_i32_8 : i32
    %10 = arith.extui %9 : i1 to i32
    %c0_i32_9 = arith.constant 0 : i32
    %11 = arith.cmpi ne, %10, %c0_i32_9 : i32
    scf.if %11 {
      %c0_10 = arith.constant 0 : index
      %c0_11 = arith.constant 0 : index
      %12 = vector.load %arg8[%c0_10, %c0_11] : memref<256x8xf32, #tpu.memory_space<vmem>>, vector<256x8xf32>
      %c0_12 = arith.constant 0 : index
      %c0_13 = arith.constant 0 : index
      %13 = vector.load %arg5[%c0_12, %c0_13] : memref<1x8xf32, #tpu.memory_space<vmem>>, vector<1x8xf32>
      %14 = vector.broadcast %13 : vector<1x8xf32> to vector<256x8xf32>
      %15 = arith.mulf %12, %14 : vector<256x8xf32>
      %c0_14 = arith.constant 0 : index
      %c0_15 = arith.constant 0 : index
      %16 = vector.load %arg6[%c0_14, %c0_15] : memref<1x8xf32, #tpu.memory_space<vmem>>, vector<1x8xf32>
      %17 = vector.broadcast %16 : vector<1x8xf32> to vector<256x8xf32>
      %18 = arith.addf %15, %17 : vector<256x8xf32>
      %cst_16 = arith.constant 0.000000e+00 : f32
      %19 = vector.broadcast %cst_16 : f32 to vector<256x8xf32>
      %20 = arith.maximumf %18, %19 : vector<256x8xf32>
      %21 = arith.truncf %20 : vector<256x8xf32> to vector<256x8xbf16>
      %c0_17 = arith.constant 0 : index
      %c0_18 = arith.constant 0 : index
      %22 = vector.load %arg7[%c0_17, %c0_18] : memref<256x8xbf16, #tpu.memory_space<vmem>>, vector<256x8xbf16>
      tpu.vector_store %arg7[%c0_17, %c0_18], %21 {strides = array<i32>} : memref<256x8xbf16, #tpu.memory_space<vmem>>, vector<256x8xbf16>,
    } else {
    }
    return
  }
  func.func @transform_0(%arg0: i32, %arg1: i32, %arg2: i32) -> (i32, i32) {
    %c0_i32 = arith.constant 0 : i32
    return %arg0, %arg2 : i32, i32
  }
  func.func @transform_1(%arg0: i32, %arg1: i32, %arg2: i32) -> (i32, i32) {
    %c0_i32 = arith.constant 0 : i32
    return %arg2, %arg1 : i32, i32
  }
  func.func @transform_2(%arg0: i32, %arg1: i32, %arg2: i32) -> (i32, i32) {
    %c0_i32 = arith.constant 0 : i32
    %c0_i32_0 = arith.constant 0 : i32
    return %c0_i32, %arg1 : i32, i32
  }
  func.func @transform_3(%arg0: i32, %arg1: i32, %arg2: i32) -> (i32, i32) {
    %c0_i32 = arith.constant 0 : i32
    %c0_i32_0 = arith.constant 0 : i32
    return %c0_i32, %arg1 : i32, i32
  }
  func.func @transform_4(%arg0: i32, %arg1: i32, %arg2: i32) -> (i32, i32) {
    %c0_i32 = arith.constant 0 : i32
    return %arg0, %arg1 : i32, i32
  }
}

module attributes {stable_mosaic.version = 11 : i64} {
  func.func @_conv3x3_kernel(%arg0: i32, %arg1: memref<1x342x8xbf16, #tpu.memory_space<vmem>>, %arg2: memref<9x8x8xbf16, #tpu.memory_space<vmem>>, %arg3: memref<1x8xf32, #tpu.memory_space<vmem>>, %arg4: memref<1x8xf32, #tpu.memory_space<vmem>>, %arg5: memref<1x288x8xbf16, #tpu.memory_space<vmem>>, %arg6: memref<288x8xf32, #tpu.memory_space<vmem>>) attributes {dimension_semantics = [#tpu.dimension_semantics<parallel>], iteration_bounds = array<i64: 2>, scalar_prefetch = 0 : i64, scratch_operands = 1 : i64, tpu.core_type = #tpu.core_type<tc>, window_params = [{transform_indices = @transform_0, window_bounds = array<i64: 1, 342, 8>}, {pipeline_mode = #tpu.pipeline_mode<synchronous>, transform_indices = @transform_1, window_bounds = array<i64: 9, 8, 8>}, {pipeline_mode = #tpu.pipeline_mode<synchronous>, transform_indices = @transform_2, window_bounds = array<i64: 1, 8>}, {pipeline_mode = #tpu.pipeline_mode<synchronous>, transform_indices = @transform_3, window_bounds = array<i64: 1, 8>}, {transform_indices = @transform_4, window_bounds = array<i64: 1, 288, 8>}]} {
    %cst = arith.constant 0.000000e+00 : f32
    %0 = vector.broadcast %cst : f32 to vector<288x8xf32>
    %c0 = arith.constant 0 : index
    %c0_0 = arith.constant 0 : index
    %1 = vector.load %arg6[%c0, %c0_0] : memref<288x8xf32, #tpu.memory_space<vmem>>, vector<288x8xf32>
    tpu.vector_store %arg6[%c0, %c0_0], %0 {strides = array<i32>} : memref<288x8xf32, #tpu.memory_space<vmem>>, vector<288x8xf32>,
    %c0_1 = arith.constant 0 : index
    %c0_2 = arith.constant 0 : index
    %c0_3 = arith.constant 0 : index
    %2 = vector.load %arg1[%c0_1, %c0_2, %c0_3] : memref<1x342x8xbf16, #tpu.memory_space<vmem>>, vector<1x288x8xbf16>
    %3 = vector.shape_cast %2 : vector<1x288x8xbf16> to vector<288x8xbf16>
    %c0_4 = arith.constant 0 : index
    %c0_5 = arith.constant 0 : index
    %4 = vector.load %arg6[%c0_4, %c0_5] : memref<288x8xf32, #tpu.memory_space<vmem>>, vector<288x8xf32>
    %c0_6 = arith.constant 0 : index
    %c0_7 = arith.constant 0 : index
    %c0_8 = arith.constant 0 : index
    %5 = vector.load %arg2[%c0_6, %c0_7, %c0_8] : memref<9x8x8xbf16, #tpu.memory_space<vmem>>, vector<1x8x8xbf16>
    %6 = vector.shape_cast %5 : vector<1x8x8xbf16> to vector<8x8xbf16>
    %cst_9 = arith.constant dense<0.000000e+00> : vector<288x8xf32>
    %7 = tpu.matmul %3, %6, %cst_9 {dimension_numbers = #tpu.dot_dimension_numbers<[1], [0], [0], [1], [0, 0, 1, 1], [], []>} : vector<288x8xbf16>, vector<8x8xbf16>, vector<288x8xf32> -> vector<288x8xf32>
    %8 = arith.addf %4, %7 : vector<288x8xf32>
    %c0_10 = arith.constant 0 : index
    %c0_11 = arith.constant 0 : index
    %9 = vector.load %arg6[%c0_10, %c0_11] : memref<288x8xf32, #tpu.memory_space<vmem>>, vector<288x8xf32>
    tpu.vector_store %arg6[%c0_10, %c0_11], %8 {strides = array<i32>} : memref<288x8xf32, #tpu.memory_space<vmem>>, vector<288x8xf32>,
    %c0_12 = arith.constant 0 : index
    %c1 = arith.constant 1 : index
    %c0_13 = arith.constant 0 : index
    %10 = vector.load %arg1[%c0_12, %c1, %c0_13] : memref<1x342x8xbf16, #tpu.memory_space<vmem>>, vector<1x288x8xbf16>
    %11 = vector.shape_cast %10 : vector<1x288x8xbf16> to vector<288x8xbf16>
    %c0_14 = arith.constant 0 : index
    %c0_15 = arith.constant 0 : index
    %12 = vector.load %arg6[%c0_14, %c0_15] : memref<288x8xf32, #tpu.memory_space<vmem>>, vector<288x8xf32>
    %c1_16 = arith.constant 1 : index
    %c0_17 = arith.constant 0 : index
    %c0_18 = arith.constant 0 : index
    %13 = vector.load %arg2[%c1_16, %c0_17, %c0_18] : memref<9x8x8xbf16, #tpu.memory_space<vmem>>, vector<1x8x8xbf16>
    %14 = vector.shape_cast %13 : vector<1x8x8xbf16> to vector<8x8xbf16>
    %cst_19 = arith.constant dense<0.000000e+00> : vector<288x8xf32>
    %15 = tpu.matmul %11, %14, %cst_19 {dimension_numbers = #tpu.dot_dimension_numbers<[1], [0], [0], [1], [0, 0, 1, 1], [], []>} : vector<288x8xbf16>, vector<8x8xbf16>, vector<288x8xf32> -> vector<288x8xf32>
    %16 = arith.addf %12, %15 : vector<288x8xf32>
    %c0_20 = arith.constant 0 : index
    %c0_21 = arith.constant 0 : index
    %17 = vector.load %arg6[%c0_20, %c0_21] : memref<288x8xf32, #tpu.memory_space<vmem>>, vector<288x8xf32>
    tpu.vector_store %arg6[%c0_20, %c0_21], %16 {strides = array<i32>} : memref<288x8xf32, #tpu.memory_space<vmem>>, vector<288x8xf32>,
    %c0_22 = arith.constant 0 : index
    %c2 = arith.constant 2 : index
    %c0_23 = arith.constant 0 : index
    %18 = vector.load %arg1[%c0_22, %c2, %c0_23] : memref<1x342x8xbf16, #tpu.memory_space<vmem>>, vector<1x288x8xbf16>
    %19 = vector.shape_cast %18 : vector<1x288x8xbf16> to vector<288x8xbf16>
    %c0_24 = arith.constant 0 : index
    %c0_25 = arith.constant 0 : index
    %20 = vector.load %arg6[%c0_24, %c0_25] : memref<288x8xf32, #tpu.memory_space<vmem>>, vector<288x8xf32>
    %c2_26 = arith.constant 2 : index
    %c0_27 = arith.constant 0 : index
    %c0_28 = arith.constant 0 : index
    %21 = vector.load %arg2[%c2_26, %c0_27, %c0_28] : memref<9x8x8xbf16, #tpu.memory_space<vmem>>, vector<1x8x8xbf16>
    %22 = vector.shape_cast %21 : vector<1x8x8xbf16> to vector<8x8xbf16>
    %cst_29 = arith.constant dense<0.000000e+00> : vector<288x8xf32>
    %23 = tpu.matmul %19, %22, %cst_29 {dimension_numbers = #tpu.dot_dimension_numbers<[1], [0], [0], [1], [0, 0, 1, 1], [], []>} : vector<288x8xbf16>, vector<8x8xbf16>, vector<288x8xf32> -> vector<288x8xf32>
    %24 = arith.addf %20, %23 : vector<288x8xf32>
    %c0_30 = arith.constant 0 : index
    %c0_31 = arith.constant 0 : index
    %25 = vector.load %arg6[%c0_30, %c0_31] : memref<288x8xf32, #tpu.memory_space<vmem>>, vector<288x8xf32>
    tpu.vector_store %arg6[%c0_30, %c0_31], %24 {strides = array<i32>} : memref<288x8xf32, #tpu.memory_space<vmem>>, vector<288x8xf32>,
    %c0_32 = arith.constant 0 : index
    %c18 = arith.constant 18 : index
    %c0_33 = arith.constant 0 : index
    %26 = vector.load %arg1[%c0_32, %c18, %c0_33] : memref<1x342x8xbf16, #tpu.memory_space<vmem>>, vector<1x288x8xbf16>
    %27 = vector.shape_cast %26 : vector<1x288x8xbf16> to vector<288x8xbf16>
    %c0_34 = arith.constant 0 : index
    %c0_35 = arith.constant 0 : index
    %28 = vector.load %arg6[%c0_34, %c0_35] : memref<288x8xf32, #tpu.memory_space<vmem>>, vector<288x8xf32>
    %c3 = arith.constant 3 : index
    %c0_36 = arith.constant 0 : index
    %c0_37 = arith.constant 0 : index
    %29 = vector.load %arg2[%c3, %c0_36, %c0_37] : memref<9x8x8xbf16, #tpu.memory_space<vmem>>, vector<1x8x8xbf16>
    %30 = vector.shape_cast %29 : vector<1x8x8xbf16> to vector<8x8xbf16>
    %cst_38 = arith.constant dense<0.000000e+00> : vector<288x8xf32>
    %31 = tpu.matmul %27, %30, %cst_38 {dimension_numbers = #tpu.dot_dimension_numbers<[1], [0], [0], [1], [0, 0, 1, 1], [], []>} : vector<288x8xbf16>, vector<8x8xbf16>, vector<288x8xf32> -> vector<288x8xf32>
    %32 = arith.addf %28, %31 : vector<288x8xf32>
    %c0_39 = arith.constant 0 : index
    %c0_40 = arith.constant 0 : index
    %33 = vector.load %arg6[%c0_39, %c0_40] : memref<288x8xf32, #tpu.memory_space<vmem>>, vector<288x8xf32>
    tpu.vector_store %arg6[%c0_39, %c0_40], %32 {strides = array<i32>} : memref<288x8xf32, #tpu.memory_space<vmem>>, vector<288x8xf32>,
    %c0_41 = arith.constant 0 : index
    %c19 = arith.constant 19 : index
    %c0_42 = arith.constant 0 : index
    %34 = vector.load %arg1[%c0_41, %c19, %c0_42] : memref<1x342x8xbf16, #tpu.memory_space<vmem>>, vector<1x288x8xbf16>
    %35 = vector.shape_cast %34 : vector<1x288x8xbf16> to vector<288x8xbf16>
    %c0_43 = arith.constant 0 : index
    %c0_44 = arith.constant 0 : index
    %36 = vector.load %arg6[%c0_43, %c0_44] : memref<288x8xf32, #tpu.memory_space<vmem>>, vector<288x8xf32>
    %c4 = arith.constant 4 : index
    %c0_45 = arith.constant 0 : index
    %c0_46 = arith.constant 0 : index
    %37 = vector.load %arg2[%c4, %c0_45, %c0_46] : memref<9x8x8xbf16, #tpu.memory_space<vmem>>, vector<1x8x8xbf16>
    %38 = vector.shape_cast %37 : vector<1x8x8xbf16> to vector<8x8xbf16>
    %cst_47 = arith.constant dense<0.000000e+00> : vector<288x8xf32>
    %39 = tpu.matmul %35, %38, %cst_47 {dimension_numbers = #tpu.dot_dimension_numbers<[1], [0], [0], [1], [0, 0, 1, 1], [], []>} : vector<288x8xbf16>, vector<8x8xbf16>, vector<288x8xf32> -> vector<288x8xf32>
    %40 = arith.addf %36, %39 : vector<288x8xf32>
    %c0_48 = arith.constant 0 : index
    %c0_49 = arith.constant 0 : index
    %41 = vector.load %arg6[%c0_48, %c0_49] : memref<288x8xf32, #tpu.memory_space<vmem>>, vector<288x8xf32>
    tpu.vector_store %arg6[%c0_48, %c0_49], %40 {strides = array<i32>} : memref<288x8xf32, #tpu.memory_space<vmem>>, vector<288x8xf32>,
    %c0_50 = arith.constant 0 : index
    %c20 = arith.constant 20 : index
    %c0_51 = arith.constant 0 : index
    %42 = vector.load %arg1[%c0_50, %c20, %c0_51] : memref<1x342x8xbf16, #tpu.memory_space<vmem>>, vector<1x288x8xbf16>
    %43 = vector.shape_cast %42 : vector<1x288x8xbf16> to vector<288x8xbf16>
    %c0_52 = arith.constant 0 : index
    %c0_53 = arith.constant 0 : index
    %44 = vector.load %arg6[%c0_52, %c0_53] : memref<288x8xf32, #tpu.memory_space<vmem>>, vector<288x8xf32>
    %c5 = arith.constant 5 : index
    %c0_54 = arith.constant 0 : index
    %c0_55 = arith.constant 0 : index
    %45 = vector.load %arg2[%c5, %c0_54, %c0_55] : memref<9x8x8xbf16, #tpu.memory_space<vmem>>, vector<1x8x8xbf16>
    %46 = vector.shape_cast %45 : vector<1x8x8xbf16> to vector<8x8xbf16>
    %cst_56 = arith.constant dense<0.000000e+00> : vector<288x8xf32>
    %47 = tpu.matmul %43, %46, %cst_56 {dimension_numbers = #tpu.dot_dimension_numbers<[1], [0], [0], [1], [0, 0, 1, 1], [], []>} : vector<288x8xbf16>, vector<8x8xbf16>, vector<288x8xf32> -> vector<288x8xf32>
    %48 = arith.addf %44, %47 : vector<288x8xf32>
    %c0_57 = arith.constant 0 : index
    %c0_58 = arith.constant 0 : index
    %49 = vector.load %arg6[%c0_57, %c0_58] : memref<288x8xf32, #tpu.memory_space<vmem>>, vector<288x8xf32>
    tpu.vector_store %arg6[%c0_57, %c0_58], %48 {strides = array<i32>} : memref<288x8xf32, #tpu.memory_space<vmem>>, vector<288x8xf32>,
    %c0_59 = arith.constant 0 : index
    %c36 = arith.constant 36 : index
    %c0_60 = arith.constant 0 : index
    %50 = vector.load %arg1[%c0_59, %c36, %c0_60] : memref<1x342x8xbf16, #tpu.memory_space<vmem>>, vector<1x288x8xbf16>
    %51 = vector.shape_cast %50 : vector<1x288x8xbf16> to vector<288x8xbf16>
    %c0_61 = arith.constant 0 : index
    %c0_62 = arith.constant 0 : index
    %52 = vector.load %arg6[%c0_61, %c0_62] : memref<288x8xf32, #tpu.memory_space<vmem>>, vector<288x8xf32>
    %c6 = arith.constant 6 : index
    %c0_63 = arith.constant 0 : index
    %c0_64 = arith.constant 0 : index
    %53 = vector.load %arg2[%c6, %c0_63, %c0_64] : memref<9x8x8xbf16, #tpu.memory_space<vmem>>, vector<1x8x8xbf16>
    %54 = vector.shape_cast %53 : vector<1x8x8xbf16> to vector<8x8xbf16>
    %cst_65 = arith.constant dense<0.000000e+00> : vector<288x8xf32>
    %55 = tpu.matmul %51, %54, %cst_65 {dimension_numbers = #tpu.dot_dimension_numbers<[1], [0], [0], [1], [0, 0, 1, 1], [], []>} : vector<288x8xbf16>, vector<8x8xbf16>, vector<288x8xf32> -> vector<288x8xf32>
    %56 = arith.addf %52, %55 : vector<288x8xf32>
    %c0_66 = arith.constant 0 : index
    %c0_67 = arith.constant 0 : index
    %57 = vector.load %arg6[%c0_66, %c0_67] : memref<288x8xf32, #tpu.memory_space<vmem>>, vector<288x8xf32>
    tpu.vector_store %arg6[%c0_66, %c0_67], %56 {strides = array<i32>} : memref<288x8xf32, #tpu.memory_space<vmem>>, vector<288x8xf32>,
    %c0_68 = arith.constant 0 : index
    %c37 = arith.constant 37 : index
    %c0_69 = arith.constant 0 : index
    %58 = vector.load %arg1[%c0_68, %c37, %c0_69] : memref<1x342x8xbf16, #tpu.memory_space<vmem>>, vector<1x288x8xbf16>
    %59 = vector.shape_cast %58 : vector<1x288x8xbf16> to vector<288x8xbf16>
    %c0_70 = arith.constant 0 : index
    %c0_71 = arith.constant 0 : index
    %60 = vector.load %arg6[%c0_70, %c0_71] : memref<288x8xf32, #tpu.memory_space<vmem>>, vector<288x8xf32>
    %c7 = arith.constant 7 : index
    %c0_72 = arith.constant 0 : index
    %c0_73 = arith.constant 0 : index
    %61 = vector.load %arg2[%c7, %c0_72, %c0_73] : memref<9x8x8xbf16, #tpu.memory_space<vmem>>, vector<1x8x8xbf16>
    %62 = vector.shape_cast %61 : vector<1x8x8xbf16> to vector<8x8xbf16>
    %cst_74 = arith.constant dense<0.000000e+00> : vector<288x8xf32>
    %63 = tpu.matmul %59, %62, %cst_74 {dimension_numbers = #tpu.dot_dimension_numbers<[1], [0], [0], [1], [0, 0, 1, 1], [], []>} : vector<288x8xbf16>, vector<8x8xbf16>, vector<288x8xf32> -> vector<288x8xf32>
    %64 = arith.addf %60, %63 : vector<288x8xf32>
    %c0_75 = arith.constant 0 : index
    %c0_76 = arith.constant 0 : index
    %65 = vector.load %arg6[%c0_75, %c0_76] : memref<288x8xf32, #tpu.memory_space<vmem>>, vector<288x8xf32>
    tpu.vector_store %arg6[%c0_75, %c0_76], %64 {strides = array<i32>} : memref<288x8xf32, #tpu.memory_space<vmem>>, vector<288x8xf32>,
    %c0_77 = arith.constant 0 : index
    %c38 = arith.constant 38 : index
    %c0_78 = arith.constant 0 : index
    %66 = vector.load %arg1[%c0_77, %c38, %c0_78] : memref<1x342x8xbf16, #tpu.memory_space<vmem>>, vector<1x288x8xbf16>
    %67 = vector.shape_cast %66 : vector<1x288x8xbf16> to vector<288x8xbf16>
    %c0_79 = arith.constant 0 : index
    %c0_80 = arith.constant 0 : index
    %68 = vector.load %arg6[%c0_79, %c0_80] : memref<288x8xf32, #tpu.memory_space<vmem>>, vector<288x8xf32>
    %c8 = arith.constant 8 : index
    %c0_81 = arith.constant 0 : index
    %c0_82 = arith.constant 0 : index
    %69 = vector.load %arg2[%c8, %c0_81, %c0_82] : memref<9x8x8xbf16, #tpu.memory_space<vmem>>, vector<1x8x8xbf16>
    %70 = vector.shape_cast %69 : vector<1x8x8xbf16> to vector<8x8xbf16>
    %cst_83 = arith.constant dense<0.000000e+00> : vector<288x8xf32>
    %71 = tpu.matmul %67, %70, %cst_83 {dimension_numbers = #tpu.dot_dimension_numbers<[1], [0], [0], [1], [0, 0, 1, 1], [], []>} : vector<288x8xbf16>, vector<8x8xbf16>, vector<288x8xf32> -> vector<288x8xf32>
    %72 = arith.addf %68, %71 : vector<288x8xf32>
    %c0_84 = arith.constant 0 : index
    %c0_85 = arith.constant 0 : index
    %73 = vector.load %arg6[%c0_84, %c0_85] : memref<288x8xf32, #tpu.memory_space<vmem>>, vector<288x8xf32>
    tpu.vector_store %arg6[%c0_84, %c0_85], %72 {strides = array<i32>} : memref<288x8xf32, #tpu.memory_space<vmem>>, vector<288x8xf32>,
    %c0_86 = arith.constant 0 : index
    %c0_87 = arith.constant 0 : index
    %74 = vector.load %arg6[%c0_86, %c0_87] : memref<288x8xf32, #tpu.memory_space<vmem>>, vector<288x8xf32>
    %c0_88 = arith.constant 0 : index
    %c0_89 = arith.constant 0 : index
    %75 = vector.load %arg3[%c0_88, %c0_89] : memref<1x8xf32, #tpu.memory_space<vmem>>, vector<1x8xf32>
    %76 = vector.broadcast %75 : vector<1x8xf32> to vector<288x8xf32>
    %77 = arith.mulf %74, %76 : vector<288x8xf32>
    %c0_90 = arith.constant 0 : index
    %c0_91 = arith.constant 0 : index
    %78 = vector.load %arg4[%c0_90, %c0_91] : memref<1x8xf32, #tpu.memory_space<vmem>>, vector<1x8xf32>
    %79 = vector.broadcast %78 : vector<1x8xf32> to vector<288x8xf32>
    %80 = arith.addf %77, %79 : vector<288x8xf32>
    %cst_92 = arith.constant 0.000000e+00 : f32
    %81 = vector.broadcast %cst_92 : f32 to vector<288x8xf32>
    %82 = arith.maximumf %80, %81 : vector<288x8xf32>
    %83 = arith.truncf %82 : vector<288x8xf32> to vector<288x8xbf16>
    %c0_93 = arith.constant 0 : index
    %c0_94 = arith.constant 0 : index
    %c0_95 = arith.constant 0 : index
    %84 = vector.load %arg5[%c0_93, %c0_94, %c0_95] : memref<1x288x8xbf16, #tpu.memory_space<vmem>>, vector<1x288x8xbf16>
    %85 = vector.shape_cast %84 : vector<1x288x8xbf16> to vector<288x8xbf16>
    %86 = vector.shape_cast %83 : vector<288x8xbf16> to vector<1x288x8xbf16>
    tpu.vector_store %arg5[%c0_93, %c0_94, %c0_95], %86 {strides = array<i32>} : memref<1x288x8xbf16, #tpu.memory_space<vmem>>, vector<1x288x8xbf16>,
    return
  }
  func.func @transform_0(%arg0: i32) -> (i32, i32, i32) {
    %c0_i32 = arith.constant 0 : i32
    %c0_i32_0 = arith.constant 0 : i32
    %c0_i32_1 = arith.constant 0 : i32
    return %arg0, %c0_i32, %c0_i32_0 : i32, i32, i32
  }
  func.func @transform_1(%arg0: i32) -> (i32, i32, i32) {
    %c0_i32 = arith.constant 0 : i32
    %c0_i32_0 = arith.constant 0 : i32
    %c0_i32_1 = arith.constant 0 : i32
    %c0_i32_2 = arith.constant 0 : i32
    return %c0_i32, %c0_i32_0, %c0_i32_1 : i32, i32, i32
  }
  func.func @transform_2(%arg0: i32) -> (i32, i32) {
    %c0_i32 = arith.constant 0 : i32
    %c0_i32_0 = arith.constant 0 : i32
    %c0_i32_1 = arith.constant 0 : i32
    return %c0_i32, %c0_i32_0 : i32, i32
  }
  func.func @transform_3(%arg0: i32) -> (i32, i32) {
    %c0_i32 = arith.constant 0 : i32
    %c0_i32_0 = arith.constant 0 : i32
    %c0_i32_1 = arith.constant 0 : i32
    return %c0_i32, %c0_i32_0 : i32, i32
  }
  func.func @transform_4(%arg0: i32) -> (i32, i32, i32) {
    %c0_i32 = arith.constant 0 : i32
    %c0_i32_0 = arith.constant 0 : i32
    %c0_i32_1 = arith.constant 0 : i32
    return %arg0, %c0_i32, %c0_i32_0 : i32, i32, i32
  }
}

module attributes {stable_mosaic.version = 11 : i64} {
  func.func @_mm_bn_kernel(%arg0: i32, %arg1: i32, %arg2: i32, %arg3: memref<128x16xbf16, #tpu.memory_space<vmem>>, %arg4: memref<16x32xbf16, #tpu.memory_space<vmem>>, %arg5: memref<1x32xf32, #tpu.memory_space<vmem>>, %arg6: memref<1x32xf32, #tpu.memory_space<vmem>>, %arg7: memref<128x32xbf16, #tpu.memory_space<vmem>>, %arg8: memref<128x32xf32, #tpu.memory_space<vmem>>) attributes {dimension_semantics = [#tpu.dimension_semantics<parallel>, #tpu.dimension_semantics<parallel>, #tpu.dimension_semantics<arbitrary>], iteration_bounds = array<i64: 1, 1, 1>, scalar_prefetch = 0 : i64, scratch_operands = 1 : i64, tpu.core_type = #tpu.core_type<tc>, window_params = [{transform_indices = @transform_0, window_bounds = array<i64: 128, 16>}, {transform_indices = @transform_1, window_bounds = array<i64: 16, 32>}, {transform_indices = @transform_2, window_bounds = array<i64: 1, 32>}, {transform_indices = @transform_3, window_bounds = array<i64: 1, 32>}, {transform_indices = @transform_4, window_bounds = array<i64: 128, 32>}]} {
    %c0_i32 = arith.constant 0 : i32
    %0 = arith.cmpi eq, %arg2, %c0_i32 : i32
    %1 = arith.extui %0 : i1 to i32
    %c0_i32_0 = arith.constant 0 : i32
    %2 = arith.cmpi ne, %1, %c0_i32_0 : i32
    scf.if %2 {
      %cst_10 = arith.constant 0.000000e+00 : f32
      %12 = vector.broadcast %cst_10 : f32 to vector<128x32xf32>
      %c0_11 = arith.constant 0 : index
      %c0_12 = arith.constant 0 : index
      %13 = vector.load %arg8[%c0_11, %c0_12] : memref<128x32xf32, #tpu.memory_space<vmem>>, vector<128x32xf32>
      tpu.vector_store %arg8[%c0_11, %c0_12], %12 {strides = array<i32>} : memref<128x32xf32, #tpu.memory_space<vmem>>, vector<128x32xf32>,
    } else {
    }
    %c0 = arith.constant 0 : index
    %c0_1 = arith.constant 0 : index
    %3 = vector.load %arg8[%c0, %c0_1] : memref<128x32xf32, #tpu.memory_space<vmem>>, vector<128x32xf32>
    %c0_2 = arith.constant 0 : index
    %c0_3 = arith.constant 0 : index
    %4 = vector.load %arg3[%c0_2, %c0_3] : memref<128x16xbf16, #tpu.memory_space<vmem>>, vector<128x16xbf16>
    %c0_4 = arith.constant 0 : index
    %c0_5 = arith.constant 0 : index
    %5 = vector.load %arg4[%c0_4, %c0_5] : memref<16x32xbf16, #tpu.memory_space<vmem>>, vector<16x32xbf16>
    %cst = arith.constant dense<0.000000e+00> : vector<128x32xf32>
    %6 = tpu.matmul %4, %5, %cst {dimension_numbers = #tpu.dot_dimension_numbers<[1], [0], [0], [1], [0, 0, 1, 1], [], []>} : vector<128x16xbf16>, vector<16x32xbf16>, vector<128x32xf32> -> vector<128x32xf32>
    %7 = arith.addf %3, %6 : vector<128x32xf32>
    %c0_6 = arith.constant 0 : index
    %c0_7 = arith.constant 0 : index
    %8 = vector.load %arg8[%c0_6, %c0_7] : memref<128x32xf32, #tpu.memory_space<vmem>>, vector<128x32xf32>
    tpu.vector_store %arg8[%c0_6, %c0_7], %7 {strides = array<i32>} : memref<128x32xf32, #tpu.memory_space<vmem>>, vector<128x32xf32>,
    %c0_i32_8 = arith.constant 0 : i32
    %9 = arith.cmpi eq, %arg2, %c0_i32_8 : i32
    %10 = arith.extui %9 : i1 to i32
    %c0_i32_9 = arith.constant 0 : i32
    %11 = arith.cmpi ne, %10, %c0_i32_9 : i32
    scf.if %11 {
      %c0_10 = arith.constant 0 : index
      %c0_11 = arith.constant 0 : index
      %12 = vector.load %arg8[%c0_10, %c0_11] : memref<128x32xf32, #tpu.memory_space<vmem>>, vector<128x32xf32>
      %c0_12 = arith.constant 0 : index
      %c0_13 = arith.constant 0 : index
      %13 = vector.load %arg5[%c0_12, %c0_13] : memref<1x32xf32, #tpu.memory_space<vmem>>, vector<1x32xf32>
      %14 = vector.broadcast %13 : vector<1x32xf32> to vector<128x32xf32>
      %15 = arith.mulf %12, %14 : vector<128x32xf32>
      %c0_14 = arith.constant 0 : index
      %c0_15 = arith.constant 0 : index
      %16 = vector.load %arg6[%c0_14, %c0_15] : memref<1x32xf32, #tpu.memory_space<vmem>>, vector<1x32xf32>
      %17 = vector.broadcast %16 : vector<1x32xf32> to vector<128x32xf32>
      %18 = arith.addf %15, %17 : vector<128x32xf32>
      %19 = arith.truncf %18 : vector<128x32xf32> to vector<128x32xbf16>
      %c0_16 = arith.constant 0 : index
      %c0_17 = arith.constant 0 : index
      %20 = vector.load %arg7[%c0_16, %c0_17] : memref<128x32xbf16, #tpu.memory_space<vmem>>, vector<128x32xbf16>
      tpu.vector_store %arg7[%c0_16, %c0_17], %19 {strides = array<i32>} : memref<128x32xbf16, #tpu.memory_space<vmem>>, vector<128x32xbf16>,
    } else {
    }
    return
  }
  func.func @transform_0(%arg0: i32, %arg1: i32, %arg2: i32) -> (i32, i32) {
    %c0_i32 = arith.constant 0 : i32
    return %arg0, %arg2 : i32, i32
  }
  func.func @transform_1(%arg0: i32, %arg1: i32, %arg2: i32) -> (i32, i32) {
    %c0_i32 = arith.constant 0 : i32
    return %arg2, %arg1 : i32, i32
  }
  func.func @transform_2(%arg0: i32, %arg1: i32, %arg2: i32) -> (i32, i32) {
    %c0_i32 = arith.constant 0 : i32
    %c0_i32_0 = arith.constant 0 : i32
    return %c0_i32, %arg1 : i32, i32
  }
  func.func @transform_3(%arg0: i32, %arg1: i32, %arg2: i32) -> (i32, i32) {
    %c0_i32 = arith.constant 0 : i32
    %c0_i32_0 = arith.constant 0 : i32
    return %c0_i32, %arg1 : i32, i32
  }
  func.func @transform_4(%arg0: i32, %arg1: i32, %arg2: i32) -> (i32, i32) {
    %c0_i32 = arith.constant 0 : i32
    return %arg0, %arg1 : i32, i32
  }
}

module attributes {stable_mosaic.version = 11 : i64} {
  func.func @_mm_bn_res_kernel(%arg0: i32, %arg1: i32, %arg2: i32, %arg3: memref<128x8xbf16, #tpu.memory_space<vmem>>, %arg4: memref<8x32xbf16, #tpu.memory_space<vmem>>, %arg5: memref<1x32xf32, #tpu.memory_space<vmem>>, %arg6: memref<1x32xf32, #tpu.memory_space<vmem>>, %arg7: memref<128x32xbf16, #tpu.memory_space<vmem>>, %arg8: memref<128x32xf32, #tpu.memory_space<vmem>>, %arg9: memref<128x32xf32, #tpu.memory_space<vmem>>) attributes {dimension_semantics = [#tpu.dimension_semantics<parallel>, #tpu.dimension_semantics<parallel>, #tpu.dimension_semantics<arbitrary>], iteration_bounds = array<i64: 1, 1, 1>, scalar_prefetch = 0 : i64, scratch_operands = 1 : i64, tpu.core_type = #tpu.core_type<tc>, window_params = [{transform_indices = @transform_0, window_bounds = array<i64: 128, 8>}, {transform_indices = @transform_1, window_bounds = array<i64: 8, 32>}, {transform_indices = @transform_2, window_bounds = array<i64: 1, 32>}, {transform_indices = @transform_3, window_bounds = array<i64: 1, 32>}, {transform_indices = @transform_4, window_bounds = array<i64: 128, 32>}, {transform_indices = @transform_5, window_bounds = array<i64: 128, 32>}]} {
    %c0_i32 = arith.constant 0 : i32
    %0 = arith.cmpi eq, %arg2, %c0_i32 : i32
    %1 = arith.extui %0 : i1 to i32
    %c0_i32_0 = arith.constant 0 : i32
    %2 = arith.cmpi ne, %1, %c0_i32_0 : i32
    scf.if %2 {
      %cst_10 = arith.constant 0.000000e+00 : f32
      %12 = vector.broadcast %cst_10 : f32 to vector<128x32xf32>
      %c0_11 = arith.constant 0 : index
      %c0_12 = arith.constant 0 : index
      %13 = vector.load %arg9[%c0_11, %c0_12] : memref<128x32xf32, #tpu.memory_space<vmem>>, vector<128x32xf32>
      tpu.vector_store %arg9[%c0_11, %c0_12], %12 {strides = array<i32>} : memref<128x32xf32, #tpu.memory_space<vmem>>, vector<128x32xf32>,
    } else {
    }
    %c0 = arith.constant 0 : index
    %c0_1 = arith.constant 0 : index
    %3 = vector.load %arg9[%c0, %c0_1] : memref<128x32xf32, #tpu.memory_space<vmem>>, vector<128x32xf32>
    %c0_2 = arith.constant 0 : index
    %c0_3 = arith.constant 0 : index
    %4 = vector.load %arg3[%c0_2, %c0_3] : memref<128x8xbf16, #tpu.memory_space<vmem>>, vector<128x8xbf16>
    %c0_4 = arith.constant 0 : index
    %c0_5 = arith.constant 0 : index
    %5 = vector.load %arg4[%c0_4, %c0_5] : memref<8x32xbf16, #tpu.memory_space<vmem>>, vector<8x32xbf16>
    %cst = arith.constant dense<0.000000e+00> : vector<128x32xf32>
    %6 = tpu.matmul %4, %5, %cst {dimension_numbers = #tpu.dot_dimension_numbers<[1], [0], [0], [1], [0, 0, 1, 1], [], []>} : vector<128x8xbf16>, vector<8x32xbf16>, vector<128x32xf32> -> vector<128x32xf32>
    %7 = arith.addf %3, %6 : vector<128x32xf32>
    %c0_6 = arith.constant 0 : index
    %c0_7 = arith.constant 0 : index
    %8 = vector.load %arg9[%c0_6, %c0_7] : memref<128x32xf32, #tpu.memory_space<vmem>>, vector<128x32xf32>
    tpu.vector_store %arg9[%c0_6, %c0_7], %7 {strides = array<i32>} : memref<128x32xf32, #tpu.memory_space<vmem>>, vector<128x32xf32>,
    %c0_i32_8 = arith.constant 0 : i32
    %9 = arith.cmpi eq, %arg2, %c0_i32_8 : i32
    %10 = arith.extui %9 : i1 to i32
    %c0_i32_9 = arith.constant 0 : i32
    %11 = arith.cmpi ne, %10, %c0_i32_9 : i32
    scf.if %11 {
      %c0_10 = arith.constant 0 : index
      %c0_11 = arith.constant 0 : index
      %12 = vector.load %arg9[%c0_10, %c0_11] : memref<128x32xf32, #tpu.memory_space<vmem>>, vector<128x32xf32>
      %c0_12 = arith.constant 0 : index
      %c0_13 = arith.constant 0 : index
      %13 = vector.load %arg5[%c0_12, %c0_13] : memref<1x32xf32, #tpu.memory_space<vmem>>, vector<1x32xf32>
      %14 = vector.broadcast %13 : vector<1x32xf32> to vector<128x32xf32>
      %15 = arith.mulf %12, %14 : vector<128x32xf32>
      %c0_14 = arith.constant 0 : index
      %c0_15 = arith.constant 0 : index
      %16 = vector.load %arg6[%c0_14, %c0_15] : memref<1x32xf32, #tpu.memory_space<vmem>>, vector<1x32xf32>
      %17 = vector.broadcast %16 : vector<1x32xf32> to vector<128x32xf32>
      %18 = arith.addf %15, %17 : vector<128x32xf32>
      %c0_16 = arith.constant 0 : index
      %c0_17 = arith.constant 0 : index
      %19 = vector.load %arg7[%c0_16, %c0_17] : memref<128x32xbf16, #tpu.memory_space<vmem>>, vector<128x32xbf16>
      %20 = arith.extf %19 : vector<128x32xbf16> to vector<128x32xf32>
      %21 = arith.addf %18, %20 : vector<128x32xf32>
      %cst_18 = arith.constant 0.000000e+00 : f32
      %22 = vector.broadcast %cst_18 : f32 to vector<128x32xf32>
      %23 = arith.maximumf %21, %22 : vector<128x32xf32>
      %c0_19 = arith.constant 0 : index
      %c0_20 = arith.constant 0 : index
      %24 = vector.load %arg8[%c0_19, %c0_20] : memref<128x32xf32, #tpu.memory_space<vmem>>, vector<128x32xf32>
      tpu.vector_store %arg8[%c0_19, %c0_20], %23 {strides = array<i32>} : memref<128x32xf32, #tpu.memory_space<vmem>>, vector<128x32xf32>,
    } else {
    }
    return
  }
  func.func @transform_0(%arg0: i32, %arg1: i32, %arg2: i32) -> (i32, i32) {
    %c0_i32 = arith.constant 0 : i32
    return %arg0, %arg2 : i32, i32
  }
  func.func @transform_1(%arg0: i32, %arg1: i32, %arg2: i32) -> (i32, i32) {
    %c0_i32 = arith.constant 0 : i32
    return %arg2, %arg1 : i32, i32
  }
  func.func @transform_2(%arg0: i32, %arg1: i32, %arg2: i32) -> (i32, i32) {
    %c0_i32 = arith.constant 0 : i32
    %c0_i32_0 = arith.constant 0 : i32
    return %c0_i32, %arg1 : i32, i32
  }
  func.func @transform_3(%arg0: i32, %arg1: i32, %arg2: i32) -> (i32, i32) {
    %c0_i32 = arith.constant 0 : i32
    %c0_i32_0 = arith.constant 0 : i32
    return %c0_i32, %arg1 : i32, i32
  }
  func.func @transform_4(%arg0: i32, %arg1: i32, %arg2: i32) -> (i32, i32) {
    %c0_i32 = arith.constant 0 : i32
    return %arg0, %arg1 : i32, i32
  }
  func.func @transform_5(%arg0: i32, %arg1: i32, %arg2: i32) -> (i32, i32) {
    %c0_i32 = arith.constant 0 : i32
    return %arg0, %arg1 : i32, i32
  }
}

module attributes {stable_mosaic.version = 11 : i64} {
  func.func @_mm_bn_kernel(%arg0: i32, %arg1: i32, %arg2: i32, %arg3: memref<128x32xbf16, #tpu.memory_space<vmem>>, %arg4: memref<32x8xbf16, #tpu.memory_space<vmem>>, %arg5: memref<1x8xf32, #tpu.memory_space<vmem>>, %arg6: memref<1x8xf32, #tpu.memory_space<vmem>>, %arg7: memref<128x8xbf16, #tpu.memory_space<vmem>>, %arg8: memref<128x8xf32, #tpu.memory_space<vmem>>) attributes {dimension_semantics = [#tpu.dimension_semantics<parallel>, #tpu.dimension_semantics<parallel>, #tpu.dimension_semantics<arbitrary>], iteration_bounds = array<i64: 1, 1, 1>, scalar_prefetch = 0 : i64, scratch_operands = 1 : i64, tpu.core_type = #tpu.core_type<tc>, window_params = [{transform_indices = @transform_0, window_bounds = array<i64: 128, 32>}, {transform_indices = @transform_1, window_bounds = array<i64: 32, 8>}, {transform_indices = @transform_2, window_bounds = array<i64: 1, 8>}, {transform_indices = @transform_3, window_bounds = array<i64: 1, 8>}, {transform_indices = @transform_4, window_bounds = array<i64: 128, 8>}]} {
    %c0_i32 = arith.constant 0 : i32
    %0 = arith.cmpi eq, %arg2, %c0_i32 : i32
    %1 = arith.extui %0 : i1 to i32
    %c0_i32_0 = arith.constant 0 : i32
    %2 = arith.cmpi ne, %1, %c0_i32_0 : i32
    scf.if %2 {
      %cst_10 = arith.constant 0.000000e+00 : f32
      %12 = vector.broadcast %cst_10 : f32 to vector<128x8xf32>
      %c0_11 = arith.constant 0 : index
      %c0_12 = arith.constant 0 : index
      %13 = vector.load %arg8[%c0_11, %c0_12] : memref<128x8xf32, #tpu.memory_space<vmem>>, vector<128x8xf32>
      tpu.vector_store %arg8[%c0_11, %c0_12], %12 {strides = array<i32>} : memref<128x8xf32, #tpu.memory_space<vmem>>, vector<128x8xf32>,
    } else {
    }
    %c0 = arith.constant 0 : index
    %c0_1 = arith.constant 0 : index
    %3 = vector.load %arg8[%c0, %c0_1] : memref<128x8xf32, #tpu.memory_space<vmem>>, vector<128x8xf32>
    %c0_2 = arith.constant 0 : index
    %c0_3 = arith.constant 0 : index
    %4 = vector.load %arg3[%c0_2, %c0_3] : memref<128x32xbf16, #tpu.memory_space<vmem>>, vector<128x32xbf16>
    %c0_4 = arith.constant 0 : index
    %c0_5 = arith.constant 0 : index
    %5 = vector.load %arg4[%c0_4, %c0_5] : memref<32x8xbf16, #tpu.memory_space<vmem>>, vector<32x8xbf16>
    %cst = arith.constant dense<0.000000e+00> : vector<128x8xf32>
    %6 = tpu.matmul %4, %5, %cst {dimension_numbers = #tpu.dot_dimension_numbers<[1], [0], [0], [1], [0, 0, 1, 1], [], []>} : vector<128x32xbf16>, vector<32x8xbf16>, vector<128x8xf32> -> vector<128x8xf32>
    %7 = arith.addf %3, %6 : vector<128x8xf32>
    %c0_6 = arith.constant 0 : index
    %c0_7 = arith.constant 0 : index
    %8 = vector.load %arg8[%c0_6, %c0_7] : memref<128x8xf32, #tpu.memory_space<vmem>>, vector<128x8xf32>
    tpu.vector_store %arg8[%c0_6, %c0_7], %7 {strides = array<i32>} : memref<128x8xf32, #tpu.memory_space<vmem>>, vector<128x8xf32>,
    %c0_i32_8 = arith.constant 0 : i32
    %9 = arith.cmpi eq, %arg2, %c0_i32_8 : i32
    %10 = arith.extui %9 : i1 to i32
    %c0_i32_9 = arith.constant 0 : i32
    %11 = arith.cmpi ne, %10, %c0_i32_9 : i32
    scf.if %11 {
      %c0_10 = arith.constant 0 : index
      %c0_11 = arith.constant 0 : index
      %12 = vector.load %arg8[%c0_10, %c0_11] : memref<128x8xf32, #tpu.memory_space<vmem>>, vector<128x8xf32>
      %c0_12 = arith.constant 0 : index
      %c0_13 = arith.constant 0 : index
      %13 = vector.load %arg5[%c0_12, %c0_13] : memref<1x8xf32, #tpu.memory_space<vmem>>, vector<1x8xf32>
      %14 = vector.broadcast %13 : vector<1x8xf32> to vector<128x8xf32>
      %15 = arith.mulf %12, %14 : vector<128x8xf32>
      %c0_14 = arith.constant 0 : index
      %c0_15 = arith.constant 0 : index
      %16 = vector.load %arg6[%c0_14, %c0_15] : memref<1x8xf32, #tpu.memory_space<vmem>>, vector<1x8xf32>
      %17 = vector.broadcast %16 : vector<1x8xf32> to vector<128x8xf32>
      %18 = arith.addf %15, %17 : vector<128x8xf32>
      %cst_16 = arith.constant 0.000000e+00 : f32
      %19 = vector.broadcast %cst_16 : f32 to vector<128x8xf32>
      %20 = arith.maximumf %18, %19 : vector<128x8xf32>
      %21 = arith.truncf %20 : vector<128x8xf32> to vector<128x8xbf16>
      %c0_17 = arith.constant 0 : index
      %c0_18 = arith.constant 0 : index
      %22 = vector.load %arg7[%c0_17, %c0_18] : memref<128x8xbf16, #tpu.memory_space<vmem>>, vector<128x8xbf16>
      tpu.vector_store %arg7[%c0_17, %c0_18], %21 {strides = array<i32>} : memref<128x8xbf16, #tpu.memory_space<vmem>>, vector<128x8xbf16>,
    } else {
    }
    return
  }
  func.func @transform_0(%arg0: i32, %arg1: i32, %arg2: i32) -> (i32, i32) {
    %c0_i32 = arith.constant 0 : i32
    return %arg0, %arg2 : i32, i32
  }
  func.func @transform_1(%arg0: i32, %arg1: i32, %arg2: i32) -> (i32, i32) {
    %c0_i32 = arith.constant 0 : i32
    return %arg2, %arg1 : i32, i32
  }
  func.func @transform_2(%arg0: i32, %arg1: i32, %arg2: i32) -> (i32, i32) {
    %c0_i32 = arith.constant 0 : i32
    %c0_i32_0 = arith.constant 0 : i32
    return %c0_i32, %arg1 : i32, i32
  }
  func.func @transform_3(%arg0: i32, %arg1: i32, %arg2: i32) -> (i32, i32) {
    %c0_i32 = arith.constant 0 : i32
    %c0_i32_0 = arith.constant 0 : i32
    return %c0_i32, %arg1 : i32, i32
  }
  func.func @transform_4(%arg0: i32, %arg1: i32, %arg2: i32) -> (i32, i32) {
    %c0_i32 = arith.constant 0 : i32
    return %arg0, %arg1 : i32, i32
  }
}

module attributes {stable_mosaic.version = 11 : i64} {
  func.func @_mm_bn_res_kernel(%arg0: i32, %arg1: i32, %arg2: i32, %arg3: memref<128x8xbf16, #tpu.memory_space<vmem>>, %arg4: memref<8x32xbf16, #tpu.memory_space<vmem>>, %arg5: memref<1x32xf32, #tpu.memory_space<vmem>>, %arg6: memref<1x32xf32, #tpu.memory_space<vmem>>, %arg7: memref<128x32xbf16, #tpu.memory_space<vmem>>, %arg8: memref<128x32xf32, #tpu.memory_space<vmem>>, %arg9: memref<128x32xf32, #tpu.memory_space<vmem>>) attributes {dimension_semantics = [#tpu.dimension_semantics<parallel>, #tpu.dimension_semantics<parallel>, #tpu.dimension_semantics<arbitrary>], iteration_bounds = array<i64: 1, 1, 1>, scalar_prefetch = 0 : i64, scratch_operands = 1 : i64, tpu.core_type = #tpu.core_type<tc>, window_params = [{transform_indices = @transform_0, window_bounds = array<i64: 128, 8>}, {transform_indices = @transform_1, window_bounds = array<i64: 8, 32>}, {transform_indices = @transform_2, window_bounds = array<i64: 1, 32>}, {transform_indices = @transform_3, window_bounds = array<i64: 1, 32>}, {transform_indices = @transform_4, window_bounds = array<i64: 128, 32>}, {transform_indices = @transform_5, window_bounds = array<i64: 128, 32>}]} {
    %c0_i32 = arith.constant 0 : i32
    %0 = arith.cmpi eq, %arg2, %c0_i32 : i32
    %1 = arith.extui %0 : i1 to i32
    %c0_i32_0 = arith.constant 0 : i32
    %2 = arith.cmpi ne, %1, %c0_i32_0 : i32
    scf.if %2 {
      %cst_10 = arith.constant 0.000000e+00 : f32
      %12 = vector.broadcast %cst_10 : f32 to vector<128x32xf32>
      %c0_11 = arith.constant 0 : index
      %c0_12 = arith.constant 0 : index
      %13 = vector.load %arg9[%c0_11, %c0_12] : memref<128x32xf32, #tpu.memory_space<vmem>>, vector<128x32xf32>
      tpu.vector_store %arg9[%c0_11, %c0_12], %12 {strides = array<i32>} : memref<128x32xf32, #tpu.memory_space<vmem>>, vector<128x32xf32>,
    } else {
    }
    %c0 = arith.constant 0 : index
    %c0_1 = arith.constant 0 : index
    %3 = vector.load %arg9[%c0, %c0_1] : memref<128x32xf32, #tpu.memory_space<vmem>>, vector<128x32xf32>
    %c0_2 = arith.constant 0 : index
    %c0_3 = arith.constant 0 : index
    %4 = vector.load %arg3[%c0_2, %c0_3] : memref<128x8xbf16, #tpu.memory_space<vmem>>, vector<128x8xbf16>
    %c0_4 = arith.constant 0 : index
    %c0_5 = arith.constant 0 : index
    %5 = vector.load %arg4[%c0_4, %c0_5] : memref<8x32xbf16, #tpu.memory_space<vmem>>, vector<8x32xbf16>
    %cst = arith.constant dense<0.000000e+00> : vector<128x32xf32>
    %6 = tpu.matmul %4, %5, %cst {dimension_numbers = #tpu.dot_dimension_numbers<[1], [0], [0], [1], [0, 0, 1, 1], [], []>} : vector<128x8xbf16>, vector<8x32xbf16>, vector<128x32xf32> -> vector<128x32xf32>
    %7 = arith.addf %3, %6 : vector<128x32xf32>
    %c0_6 = arith.constant 0 : index
    %c0_7 = arith.constant 0 : index
    %8 = vector.load %arg9[%c0_6, %c0_7] : memref<128x32xf32, #tpu.memory_space<vmem>>, vector<128x32xf32>
    tpu.vector_store %arg9[%c0_6, %c0_7], %7 {strides = array<i32>} : memref<128x32xf32, #tpu.memory_space<vmem>>, vector<128x32xf32>,
    %c0_i32_8 = arith.constant 0 : i32
    %9 = arith.cmpi eq, %arg2, %c0_i32_8 : i32
    %10 = arith.extui %9 : i1 to i32
    %c0_i32_9 = arith.constant 0 : i32
    %11 = arith.cmpi ne, %10, %c0_i32_9 : i32
    scf.if %11 {
      %c0_10 = arith.constant 0 : index
      %c0_11 = arith.constant 0 : index
      %12 = vector.load %arg9[%c0_10, %c0_11] : memref<128x32xf32, #tpu.memory_space<vmem>>, vector<128x32xf32>
      %c0_12 = arith.constant 0 : index
      %c0_13 = arith.constant 0 : index
      %13 = vector.load %arg5[%c0_12, %c0_13] : memref<1x32xf32, #tpu.memory_space<vmem>>, vector<1x32xf32>
      %14 = vector.broadcast %13 : vector<1x32xf32> to vector<128x32xf32>
      %15 = arith.mulf %12, %14 : vector<128x32xf32>
      %c0_14 = arith.constant 0 : index
      %c0_15 = arith.constant 0 : index
      %16 = vector.load %arg6[%c0_14, %c0_15] : memref<1x32xf32, #tpu.memory_space<vmem>>, vector<1x32xf32>
      %17 = vector.broadcast %16 : vector<1x32xf32> to vector<128x32xf32>
      %18 = arith.addf %15, %17 : vector<128x32xf32>
      %c0_16 = arith.constant 0 : index
      %c0_17 = arith.constant 0 : index
      %19 = vector.load %arg7[%c0_16, %c0_17] : memref<128x32xbf16, #tpu.memory_space<vmem>>, vector<128x32xbf16>
      %20 = arith.extf %19 : vector<128x32xbf16> to vector<128x32xf32>
      %21 = arith.addf %18, %20 : vector<128x32xf32>
      %cst_18 = arith.constant 0.000000e+00 : f32
      %22 = vector.broadcast %cst_18 : f32 to vector<128x32xf32>
      %23 = arith.maximumf %21, %22 : vector<128x32xf32>
      %c0_19 = arith.constant 0 : index
      %c0_20 = arith.constant 0 : index
      %24 = vector.load %arg8[%c0_19, %c0_20] : memref<128x32xf32, #tpu.memory_space<vmem>>, vector<128x32xf32>
      tpu.vector_store %arg8[%c0_19, %c0_20], %23 {strides = array<i32>} : memref<128x32xf32, #tpu.memory_space<vmem>>, vector<128x32xf32>,
    } else {
    }
    return
  }
  func.func @transform_0(%arg0: i32, %arg1: i32, %arg2: i32) -> (i32, i32) {
    %c0_i32 = arith.constant 0 : i32
    return %arg0, %arg2 : i32, i32
  }
  func.func @transform_1(%arg0: i32, %arg1: i32, %arg2: i32) -> (i32, i32) {
    %c0_i32 = arith.constant 0 : i32
    return %arg2, %arg1 : i32, i32
  }
  func.func @transform_2(%arg0: i32, %arg1: i32, %arg2: i32) -> (i32, i32) {
    %c0_i32 = arith.constant 0 : i32
    %c0_i32_0 = arith.constant 0 : i32
    return %c0_i32, %arg1 : i32, i32
  }
  func.func @transform_3(%arg0: i32, %arg1: i32, %arg2: i32) -> (i32, i32) {
    %c0_i32 = arith.constant 0 : i32
    %c0_i32_0 = arith.constant 0 : i32
    return %c0_i32, %arg1 : i32, i32
  }
  func.func @transform_4(%arg0: i32, %arg1: i32, %arg2: i32) -> (i32, i32) {
    %c0_i32 = arith.constant 0 : i32
    return %arg0, %arg1 : i32, i32
  }
  func.func @transform_5(%arg0: i32, %arg1: i32, %arg2: i32) -> (i32, i32) {
    %c0_i32 = arith.constant 0 : i32
    return %arg0, %arg1 : i32, i32
  }
}

module attributes {stable_mosaic.version = 11 : i64} {
  func.func @_conv3x3_kernel(%arg0: i32, %arg1: memref<1x110x8xbf16, #tpu.memory_space<vmem>>, %arg2: memref<9x8x8xbf16, #tpu.memory_space<vmem>>, %arg3: memref<1x8xf32, #tpu.memory_space<vmem>>, %arg4: memref<1x8xf32, #tpu.memory_space<vmem>>, %arg5: memref<1x80x8xbf16, #tpu.memory_space<vmem>>, %arg6: memref<80x8xf32, #tpu.memory_space<vmem>>) attributes {dimension_semantics = [#tpu.dimension_semantics<parallel>], iteration_bounds = array<i64: 2>, scalar_prefetch = 0 : i64, scratch_operands = 1 : i64, tpu.core_type = #tpu.core_type<tc>, window_params = [{transform_indices = @transform_0, window_bounds = array<i64: 1, 110, 8>}, {pipeline_mode = #tpu.pipeline_mode<synchronous>, transform_indices = @transform_1, window_bounds = array<i64: 9, 8, 8>}, {pipeline_mode = #tpu.pipeline_mode<synchronous>, transform_indices = @transform_2, window_bounds = array<i64: 1, 8>}, {pipeline_mode = #tpu.pipeline_mode<synchronous>, transform_indices = @transform_3, window_bounds = array<i64: 1, 8>}, {transform_indices = @transform_4, window_bounds = array<i64: 1, 80, 8>}]} {
    %cst = arith.constant 0.000000e+00 : f32
    %0 = vector.broadcast %cst : f32 to vector<80x8xf32>
    %c0 = arith.constant 0 : index
    %c0_0 = arith.constant 0 : index
    %1 = vector.load %arg6[%c0, %c0_0] : memref<80x8xf32, #tpu.memory_space<vmem>>, vector<80x8xf32>
    tpu.vector_store %arg6[%c0, %c0_0], %0 {strides = array<i32>} : memref<80x8xf32, #tpu.memory_space<vmem>>, vector<80x8xf32>,
    %c0_1 = arith.constant 0 : index
    %c0_2 = arith.constant 0 : index
    %c0_3 = arith.constant 0 : index
    %2 = vector.load %arg1[%c0_1, %c0_2, %c0_3] : memref<1x110x8xbf16, #tpu.memory_space<vmem>>, vector<1x80x8xbf16>
    %3 = vector.shape_cast %2 : vector<1x80x8xbf16> to vector<80x8xbf16>
    %c0_4 = arith.constant 0 : index
    %c0_5 = arith.constant 0 : index
    %4 = vector.load %arg6[%c0_4, %c0_5] : memref<80x8xf32, #tpu.memory_space<vmem>>, vector<80x8xf32>
    %c0_6 = arith.constant 0 : index
    %c0_7 = arith.constant 0 : index
    %c0_8 = arith.constant 0 : index
    %5 = vector.load %arg2[%c0_6, %c0_7, %c0_8] : memref<9x8x8xbf16, #tpu.memory_space<vmem>>, vector<1x8x8xbf16>
    %6 = vector.shape_cast %5 : vector<1x8x8xbf16> to vector<8x8xbf16>
    %cst_9 = arith.constant dense<0.000000e+00> : vector<80x8xf32>
    %7 = tpu.matmul %3, %6, %cst_9 {dimension_numbers = #tpu.dot_dimension_numbers<[1], [0], [0], [1], [0, 0, 1, 1], [], []>} : vector<80x8xbf16>, vector<8x8xbf16>, vector<80x8xf32> -> vector<80x8xf32>
    %8 = arith.addf %4, %7 : vector<80x8xf32>
    %c0_10 = arith.constant 0 : index
    %c0_11 = arith.constant 0 : index
    %9 = vector.load %arg6[%c0_10, %c0_11] : memref<80x8xf32, #tpu.memory_space<vmem>>, vector<80x8xf32>
    tpu.vector_store %arg6[%c0_10, %c0_11], %8 {strides = array<i32>} : memref<80x8xf32, #tpu.memory_space<vmem>>, vector<80x8xf32>,
    %c0_12 = arith.constant 0 : index
    %c1 = arith.constant 1 : index
    %c0_13 = arith.constant 0 : index
    %10 = vector.load %arg1[%c0_12, %c1, %c0_13] : memref<1x110x8xbf16, #tpu.memory_space<vmem>>, vector<1x80x8xbf16>
    %11 = vector.shape_cast %10 : vector<1x80x8xbf16> to vector<80x8xbf16>
    %c0_14 = arith.constant 0 : index
    %c0_15 = arith.constant 0 : index
    %12 = vector.load %arg6[%c0_14, %c0_15] : memref<80x8xf32, #tpu.memory_space<vmem>>, vector<80x8xf32>
    %c1_16 = arith.constant 1 : index
    %c0_17 = arith.constant 0 : index
    %c0_18 = arith.constant 0 : index
    %13 = vector.load %arg2[%c1_16, %c0_17, %c0_18] : memref<9x8x8xbf16, #tpu.memory_space<vmem>>, vector<1x8x8xbf16>
    %14 = vector.shape_cast %13 : vector<1x8x8xbf16> to vector<8x8xbf16>
    %cst_19 = arith.constant dense<0.000000e+00> : vector<80x8xf32>
    %15 = tpu.matmul %11, %14, %cst_19 {dimension_numbers = #tpu.dot_dimension_numbers<[1], [0], [0], [1], [0, 0, 1, 1], [], []>} : vector<80x8xbf16>, vector<8x8xbf16>, vector<80x8xf32> -> vector<80x8xf32>
    %16 = arith.addf %12, %15 : vector<80x8xf32>
    %c0_20 = arith.constant 0 : index
    %c0_21 = arith.constant 0 : index
    %17 = vector.load %arg6[%c0_20, %c0_21] : memref<80x8xf32, #tpu.memory_space<vmem>>, vector<80x8xf32>
    tpu.vector_store %arg6[%c0_20, %c0_21], %16 {strides = array<i32>} : memref<80x8xf32, #tpu.memory_space<vmem>>, vector<80x8xf32>,
    %c0_22 = arith.constant 0 : index
    %c2 = arith.constant 2 : index
    %c0_23 = arith.constant 0 : index
    %18 = vector.load %arg1[%c0_22, %c2, %c0_23] : memref<1x110x8xbf16, #tpu.memory_space<vmem>>, vector<1x80x8xbf16>
    %19 = vector.shape_cast %18 : vector<1x80x8xbf16> to vector<80x8xbf16>
    %c0_24 = arith.constant 0 : index
    %c0_25 = arith.constant 0 : index
    %20 = vector.load %arg6[%c0_24, %c0_25] : memref<80x8xf32, #tpu.memory_space<vmem>>, vector<80x8xf32>
    %c2_26 = arith.constant 2 : index
    %c0_27 = arith.constant 0 : index
    %c0_28 = arith.constant 0 : index
    %21 = vector.load %arg2[%c2_26, %c0_27, %c0_28] : memref<9x8x8xbf16, #tpu.memory_space<vmem>>, vector<1x8x8xbf16>
    %22 = vector.shape_cast %21 : vector<1x8x8xbf16> to vector<8x8xbf16>
    %cst_29 = arith.constant dense<0.000000e+00> : vector<80x8xf32>
    %23 = tpu.matmul %19, %22, %cst_29 {dimension_numbers = #tpu.dot_dimension_numbers<[1], [0], [0], [1], [0, 0, 1, 1], [], []>} : vector<80x8xbf16>, vector<8x8xbf16>, vector<80x8xf32> -> vector<80x8xf32>
    %24 = arith.addf %20, %23 : vector<80x8xf32>
    %c0_30 = arith.constant 0 : index
    %c0_31 = arith.constant 0 : index
    %25 = vector.load %arg6[%c0_30, %c0_31] : memref<80x8xf32, #tpu.memory_space<vmem>>, vector<80x8xf32>
    tpu.vector_store %arg6[%c0_30, %c0_31], %24 {strides = array<i32>} : memref<80x8xf32, #tpu.memory_space<vmem>>, vector<80x8xf32>,
    %c0_32 = arith.constant 0 : index
    %c10 = arith.constant 10 : index
    %c0_33 = arith.constant 0 : index
    %26 = vector.load %arg1[%c0_32, %c10, %c0_33] : memref<1x110x8xbf16, #tpu.memory_space<vmem>>, vector<1x80x8xbf16>
    %27 = vector.shape_cast %26 : vector<1x80x8xbf16> to vector<80x8xbf16>
    %c0_34 = arith.constant 0 : index
    %c0_35 = arith.constant 0 : index
    %28 = vector.load %arg6[%c0_34, %c0_35] : memref<80x8xf32, #tpu.memory_space<vmem>>, vector<80x8xf32>
    %c3 = arith.constant 3 : index
    %c0_36 = arith.constant 0 : index
    %c0_37 = arith.constant 0 : index
    %29 = vector.load %arg2[%c3, %c0_36, %c0_37] : memref<9x8x8xbf16, #tpu.memory_space<vmem>>, vector<1x8x8xbf16>
    %30 = vector.shape_cast %29 : vector<1x8x8xbf16> to vector<8x8xbf16>
    %cst_38 = arith.constant dense<0.000000e+00> : vector<80x8xf32>
    %31 = tpu.matmul %27, %30, %cst_38 {dimension_numbers = #tpu.dot_dimension_numbers<[1], [0], [0], [1], [0, 0, 1, 1], [], []>} : vector<80x8xbf16>, vector<8x8xbf16>, vector<80x8xf32> -> vector<80x8xf32>
    %32 = arith.addf %28, %31 : vector<80x8xf32>
    %c0_39 = arith.constant 0 : index
    %c0_40 = arith.constant 0 : index
    %33 = vector.load %arg6[%c0_39, %c0_40] : memref<80x8xf32, #tpu.memory_space<vmem>>, vector<80x8xf32>
    tpu.vector_store %arg6[%c0_39, %c0_40], %32 {strides = array<i32>} : memref<80x8xf32, #tpu.memory_space<vmem>>, vector<80x8xf32>,
    %c0_41 = arith.constant 0 : index
    %c11 = arith.constant 11 : index
    %c0_42 = arith.constant 0 : index
    %34 = vector.load %arg1[%c0_41, %c11, %c0_42] : memref<1x110x8xbf16, #tpu.memory_space<vmem>>, vector<1x80x8xbf16>
    %35 = vector.shape_cast %34 : vector<1x80x8xbf16> to vector<80x8xbf16>
    %c0_43 = arith.constant 0 : index
    %c0_44 = arith.constant 0 : index
    %36 = vector.load %arg6[%c0_43, %c0_44] : memref<80x8xf32, #tpu.memory_space<vmem>>, vector<80x8xf32>
    %c4 = arith.constant 4 : index
    %c0_45 = arith.constant 0 : index
    %c0_46 = arith.constant 0 : index
    %37 = vector.load %arg2[%c4, %c0_45, %c0_46] : memref<9x8x8xbf16, #tpu.memory_space<vmem>>, vector<1x8x8xbf16>
    %38 = vector.shape_cast %37 : vector<1x8x8xbf16> to vector<8x8xbf16>
    %cst_47 = arith.constant dense<0.000000e+00> : vector<80x8xf32>
    %39 = tpu.matmul %35, %38, %cst_47 {dimension_numbers = #tpu.dot_dimension_numbers<[1], [0], [0], [1], [0, 0, 1, 1], [], []>} : vector<80x8xbf16>, vector<8x8xbf16>, vector<80x8xf32> -> vector<80x8xf32>
    %40 = arith.addf %36, %39 : vector<80x8xf32>
    %c0_48 = arith.constant 0 : index
    %c0_49 = arith.constant 0 : index
    %41 = vector.load %arg6[%c0_48, %c0_49] : memref<80x8xf32, #tpu.memory_space<vmem>>, vector<80x8xf32>
    tpu.vector_store %arg6[%c0_48, %c0_49], %40 {strides = array<i32>} : memref<80x8xf32, #tpu.memory_space<vmem>>, vector<80x8xf32>,
    %c0_50 = arith.constant 0 : index
    %c12 = arith.constant 12 : index
    %c0_51 = arith.constant 0 : index
    %42 = vector.load %arg1[%c0_50, %c12, %c0_51] : memref<1x110x8xbf16, #tpu.memory_space<vmem>>, vector<1x80x8xbf16>
    %43 = vector.shape_cast %42 : vector<1x80x8xbf16> to vector<80x8xbf16>
    %c0_52 = arith.constant 0 : index
    %c0_53 = arith.constant 0 : index
    %44 = vector.load %arg6[%c0_52, %c0_53] : memref<80x8xf32, #tpu.memory_space<vmem>>, vector<80x8xf32>
    %c5 = arith.constant 5 : index
    %c0_54 = arith.constant 0 : index
    %c0_55 = arith.constant 0 : index
    %45 = vector.load %arg2[%c5, %c0_54, %c0_55] : memref<9x8x8xbf16, #tpu.memory_space<vmem>>, vector<1x8x8xbf16>
    %46 = vector.shape_cast %45 : vector<1x8x8xbf16> to vector<8x8xbf16>
    %cst_56 = arith.constant dense<0.000000e+00> : vector<80x8xf32>
    %47 = tpu.matmul %43, %46, %cst_56 {dimension_numbers = #tpu.dot_dimension_numbers<[1], [0], [0], [1], [0, 0, 1, 1], [], []>} : vector<80x8xbf16>, vector<8x8xbf16>, vector<80x8xf32> -> vector<80x8xf32>
    %48 = arith.addf %44, %47 : vector<80x8xf32>
    %c0_57 = arith.constant 0 : index
    %c0_58 = arith.constant 0 : index
    %49 = vector.load %arg6[%c0_57, %c0_58] : memref<80x8xf32, #tpu.memory_space<vmem>>, vector<80x8xf32>
    tpu.vector_store %arg6[%c0_57, %c0_58], %48 {strides = array<i32>} : memref<80x8xf32, #tpu.memory_space<vmem>>, vector<80x8xf32>,
    %c0_59 = arith.constant 0 : index
    %c20 = arith.constant 20 : index
    %c0_60 = arith.constant 0 : index
    %50 = vector.load %arg1[%c0_59, %c20, %c0_60] : memref<1x110x8xbf16, #tpu.memory_space<vmem>>, vector<1x80x8xbf16>
    %51 = vector.shape_cast %50 : vector<1x80x8xbf16> to vector<80x8xbf16>
    %c0_61 = arith.constant 0 : index
    %c0_62 = arith.constant 0 : index
    %52 = vector.load %arg6[%c0_61, %c0_62] : memref<80x8xf32, #tpu.memory_space<vmem>>, vector<80x8xf32>
    %c6 = arith.constant 6 : index
    %c0_63 = arith.constant 0 : index
    %c0_64 = arith.constant 0 : index
    %53 = vector.load %arg2[%c6, %c0_63, %c0_64] : memref<9x8x8xbf16, #tpu.memory_space<vmem>>, vector<1x8x8xbf16>
    %54 = vector.shape_cast %53 : vector<1x8x8xbf16> to vector<8x8xbf16>
    %cst_65 = arith.constant dense<0.000000e+00> : vector<80x8xf32>
    %55 = tpu.matmul %51, %54, %cst_65 {dimension_numbers = #tpu.dot_dimension_numbers<[1], [0], [0], [1], [0, 0, 1, 1], [], []>} : vector<80x8xbf16>, vector<8x8xbf16>, vector<80x8xf32> -> vector<80x8xf32>
    %56 = arith.addf %52, %55 : vector<80x8xf32>
    %c0_66 = arith.constant 0 : index
    %c0_67 = arith.constant 0 : index
    %57 = vector.load %arg6[%c0_66, %c0_67] : memref<80x8xf32, #tpu.memory_space<vmem>>, vector<80x8xf32>
    tpu.vector_store %arg6[%c0_66, %c0_67], %56 {strides = array<i32>} : memref<80x8xf32, #tpu.memory_space<vmem>>, vector<80x8xf32>,
    %c0_68 = arith.constant 0 : index
    %c21 = arith.constant 21 : index
    %c0_69 = arith.constant 0 : index
    %58 = vector.load %arg1[%c0_68, %c21, %c0_69] : memref<1x110x8xbf16, #tpu.memory_space<vmem>>, vector<1x80x8xbf16>
    %59 = vector.shape_cast %58 : vector<1x80x8xbf16> to vector<80x8xbf16>
    %c0_70 = arith.constant 0 : index
    %c0_71 = arith.constant 0 : index
    %60 = vector.load %arg6[%c0_70, %c0_71] : memref<80x8xf32, #tpu.memory_space<vmem>>, vector<80x8xf32>
    %c7 = arith.constant 7 : index
    %c0_72 = arith.constant 0 : index
    %c0_73 = arith.constant 0 : index
    %61 = vector.load %arg2[%c7, %c0_72, %c0_73] : memref<9x8x8xbf16, #tpu.memory_space<vmem>>, vector<1x8x8xbf16>
    %62 = vector.shape_cast %61 : vector<1x8x8xbf16> to vector<8x8xbf16>
    %cst_74 = arith.constant dense<0.000000e+00> : vector<80x8xf32>
    %63 = tpu.matmul %59, %62, %cst_74 {dimension_numbers = #tpu.dot_dimension_numbers<[1], [0], [0], [1], [0, 0, 1, 1], [], []>} : vector<80x8xbf16>, vector<8x8xbf16>, vector<80x8xf32> -> vector<80x8xf32>
    %64 = arith.addf %60, %63 : vector<80x8xf32>
    %c0_75 = arith.constant 0 : index
    %c0_76 = arith.constant 0 : index
    %65 = vector.load %arg6[%c0_75, %c0_76] : memref<80x8xf32, #tpu.memory_space<vmem>>, vector<80x8xf32>
    tpu.vector_store %arg6[%c0_75, %c0_76], %64 {strides = array<i32>} : memref<80x8xf32, #tpu.memory_space<vmem>>, vector<80x8xf32>,
    %c0_77 = arith.constant 0 : index
    %c22 = arith.constant 22 : index
    %c0_78 = arith.constant 0 : index
    %66 = vector.load %arg1[%c0_77, %c22, %c0_78] : memref<1x110x8xbf16, #tpu.memory_space<vmem>>, vector<1x80x8xbf16>
    %67 = vector.shape_cast %66 : vector<1x80x8xbf16> to vector<80x8xbf16>
    %c0_79 = arith.constant 0 : index
    %c0_80 = arith.constant 0 : index
    %68 = vector.load %arg6[%c0_79, %c0_80] : memref<80x8xf32, #tpu.memory_space<vmem>>, vector<80x8xf32>
    %c8 = arith.constant 8 : index
    %c0_81 = arith.constant 0 : index
    %c0_82 = arith.constant 0 : index
    %69 = vector.load %arg2[%c8, %c0_81, %c0_82] : memref<9x8x8xbf16, #tpu.memory_space<vmem>>, vector<1x8x8xbf16>
    %70 = vector.shape_cast %69 : vector<1x8x8xbf16> to vector<8x8xbf16>
    %cst_83 = arith.constant dense<0.000000e+00> : vector<80x8xf32>
    %71 = tpu.matmul %67, %70, %cst_83 {dimension_numbers = #tpu.dot_dimension_numbers<[1], [0], [0], [1], [0, 0, 1, 1], [], []>} : vector<80x8xbf16>, vector<8x8xbf16>, vector<80x8xf32> -> vector<80x8xf32>
    %72 = arith.addf %68, %71 : vector<80x8xf32>
    %c0_84 = arith.constant 0 : index
    %c0_85 = arith.constant 0 : index
    %73 = vector.load %arg6[%c0_84, %c0_85] : memref<80x8xf32, #tpu.memory_space<vmem>>, vector<80x8xf32>
    tpu.vector_store %arg6[%c0_84, %c0_85], %72 {strides = array<i32>} : memref<80x8xf32, #tpu.memory_space<vmem>>, vector<80x8xf32>,
    %c0_86 = arith.constant 0 : index
    %c0_87 = arith.constant 0 : index
    %74 = vector.load %arg6[%c0_86, %c0_87] : memref<80x8xf32, #tpu.memory_space<vmem>>, vector<80x8xf32>
    %c0_88 = arith.constant 0 : index
    %c0_89 = arith.constant 0 : index
    %75 = vector.load %arg3[%c0_88, %c0_89] : memref<1x8xf32, #tpu.memory_space<vmem>>, vector<1x8xf32>
    %76 = vector.broadcast %75 : vector<1x8xf32> to vector<80x8xf32>
    %77 = arith.mulf %74, %76 : vector<80x8xf32>
    %c0_90 = arith.constant 0 : index
    %c0_91 = arith.constant 0 : index
    %78 = vector.load %arg4[%c0_90, %c0_91] : memref<1x8xf32, #tpu.memory_space<vmem>>, vector<1x8xf32>
    %79 = vector.broadcast %78 : vector<1x8xf32> to vector<80x8xf32>
    %80 = arith.addf %77, %79 : vector<80x8xf32>
    %cst_92 = arith.constant 0.000000e+00 : f32
    %81 = vector.broadcast %cst_92 : f32 to vector<80x8xf32>
    %82 = arith.maximumf %80, %81 : vector<80x8xf32>
    %83 = arith.truncf %82 : vector<80x8xf32> to vector<80x8xbf16>
    %c0_93 = arith.constant 0 : index
    %c0_94 = arith.constant 0 : index
    %c0_95 = arith.constant 0 : index
    %84 = vector.load %arg5[%c0_93, %c0_94, %c0_95] : memref<1x80x8xbf16, #tpu.memory_space<vmem>>, vector<1x80x8xbf16>
    %85 = vector.shape_cast %84 : vector<1x80x8xbf16> to vector<80x8xbf16>
    %86 = vector.shape_cast %83 : vector<80x8xbf16> to vector<1x80x8xbf16>
    tpu.vector_store %arg5[%c0_93, %c0_94, %c0_95], %86 {strides = array<i32>} : memref<1x80x8xbf16, #tpu.memory_space<vmem>>, vector<1x80x8xbf16>,
    return
  }
  func.func @transform_0(%arg0: i32) -> (i32, i32, i32) {
    %c0_i32 = arith.constant 0 : i32
    %c0_i32_0 = arith.constant 0 : i32
    %c0_i32_1 = arith.constant 0 : i32
    return %arg0, %c0_i32, %c0_i32_0 : i32, i32, i32
  }
  func.func @transform_1(%arg0: i32) -> (i32, i32, i32) {
    %c0_i32 = arith.constant 0 : i32
    %c0_i32_0 = arith.constant 0 : i32
    %c0_i32_1 = arith.constant 0 : i32
    %c0_i32_2 = arith.constant 0 : i32
    return %c0_i32, %c0_i32_0, %c0_i32_1 : i32, i32, i32
  }
  func.func @transform_2(%arg0: i32) -> (i32, i32) {
    %c0_i32 = arith.constant 0 : i32
    %c0_i32_0 = arith.constant 0 : i32
    %c0_i32_1 = arith.constant 0 : i32
    return %c0_i32, %c0_i32_0 : i32, i32
  }
  func.func @transform_3(%arg0: i32) -> (i32, i32) {
    %c0_i32 = arith.constant 0 : i32
    %c0_i32_0 = arith.constant 0 : i32
    %c0_i32_1 = arith.constant 0 : i32
    return %c0_i32, %c0_i32_0 : i32, i32
  }
  func.func @transform_4(%arg0: i32) -> (i32, i32, i32) {
    %c0_i32 = arith.constant 0 : i32
    %c0_i32_0 = arith.constant 0 : i32
    %c0_i32_1 = arith.constant 0 : i32
    return %arg0, %c0_i32, %c0_i32_0 : i32, i32, i32
  }
}

</mosaic_0001>

<llo_original>
// kernel: _lambda_.7
$region0: #{_lambda_.7}
  #allocation0 [shape = 'u32[]', space=smem, size = 0x4, offset = 0x4, fixed_abs, tag = 'smem constant byte address 0x4 - core index']
  #allocation1 [shape = 'u32[144,128]{1,0:T(1,128)}', space=vmem, size = 0x12000, scoped, tag = 'internal scratch']
  #allocation2 [shape = 'f32[256,8]{1,0:T(8,128)}', space=vmem, size = 0x20000, scoped, tag = 'scratch operand']
  %s0 = inlined_call_operand.vmem [shape: bf16[512,16], index: 0, kind: input, shape index: {}]
  %s1 = inlined_call_operand.vmem [shape: bf16[16,8], index: 1, kind: input, shape index: {}]
  %s2 = inlined_call_operand.vmem [shape: f32[1,8], index: 2, kind: input, shape index: {}]
  %s3 = inlined_call_operand.vmem [shape: f32[1,8], index: 3, kind: input, shape index: {}]
  %s4 = inlined_call_operand.vmem [shape: bf16[512,8], index: 4, kind: output, shape index: {}]
  %s5 = sld [smem:[#allocation0]]
  $region57: #{_lambda_.7} parent=0
    _
  %s7 = ssub.s32 1, %s5
  %s8 = scalar_select 0, %s7, %s5
  loop: start=0, step=1, limit=4
  $region2: #{_lambda_.7} parent=0 // loop_pre_header
    _
  $region3: #{_lambda_.7} parent=0 // loop_header
    %s10 = sphi 0, %s14
    %p11 = scmp.ge.s32.totalorder %s10, 4
    %s17 = sphi 0, %s36
    %s18 = sphi 0, %s32
    %s19 = sphi 0, %s28
    %s20 = sphi 0, %s17
    %s21 = sphi 0, %s18
    %s22 = sphi 0, %s19
    %s23 = sphi 0, %s20
    %s24 = sphi 0, %s21
    %s25 = sphi 0, %s22
    %s41 = sphi 0, %s43
    %s44 = sphi 0, %s41
    %s45 = sphi 0, %s44
    %s61 = sphi 0, %s45
    %s69 = sphi 0, %s71
    %s72 = sphi 0, %s69
    %s73 = sphi 0, %s72
    %s89 = sphi 0, %s73
    %s95 = sphi 0, %s97
    %s98 = sphi 0, %s95
    %s99 = sphi 0, %s98
    %s115 = sphi 0, %s99
    %s121 = sphi 0, %s123
    %s124 = sphi 0, %s121
    %s125 = sphi 0, %s124
    %s141 = sphi 0, %s125
    %s149 = sphi 0, %s151
    %s152 = sphi 0, %s149
    %s153 = sphi 0, %s152
    %s169 = sphi 0, %s153
  $region4: #{_lambda_.7} parent=0 // loop_header_branch
    %13 = sbr.rel (%p11) target = $region8
  $region5: #{_lambda_.7} parent=0 // loop_body
    %s15 = ssub.s32 %s10, 1
    %s16 = ssub.s32 %s10, 2
    %s26 = sadd.s32 1, %s19
    %p27 = scmp.ge.s32.totalorder %s26, 1
    %s28 = scalar_select %p27, 0, %s26
    %s29 = sadd.s32 1, %s18
    %s30 = scalar_select %p27, %s29, %s18
    %p31 = scmp.ge.s32.totalorder %s30, 1
    %s32 = scalar_select %p31, 0, %s30
    %s33 = sadd.s32 1, %s17
    %s34 = scalar_select %p31, %s33, %s17
    %p35 = scmp.ge.s32.totalorder %s34, 2
    %s36 = scalar_select %p35, 0, %s34
    %s37 = ssub.s32 %s17, %s36
    %s38 = ssub.s32 %s19, %s28
    %s39 = sor.u32 %s37, %s38
    %p40 = scmp.eq.s32.totalorder %s39, 0
    %s42 = sadd.s32 %s41, 1
    %s43 = scalar_select %p40, %s41, %s42
    %p46 = pneg %p40
    %p47 = scmp.eq.s32.totalorder %s10, 1
    %p48 = por %p46, %p47
    %p49 = scmp.ne.s32.totalorder %s41, %s44
    %p50 = scmp.eq.s32.totalorder %s10, 0
    %p51 = por %p49, %p50
    %p52 = scmp.ne.s32.totalorder %s41, %s44
    %p53 = scmp.eq.s32.totalorder %s15, 1
    %p54 = por %p52, %p53
    %p55 = scmp.ne.s32.totalorder %s44, %s45
    %p56 = scmp.eq.s32.totalorder %s15, 0
    %p57 = por %p55, %p56
    %p58 = scmp.ne.s32.totalorder %s44, %s45
    %p59 = scmp.eq.s32.totalorder %s16, 1
    %p60 = por %p58, %p59
    %p62 = scmp.ne.s32.totalorder %s45, %s61
    %p63 = scmp.eq.s32.totalorder %s16, 0
    %p64 = por %p62, %p63
    %s65 = ssub.s32 %s19, %s28
    %s66 = ssub.s32 %s18, %s32
    %s67 = sor.u32 %s65, %s66
    %p68 = scmp.eq.s32.totalorder %s67, 0
    %s70 = sadd.s32 %s69, 1
    %s71 = scalar_select %p68, %s69, %s70
    %p74 = pneg %p68
    %p75 = scmp.eq.s32.totalorder %s10, 1
    %p76 = por %p74, %p75
    %p77 = scmp.ne.s32.totalorder %s69, %s72
    %p78 = scmp.eq.s32.totalorder %s10, 0
    %p79 = por %p77, %p78
    %p80 = scmp.ne.s32.totalorder %s69, %s72
    %p81 = scmp.eq.s32.totalorder %s15, 1
    %p82 = por %p80, %p81
    %p83 = scmp.ne.s32.totalorder %s72, %s73
    %p84 = scmp.eq.s32.totalorder %s15, 0
    %p85 = por %p83, %p84
    %p86 = scmp.ne.s32.totalorder %s72, %s73
    %p87 = scmp.eq.s32.totalorder %s16, 1
    %p88 = por %p86, %p87
    %p90 = scmp.ne.s32.totalorder %s73, %s89
    %p91 = scmp.eq.s32.totalorder %s16, 0
    %p92 = por %p90, %p91
    %s93 = ssub.s32 %s18, %s32
    %p94 = scmp.eq.s32.totalorder %s93, 0
    %s96 = sadd.s32 %s95, 1
    %s97 = scalar_select %p94, %s95, %s96
    %p100 = pneg %p94
    %p101 = scmp.eq.s32.totalorder %s10, 1
    %p102 = por %p100, %p101
    %p103 = scmp.ne.s32.totalorder %s95, %s98
    %p104 = scmp.eq.s32.totalorder %s10, 0
    %p105 = por %p103, %p104
    %p106 = scmp.ne.s32.totalorder %s95, %s98
    %p107 = scmp.eq.s32.totalorder %s15, 1
    %p108 = por %p106, %p107
    %p109 = scmp.ne.s32.totalorder %s98, %s99
    %p110 = scmp.eq.s32.totalorder %s15, 0
    %p111 = por %p109, %p110
    %p112 = scmp.ne.s32.totalorder %s98, %s99
    %p113 = scmp.eq.s32.totalorder %s16, 1
    %p114 = por %p112, %p113
    %p116 = scmp.ne.s32.totalorder %s99, %s115
    %p117 = scmp.eq.s32.totalorder %s16, 0
    %p118 = por %p116, %p117
    %s119 = ssub.s32 %s18, %s32
    %p120 = scmp.eq.s32.totalorder %s119, 0
    %s122 = sadd.s32 %s121, 1
    %s123 = scalar_select %p120, %s121, %s122
    %p126 = pneg %p120
    %p127 = scmp.eq.s32.totalorder %s10, 1
    %p128 = por %p126, %p127
    %p129 = scmp.ne.s32.totalorder %s121, %s124
    %p130 = scmp.eq.s32.totalorder %s10, 0
    %p131 = por %p129, %p130
    %p132 = scmp.ne.s32.totalorder %s121, %s124
    %p133 = scmp.eq.s32.totalorder %s15, 1
    %p134 = por %p132, %p133
    %p135 = scmp.ne.s32.totalorder %s124, %s125
    %p136 = scmp.eq.s32.totalorder %s15, 0
    %p137 = por %p135, %p136
    %p138 = scmp.ne.s32.totalorder %s124, %s125
    %p139 = scmp.eq.s32.totalorder %s16, 1
    %p140 = por %p138, %p139
    %p142 = scmp.ne.s32.totalorder %s125, %s141
    %p143 = scmp.eq.s32.totalorder %s16, 0
    %p144 = por %p142, %p143
    %s145 = ssub.s32 %s17, %s36
    %s146 = ssub.s32 %s18, %s32
    %s147 = sor.u32 %s145, %s146
    %p148 = scmp.eq.s32.totalorder %s147, 0
    %s150 = sadd.s32 %s149, 1
    %s151 = scalar_select %p148, %s149, %s150
    %p154 = pneg %p148
    %p155 = scmp.eq.s32.totalorder %s10, 1
    %p156 = por %p154, %p155
    %p157 = scmp.ne.s32.totalorder %s149, %s152
    %p158 = scmp.eq.s32.totalorder %s10, 0
    %p159 = por %p157, %p158
    %p160 = scmp.ne.s32.totalorder %s149, %s152
    %p161 = scmp.eq.s32.totalorder %s15, 1
    %p162 = por %p160, %p161
    %p163 = scmp.ne.s32.totalorder %s152, %s153
    %p164 = scmp.eq.s32.totalorder %s15, 0
    %p165 = por %p163, %p164
    %p166 = scmp.ne.s32.totalorder %s152, %s153
    %p167 = scmp.eq.s32.totalorder %s16, 1
    %p168 = por %p166, %p167
    %p170 = scmp.ne.s32.totalorder %s153, %s169
    %p171 = scmp.eq.s32.totalorder %s16, 0
    %p172 = por %p170, %p171
    %p173 = scmp.le.s32.totalorder 1, %s10
    %p174 = scmp.lt.s32.totalorder %s10, 3
    %p175 = pnand %p173, %p174
    %p176 = pneg %p175
    // Predicated region
    $region9: #{_lambda_.7} parent=5 // pred_check
      _
    $region10: #{_lambda_.7} parent=5 // pred_check_branch
      %178 = sbr.rel (%p175) target = $region12
    $region11: #{_lambda_.7} parent=5 // pred_region
      %s179 = ssub.s32 %s10, 1
      // Predicated region
      $region13: #{_lambda_.7} parent=11 // pred_check
        %p180 = pneg %p85
      $region14: #{_lambda_.7} parent=11 // pred_check_branch
        %182 = sbr.rel (%p180) target = $region16
      $region15: #{_lambda_.7} parent=11 // pred_region
        %s183 = smul.u32 2, %s22
        %p184 = scmp.lt.s32.totalorder %s183, 1
        %s185 = scalar_select %p184, %s183, 1
        %p186 = scmp.lt.s32.totalorder %s21, 0
        %s187 = scalar_select %p186, %s21, 0
        %s188 = sadd.s32 %s187, %s185
        %s189 = smul.addr %s188, 4
        %s190 = scalar_lea.vmem %s1, %s189
        %s191 = smul.u32 2, %s22
      $region16: #{_lambda_.7} parent=11 // pred_fallthru
        _
      // Predicated region
      $region17: #{_lambda_.7} parent=11 // pred_check
        %p192 = pneg %p111
      $region18: #{_lambda_.7} parent=11 // pred_check_branch
        %194 = sbr.rel (%p192) target = $region20
      $region19: #{_lambda_.7} parent=11 // pred_region
        %p195 = scmp.lt.s32.totalorder %s21, 0
        %s196 = scalar_select %p195, %s21, 0
        %s197 = scalar_lea.vmem %s2, %s196
      $region20: #{_lambda_.7} parent=11 // pred_fallthru
        _
      // Predicated region
      $region21: #{_lambda_.7} parent=11 // pred_check
        %p198 = pneg %p137
      $region22: #{_lambda_.7} parent=11 // pred_check_branch
        %200 = sbr.rel (%p198) target = $region24
      $region23: #{_lambda_.7} parent=11 // pred_region
        %p201 = scmp.lt.s32.totalorder %s21, 0
        %s202 = scalar_select %p201, %s21, 0
        %s203 = scalar_lea.vmem %s3, %s202
      $region24: #{_lambda_.7} parent=11 // pred_fallthru
        _
    $region12: #{_lambda_.7} parent=5 // pred_fallthru
      _
    %p204 = scmp.lt.s32.totalorder %s10, 2
    // Predicated region
    $region25: #{_lambda_.7} parent=5 // pred_check
      %p205 = pneg %p204
    $region26: #{_lambda_.7} parent=5 // pred_check_branch
      %207 = sbr.rel (%p205) target = $region28
    $region27: #{_lambda_.7} parent=5 // pred_region
      // Predicated region
      $region29: #{_lambda_.7} parent=27 // pred_check
        %p208 = pneg %p51
      $region30: #{_lambda_.7} parent=27 // pred_check_branch
        %210 = sbr.rel (%p208) target = $region32
      $region31: #{_lambda_.7} parent=27 // pred_region
        %s211 = smul.u32 32, %s17
        %p212 = scmp.lt.s32.totalorder %s211, 63
        %s213 = scalar_select %p212, %s211, 63
        %p214 = scmp.lt.s32.totalorder %s19, 0
        %s215 = scalar_select %p214, %s19, 0
        %s216 = sadd.s32 %s215, %s213
        %s217 = smul.addr %s216, 4
        %s218 = scalar_lea.vmem %s0, %s217
        %s219 = smul.u32 32, %s17
      $region32: #{_lambda_.7} parent=27 // pred_fallthru
        _
    $region28: #{_lambda_.7} parent=5 // pred_fallthru
      _
    %p220 = scmp.le.s32.totalorder 1, %s10
    %p221 = scmp.lt.s32.totalorder %s10, 3
    %p222 = pnand %p220, %p221
    %p223 = pneg %p222
    // Predicated region
    $region33: #{_lambda_.7} parent=5 // pred_check
      _
    $region34: #{_lambda_.7} parent=5 // pred_check_branch
      %225 = sbr.rel (%p222) target = $region36
    $region35: #{_lambda_.7} parent=5 // pred_region
      %s226 = ssub.s32 %s10, 1
      %s227 = smul.u32 32, %s20
      %p228 = scmp.lt.s32.totalorder %s227, 63
      %s229 = scalar_select %p228, %s227, 63
      %p230 = scmp.lt.s32.totalorder %s22, 0
      %s231 = scalar_select %p230, %s22, 0
      %s232 = sadd.s32 %s231, %s229
      %s233 = smul.addr %s232, 4
      %s234 = scalar_lea.vmem %s0, %s233
      %p235 = pneg %p57
      %p236 = pneg %p54
      %s237 = smul.u32 2, %s22
      %p238 = scmp.lt.s32.totalorder %s237, 1
      %s239 = scalar_select %p238, %s237, 1
      %p240 = scmp.lt.s32.totalorder %s21, 0
      %s241 = scalar_select %p240, %s21, 0
      %s242 = sadd.s32 %s241, %s239
      %s243 = smul.addr %s242, 4
      %s244 = scalar_lea.vmem %s1, %s243
      %p245 = pneg %p85
      %p246 = pneg %p82
      %p247 = scmp.lt.s32.totalorder %s21, 0
      %s248 = scalar_select %p247, %s21, 0
      %s249 = scalar_lea.vmem %s2, %s248
      %p250 = pneg %p111
      %p251 = pneg %p108
      %p252 = scmp.lt.s32.totalorder %s21, 0
      %s253 = scalar_select %p252, %s21, 0
      %s254 = scalar_lea.vmem %s3, %s253
      %p255 = pneg %p137
      %p256 = pneg %p134
      %p257 = pneg %p165
      %p258 = pneg %p162
      %s259 = smul.u32 32, %s20
      %p260 = scmp.lt.s32.totalorder %s259, 63
      %s261 = scalar_select %p260, %s259, 63
      %p262 = scmp.lt.s32.totalorder %s21, 0
      %s263 = scalar_select %p262, %s21, 0
      %s264 = sadd.s32 %s263, %s261
      %s265 = smul.addr %s264, 4
      %s266 = scalar_lea.vmem %s4, %s265
      %s267 = smul.u32 32, %s20
      %p268 = scmp.lt.s32.totalorder %s267, 63
      %s269 = scalar_select %p268, %s267, 63
      %p270 = scmp.lt.s32.totalorder %s22, 0
      %s271 = scalar_select %p270, %s22, 0
      %s272 = sadd.s32 %s271, %s269
      %s273 = smul.addr %s272, 4
      %s274 = scalar_lea.vmem %s0, %s273
      %s275 = smul.u32 32, %s20
      %s276 = smul.u32 2, %s22
      %p277 = scmp.lt.s32.totalorder %s276, 1
      %s278 = scalar_select %p277, %s276, 1
      %p279 = scmp.lt.s32.totalorder %s21, 0
      %s280 = scalar_select %p279, %s21, 0
      %s281 = sadd.s32 %s280, %s278
      %s282 = smul.addr %s281, 4
      %s283 = scalar_lea.vmem %s1, %s282
      %s284 = smul.u32 2, %s22
      %p285 = scmp.lt.s32.totalorder %s21, 0
      %s286 = scalar_select %p285, %s21, 0
      %s287 = scalar_lea.vmem %s2, %s286
      %p288 = scmp.lt.s32.totalorder %s21, 0
      %s289 = scalar_select %p288, %s21, 0
      %s290 = scalar_lea.vmem %s3, %s289
      %s291 = smul.u32 32, %s20
      %p292 = scmp.lt.s32.totalorder %s291, 63
      %s293 = scalar_select %p292, %s291, 63
      %p294 = scmp.lt.s32.totalorder %s21, 0
      %s295 = scalar_select %p294, %s21, 0
      %s296 = sadd.s32 %s295, %s293
      %s297 = smul.addr %s296, 4
      %s298 = scalar_lea.vmem %s4, %s297
      %s299 = smul.u32 32, %s20
      %p301 = scmp.eq.s32.totalorder %s22, 0
      // Predicated region
      $region37: #{_lambda_.7} parent=35 // pred_check
        %p302 = pneg %p301
      $region38: #{_lambda_.7} parent=35 // pred_check_branch
        %304 = sbr.rel (%p302) target = $region40
      $region39: #{_lambda_.7} parent=35 // pred_region
        %vm305 = vcmask 64512
        %306 = vst.msk [vmem:[#allocation2] sm:$0xff] %vm305, 0.0
        %307 = vst.msk [vmem:[#allocation2 + $0x8] sm:$0xff] %vm305, 0.0
        %308 = vst.msk [vmem:[#allocation2 + $0x10] sm:$0xff] %vm305, 0.0
        %309 = vst.msk [vmem:[#allocation2 + $0x18] sm:$0xff] %vm305, 0.0
        %310 = vst.msk [vmem:[#allocation2 + $0x20] sm:$0xff] %vm305, 0.0
        %311 = vst.msk [vmem:[#allocation2 + $0x28] sm:$0xff] %vm305, 0.0
        %312 = vst.msk [vmem:[#allocation2 + $0x30] sm:$0xff] %vm305, 0.0
        %313 = vst.msk [vmem:[#allocation2 + $0x38] sm:$0xff] %vm305, 0.0
        %314 = vst.msk [vmem:[#allocation2 + $0x40] sm:$0xff] %vm305, 0.0
        %315 = vst.msk [vmem:[#allocation2 + $0x48] sm:$0xff] %vm305, 0.0
        %316 = vst.msk [vmem:[#allocation2 + $0x50] sm:$0xff] %vm305, 0.0
        %317 = vst.msk [vmem:[#allocation2 + $0x58] sm:$0xff] %vm305, 0.0
        %318 = vst.msk [vmem:[#allocation2 + $0x60] sm:$0xff] %vm305, 0.0
        %319 = vst.msk [vmem:[#allocation2 + $0x68] sm:$0xff] %vm305, 0.0
        %320 = vst.msk [vmem:[#allocation2 + $0x70] sm:$0xff] %vm305, 0.0
        %321 = vst.msk [vmem:[#allocation2 + $0x78] sm:$0xff] %vm305, 0.0
        %322 = vst.msk [vmem:[#allocation2 + $0x80] sm:$0xff] %vm305, 0.0
        %323 = vst.msk [vmem:[#allocation2 + $0x88] sm:$0xff] %vm305, 0.0
        %324 = vst.msk [vmem:[#allocation2 + $0x90] sm:$0xff] %vm305, 0.0
        %325 = vst.msk [vmem:[#allocation2 + $0x98] sm:$0xff] %vm305, 0.0
        %326 = vst.msk [vmem:[#allocation2 + $0xa0] sm:$0xff] %vm305, 0.0
        %327 = vst.msk [vmem:[#allocation2 + $0xa8] sm:$0xff] %vm305, 0.0
        %328 = vst.msk [vmem:[#allocation2 + $0xb0] sm:$0xff] %vm305, 0.0
        %329 = vst.msk [vmem:[#allocation2 + $0xb8] sm:$0xff] %vm305, 0.0
        %330 = vst.msk [vmem:[#allocation2 + $0xc0] sm:$0xff] %vm305, 0.0
        %331 = vst.msk [vmem:[#allocation2 + $0xc8] sm:$0xff] %vm305, 0.0
        %332 = vst.msk [vmem:[#allocation2 + $0xd0] sm:$0xff] %vm305, 0.0
        %333 = vst.msk [vmem:[#allocation2 + $0xd8] sm:$0xff] %vm305, 0.0
        %334 = vst.msk [vmem:[#allocation2 + $0xe0] sm:$0xff] %vm305, 0.0
        %335 = vst.msk [vmem:[#allocation2 + $0xe8] sm:$0xff] %vm305, 0.0
        %336 = vst.msk [vmem:[#allocation2 + $0xf0] sm:$0xff] %vm305, 0.0
        %337 = vst.msk [vmem:[#allocation2 + $0xf8] sm:$0xff] %vm305, 0.0
      $region40: #{_lambda_.7} parent=35 // pred_fallthru
        _
      %v338 = vld [vmem:[#allocation2] sm:$0xff]
      %v339 = vld [vmem:[#allocation2 + $0x8] sm:$0xff]
      %v340 = vld [vmem:[#allocation2 + $0x10] sm:$0xff]
      %v341 = vld [vmem:[#allocation2 + $0x18] sm:$0xff]
      %v342 = vld [vmem:[#allocation2 + $0x20] sm:$0xff]
      %v343 = vld [vmem:[#allocation2 + $0x28] sm:$0xff]
      %v344 = vld [vmem:[#allocation2 + $0x30] sm:$0xff]
      %v345 = vld [vmem:[#allocation2 + $0x38] sm:$0xff]
      %v346 = vld [vmem:[#allocation2 + $0x40] sm:$0xff]
      %v347 = vld [vmem:[#allocation2 + $0x48] sm:$0xff]
      %v348 = vld [vmem:[#allocation2 + $0x50] sm:$0xff]
      %v349 = vld [vmem:[#allocation2 + $0x58] sm:$0xff]
      %v350 = vld [vmem:[#allocation2 + $0x60] sm:$0xff]
      %v351 = vld [vmem:[#allocation2 + $0x68] sm:$0xff]
      %v352 = vld [vmem:[#allocation2 + $0x70] sm:$0xff]
      %v353 = vld [vmem:[#allocation2 + $0x78] sm:$0xff]
      %v354 = vld [vmem:[#allocation2 + $0x80] sm:$0xff]
      %v355 = vld [vmem:[#allocation2 + $0x88] sm:$0xff]
      %v356 = vld [vmem:[#allocation2 + $0x90] sm:$0xff]
      %v357 = vld [vmem:[#allocation2 + $0x98] sm:$0xff]
      %v358 = vld [vmem:[#allocation2 + $0xa0] sm:$0xff]
      %v359 = vld [vmem:[#allocation2 + $0xa8] sm:$0xff]
      %v360 = vld [vmem:[#allocation2 + $0xb0] sm:$0xff]
      %v361 = vld [vmem:[#allocation2 + $0xb8] sm:$0xff]
      %v362 = vld [vmem:[#allocation2 + $0xc0] sm:$0xff]
      %v363 = vld [vmem:[#allocation2 + $0xc8] sm:$0xff]
      %v364 = vld [vmem:[#allocation2 + $0xd0] sm:$0xff]
      %v365 = vld [vmem:[#allocation2 + $0xd8] sm:$0xff]
      %v366 = vld [vmem:[#allocation2 + $0xe0] sm:$0xff]
      %v367 = vld [vmem:[#allocation2 + $0xe8] sm:$0xff]
      %v368 = vld [vmem:[#allocation2 + $0xf0] sm:$0xff]
      %v369 = vld [vmem:[#allocation2 + $0xf8] sm:$0xff]
      %v370 = vld [vmem:[%s274] sm:$0xf]
      %v371 = vld [vmem:[%s274 + $0x4] sm:$0xf]
      %v372 = vld [vmem:[%s274 + $0x8] sm:$0xf]
      %v373 = vld [vmem:[%s274 + $0xc] sm:$0xf]
      %v374 = vld [vmem:[%s274 + $0x10] sm:$0xf]
      %v375 = vld [vmem:[%s274 + $0x14] sm:$0xf]
      %v376 = vld [vmem:[%s274 + $0x18] sm:$0xf]
      %v377 = vld [vmem:[%s274 + $0x1c] sm:$0xf]
      %v378 = vld [vmem:[%s274 + $0x20] sm:$0xf]
      %v379 = vld [vmem:[%s274 + $0x24] sm:$0xf]
      %v380 = vld [vmem:[%s274 + $0x28] sm:$0xf]
      %v381 = vld [vmem:[%s274 + $0x2c] sm:$0xf]
      %v382 = vld [vmem:[%s274 + $0x30] sm:$0xf]
      %v383 = vld [vmem:[%s274 + $0x34] sm:$0xf]
      %v384 = vld [vmem:[%s274 + $0x38] sm:$0xf]
      %v385 = vld [vmem:[%s274 + $0x3c] sm:$0xf]
      %v386 = vld [vmem:[%s274 + $0x40] sm:$0xf]
      %v387 = vld [vmem:[%s274 + $0x44] sm:$0xf]
      %v388 = vld [vmem:[%s274 + $0x48] sm:$0xf]
      %v389 = vld [vmem:[%s274 + $0x4c] sm:$0xf]
      %v390 = vld [vmem:[%s274 + $0x50] sm:$0xf]
      %v391 = vld [vmem:[%s274 + $0x54] sm:$0xf]
      %v392 = vld [vmem:[%s274 + $0x58] sm:$0xf]
      %v393 = vld [vmem:[%s274 + $0x5c] sm:$0xf]
      %v394 = vld [vmem:[%s274 + $0x60] sm:$0xf]
      %v395 = vld [vmem:[%s274 + $0x64] sm:$0xf]
      %v396 = vld [vmem:[%s274 + $0x68] sm:$0xf]
      %v397 = vld [vmem:[%s274 + $0x6c] sm:$0xf]
      %v398 = vld [vmem:[%s274 + $0x70] sm:$0xf]
      %v399 = vld [vmem:[%s274 + $0x74] sm:$0xf]
      %v400 = vld [vmem:[%s274 + $0x78] sm:$0xf]
      %v401 = vld [vmem:[%s274 + $0x7c] sm:$0xf]
      %v402 = vld [vmem:[%s283] sm:$0xf]
      %v403 = vld [vmem:[%s283 + $0x4] sm:$0xf]
      %v436 = vunpack.c.l.b16 %v370
      %v437 = vunpack.c.l.b16 %v371
      %v438 = vunpack.c.l.b16 %v372
      %v439 = vunpack.c.l.b16 %v373
      %v440 = vunpack.c.l.b16 %v374
      %v441 = vunpack.c.l.b16 %v375
      %v442 = vunpack.c.l.b16 %v376
      %v443 = vunpack.c.l.b16 %v377
      %v444 = vunpack.c.l.b16 %v378
      %v445 = vunpack.c.l.b16 %v379
      %v446 = vunpack.c.l.b16 %v380
      %v447 = vunpack.c.l.b16 %v381
      %v448 = vunpack.c.l.b16 %v382
      %v449 = vunpack.c.l.b16 %v383
      %v450 = vunpack.c.l.b16 %v384
      %v451 = vunpack.c.l.b16 %v385
      %v452 = vunpack.c.l.b16 %v386
      %v453 = vunpack.c.l.b16 %v387
      %v454 = vunpack.c.l.b16 %v388
      %v455 = vunpack.c.l.b16 %v389
      %v456 = vunpack.c.l.b16 %v390
      %v457 = vunpack.c.l.b16 %v391
      %v458 = vunpack.c.l.b16 %v392
      %v459 = vunpack.c.l.b16 %v393
      %v460 = vunpack.c.l.b16 %v394
      %v461 = vunpack.c.l.b16 %v395
      %v462 = vunpack.c.l.b16 %v396
      %v463 = vunpack.c.l.b16 %v397
      %v464 = vunpack.c.l.b16 %v398
      %v465 = vunpack.c.l.b16 %v399
      %v466 = vunpack.c.l.b16 %v400
      %v467 = vunpack.c.l.b16 %v401
      %v468 = vpack.c.b16 %v437, %v436
      %v469 = vpack.c.b16 %v439, %v438
      %v470 = vpack.c.b16 %v441, %v440
      %v471 = vpack.c.b16 %v443, %v442
      %v472 = vpack.c.b16 %v445, %v444
      %v473 = vpack.c.b16 %v447, %v446
      %v474 = vpack.c.b16 %v449, %v448
      %v475 = vpack.c.b16 %v451, %v450
      %v476 = vpack.c.b16 %v453, %v452
      %v477 = vpack.c.b16 %v455, %v454
      %v478 = vpack.c.b16 %v457, %v456
      %v479 = vpack.c.b16 %v459, %v458
      %v480 = vpack.c.b16 %v461, %v460
      %v481 = vpack.c.b16 %v463, %v462
      %v482 = vpack.c.b16 %v465, %v464
      %v483 = vpack.c.b16 %v467, %v466
      %v486 = vunpack.c.l.b16 %v402
      %v487 = vunpack.c.l.b16 %v403
      %v488 = vpack.c.b16 %v487, %v486
      %vm490 = vcmask 130048
      %v492 = vsel %vm490, %v468, 0
      %v495 = vsel %vm490, %v469, 0
      %v498 = vsel %vm490, %v470, 0
      %v501 = vsel %vm490, %v471, 0
      %v504 = vsel %vm490, %v472, 0
      %v507 = vsel %vm490, %v473, 0
      %v510 = vsel %vm490, %v474, 0
      %v513 = vsel %vm490, %v475, 0
      %v516 = vsel %vm490, %v476, 0
      %v519 = vsel %vm490, %v477, 0
      %v522 = vsel %vm490, %v478, 0
      %v525 = vsel %vm490, %v479, 0
      %v528 = vsel %vm490, %v480, 0
      %v531 = vsel %vm490, %v481, 0
      %v534 = vsel %vm490, %v482, 0
      %v537 = vsel %vm490, %v483, 0
      %539 = vmatprep.subr.bf16.mxu0 0
      %540 = vmatpush1.bf16.msra.mxu0 %v488
      %541 = vmatprep.subr.bf16.mxu0 0
      %542 = vmatpush1.bf16.msra.mxu0 0
      %543 = vmatprep.subr.bf16.mxu0 0
      %544 = vmatpush1.bf16.msra.mxu0 0
      %545 = vmatprep.subr.bf16.mxu0 0
      %546 = vmatpush1.bf16.msra.mxu0 0
      %547 = vmatprep.subr.bf16.mxu0 0
      %548 = vmatpush1.bf16.msra.mxu0 0
      %549 = vmatprep.subr.bf16.mxu0 0
      %550 = vmatpush1.bf16.msra.mxu0 0
      %551 = vmatprep.subr.bf16.mxu0 0
      %552 = vmatpush1.bf16.msra.mxu0 0
      %553 = vmatprep.subr.bf16.mxu0 0
      %554 = vmatpush1.bf16.msra.mxu0 0
      %555 = vmatprep.subr.bf16.mxu0 0
      %556 = vmatpush1.bf16.msra.mxu0 0
      %557 = vmatprep.subr.bf16.mxu0 0
      %558 = vmatpush1.bf16.msra.mxu0 0
      %559 = vmatprep.subr.bf16.mxu0 0
      %560 = vmatpush1.bf16.msra.mxu0 0
      %561 = vmatprep.subr.bf16.mxu0 0
      %562 = vmatpush1.bf16.msra.mxu0 0
      %563 = vmatprep.subr.bf16.mxu0 0
      %564 = vmatpush1.bf16.msra.mxu0 0
      %565 = vmatprep.subr.bf16.mxu0 0
      %566 = vmatpush1.bf16.msra.mxu0 0
      %567 = vmatprep.subr.bf16.mxu0 0
      %568 = vmatpush1.bf16.msra.mxu0 0
      %569 = vmatprep.subr.bf16.mxu0 0
      %570 = vmatpush1.bf16.msra.mxu0 0
      %571 = vmatprep.mubr.bf16.mxu0 0
      %572 = vmatmul.mubr.bf16.gmra.mrb[0].mxu0 %v492
      %v573 = vpop.f32.mrb[0].mxu0
      %v574 = vadd.f32 0.0, %v573
      %v575 = vpop.f32.mrb[0].mxu0
      %v576 = vpop.f32.mrb[0].mxu0
      %v577 = vadd.f32 0.0, %v576
      %v578 = vpop.f32.mrb[0].mxu0
      %579 = vmatprep.mubr.bf16.mxu0 0
      %580 = vmatmul.mubr.bf16.gmra.mrb[0].mxu0 %v495
      %v581 = vpop.f32.mrb[0].mxu0
      %v582 = vadd.f32 0.0, %v581
      %v583 = vpop.f32.mrb[0].mxu0
      %v584 = vpop.f32.mrb[0].mxu0
      %v585 = vadd.f32 0.0, %v584
      %v586 = vpop.f32.mrb[0].mxu0
      %587 = vmatprep.mubr.bf16.mxu0 0
      %588 = vmatmul.mubr.bf16.gmra.mrb[0].mxu0 %v498
      %v589 = vpop.f32.mrb[0].mxu0
      %v590 = vadd.f32 0.0, %v589
      %v591 = vpop.f32.mrb[0].mxu0
      %v592 = vpop.f32.mrb[0].mxu0
      %v593 = vadd.f32 0.0, %v592
      %v594 = vpop.f32.mrb[0].mxu0
      %595 = vmatprep.mubr.bf16.mxu0 0
      %596 = vmatmul.mubr.bf16.gmra.mrb[0].mxu0 %v501
      %v597 = vpop.f32.mrb[0].mxu0
      %v598 = vadd.f32 0.0, %v597
      %v599 = vpop.f32.mrb[0].mxu0
      %v600 = vpop.f32.mrb[0].mxu0
      %v601 = vadd.f32 0.0, %v600
      %v602 = vpop.f32.mrb[0].mxu0
      %603 = vmatprep.mubr.bf16.mxu0 0
      %604 = vmatmul.mubr.bf16.gmra.mrb[0].mxu0 %v504
      %v605 = vpop.f32.mrb[0].mxu0
      %v606 = vadd.f32 0.0, %v605
      %v607 = vpop.f32.mrb[0].mxu0
      %v608 = vpop.f32.mrb[0].mxu0
      %v609 = vadd.f32 0.0, %v608
      %v610 = vpop.f32.mrb[0].mxu0
      %611 = vmatprep.mubr.bf16.mxu0 0
      %612 = vmatmul.mubr.bf16.gmra.mrb[0].mxu0 %v507
      %v613 = vpop.f32.mrb[0].mxu0
      %v614 = vadd.f32 0.0, %v613
      %v615 = vpop.f32.mrb[0].mxu0
      %v616 = vpop.f32.mrb[0].mxu0
      %v617 = vadd.f32 0.0, %v616
      %v618 = vpop.f32.mrb[0].mxu0
      %619 = vmatprep.mubr.bf16.mxu0 0
      %620 = vmatmul.mubr.bf16.gmra.mrb[0].mxu0 %v510
      %v621 = vpop.f32.mrb[0].mxu0
      %v622 = vadd.f32 0.0, %v621
      %v623 = vpop.f32.mrb[0].mxu0
      %v624 = vpop.f32.mrb[0].mxu0
      %v625 = vadd.f32 0.0, %v624
      %v626 = vpop.f32.mrb[0].mxu0
      %627 = vmatprep.mubr.bf16.mxu0 0
      %628 = vmatmul.mubr.bf16.gmra.mrb[0].mxu0 %v513
      %v629 = vpop.f32.mrb[0].mxu0
      %v630 = vadd.f32 0.0, %v629
      %v631 = vpop.f32.mrb[0].mxu0
      %v632 = vpop.f32.mrb[0].mxu0
      %v633 = vadd.f32 0.0, %v632
      %v634 = vpop.f32.mrb[0].mxu0
      %635 = vmatprep.mubr.bf16.mxu0 0
      %636 = vmatmul.mubr.bf16.gmra.mrb[0].mxu0 %v516
      %v637 = vpop.f32.mrb[0].mxu0
      %v638 = vadd.f32 0.0, %v637
      %v639 = vpop.f32.mrb[0].mxu0
      %v640 = vpop.f32.mrb[0].mxu0
      %v641 = vadd.f32 0.0, %v640
      %v642 = vpop.f32.mrb[0].mxu0
      %643 = vmatprep.mubr.bf16.mxu0 0
      %644 = vmatmul.mubr.bf16.gmra.mrb[0].mxu0 %v519
      %v645 = vpop.f32.mrb[0].mxu0
      %v646 = vadd.f32 0.0, %v645
      %v647 = vpop.f32.mrb[0].mxu0
      %v648 = vpop.f32.mrb[0].mxu0
      %v649 = vadd.f32 0.0, %v648
      %v650 = vpop.f32.mrb[0].mxu0
      %651 = vmatprep.mubr.bf16.mxu0 0
      %652 = vmatmul.mubr.bf16.gmra.mrb[0].mxu0 %v522
      %v653 = vpop.f32.mrb[0].mxu0
      %v654 = vadd.f32 0.0, %v653
      %v655 = vpop.f32.mrb[0].mxu0
      %v656 = vpop.f32.mrb[0].mxu0
      %v657 = vadd.f32 0.0, %v656
      %v658 = vpop.f32.mrb[0].mxu0
      %659 = vmatprep.mubr.bf16.mxu0 0
      %660 = vmatmul.mubr.bf16.gmra.mrb[0].mxu0 %v525
      %v661 = vpop.f32.mrb[0].mxu0
      %v662 = vadd.f32 0.0, %v661
      %v663 = vpop.f32.mrb[0].mxu0
      %v664 = vpop.f32.mrb[0].mxu0
      %v665 = vadd.f32 0.0, %v664
      %v666 = vpop.f32.mrb[0].mxu0
      %667 = vmatprep.mubr.bf16.mxu0 0
      %668 = vmatmul.mubr.bf16.gmra.mrb[0].mxu0 %v528
      %v669 = vpop.f32.mrb[0].mxu0
      %v670 = vadd.f32 0.0, %v669
      %v671 = vpop.f32.mrb[0].mxu0
      %v672 = vpop.f32.mrb[0].mxu0
      %v673 = vadd.f32 0.0, %v672
      %v674 = vpop.f32.mrb[0].mxu0
      %675 = vmatprep.mubr.bf16.mxu0 0
      %676 = vmatmul.mubr.bf16.gmra.mrb[0].mxu0 %v531
      %v677 = vpop.f32.mrb[0].mxu0
      %v678 = vadd.f32 0.0, %v677
      %v679 = vpop.f32.mrb[0].mxu0
      %v680 = vpop.f32.mrb[0].mxu0
      %v681 = vadd.f32 0.0, %v680
      %v682 = vpop.f32.mrb[0].mxu0
      %683 = vmatprep.mubr.bf16.mxu0 0
      %684 = vmatmul.mubr.bf16.gmra.mrb[0].mxu0 %v534
      %v685 = vpop.f32.mrb[0].mxu0
      %v686 = vadd.f32 0.0, %v685
      %v687 = vpop.f32.mrb[0].mxu0
      %v688 = vpop.f32.mrb[0].mxu0
      %v689 = vadd.f32 0.0, %v688
      %v690 = vpop.f32.mrb[0].mxu0
      %691 = vmatprep.mubr.bf16.mxu0 0
      %692 = vmatmul.mubr.bf16.gmra.mrb[0].mxu0 %v537
      %v693 = vpop.f32.mrb[0].mxu0
      %v694 = vadd.f32 0.0, %v693
      %v695 = vpop.f32.mrb[0].mxu0
      %v696 = vpop.f32.mrb[0].mxu0
      %v697 = vadd.f32 0.0, %v696
      %v698 = vpop.f32.mrb[0].mxu0
      %699 = vdwg.mxu0
      %v700 = vadd.f32 %v338, %v574
      %v701 = vadd.f32 %v339, %v577
      %v702 = vadd.f32 %v340, %v582
      %v703 = vadd.f32 %v341, %v585
      %v704 = vadd.f32 %v342, %v590
      %v705 = vadd.f32 %v343, %v593
      %v706 = vadd.f32 %v344, %v598
      %v707 = vadd.f32 %v345, %v601
      %v708 = vadd.f32 %v346, %v606
      %v709 = vadd.f32 %v347, %v609
      %v710 = vadd.f32 %v348, %v614
      %v711 = vadd.f32 %v349, %v617
      %v712 = vadd.f32 %v350, %v622
      %v713 = vadd.f32 %v351, %v625
      %v714 = vadd.f32 %v352, %v630
      %v715 = vadd.f32 %v353, %v633
      %v716 = vadd.f32 %v354, %v638
      %v717 = vadd.f32 %v355, %v641
      %v718 = vadd.f32 %v356, %v646
      %v719 = vadd.f32 %v357, %v649
      %v720 = vadd.f32 %v358, %v654
      %v721 = vadd.f32 %v359, %v657
      %v722 = vadd.f32 %v360, %v662
      %v723 = vadd.f32 %v361, %v665
      %v724 = vadd.f32 %v362, %v670
      %v725 = vadd.f32 %v363, %v673
      %v726 = vadd.f32 %v364, %v678
      %v727 = vadd.f32 %v365, %v681
      %v728 = vadd.f32 %v366, %v686
      %v729 = vadd.f32 %v367, %v689
      %v730 = vadd.f32 %v368, %v694
      %v731 = vadd.f32 %v369, %v697
      %vm732 = vcmask 64512
      %733 = vst.msk [vmem:[#allocation2] sm:$0xff] %vm732, %v700
      %734 = vst.msk [vmem:[#allocation2 + $0x8] sm:$0xff] %vm732, %v701
      %735 = vst.msk [vmem:[#allocation2 + $0x10] sm:$0xff] %vm732, %v702
      %736 = vst.msk [vmem:[#allocation2 + $0x18] sm:$0xff] %vm732, %v703
      %737 = vst.msk [vmem:[#allocation2 + $0x20] sm:$0xff] %vm732, %v704
      %738 = vst.msk [vmem:[#allocation2 + $0x28] sm:$0xff] %vm732, %v705
      %739 = vst.msk [vmem:[#allocation2 + $0x30] sm:$0xff] %vm732, %v706
      %740 = vst.msk [vmem:[#allocation2 + $0x38] sm:$0xff] %vm732, %v707
      %741 = vst.msk [vmem:[#allocation2 + $0x40] sm:$0xff] %vm732, %v708
      %742 = vst.msk [vmem:[#allocation2 + $0x48] sm:$0xff] %vm732, %v709
      %743 = vst.msk [vmem:[#allocation2 + $0x50] sm:$0xff] %vm732, %v710
      %744 = vst.msk [vmem:[#allocation2 + $0x58] sm:$0xff] %vm732, %v711
      %745 = vst.msk [vmem:[#allocation2 + $0x60] sm:$0xff] %vm732, %v712
      %746 = vst.msk [vmem:[#allocation2 + $0x68] sm:$0xff] %vm732, %v713
      %747 = vst.msk [vmem:[#allocation2 + $0x70] sm:$0xff] %vm732, %v714
      %748 = vst.msk [vmem:[#allocation2 + $0x78] sm:$0xff] %vm732, %v715
      %749 = vst.msk [vmem:[#allocation2 + $0x80] sm:$0xff] %vm732, %v716
      %750 = vst.msk [vmem:[#allocation2 + $0x88] sm:$0xff] %vm732, %v717
      %751 = vst.msk [vmem:[#allocation2 + $0x90] sm:$0xff] %vm732, %v718
      %752 = vst.msk [vmem:[#allocation2 + $0x98] sm:$0xff] %vm732, %v719
      %753 = vst.msk [vmem:[#allocation2 + $0xa0] sm:$0xff] %vm732, %v720
      %754 = vst.msk [vmem:[#allocation2 + $0xa8] sm:$0xff] %vm732, %v721
      %755 = vst.msk [vmem:[#allocation2 + $0xb0] sm:$0xff] %vm732, %v722
      %756 = vst.msk [vmem:[#allocation2 + $0xb8] sm:$0xff] %vm732, %v723
      %757 = vst.msk [vmem:[#allocation2 + $0xc0] sm:$0xff] %vm732, %v724
      %758 = vst.msk [vmem:[#allocation2 + $0xc8] sm:$0xff] %vm732, %v725
      %759 = vst.msk [vmem:[#allocation2 + $0xd0] sm:$0xff] %vm732, %v726
      %760 = vst.msk [vmem:[#allocation2 + $0xd8] sm:$0xff] %vm732, %v727
      %761 = vst.msk [vmem:[#allocation2 + $0xe0] sm:$0xff] %vm732, %v728
      %762 = vst.msk [vmem:[#allocation2 + $0xe8] sm:$0xff] %vm732, %v729
      %763 = vst.msk [vmem:[#allocation2 + $0xf0] sm:$0xff] %vm732, %v730
      %764 = vst.msk [vmem:[#allocation2 + $0xf8] sm:$0xff] %vm732, %v731
      // Predicated region
      $region41: #{_lambda_.7} parent=35 // pred_check
        %p765 = pneg %p301
      $region42: #{_lambda_.7} parent=35 // pred_check_branch
        %767 = sbr.rel (%p765) target = $region44
      $region43: #{_lambda_.7} parent=35 // pred_region
        %v768 = vld [vmem:[#allocation2] sm:$0xff]
        %v769 = vld [vmem:[#allocation2 + $0x8] sm:$0xff]
        %v770 = vld [vmem:[#allocation2 + $0x10] sm:$0xff]
        %v771 = vld [vmem:[#allocation2 + $0x18] sm:$0xff]
        %v772 = vld [vmem:[#allocation2 + $0x20] sm:$0xff]
        %v773 = vld [vmem:[#allocation2 + $0x28] sm:$0xff]
        %v774 = vld [vmem:[#allocation2 + $0x30] sm:$0xff]
        %v775 = vld [vmem:[#allocation2 + $0x38] sm:$0xff]
        %v776 = vld [vmem:[#allocation2 + $0x40] sm:$0xff]
        %v777 = vld [vmem:[#allocation2 + $0x48] sm:$0xff]
        %v778 = vld [vmem:[#allocation2 + $0x50] sm:$0xff]
        %v779 = vld [vmem:[#allocation2 + $0x58] sm:$0xff]
        %v780 = vld [vmem:[#allocation2 + $0x60] sm:$0xff]
        %v781 = vld [vmem:[#allocation2 + $0x68] sm:$0xff]
        %v782 = vld [vmem:[#allocation2 + $0x70] sm:$0xff]
        %v783 = vld [vmem:[#allocation2 + $0x78] sm:$0xff]
        %v784 = vld [vmem:[#allocation2 + $0x80] sm:$0xff]
        %v785 = vld [vmem:[#allocation2 + $0x88] sm:$0xff]
        %v786 = vld [vmem:[#allocation2 + $0x90] sm:$0xff]
        %v787 = vld [vmem:[#allocation2 + $0x98] sm:$0xff]
        %v788 = vld [vmem:[#allocation2 + $0xa0] sm:$0xff]
        %v789 = vld [vmem:[#allocation2 + $0xa8] sm:$0xff]
        %v790 = vld [vmem:[#allocation2 + $0xb0] sm:$0xff]
        %v791 = vld [vmem:[#allocation2 + $0xb8] sm:$0xff]
        %v792 = vld [vmem:[#allocation2 + $0xc0] sm:$0xff]
        %v793 = vld [vmem:[#allocation2 + $0xc8] sm:$0xff]
        %v794 = vld [vmem:[#allocation2 + $0xd0] sm:$0xff]
        %v795 = vld [vmem:[#allocation2 + $0xd8] sm:$0xff]
        %v796 = vld [vmem:[#allocation2 + $0xe0] sm:$0xff]
        %v797 = vld [vmem:[#allocation2 + $0xe8] sm:$0xff]
        %v798 = vld [vmem:[#allocation2 + $0xf0] sm:$0xff]
        %v799 = vld [vmem:[#allocation2 + $0xf8] sm:$0xff]
        %v800 = vld [vmem:[%s287] sm:$0x1]
        %v802 = vlaneseq
        %v803 = vshrl.u32 %v802, 7
        %v804 = vsub.s32 0, %v803
        %v805 = vrot.slane %v800, %v804
        %v807 = vmul.f32 %v768, %v805
        %v808 = vmul.f32 %v769, %v805
        %v809 = vmul.f32 %v770, %v805
        %v810 = vmul.f32 %v771, %v805
        %v811 = vmul.f32 %v772, %v805
        %v812 = vmul.f32 %v773, %v805
        %v813 = vmul.f32 %v774, %v805
        %v814 = vmul.f32 %v775, %v805
        %v815 = vmul.f32 %v776, %v805
        %v816 = vmul.f32 %v777, %v805
        %v817 = vmul.f32 %v778, %v805
        %v818 = vmul.f32 %v779, %v805
        %v819 = vmul.f32 %v780, %v805
        %v820 = vmul.f32 %v781, %v805
        %v821 = vmul.f32 %v782, %v805
        %v822 = vmul.f32 %v783, %v805
        %v823 = vmul.f32 %v784, %v805
        %v824 = vmul.f32 %v785, %v805
        %v825 = vmul.f32 %v786, %v805
        %v826 = vmul.f32 %v787, %v805
        %v827 = vmul.f32 %v788, %v805
        %v828 = vmul.f32 %v789, %v805
        %v829 = vmul.f32 %v790, %v805
        %v830 = vmul.f32 %v791, %v805
        %v831 = vmul.f32 %v792, %v805
        %v832 = vmul.f32 %v793, %v805
        %v833 = vmul.f32 %v794, %v805
        %v834 = vmul.f32 %v795, %v805
        %v835 = vmul.f32 %v796, %v805
        %v836 = vmul.f32 %v797, %v805
        %v837 = vmul.f32 %v798, %v805
        %v838 = vmul.f32 %v799, %v805
        %v839 = vld [vmem:[%s290] sm:$0x1]
        %v841 = vlaneseq
        %v842 = vshrl.u32 %v841, 7
        %v843 = vsub.s32 0, %v842
        %v844 = vrot.slane %v839, %v843
        %v846 = vadd.f32 %v807, %v844
        %v847 = vadd.f32 %v808, %v844
        %v848 = vadd.f32 %v809, %v844
        %v849 = vadd.f32 %v810, %v844
        %v850 = vadd.f32 %v811, %v844
        %v851 = vadd.f32 %v812, %v844
        %v852 = vadd.f32 %v813, %v844
        %v853 = vadd.f32 %v814, %v844
        %v854 = vadd.f32 %v815, %v844
        %v855 = vadd.f32 %v816, %v844
        %v856 = vadd.f32 %v817, %v844
        %v857 = vadd.f32 %v818, %v844
        %v858 = vadd.f32 %v819, %v844
        %v859 = vadd.f32 %v820, %v844
        %v860 = vadd.f32 %v821, %v844
        %v861 = vadd.f32 %v822, %v844
        %v862 = vadd.f32 %v823, %v844
        %v863 = vadd.f32 %v824, %v844
        %v864 = vadd.f32 %v825, %v844
        %v865 = vadd.f32 %v826, %v844
        %v866 = vadd.f32 %v827, %v844
        %v867 = vadd.f32 %v828, %v844
        %v868 = vadd.f32 %v829, %v844
        %v869 = vadd.f32 %v830, %v844
        %v870 = vadd.f32 %v831, %v844
        %v871 = vadd.f32 %v832, %v844
        %v872 = vadd.f32 %v833, %v844
        %v873 = vadd.f32 %v834, %v844
        %v874 = vadd.f32 %v835, %v844
        %v875 = vadd.f32 %v836, %v844
        %v876 = vadd.f32 %v837, %v844
        %v877 = vadd.f32 %v838, %v844
        %v878 = vmax.f32 %v846, 0.0
        %v879 = vmax.f32 %v847, 0.0
        %v880 = vmax.f32 %v848, 0.0
        %v881 = vmax.f32 %v849, 0.0
        %v882 = vmax.f32 %v850, 0.0
        %v883 = vmax.f32 %v851, 0.0
        %v884 = vmax.f32 %v852, 0.0
        %v885 = vmax.f32 %v853, 0.0
        %v886 = vmax.f32 %v854, 0.0
        %v887 = vmax.f32 %v855, 0.0
        %v888 = vmax.f32 %v856, 0.0
        %v889 = vmax.f32 %v857, 0.0
        %v890 = vmax.f32 %v858, 0.0
        %v891 = vmax.f32 %v859, 0.0
        %v892 = vmax.f32 %v860, 0.0
        %v893 = vmax.f32 %v861, 0.0
        %v894 = vmax.f32 %v862, 0.0
        %v895 = vmax.f32 %v863, 0.0
        %v896 = vmax.f32 %v864, 0.0
        %v897 = vmax.f32 %v865, 0.0
        %v898 = vmax.f32 %v866, 0.0
        %v899 = vmax.f32 %v867, 0.0
        %v900 = vmax.f32 %v868, 0.0
        %v901 = vmax.f32 %v869, 0.0
        %v902 = vmax.f32 %v870, 0.0
        %v903 = vmax.f32 %v871, 0.0
        %v904 = vmax.f32 %v872, 0.0
        %v905 = vmax.f32 %v873, 0.0
        %v906 = vmax.f32 %v874, 0.0
        %v907 = vmax.f32 %v875, 0.0
        %v908 = vmax.f32 %v876, 0.0
        %v909 = vmax.f32 %v877, 0.0
        %v910 = vpack.c.bf16 %v879, %v878
        %v911 = vpack.c.bf16 %v881, %v880
        %v912 = vpack.c.bf16 %v883, %v882
        %v913 = vpack.c.bf16 %v885, %v884
        %v914 = vpack.c.bf16 %v887, %v886
        %v915 = vpack.c.bf16 %v889, %v888
        %v916 = vpack.c.bf16 %v891, %v890
        %v917 = vpack.c.bf16 %v893, %v892
        %v918 = vpack.c.bf16 %v895, %v894
        %v919 = vpack.c.bf16 %v897, %v896
        %v920 = vpack.c.bf16 %v899, %v898
        %v921 = vpack.c.bf16 %v901, %v900
        %v922 = vpack.c.bf16 %v903, %v902
        %v923 = vpack.c.bf16 %v905, %v904
        %v924 = vpack.c.bf16 %v907, %v906
        %v925 = vpack.c.bf16 %v909, %v908
        %v942 = vunpack.c.l.b16 %v910
        %v943 = vunpack.c.h.b16 %v910
        %v944 = vunpack.c.l.b16 %v911
        %v945 = vunpack.c.h.b16 %v911
        %v946 = vunpack.c.l.b16 %v912
        %v947 = vunpack.c.h.b16 %v912
        %v948 = vunpack.c.l.b16 %v913
        %v949 = vunpack.c.h.b16 %v913
        %v950 = vunpack.c.l.b16 %v914
        %v951 = vunpack.c.h.b16 %v914
        %v952 = vunpack.c.l.b16 %v915
        %v953 = vunpack.c.h.b16 %v915
        %v954 = vunpack.c.l.b16 %v916
        %v955 = vunpack.c.h.b16 %v916
        %v956 = vunpack.c.l.b16 %v917
        %v957 = vunpack.c.h.b16 %v917
        %v958 = vunpack.c.l.b16 %v918
        %v959 = vunpack.c.h.b16 %v918
        %v960 = vunpack.c.l.b16 %v919
        %v961 = vunpack.c.h.b16 %v919
        %v962 = vunpack.c.l.b16 %v920
        %v963 = vunpack.c.h.b16 %v920
        %v964 = vunpack.c.l.b16 %v921
        %v965 = vunpack.c.h.b16 %v921
        %v966 = vunpack.c.l.b16 %v922
        %v967 = vunpack.c.h.b16 %v922
        %v968 = vunpack.c.l.b16 %v923
        %v969 = vunpack.c.h.b16 %v923
        %v970 = vunpack.c.l.b16 %v924
        %v971 = vunpack.c.h.b16 %v924
        %v972 = vunpack.c.l.b16 %v925
        %v973 = vunpack.c.h.b16 %v925
        %v974 = vpack.c.b16 %v942, %v942
        %v975 = vpack.c.b16 %v943, %v943
        %v976 = vpack.c.b16 %v944, %v944
        %v977 = vpack.c.b16 %v945, %v945
        %v978 = vpack.c.b16 %v946, %v946
        %v979 = vpack.c.b16 %v947, %v947
        %v980 = vpack.c.b16 %v948, %v948
        %v981 = vpack.c.b16 %v949, %v949
        %v982 = vpack.c.b16 %v950, %v950
        %v983 = vpack.c.b16 %v951, %v951
        %v984 = vpack.c.b16 %v952, %v952
        %v985 = vpack.c.b16 %v953, %v953
        %v986 = vpack.c.b16 %v954, %v954
        %v987 = vpack.c.b16 %v955, %v955
        %v988 = vpack.c.b16 %v956, %v956
        %v989 = vpack.c.b16 %v957, %v957
        %v990 = vpack.c.b16 %v958, %v958
        %v991 = vpack.c.b16 %v959, %v959
        %v992 = vpack.c.b16 %v960, %v960
        %v993 = vpack.c.b16 %v961, %v961
        %v994 = vpack.c.b16 %v962, %v962
        %v995 = vpack.c.b16 %v963, %v963
        %v996 = vpack.c.b16 %v964, %v964
        %v997 = vpack.c.b16 %v965, %v965
        %v998 = vpack.c.b16 %v966, %v966
        %v999 = vpack.c.b16 %v967, %v967
        %v1000 = vpack.c.b16 %v968, %v968
        %v1001 = vpack.c.b16 %v969, %v969
        %v1002 = vpack.c.b16 %v970, %v970
        %v1003 = vpack.c.b16 %v971, %v971
        %v1004 = vpack.c.b16 %v972, %v972
        %v1005 = vpack.c.b16 %v973, %v973
        %vm1038 = vcmask 60416
        %1039 = vst.msk [vmem:[%s298] sm:$0xf] %vm1038, %v974
        %1040 = vst.msk [vmem:[%s298 + $0x4] sm:$0xf] %vm1038, %v975
        %1041 = vst.msk [vmem:[%s298 + $0x8] sm:$0xf] %vm1038, %v976
        %1042 = vst.msk [vmem:[%s298 + $0xc] sm:$0xf] %vm1038, %v977
        %1043 = vst.msk [vmem:[%s298 + $0x10] sm:$0xf] %vm1038, %v978
        %1044 = vst.msk [vmem:[%s298 + $0x14] sm:$0xf] %vm1038, %v979
        %1045 = vst.msk [vmem:[%s298 + $0x18] sm:$0xf] %vm1038, %v980
        %1046 = vst.msk [vmem:[%s298 + $0x1c] sm:$0xf] %vm1038, %v981
        %1047 = vst.msk [vmem:[%s298 + $0x20] sm:$0xf] %vm1038, %v982
        %1048 = vst.msk [vmem:[%s298 + $0x24] sm:$0xf] %vm1038, %v983
        %1049 = vst.msk [vmem:[%s298 + $0x28] sm:$0xf] %vm1038, %v984
        %1050 = vst.msk [vmem:[%s298 + $0x2c] sm:$0xf] %vm1038, %v985
        %1051 = vst.msk [vmem:[%s298 + $0x30] sm:$0xf] %vm1038, %v986
        %1052 = vst.msk [vmem:[%s298 + $0x34] sm:$0xf] %vm1038, %v987
        %1053 = vst.msk [vmem:[%s298 + $0x38] sm:$0xf] %vm1038, %v988
        %1054 = vst.msk [vmem:[%s298 + $0x3c] sm:$0xf] %vm1038, %v989
        %1055 = vst.msk [vmem:[%s298 + $0x40] sm:$0xf] %vm1038, %v990
        %1056 = vst.msk [vmem:[%s298 + $0x44] sm:$0xf] %vm1038, %v991
        %1057 = vst.msk [vmem:[%s298 + $0x48] sm:$0xf] %vm1038, %v992
        %1058 = vst.msk [vmem:[%s298 + $0x4c] sm:$0xf] %vm1038, %v993
        %1059 = vst.msk [vmem:[%s298 + $0x50] sm:$0xf] %vm1038, %v994
        %1060 = vst.msk [vmem:[%s298 + $0x54] sm:$0xf] %vm1038, %v995
        %1061 = vst.msk [vmem:[%s298 + $0x58] sm:$0xf] %vm1038, %v996
        %1062 = vst.msk [vmem:[%s298 + $0x5c] sm:$0xf] %vm1038, %v997
        %1063 = vst.msk [vmem:[%s298 + $0x60] sm:$0xf] %vm1038, %v998
        %1064 = vst.msk [vmem:[%s298 + $0x64] sm:$0xf] %vm1038, %v999
        %1065 = vst.msk [vmem:[%s298 + $0x68] sm:$0xf] %vm1038, %v1000
        %1066 = vst.msk [vmem:[%s298 + $0x6c] sm:$0xf] %vm1038, %v1001
        %1067 = vst.msk [vmem:[%s298 + $0x70] sm:$0xf] %vm1038, %v1002
        %1068 = vst.msk [vmem:[%s298 + $0x74] sm:$0xf] %vm1038, %v1003
        %1069 = vst.msk [vmem:[%s298 + $0x78] sm:$0xf] %vm1038, %v1004
        %1070 = vst.msk [vmem:[%s298 + $0x7c] sm:$0xf] %vm1038, %v1005
      $region44: #{_lambda_.7} parent=35 // pred_fallthru
        _
      %s1071 = smul.u32 32, %s20
      %p1072 = scmp.lt.s32.totalorder %s1071, 63
      %s1073 = scalar_select %p1072, %s1071, 63
      %p1074 = scmp.lt.s32.totalorder %s21, 0
      %s1075 = scalar_select %p1074, %s21, 0
      %s1076 = sadd.s32 %s1075, %s1073
      %s1077 = smul.addr %s1076, 4
      %s1078 = scalar_lea.vmem %s4, %s1077
      // Predicated region
      $region45: #{_lambda_.7} parent=35 // pred_check
        %p1079 = pneg %p162
      $region46: #{_lambda_.7} parent=35 // pred_check_branch
        %1081 = sbr.rel (%p1079) target = $region48
      $region47: #{_lambda_.7} parent=35 // pred_region
        %s1082 = smul.u32 32, %s20
      $region48: #{_lambda_.7} parent=35 // pred_fallthru
        _
    $region36: #{_lambda_.7} parent=5 // pred_fallthru
      _
    %p1083 = scmp.le.s32.totalorder 2, %s10
    // Predicated region
    $region49: #{_lambda_.7} parent=5 // pred_check
      %p1084 = pneg %p1083
    $region50: #{_lambda_.7} parent=5 // pred_check_branch
      %1086 = sbr.rel (%p1084) target = $region52
    $region51: #{_lambda_.7} parent=5 // pred_region
      %s1087 = ssub.s32 %s10, 2
      // Predicated region
      $region53: #{_lambda_.7} parent=51 // pred_check
        %p1088 = pneg %p168
      $region54: #{_lambda_.7} parent=51 // pred_check_branch
        %1090 = sbr.rel (%p1088) target = $region56
      $region55: #{_lambda_.7} parent=51 // pred_region
        %s1091 = smul.u32 32, %s23
        %p1092 = scmp.lt.s32.totalorder %s1091, 63
        %s1093 = scalar_select %p1092, %s1091, 63
        %p1094 = scmp.lt.s32.totalorder %s24, 0
        %s1095 = scalar_select %p1094, %s24, 0
        %s1096 = sadd.s32 %s1095, %s1093
        %s1097 = smul.addr %s1096, 4
        %s1098 = scalar_lea.vmem %s4, %s1097
      $region56: #{_lambda_.7} parent=51 // pred_fallthru
        _
    $region52: #{_lambda_.7} parent=5 // pred_fallthru
      _
  $region6: #{_lambda_.7} parent=0 // loop_footer
    %s14 = sadd.s32 1, %s10
  $region7: #{_lambda_.7} parent=0 // loop_footer_branch
    %9 = sbr.rel target = $region3
  $region8: #{_lambda_.7} parent=0 // loop_exit
    _

// kernel: _lambda_.9
$region0: #{_lambda_.9}
  #allocation0 [shape = 'u32[]', space=smem, size = 0x4, offset = 0x4, fixed_abs, tag = 'smem constant byte address 0x4 - core index']
  #allocation1 [shape = 'u32[144,128]{1,0:T(1,128)}', space=vmem, size = 0x12000, scoped, tag = 'internal scratch']
  #allocation2 [shape = 'f32[128,32]{1,0:T(8,128)}', space=vmem, size = 0x10000, scoped, tag = 'scratch operand']
  %s0 = inlined_call_operand.vmem [shape: bf16[128,16], index: 0, kind: input, shape index: {}]
  %s1 = inlined_call_operand.vmem [shape: bf16[16,32], index: 1, kind: input, shape index: {}]
  %s2 = inlined_call_operand.vmem [shape: f32[1,32], index: 2, kind: input, shape index: {}]
  %s3 = inlined_call_operand.vmem [shape: f32[1,32], index: 3, kind: input, shape index: {}]
  %s4 = inlined_call_operand.vmem [shape: bf16[128,32], index: 4, kind: output, shape index: {}]
  %s5 = sld [smem:[#allocation0]]
  $region34: #{_lambda_.9} parent=0
    _
  %s7 = ssub.s32 1, %s5
  %s8 = scalar_select 0, %s7, %s5
  // Predicated region
  $region2: #{_lambda_.9} parent=0 // pred_check
    _
  $region3: #{_lambda_.9} parent=0 // pred_check_branch
    %10 = sbr.rel (0) target = $region5
  $region4: #{_lambda_.9} parent=0 // pred_region
    _
  $region5: #{_lambda_.9} parent=0 // pred_fallthru
    _
  // Predicated region
  $region6: #{_lambda_.9} parent=0 // pred_check
    _
  $region7: #{_lambda_.9} parent=0 // pred_check_branch
    %12 = sbr.rel (0) target = $region9
  $region8: #{_lambda_.9} parent=0 // pred_region
    _
  $region9: #{_lambda_.9} parent=0 // pred_fallthru
    _
  // Predicated region
  $region10: #{_lambda_.9} parent=0 // pred_check
    _
  $region11: #{_lambda_.9} parent=0 // pred_check_branch
    %14 = sbr.rel (0) target = $region13
  $region12: #{_lambda_.9} parent=0 // pred_region
    _
  $region13: #{_lambda_.9} parent=0 // pred_fallthru
    _
  // Predicated region
  $region14: #{_lambda_.9} parent=0 // pred_check
    _
  $region15: #{_lambda_.9} parent=0 // pred_check_branch
    %16 = sbr.rel (0) target = $region17
  $region16: #{_lambda_.9} parent=0 // pred_region
    _
  $region17: #{_lambda_.9} parent=0 // pred_fallthru
    _
  %p18 = scmp.eq.s32.totalorder 0, 0
  // Predicated region
  $region18: #{_lambda_.9} parent=0 // pred_check
    %p19 = pneg %p18
  $region19: #{_lambda_.9} parent=0 // pred_check_branch
    %21 = sbr.rel (%p19) target = $region21
  $region20: #{_lambda_.9} parent=0 // pred_region
    %vm22 = vcmask 261120
    %23 = vst.msk [vmem:[#allocation2] sm:$0xff] %vm22, 0.0
    %24 = vst.msk [vmem:[#allocation2 + $0x8] sm:$0xff] %vm22, 0.0
    %25 = vst.msk [vmem:[#allocation2 + $0x10] sm:$0xff] %vm22, 0.0
    %26 = vst.msk [vmem:[#allocation2 + $0x18] sm:$0xff] %vm22, 0.0
    %27 = vst.msk [vmem:[#allocation2 + $0x20] sm:$0xff] %vm22, 0.0
    %28 = vst.msk [vmem:[#allocation2 + $0x28] sm:$0xff] %vm22, 0.0
    %29 = vst.msk [vmem:[#allocation2 + $0x30] sm:$0xff] %vm22, 0.0
    %30 = vst.msk [vmem:[#allocation2 + $0x38] sm:$0xff] %vm22, 0.0
    %31 = vst.msk [vmem:[#allocation2 + $0x40] sm:$0xff] %vm22, 0.0
    %32 = vst.msk [vmem:[#allocation2 + $0x48] sm:$0xff] %vm22, 0.0
    %33 = vst.msk [vmem:[#allocation2 + $0x50] sm:$0xff] %vm22, 0.0
    %34 = vst.msk [vmem:[#allocation2 + $0x58] sm:$0xff] %vm22, 0.0
    %35 = vst.msk [vmem:[#allocation2 + $0x60] sm:$0xff] %vm22, 0.0
    %36 = vst.msk [vmem:[#allocation2 + $0x68] sm:$0xff] %vm22, 0.0
    %37 = vst.msk [vmem:[#allocation2 + $0x70] sm:$0xff] %vm22, 0.0
    %38 = vst.msk [vmem:[#allocation2 + $0x78] sm:$0xff] %vm22, 0.0
  $region21: #{_lambda_.9} parent=0 // pred_fallthru
    _
  %v39 = vld [vmem:[#allocation2] sm:$0xff]
  %v40 = vld [vmem:[#allocation2 + $0x8] sm:$0xff]
  %v41 = vld [vmem:[#allocation2 + $0x10] sm:$0xff]
  %v42 = vld [vmem:[#allocation2 + $0x18] sm:$0xff]
  %v43 = vld [vmem:[#allocation2 + $0x20] sm:$0xff]
  %v44 = vld [vmem:[#allocation2 + $0x28] sm:$0xff]
  %v45 = vld [vmem:[#allocation2 + $0x30] sm:$0xff]
  %v46 = vld [vmem:[#allocation2 + $0x38] sm:$0xff]
  %v47 = vld [vmem:[#allocation2 + $0x40] sm:$0xff]
  %v48 = vld [vmem:[#allocation2 + $0x48] sm:$0xff]
  %v49 = vld [vmem:[#allocation2 + $0x50] sm:$0xff]
  %v50 = vld [vmem:[#allocation2 + $0x58] sm:$0xff]
  %v51 = vld [vmem:[#allocation2 + $0x60] sm:$0xff]
  %v52 = vld [vmem:[#allocation2 + $0x68] sm:$0xff]
  %v53 = vld [vmem:[#allocation2 + $0x70] sm:$0xff]
  %v54 = vld [vmem:[#allocation2 + $0x78] sm:$0xff]
  %v55 = vld [vmem:[%s0] sm:$0xf]
  %v56 = vld [vmem:[%s0 + $0x4] sm:$0xf]
  %v57 = vld [vmem:[%s0 + $0x8] sm:$0xf]
  %v58 = vld [vmem:[%s0 + $0xc] sm:$0xf]
  %v59 = vld [vmem:[%s0 + $0x10] sm:$0xf]
  %v60 = vld [vmem:[%s0 + $0x14] sm:$0xf]
  %v61 = vld [vmem:[%s0 + $0x18] sm:$0xf]
  %v62 = vld [vmem:[%s0 + $0x1c] sm:$0xf]
  %v63 = vld [vmem:[%s0 + $0x20] sm:$0xf]
  %v64 = vld [vmem:[%s0 + $0x24] sm:$0xf]
  %v65 = vld [vmem:[%s0 + $0x28] sm:$0xf]
  %v66 = vld [vmem:[%s0 + $0x2c] sm:$0xf]
  %v67 = vld [vmem:[%s0 + $0x30] sm:$0xf]
  %v68 = vld [vmem:[%s0 + $0x34] sm:$0xf]
  %v69 = vld [vmem:[%s0 + $0x38] sm:$0xf]
  %v70 = vld [vmem:[%s0 + $0x3c] sm:$0xf]
  %v71 = vld [vmem:[%s1] sm:$0xf]
  %v72 = vld [vmem:[%s1 + $0x4] sm:$0xf]
  %v89 = vunpack.c.l.b16 %v55
  %v90 = vunpack.c.l.b16 %v56
  %v91 = vunpack.c.l.b16 %v57
  %v92 = vunpack.c.l.b16 %v58
  %v93 = vunpack.c.l.b16 %v59
  %v94 = vunpack.c.l.b16 %v60
  %v95 = vunpack.c.l.b16 %v61
  %v96 = vunpack.c.l.b16 %v62
  %v97 = vunpack.c.l.b16 %v63
  %v98 = vunpack.c.l.b16 %v64
  %v99 = vunpack.c.l.b16 %v65
  %v100 = vunpack.c.l.b16 %v66
  %v101 = vunpack.c.l.b16 %v67
  %v102 = vunpack.c.l.b16 %v68
  %v103 = vunpack.c.l.b16 %v69
  %v104 = vunpack.c.l.b16 %v70
  %v105 = vpack.c.b16 %v90, %v89
  %v106 = vpack.c.b16 %v92, %v91
  %v107 = vpack.c.b16 %v94, %v93
  %v108 = vpack.c.b16 %v96, %v95
  %v109 = vpack.c.b16 %v98, %v97
  %v110 = vpack.c.b16 %v100, %v99
  %v111 = vpack.c.b16 %v102, %v101
  %v112 = vpack.c.b16 %v104, %v103
  %v115 = vunpack.c.l.b16 %v71
  %v116 = vunpack.c.l.b16 %v72
  %v117 = vpack.c.b16 %v116, %v115
  %vm119 = vcmask 130048
  %v121 = vsel %vm119, %v105, 0
  %v124 = vsel %vm119, %v106, 0
  %v127 = vsel %vm119, %v107, 0
  %v130 = vsel %vm119, %v108, 0
  %v133 = vsel %vm119, %v109, 0
  %v136 = vsel %vm119, %v110, 0
  %v139 = vsel %vm119, %v111, 0
  %v142 = vsel %vm119, %v112, 0
  %144 = vmatprep.subr.bf16.mxu0 0
  %145 = vmatpush1.bf16.msra.mxu0 %v117
  %146 = vmatprep.subr.bf16.mxu0 0
  %147 = vmatpush1.bf16.msra.mxu0 0
  %148 = vmatprep.subr.bf16.mxu0 0
  %149 = vmatpush1.bf16.msra.mxu0 0
  %150 = vmatprep.subr.bf16.mxu0 0
  %151 = vmatpush1.bf16.msra.mxu0 0
  %152 = vmatprep.subr.bf16.mxu0 0
  %153 = vmatpush1.bf16.msra.mxu0 0
  %154 = vmatprep.subr.bf16.mxu0 0
  %155 = vmatpush1.bf16.msra.mxu0 0
  %156 = vmatprep.subr.bf16.mxu0 0
  %157 = vmatpush1.bf16.msra.mxu0 0
  %158 = vmatprep.subr.bf16.mxu0 0
  %159 = vmatpush1.bf16.msra.mxu0 0
  %160 = vmatprep.subr.bf16.mxu0 0
  %161 = vmatpush1.bf16.msra.mxu0 0
  %162 = vmatprep.subr.bf16.mxu0 0
  %163 = vmatpush1.bf16.msra.mxu0 0
  %164 = vmatprep.subr.bf16.mxu0 0
  %165 = vmatpush1.bf16.msra.mxu0 0
  %166 = vmatprep.subr.bf16.mxu0 0
  %167 = vmatpush1.bf16.msra.mxu0 0
  %168 = vmatprep.subr.bf16.mxu0 0
  %169 = vmatpush1.bf16.msra.mxu0 0
  %170 = vmatprep.subr.bf16.mxu0 0
  %171 = vmatpush1.bf16.msra.mxu0 0
  %172 = vmatprep.subr.bf16.mxu0 0
  %173 = vmatpush1.bf16.msra.mxu0 0
  %174 = vmatprep.subr.bf16.mxu0 0
  %175 = vmatpush1.bf16.msra.mxu0 0
  %176 = vmatprep.mubr.bf16.mxu0 0
  %177 = vmatmul.mubr.bf16.gmra.mrb[0].mxu0 %v121
  %v178 = vpop.f32.mrb[0].mxu0
  %v179 = vadd.f32 0.0, %v178
  %v180 = vpop.f32.mrb[0].mxu0
  %v181 = vpop.f32.mrb[0].mxu0
  %v182 = vadd.f32 0.0, %v181
  %v183 = vpop.f32.mrb[0].mxu0
  %184 = vmatprep.mubr.bf16.mxu0 0
  %185 = vmatmul.mubr.bf16.gmra.mrb[0].mxu0 %v124
  %v186 = vpop.f32.mrb[0].mxu0
  %v187 = vadd.f32 0.0, %v186
  %v188 = vpop.f32.mrb[0].mxu0
  %v189 = vpop.f32.mrb[0].mxu0
  %v190 = vadd.f32 0.0, %v189
  %v191 = vpop.f32.mrb[0].mxu0
  %192 = vmatprep.mubr.bf16.mxu0 0
  %193 = vmatmul.mubr.bf16.gmra.mrb[0].mxu0 %v127
  %v194 = vpop.f32.mrb[0].mxu0
  %v195 = vadd.f32 0.0, %v194
  %v196 = vpop.f32.mrb[0].mxu0
  %v197 = vpop.f32.mrb[0].mxu0
  %v198 = vadd.f32 0.0, %v197
  %v199 = vpop.f32.mrb[0].mxu0
  %200 = vmatprep.mubr.bf16.mxu0 0
  %201 = vmatmul.mubr.bf16.gmra.mrb[0].mxu0 %v130
  %v202 = vpop.f32.mrb[0].mxu0
  %v203 = vadd.f32 0.0, %v202
  %v204 = vpop.f32.mrb[0].mxu0
  %v205 = vpop.f32.mrb[0].mxu0
  %v206 = vadd.f32 0.0, %v205
  %v207 = vpop.f32.mrb[0].mxu0
  %208 = vmatprep.mubr.bf16.mxu0 0
  %209 = vmatmul.mubr.bf16.gmra.mrb[0].mxu0 %v133
  %v210 = vpop.f32.mrb[0].mxu0
  %v211 = vadd.f32 0.0, %v210
  %v212 = vpop.f32.mrb[0].mxu0
  %v213 = vpop.f32.mrb[0].mxu0
  %v214 = vadd.f32 0.0, %v213
  %v215 = vpop.f32.mrb[0].mxu0
  %216 = vmatprep.mubr.bf16.mxu0 0
  %217 = vmatmul.mubr.bf16.gmra.mrb[0].mxu0 %v136
  %v218 = vpop.f32.mrb[0].mxu0
  %v219 = vadd.f32 0.0, %v218
  %v220 = vpop.f32.mrb[0].mxu0
  %v221 = vpop.f32.mrb[0].mxu0
  %v222 = vadd.f32 0.0, %v221
  %v223 = vpop.f32.mrb[0].mxu0
  %224 = vmatprep.mubr.bf16.mxu0 0
  %225 = vmatmul.mubr.bf16.gmra.mrb[0].mxu0 %v139
  %v226 = vpop.f32.mrb[0].mxu0
  %v227 = vadd.f32 0.0, %v226
  %v228 = vpop.f32.mrb[0].mxu0
  %v229 = vpop.f32.mrb[0].mxu0
  %v230 = vadd.f32 0.0, %v229
  %v231 = vpop.f32.mrb[0].mxu0
  %232 = vmatprep.mubr.bf16.mxu0 0
  %233 = vmatmul.mubr.bf16.gmra.mrb[0].mxu0 %v142
  %v234 = vpop.f32.mrb[0].mxu0
  %v235 = vadd.f32 0.0, %v234
  %v236 = vpop.f32.mrb[0].mxu0
  %v237 = vpop.f32.mrb[0].mxu0
  %v238 = vadd.f32 0.0, %v237
  %v239 = vpop.f32.mrb[0].mxu0
  %240 = vdwg.mxu0
  %v241 = vadd.f32 %v39, %v179
  %v242 = vadd.f32 %v40, %v182
  %v243 = vadd.f32 %v41, %v187
  %v244 = vadd.f32 %v42, %v190
  %v245 = vadd.f32 %v43, %v195
  %v246 = vadd.f32 %v44, %v198
  %v247 = vadd.f32 %v45, %v203
  %v248 = vadd.f32 %v46, %v206
  %v249 = vadd.f32 %v47, %v211
  %v250 = vadd.f32 %v48, %v214
  %v251 = vadd.f32 %v49, %v219
  %v252 = vadd.f32 %v50, %v222
  %v253 = vadd.f32 %v51, %v227
  %v254 = vadd.f32 %v52, %v230
  %v255 = vadd.f32 %v53, %v235
  %v256 = vadd.f32 %v54, %v238
  %vm257 = vcmask 261120
  %258 = vst.msk [vmem:[#allocation2] sm:$0xff] %vm257, %v241
  %259 = vst.msk [vmem:[#allocation2 + $0x8] sm:$0xff] %vm257, %v242
  %260 = vst.msk [vmem:[#allocation2 + $0x10] sm:$0xff] %vm257, %v243
  %261 = vst.msk [vmem:[#allocation2 + $0x18] sm:$0xff] %vm257, %v244
  %262 = vst.msk [vmem:[#allocation2 + $0x20] sm:$0xff] %vm257, %v245
  %263 = vst.msk [vmem:[#allocation2 + $0x28] sm:$0xff] %vm257, %v246
  %264 = vst.msk [vmem:[#allocation2 + $0x30] sm:$0xff] %vm257, %v247
  %265 = vst.msk [vmem:[#allocation2 + $0x38] sm:$0xff] %vm257, %v248
  %266 = vst.msk [vmem:[#allocation2 + $0x40] sm:$0xff] %vm257, %v249
  %267 = vst.msk [vmem:[#allocation2 + $0x48] sm:$0xff] %vm257, %v250
  %268 = vst.msk [vmem:[#allocation2 + $0x50] sm:$0xff] %vm257, %v251
  %269 = vst.msk [vmem:[#allocation2 + $0x58] sm:$0xff] %vm257, %v252
  %270 = vst.msk [vmem:[#allocation2 + $0x60] sm:$0xff] %vm257, %v253
  %271 = vst.msk [vmem:[#allocation2 + $0x68] sm:$0xff] %vm257, %v254
  %272 = vst.msk [vmem:[#allocation2 + $0x70] sm:$0xff] %vm257, %v255
  %273 = vst.msk [vmem:[#allocation2 + $0x78] sm:$0xff] %vm257, %v256
  // Predicated region
  $region22: #{_lambda_.9} parent=0 // pred_check
    %p274 = pneg %p18
  $region23: #{_lambda_.9} parent=0 // pred_check_branch
    %276 = sbr.rel (%p274) target = $region25
  $region24: #{_lambda_.9} parent=0 // pred_region
    %v277 = vld [vmem:[#allocation2] sm:$0xff]
    %v278 = vld [vmem:[#allocation2 + $0x8] sm:$0xff]
    %v279 = vld [vmem:[#allocation2 + $0x10] sm:$0xff]
    %v280 = vld [vmem:[#allocation2 + $0x18] sm:$0xff]
    %v281 = vld [vmem:[#allocation2 + $0x20] sm:$0xff]
    %v282 = vld [vmem:[#allocation2 + $0x28] sm:$0xff]
    %v283 = vld [vmem:[#allocation2 + $0x30] sm:$0xff]
    %v284 = vld [vmem:[#allocation2 + $0x38] sm:$0xff]
    %v285 = vld [vmem:[#allocation2 + $0x40] sm:$0xff]
    %v286 = vld [vmem:[#allocation2 + $0x48] sm:$0xff]
    %v287 = vld [vmem:[#allocation2 + $0x50] sm:$0xff]
    %v288 = vld [vmem:[#allocation2 + $0x58] sm:$0xff]
    %v289 = vld [vmem:[#allocation2 + $0x60] sm:$0xff]
    %v290 = vld [vmem:[#allocation2 + $0x68] sm:$0xff]
    %v291 = vld [vmem:[#allocation2 + $0x70] sm:$0xff]
    %v292 = vld [vmem:[#allocation2 + $0x78] sm:$0xff]
    %v293 = vld [vmem:[%s2] sm:$0x1]
    %v295 = vlaneseq
    %v296 = vshrl.u32 %v295, 7
    %v297 = vsub.s32 0, %v296
    %v298 = vrot.slane %v293, %v297
    %v300 = vmul.f32 %v277, %v298
    %v301 = vmul.f32 %v278, %v298
    %v302 = vmul.f32 %v279, %v298
    %v303 = vmul.f32 %v280, %v298
    %v304 = vmul.f32 %v281, %v298
    %v305 = vmul.f32 %v282, %v298
    %v306 = vmul.f32 %v283, %v298
    %v307 = vmul.f32 %v284, %v298
    %v308 = vmul.f32 %v285, %v298
    %v309 = vmul.f32 %v286, %v298
    %v310 = vmul.f32 %v287, %v298
    %v311 = vmul.f32 %v288, %v298
    %v312 = vmul.f32 %v289, %v298
    %v313 = vmul.f32 %v290, %v298
    %v314 = vmul.f32 %v291, %v298
    %v315 = vmul.f32 %v292, %v298
    %v316 = vld [vmem:[%s3] sm:$0x1]
    %v318 = vlaneseq
    %v319 = vshrl.u32 %v318, 7
    %v320 = vsub.s32 0, %v319
    %v321 = vrot.slane %v316, %v320
    %v323 = vadd.f32 %v300, %v321
    %v324 = vadd.f32 %v301, %v321
    %v325 = vadd.f32 %v302, %v321
    %v326 = vadd.f32 %v303, %v321
    %v327 = vadd.f32 %v304, %v321
    %v328 = vadd.f32 %v305, %v321
    %v329 = vadd.f32 %v306, %v321
    %v330 = vadd.f32 %v307, %v321
    %v331 = vadd.f32 %v308, %v321
    %v332 = vadd.f32 %v309, %v321
    %v333 = vadd.f32 %v310, %v321
    %v334 = vadd.f32 %v311, %v321
    %v335 = vadd.f32 %v312, %v321
    %v336 = vadd.f32 %v313, %v321
    %v337 = vadd.f32 %v314, %v321
    %v338 = vadd.f32 %v315, %v321
    %v339 = vpack.c.bf16 %v324, %v323
    %v340 = vpack.c.bf16 %v326, %v325
    %v341 = vpack.c.bf16 %v328, %v327
    %v342 = vpack.c.bf16 %v330, %v329
    %v343 = vpack.c.bf16 %v332, %v331
    %v344 = vpack.c.bf16 %v334, %v333
    %v345 = vpack.c.bf16 %v336, %v335
    %v346 = vpack.c.bf16 %v338, %v337
    %v355 = vunpack.c.l.b16 %v339
    %v356 = vunpack.c.h.b16 %v339
    %v357 = vunpack.c.l.b16 %v340
    %v358 = vunpack.c.h.b16 %v340
    %v359 = vunpack.c.l.b16 %v341
    %v360 = vunpack.c.h.b16 %v341
    %v361 = vunpack.c.l.b16 %v342
    %v362 = vunpack.c.h.b16 %v342
    %v363 = vunpack.c.l.b16 %v343
    %v364 = vunpack.c.h.b16 %v343
    %v365 = vunpack.c.l.b16 %v344
    %v366 = vunpack.c.h.b16 %v344
    %v367 = vunpack.c.l.b16 %v345
    %v368 = vunpack.c.h.b16 %v345
    %v369 = vunpack.c.l.b16 %v346
    %v370 = vunpack.c.h.b16 %v346
    %v371 = vpack.c.b16 %v355, %v355
    %v372 = vpack.c.b16 %v356, %v356
    %v373 = vpack.c.b16 %v357, %v357
    %v374 = vpack.c.b16 %v358, %v358
    %v375 = vpack.c.b16 %v359, %v359
    %v376 = vpack.c.b16 %v360, %v360
    %v377 = vpack.c.b16 %v361, %v361
    %v378 = vpack.c.b16 %v362, %v362
    %v379 = vpack.c.b16 %v363, %v363
    %v380 = vpack.c.b16 %v364, %v364
    %v381 = vpack.c.b16 %v365, %v365
    %v382 = vpack.c.b16 %v366, %v366
    %v383 = vpack.c.b16 %v367, %v367
    %v384 = vpack.c.b16 %v368, %v368
    %v385 = vpack.c.b16 %v369, %v369
    %v386 = vpack.c.b16 %v370, %v370
    %vm403 = vcmask 257024
    %404 = vst.msk [vmem:[%s4] sm:$0xf] %vm403, %v371
    %405 = vst.msk [vmem:[%s4 + $0x4] sm:$0xf] %vm403, %v372
    %406 = vst.msk [vmem:[%s4 + $0x8] sm:$0xf] %vm403, %v373
    %407 = vst.msk [vmem:[%s4 + $0xc] sm:$0xf] %vm403, %v374
    %408 = vst.msk [vmem:[%s4 + $0x10] sm:$0xf] %vm403, %v375
    %409 = vst.msk [vmem:[%s4 + $0x14] sm:$0xf] %vm403, %v376
    %410 = vst.msk [vmem:[%s4 + $0x18] sm:$0xf] %vm403, %v377
    %411 = vst.msk [vmem:[%s4 + $0x1c] sm:$0xf] %vm403, %v378
    %412 = vst.msk [vmem:[%s4 + $0x20] sm:$0xf] %vm403, %v379
    %413 = vst.msk [vmem:[%s4 + $0x24] sm:$0xf] %vm403, %v380
    %414 = vst.msk [vmem:[%s4 + $0x28] sm:$0xf] %vm403, %v381
    %415 = vst.msk [vmem:[%s4 + $0x2c] sm:$0xf] %vm403, %v382
    %416 = vst.msk [vmem:[%s4 + $0x30] sm:$0xf] %vm403, %v383
    %417 = vst.msk [vmem:[%s4 + $0x34] sm:$0xf] %vm403, %v384
    %418 = vst.msk [vmem:[%s4 + $0x38] sm:$0xf] %vm403, %v385
    %419 = vst.msk [vmem:[%s4 + $0x3c] sm:$0xf] %vm403, %v386
  $region25: #{_lambda_.9} parent=0 // pred_fallthru
    _
  // Predicated region
  $region26: #{_lambda_.9} parent=0 // pred_check
    _
  $region27: #{_lambda_.9} parent=0 // pred_check_branch
    %421 = sbr.rel (0) target = $region29
  $region28: #{_lambda_.9} parent=0 // pred_region
    _
  $region29: #{_lambda_.9} parent=0 // pred_fallthru
    _
  // Predicated region
  $region30: #{_lambda_.9} parent=0 // pred_check
    _
  $region31: #{_lambda_.9} parent=0 // pred_check_branch
    %423 = sbr.rel (0) target = $region33
  $region32: #{_lambda_.9} parent=0 // pred_region
    _
  $region33: #{_lambda_.9} parent=0 // pred_fallthru
    _

// kernel: _lambda_.10
$region0: #{_lambda_.10}
  #allocation0 [shape = 'u32[]', space=smem, size = 0x4, offset = 0x4, fixed_abs, tag = 'smem constant byte address 0x4 - core index']
  #allocation1 [shape = 'u32[144,128]{1,0:T(1,128)}', space=vmem, size = 0x12000, scoped, tag = 'internal scratch']
  #allocation2 [shape = 'f32[128,32]{1,0:T(8,128)}', space=vmem, size = 0x10000, scoped, tag = 'scratch operand']
  %s0 = inlined_call_operand.vmem [shape: bf16[128,8], index: 0, kind: input, shape index: {}]
  %s1 = inlined_call_operand.vmem [shape: bf16[8,32], index: 1, kind: input, shape index: {}]
  %s2 = inlined_call_operand.vmem [shape: f32[1,32], index: 2, kind: input, shape index: {}]
  %s3 = inlined_call_operand.vmem [shape: f32[1,32], index: 3, kind: input, shape index: {}]
  %s4 = inlined_call_operand.vmem [shape: bf16[128,32], index: 4, kind: input, shape index: {}]
  %s5 = inlined_call_operand.vmem [shape: f32[128,32], index: 5, kind: output, shape index: {}]
  %s6 = sld [smem:[#allocation0]]
  $region38: #{_lambda_.10} parent=0
    _
  %s8 = ssub.s32 1, %s6
  %s9 = scalar_select 0, %s8, %s6
  // Predicated region
  $region2: #{_lambda_.10} parent=0 // pred_check
    _
  $region3: #{_lambda_.10} parent=0 // pred_check_branch
    %11 = sbr.rel (0) target = $region5
  $region4: #{_lambda_.10} parent=0 // pred_region
    _
  $region5: #{_lambda_.10} parent=0 // pred_fallthru
    _
  // Predicated region
  $region6: #{_lambda_.10} parent=0 // pred_check
    _
  $region7: #{_lambda_.10} parent=0 // pred_check_branch
    %13 = sbr.rel (0) target = $region9
  $region8: #{_lambda_.10} parent=0 // pred_region
    _
  $region9: #{_lambda_.10} parent=0 // pred_fallthru
    _
  // Predicated region
  $region10: #{_lambda_.10} parent=0 // pred_check
    _
  $region11: #{_lambda_.10} parent=0 // pred_check_branch
    %15 = sbr.rel (0) target = $region13
  $region12: #{_lambda_.10} parent=0 // pred_region
    _
  $region13: #{_lambda_.10} parent=0 // pred_fallthru
    _
  // Predicated region
  $region14: #{_lambda_.10} parent=0 // pred_check
    _
  $region15: #{_lambda_.10} parent=0 // pred_check_branch
    %17 = sbr.rel (0) target = $region17
  $region16: #{_lambda_.10} parent=0 // pred_region
    _
  $region17: #{_lambda_.10} parent=0 // pred_fallthru
    _
  // Predicated region
  $region18: #{_lambda_.10} parent=0 // pred_check
    _
  $region19: #{_lambda_.10} parent=0 // pred_check_branch
    %19 = sbr.rel (0) target = $region21
  $region20: #{_lambda_.10} parent=0 // pred_region
    _
  $region21: #{_lambda_.10} parent=0 // pred_fallthru
    _
  %p21 = scmp.eq.s32.totalorder 0, 0
  // Predicated region
  $region22: #{_lambda_.10} parent=0 // pred_check
    %p22 = pneg %p21
  $region23: #{_lambda_.10} parent=0 // pred_check_branch
    %24 = sbr.rel (%p22) target = $region25
  $region24: #{_lambda_.10} parent=0 // pred_region
    %vm25 = vcmask 261120
    %26 = vst.msk [vmem:[#allocation2] sm:$0xff] %vm25, 0.0
    %27 = vst.msk [vmem:[#allocation2 + $0x8] sm:$0xff] %vm25, 0.0
    %28 = vst.msk [vmem:[#allocation2 + $0x10] sm:$0xff] %vm25, 0.0
    %29 = vst.msk [vmem:[#allocation2 + $0x18] sm:$0xff] %vm25, 0.0
    %30 = vst.msk [vmem:[#allocation2 + $0x20] sm:$0xff] %vm25, 0.0
    %31 = vst.msk [vmem:[#allocation2 + $0x28] sm:$0xff] %vm25, 0.0
    %32 = vst.msk [vmem:[#allocation2 + $0x30] sm:$0xff] %vm25, 0.0
    %33 = vst.msk [vmem:[#allocation2 + $0x38] sm:$0xff] %vm25, 0.0
    %34 = vst.msk [vmem:[#allocation2 + $0x40] sm:$0xff] %vm25, 0.0
    %35 = vst.msk [vmem:[#allocation2 + $0x48] sm:$0xff] %vm25, 0.0
    %36 = vst.msk [vmem:[#allocation2 + $0x50] sm:$0xff] %vm25, 0.0
    %37 = vst.msk [vmem:[#allocation2 + $0x58] sm:$0xff] %vm25, 0.0
    %38 = vst.msk [vmem:[#allocation2 + $0x60] sm:$0xff] %vm25, 0.0
    %39 = vst.msk [vmem:[#allocation2 + $0x68] sm:$0xff] %vm25, 0.0
    %40 = vst.msk [vmem:[#allocation2 + $0x70] sm:$0xff] %vm25, 0.0
    %41 = vst.msk [vmem:[#allocation2 + $0x78] sm:$0xff] %vm25, 0.0
  $region25: #{_lambda_.10} parent=0 // pred_fallthru
    _
  %v42 = vld [vmem:[#allocation2] sm:$0xff]
  %v43 = vld [vmem:[#allocation2 + $0x8] sm:$0xff]
  %v44 = vld [vmem:[#allocation2 + $0x10] sm:$0xff]
  %v45 = vld [vmem:[#allocation2 + $0x18] sm:$0xff]
  %v46 = vld [vmem:[#allocation2 + $0x20] sm:$0xff]
  %v47 = vld [vmem:[#allocation2 + $0x28] sm:$0xff]
  %v48 = vld [vmem:[#allocation2 + $0x30] sm:$0xff]
  %v49 = vld [vmem:[#allocation2 + $0x38] sm:$0xff]
  %v50 = vld [vmem:[#allocation2 + $0x40] sm:$0xff]
  %v51 = vld [vmem:[#allocation2 + $0x48] sm:$0xff]
  %v52 = vld [vmem:[#allocation2 + $0x50] sm:$0xff]
  %v53 = vld [vmem:[#allocation2 + $0x58] sm:$0xff]
  %v54 = vld [vmem:[#allocation2 + $0x60] sm:$0xff]
  %v55 = vld [vmem:[#allocation2 + $0x68] sm:$0xff]
  %v56 = vld [vmem:[#allocation2 + $0x70] sm:$0xff]
  %v57 = vld [vmem:[#allocation2 + $0x78] sm:$0xff]
  %v58 = vld [vmem:[%s0] sm:$0xf]
  %v59 = vld [vmem:[%s0 + $0x4] sm:$0xf]
  %v60 = vld [vmem:[%s0 + $0x8] sm:$0xf]
  %v61 = vld [vmem:[%s0 + $0xc] sm:$0xf]
  %v62 = vld [vmem:[%s0 + $0x10] sm:$0xf]
  %v63 = vld [vmem:[%s0 + $0x14] sm:$0xf]
  %v64 = vld [vmem:[%s0 + $0x18] sm:$0xf]
  %v65 = vld [vmem:[%s0 + $0x1c] sm:$0xf]
  %v66 = vld [vmem:[%s0 + $0x20] sm:$0xf]
  %v67 = vld [vmem:[%s0 + $0x24] sm:$0xf]
  %v68 = vld [vmem:[%s0 + $0x28] sm:$0xf]
  %v69 = vld [vmem:[%s0 + $0x2c] sm:$0xf]
  %v70 = vld [vmem:[%s0 + $0x30] sm:$0xf]
  %v71 = vld [vmem:[%s0 + $0x34] sm:$0xf]
  %v72 = vld [vmem:[%s0 + $0x38] sm:$0xf]
  %v73 = vld [vmem:[%s0 + $0x3c] sm:$0xf]
  %v74 = vld [vmem:[%s1] sm:$0xf]
  %v91 = vunpack.c.l.b16 %v58
  %v92 = vunpack.c.l.b16 %v59
  %v93 = vunpack.c.l.b16 %v60
  %v94 = vunpack.c.l.b16 %v61
  %v95 = vunpack.c.l.b16 %v62
  %v96 = vunpack.c.l.b16 %v63
  %v97 = vunpack.c.l.b16 %v64
  %v98 = vunpack.c.l.b16 %v65
  %v99 = vunpack.c.l.b16 %v66
  %v100 = vunpack.c.l.b16 %v67
  %v101 = vunpack.c.l.b16 %v68
  %v102 = vunpack.c.l.b16 %v69
  %v103 = vunpack.c.l.b16 %v70
  %v104 = vunpack.c.l.b16 %v71
  %v105 = vunpack.c.l.b16 %v72
  %v106 = vunpack.c.l.b16 %v73
  %v107 = vpack.c.b16 %v92, %v91
  %v108 = vpack.c.b16 %v94, %v93
  %v109 = vpack.c.b16 %v96, %v95
  %v110 = vpack.c.b16 %v98, %v97
  %v111 = vpack.c.b16 %v100, %v99
  %v112 = vpack.c.b16 %v102, %v101
  %v113 = vpack.c.b16 %v104, %v103
  %v114 = vpack.c.b16 %v106, %v105
  %vm115 = vcmask 64512
  %v117 = vsel %vm115, %v107, 0
  %v120 = vsel %vm115, %v108, 0
  %v123 = vsel %vm115, %v109, 0
  %v126 = vsel %vm115, %v110, 0
  %v129 = vsel %vm115, %v111, 0
  %v132 = vsel %vm115, %v112, 0
  %v135 = vsel %vm115, %v113, 0
  %v138 = vsel %vm115, %v114, 0
  %vm140 = vcmask 1043456
  %v142 = vsel %vm140, %v74, 0
  %144 = vmatprep.subr.bf16.mxu0 0
  %145 = vmatpush1.bf16.msra.mxu0 %v142
  %146 = vmatprep.subr.bf16.mxu0 0
  %147 = vmatpush1.bf16.msra.mxu0 0
  %148 = vmatprep.subr.bf16.mxu0 0
  %149 = vmatpush1.bf16.msra.mxu0 0
  %150 = vmatprep.subr.bf16.mxu0 0
  %151 = vmatpush1.bf16.msra.mxu0 0
  %152 = vmatprep.subr.bf16.mxu0 0
  %153 = vmatpush1.bf16.msra.mxu0 0
  %154 = vmatprep.subr.bf16.mxu0 0
  %155 = vmatpush1.bf16.msra.mxu0 0
  %156 = vmatprep.subr.bf16.mxu0 0
  %157 = vmatpush1.bf16.msra.mxu0 0
  %158 = vmatprep.subr.bf16.mxu0 0
  %159 = vmatpush1.bf16.msra.mxu0 0
  %160 = vmatprep.subr.bf16.mxu0 0
  %161 = vmatpush1.bf16.msra.mxu0 0
  %162 = vmatprep.subr.bf16.mxu0 0
  %163 = vmatpush1.bf16.msra.mxu0 0
  %164 = vmatprep.subr.bf16.mxu0 0
  %165 = vmatpush1.bf16.msra.mxu0 0
  %166 = vmatprep.subr.bf16.mxu0 0
  %167 = vmatpush1.bf16.msra.mxu0 0
  %168 = vmatprep.subr.bf16.mxu0 0
  %169 = vmatpush1.bf16.msra.mxu0 0
  %170 = vmatprep.subr.bf16.mxu0 0
  %171 = vmatpush1.bf16.msra.mxu0 0
  %172 = vmatprep.subr.bf16.mxu0 0
  %173 = vmatpush1.bf16.msra.mxu0 0
  %174 = vmatprep.subr.bf16.mxu0 0
  %175 = vmatpush1.bf16.msra.mxu0 0
  %176 = vmatprep.mubr.bf16.mxu0 0
  %177 = vmatmul.mubr.bf16.gmra.mrb[0].mxu0 %v117
  %v178 = vpop.f32.mrb[0].mxu0
  %v179 = vadd.f32 0.0, %v178
  %v180 = vpop.f32.mrb[0].mxu0
  %v181 = vpop.f32.mrb[0].mxu0
  %v182 = vadd.f32 0.0, %v181
  %v183 = vpop.f32.mrb[0].mxu0
  %184 = vmatprep.mubr.bf16.mxu0 0
  %185 = vmatmul.mubr.bf16.gmra.mrb[0].mxu0 %v120
  %v186 = vpop.f32.mrb[0].mxu0
  %v187 = vadd.f32 0.0, %v186
  %v188 = vpop.f32.mrb[0].mxu0
  %v189 = vpop.f32.mrb[0].mxu0
  %v190 = vadd.f32 0.0, %v189
  %v191 = vpop.f32.mrb[0].mxu0
  %192 = vmatprep.mubr.bf16.mxu0 0
  %193 = vmatmul.mubr.bf16.gmra.mrb[0].mxu0 %v123
  %v194 = vpop.f32.mrb[0].mxu0
  %v195 = vadd.f32 0.0, %v194
  %v196 = vpop.f32.mrb[0].mxu0
  %v197 = vpop.f32.mrb[0].mxu0
  %v198 = vadd.f32 0.0, %v197
  %v199 = vpop.f32.mrb[0].mxu0
  %200 = vmatprep.mubr.bf16.mxu0 0
  %201 = vmatmul.mubr.bf16.gmra.mrb[0].mxu0 %v126
  %v202 = vpop.f32.mrb[0].mxu0
  %v203 = vadd.f32 0.0, %v202
  %v204 = vpop.f32.mrb[0].mxu0
  %v205 = vpop.f32.mrb[0].mxu0
  %v206 = vadd.f32 0.0, %v205
  %v207 = vpop.f32.mrb[0].mxu0
  %208 = vmatprep.mubr.bf16.mxu0 0
  %209 = vmatmul.mubr.bf16.gmra.mrb[0].mxu0 %v129
  %v210 = vpop.f32.mrb[0].mxu0
  %v211 = vadd.f32 0.0, %v210
  %v212 = vpop.f32.mrb[0].mxu0
  %v213 = vpop.f32.mrb[0].mxu0
  %v214 = vadd.f32 0.0, %v213
  %v215 = vpop.f32.mrb[0].mxu0
  %216 = vmatprep.mubr.bf16.mxu0 0
  %217 = vmatmul.mubr.bf16.gmra.mrb[0].mxu0 %v132
  %v218 = vpop.f32.mrb[0].mxu0
  %v219 = vadd.f32 0.0, %v218
  %v220 = vpop.f32.mrb[0].mxu0
  %v221 = vpop.f32.mrb[0].mxu0
  %v222 = vadd.f32 0.0, %v221
  %v223 = vpop.f32.mrb[0].mxu0
  %224 = vmatprep.mubr.bf16.mxu0 0
  %225 = vmatmul.mubr.bf16.gmra.mrb[0].mxu0 %v135
  %v226 = vpop.f32.mrb[0].mxu0
  %v227 = vadd.f32 0.0, %v226
  %v228 = vpop.f32.mrb[0].mxu0
  %v229 = vpop.f32.mrb[0].mxu0
  %v230 = vadd.f32 0.0, %v229
  %v231 = vpop.f32.mrb[0].mxu0
  %232 = vmatprep.mubr.bf16.mxu0 0
  %233 = vmatmul.mubr.bf16.gmra.mrb[0].mxu0 %v138
  %v234 = vpop.f32.mrb[0].mxu0
  %v235 = vadd.f32 0.0, %v234
  %v236 = vpop.f32.mrb[0].mxu0
  %v237 = vpop.f32.mrb[0].mxu0
  %v238 = vadd.f32 0.0, %v237
  %v239 = vpop.f32.mrb[0].mxu0
  %240 = vdwg.mxu0
  %v241 = vadd.f32 %v42, %v179
  %v242 = vadd.f32 %v43, %v182
  %v243 = vadd.f32 %v44, %v187
  %v244 = vadd.f32 %v45, %v190
  %v245 = vadd.f32 %v46, %v195
  %v246 = vadd.f32 %v47, %v198
  %v247 = vadd.f32 %v48, %v203
  %v248 = vadd.f32 %v49, %v206
  %v249 = vadd.f32 %v50, %v211
  %v250 = vadd.f32 %v51, %v214
  %v251 = vadd.f32 %v52, %v219
  %v252 = vadd.f32 %v53, %v222
  %v253 = vadd.f32 %v54, %v227
  %v254 = vadd.f32 %v55, %v230
  %v255 = vadd.f32 %v56, %v235
  %v256 = vadd.f32 %v57, %v238
  %vm257 = vcmask 261120
  %258 = vst.msk [vmem:[#allocation2] sm:$0xff] %vm257, %v241
  %259 = vst.msk [vmem:[#allocation2 + $0x8] sm:$0xff] %vm257, %v242
  %260 = vst.msk [vmem:[#allocation2 + $0x10] sm:$0xff] %vm257, %v243
  %261 = vst.msk [vmem:[#allocation2 + $0x18] sm:$0xff] %vm257, %v244
  %262 = vst.msk [vmem:[#allocation2 + $0x20] sm:$0xff] %vm257, %v245
  %263 = vst.msk [vmem:[#allocation2 + $0x28] sm:$0xff] %vm257, %v246
  %264 = vst.msk [vmem:[#allocation2 + $0x30] sm:$0xff] %vm257, %v247
  %265 = vst.msk [vmem:[#allocation2 + $0x38] sm:$0xff] %vm257, %v248
  %266 = vst.msk [vmem:[#allocation2 + $0x40] sm:$0xff] %vm257, %v249
  %267 = vst.msk [vmem:[#allocation2 + $0x48] sm:$0xff] %vm257, %v250
  %268 = vst.msk [vmem:[#allocation2 + $0x50] sm:$0xff] %vm257, %v251
  %269 = vst.msk [vmem:[#allocation2 + $0x58] sm:$0xff] %vm257, %v252
  %270 = vst.msk [vmem:[#allocation2 + $0x60] sm:$0xff] %vm257, %v253
  %271 = vst.msk [vmem:[#allocation2 + $0x68] sm:$0xff] %vm257, %v254
  %272 = vst.msk [vmem:[#allocation2 + $0x70] sm:$0xff] %vm257, %v255
  %273 = vst.msk [vmem:[#allocation2 + $0x78] sm:$0xff] %vm257, %v256
  // Predicated region
  $region26: #{_lambda_.10} parent=0 // pred_check
    %p274 = pneg %p21
  $region27: #{_lambda_.10} parent=0 // pred_check_branch
    %276 = sbr.rel (%p274) target = $region29
  $region28: #{_lambda_.10} parent=0 // pred_region
    %v277 = vld [vmem:[#allocation2] sm:$0xff]
    %v278 = vld [vmem:[#allocation2 + $0x8] sm:$0xff]
    %v279 = vld [vmem:[#allocation2 + $0x10] sm:$0xff]
    %v280 = vld [vmem:[#allocation2 + $0x18] sm:$0xff]
    %v281 = vld [vmem:[#allocation2 + $0x20] sm:$0xff]
    %v282 = vld [vmem:[#allocation2 + $0x28] sm:$0xff]
    %v283 = vld [vmem:[#allocation2 + $0x30] sm:$0xff]
    %v284 = vld [vmem:[#allocation2 + $0x38] sm:$0xff]
    %v285 = vld [vmem:[#allocation2 + $0x40] sm:$0xff]
    %v286 = vld [vmem:[#allocation2 + $0x48] sm:$0xff]
    %v287 = vld [vmem:[#allocation2 + $0x50] sm:$0xff]
    %v288 = vld [vmem:[#allocation2 + $0x58] sm:$0xff]
    %v289 = vld [vmem:[#allocation2 + $0x60] sm:$0xff]
    %v290 = vld [vmem:[#allocation2 + $0x68] sm:$0xff]
    %v291 = vld [vmem:[#allocation2 + $0x70] sm:$0xff]
    %v292 = vld [vmem:[#allocation2 + $0x78] sm:$0xff]
    %v293 = vld [vmem:[%s2] sm:$0x1]
    %v295 = vlaneseq
    %v296 = vshrl.u32 %v295, 7
    %v297 = vsub.s32 0, %v296
    %v298 = vrot.slane %v293, %v297
    %v300 = vmul.f32 %v277, %v298
    %v301 = vmul.f32 %v278, %v298
    %v302 = vmul.f32 %v279, %v298
    %v303 = vmul.f32 %v280, %v298
    %v304 = vmul.f32 %v281, %v298
    %v305 = vmul.f32 %v282, %v298
    %v306 = vmul.f32 %v283, %v298
    %v307 = vmul.f32 %v284, %v298
    %v308 = vmul.f32 %v285, %v298
    %v309 = vmul.f32 %v286, %v298
    %v310 = vmul.f32 %v287, %v298
    %v311 = vmul.f32 %v288, %v298
    %v312 = vmul.f32 %v289, %v298
    %v313 = vmul.f32 %v290, %v298
    %v314 = vmul.f32 %v291, %v298
    %v315 = vmul.f32 %v292, %v298
    %v316 = vld [vmem:[%s3] sm:$0x1]
    %v318 = vlaneseq
    %v319 = vshrl.u32 %v318, 7
    %v320 = vsub.s32 0, %v319
    %v321 = vrot.slane %v316, %v320
    %v323 = vadd.f32 %v300, %v321
    %v324 = vadd.f32 %v301, %v321
    %v325 = vadd.f32 %v302, %v321
    %v326 = vadd.f32 %v303, %v321
    %v327 = vadd.f32 %v304, %v321
    %v328 = vadd.f32 %v305, %v321
    %v329 = vadd.f32 %v306, %v321
    %v330 = vadd.f32 %v307, %v321
    %v331 = vadd.f32 %v308, %v321
    %v332 = vadd.f32 %v309, %v321
    %v333 = vadd.f32 %v310, %v321
    %v334 = vadd.f32 %v311, %v321
    %v335 = vadd.f32 %v312, %v321
    %v336 = vadd.f32 %v313, %v321
    %v337 = vadd.f32 %v314, %v321
    %v338 = vadd.f32 %v315, %v321
    %v339 = vld [vmem:[%s4] sm:$0xf]
    %v340 = vld [vmem:[%s4 + $0x4] sm:$0xf]
    %v341 = vld [vmem:[%s4 + $0x8] sm:$0xf]
    %v342 = vld [vmem:[%s4 + $0xc] sm:$0xf]
    %v343 = vld [vmem:[%s4 + $0x10] sm:$0xf]
    %v344 = vld [vmem:[%s4 + $0x14] sm:$0xf]
    %v345 = vld [vmem:[%s4 + $0x18] sm:$0xf]
    %v346 = vld [vmem:[%s4 + $0x1c] sm:$0xf]
    %v347 = vld [vmem:[%s4 + $0x20] sm:$0xf]
    %v348 = vld [vmem:[%s4 + $0x24] sm:$0xf]
    %v349 = vld [vmem:[%s4 + $0x28] sm:$0xf]
    %v350 = vld [vmem:[%s4 + $0x2c] sm:$0xf]
    %v351 = vld [vmem:[%s4 + $0x30] sm:$0xf]
    %v352 = vld [vmem:[%s4 + $0x34] sm:$0xf]
    %v353 = vld [vmem:[%s4 + $0x38] sm:$0xf]
    %v354 = vld [vmem:[%s4 + $0x3c] sm:$0xf]
    %v355 = vunpack.c.l.bf16 %v339
    %v356 = vunpack.c.l.bf16 %v340
    %v357 = vunpack.c.l.bf16 %v341
    %v358 = vunpack.c.l.bf16 %v342
    %v359 = vunpack.c.l.bf16 %v343
    %v360 = vunpack.c.l.bf16 %v344
    %v361 = vunpack.c.l.bf16 %v345
    %v362 = vunpack.c.l.bf16 %v346
    %v363 = vunpack.c.l.bf16 %v347
    %v364 = vunpack.c.l.bf16 %v348
    %v365 = vunpack.c.l.bf16 %v349
    %v366 = vunpack.c.l.bf16 %v350
    %v367 = vunpack.c.l.bf16 %v351
    %v368 = vunpack.c.l.bf16 %v352
    %v369 = vunpack.c.l.bf16 %v353
    %v370 = vunpack.c.l.bf16 %v354
    %v371 = vadd.f32 %v323, %v355
    %v372 = vadd.f32 %v324, %v356
    %v373 = vadd.f32 %v325, %v357
    %v374 = vadd.f32 %v326, %v358
    %v375 = vadd.f32 %v327, %v359
    %v376 = vadd.f32 %v328, %v360
    %v377 = vadd.f32 %v329, %v361
    %v378 = vadd.f32 %v330, %v362
    %v379 = vadd.f32 %v331, %v363
    %v380 = vadd.f32 %v332, %v364
    %v381 = vadd.f32 %v333, %v365
    %v382 = vadd.f32 %v334, %v366
    %v383 = vadd.f32 %v335, %v367
    %v384 = vadd.f32 %v336, %v368
    %v385 = vadd.f32 %v337, %v369
    %v386 = vadd.f32 %v338, %v370
    %v387 = vmax.f32 %v371, 0.0
    %v388 = vmax.f32 %v372, 0.0
    %v389 = vmax.f32 %v373, 0.0
    %v390 = vmax.f32 %v374, 0.0
    %v391 = vmax.f32 %v375, 0.0
    %v392 = vmax.f32 %v376, 0.0
    %v393 = vmax.f32 %v377, 0.0
    %v394 = vmax.f32 %v378, 0.0
    %v395 = vmax.f32 %v379, 0.0
    %v396 = vmax.f32 %v380, 0.0
    %v397 = vmax.f32 %v381, 0.0
    %v398 = vmax.f32 %v382, 0.0
    %v399 = vmax.f32 %v383, 0.0
    %v400 = vmax.f32 %v384, 0.0
    %v401 = vmax.f32 %v385, 0.0
    %v402 = vmax.f32 %v386, 0.0
    %403 = vst.msk [vmem:[%s5] sm:$0xff] %vm257, %v387
    %404 = vst.msk [vmem:[%s5 + $0x8] sm:$0xff] %vm257, %v388
    %405 = vst.msk [vmem:[%s5 + $0x10] sm:$0xff] %vm257, %v389
    %406 = vst.msk [vmem:[%s5 + $0x18] sm:$0xff] %vm257, %v390
    %407 = vst.msk [vmem:[%s5 + $0x20] sm:$0xff] %vm257, %v391
    %408 = vst.msk [vmem:[%s5 + $0x28] sm:$0xff] %vm257, %v392
    %409 = vst.msk [vmem:[%s5 + $0x30] sm:$0xff] %vm257, %v393
    %410 = vst.msk [vmem:[%s5 + $0x38] sm:$0xff] %vm257, %v394
    %411 = vst.msk [vmem:[%s5 + $0x40] sm:$0xff] %vm257, %v395
    %412 = vst.msk [vmem:[%s5 + $0x48] sm:$0xff] %vm257, %v396
    %413 = vst.msk [vmem:[%s5 + $0x50] sm:$0xff] %vm257, %v397
    %414 = vst.msk [vmem:[%s5 + $0x58] sm:$0xff] %vm257, %v398
    %415 = vst.msk [vmem:[%s5 + $0x60] sm:$0xff] %vm257, %v399
    %416 = vst.msk [vmem:[%s5 + $0x68] sm:$0xff] %vm257, %v400
    %417 = vst.msk [vmem:[%s5 + $0x70] sm:$0xff] %vm257, %v401
    %418 = vst.msk [vmem:[%s5 + $0x78] sm:$0xff] %vm257, %v402
  $region29: #{_lambda_.10} parent=0 // pred_fallthru
    _
  // Predicated region
  $region30: #{_lambda_.10} parent=0 // pred_check
    _
  $region31: #{_lambda_.10} parent=0 // pred_check_branch
    %420 = sbr.rel (0) target = $region33
  $region32: #{_lambda_.10} parent=0 // pred_region
    _
  $region33: #{_lambda_.10} parent=0 // pred_fallthru
    _
  // Predicated region
  $region34: #{_lambda_.10} parent=0 // pred_check
    _
  $region35: #{_lambda_.10} parent=0 // pred_check_branch
    %422 = sbr.rel (0) target = $region37
  $region36: #{_lambda_.10} parent=0 // pred_region
    _
  $region37: #{_lambda_.10} parent=0 // pred_fallthru
    _

// kernel: _lambda_.11
$region0: #{_lambda_.11}
  #allocation0 [shape = 'u32[]', space=smem, size = 0x4, offset = 0x4, fixed_abs, tag = 'smem constant byte address 0x4 - core index']
  #allocation1 [shape = 'u32[144,128]{1,0:T(1,128)}', space=vmem, size = 0x12000, scoped, tag = 'internal scratch']
  #allocation2 [shape = 'f32[128,8]{1,0:T(8,128)}', space=vmem, size = 0x10000, scoped, tag = 'scratch operand']
  %s0 = inlined_call_operand.vmem [shape: bf16[128,32], index: 0, kind: input, shape index: {}]
  %s1 = inlined_call_operand.vmem [shape: bf16[32,8], index: 1, kind: input, shape index: {}]
  %s2 = inlined_call_operand.vmem [shape: f32[1,8], index: 2, kind: input, shape index: {}]
  %s3 = inlined_call_operand.vmem [shape: f32[1,8], index: 3, kind: input, shape index: {}]
  %s4 = inlined_call_operand.vmem [shape: bf16[128,8], index: 4, kind: output, shape index: {}]
  %s5 = sld [smem:[#allocation0]]
  $region34: #{_lambda_.11} parent=0
    _
  %s7 = ssub.s32 1, %s5
  %s8 = scalar_select 0, %s7, %s5
  // Predicated region
  $region2: #{_lambda_.11} parent=0 // pred_check
    _
  $region3: #{_lambda_.11} parent=0 // pred_check_branch
    %10 = sbr.rel (0) target = $region5
  $region4: #{_lambda_.11} parent=0 // pred_region
    _
  $region5: #{_lambda_.11} parent=0 // pred_fallthru
    _
  // Predicated region
  $region6: #{_lambda_.11} parent=0 // pred_check
    _
  $region7: #{_lambda_.11} parent=0 // pred_check_branch
    %12 = sbr.rel (0) target = $region9
  $region8: #{_lambda_.11} parent=0 // pred_region
    _
  $region9: #{_lambda_.11} parent=0 // pred_fallthru
    _
  // Predicated region
  $region10: #{_lambda_.11} parent=0 // pred_check
    _
  $region11: #{_lambda_.11} parent=0 // pred_check_branch
    %14 = sbr.rel (0) target = $region13
  $region12: #{_lambda_.11} parent=0 // pred_region
    _
  $region13: #{_lambda_.11} parent=0 // pred_fallthru
    _
  // Predicated region
  $region14: #{_lambda_.11} parent=0 // pred_check
    _
  $region15: #{_lambda_.11} parent=0 // pred_check_branch
    %16 = sbr.rel (0) target = $region17
  $region16: #{_lambda_.11} parent=0 // pred_region
    _
  $region17: #{_lambda_.11} parent=0 // pred_fallthru
    _
  %p18 = scmp.eq.s32.totalorder 0, 0
  // Predicated region
  $region18: #{_lambda_.11} parent=0 // pred_check
    %p19 = pneg %p18
  $region19: #{_lambda_.11} parent=0 // pred_check_branch
    %21 = sbr.rel (%p19) target = $region21
  $region20: #{_lambda_.11} parent=0 // pred_region
    %vm22 = vcmask 64512
    %23 = vst.msk [vmem:[#allocation2] sm:$0xff] %vm22, 0.0
    %24 = vst.msk [vmem:[#allocation2 + $0x8] sm:$0xff] %vm22, 0.0
    %25 = vst.msk [vmem:[#allocation2 + $0x10] sm:$0xff] %vm22, 0.0
    %26 = vst.msk [vmem:[#allocation2 + $0x18] sm:$0xff] %vm22, 0.0
    %27 = vst.msk [vmem:[#allocation2 + $0x20] sm:$0xff] %vm22, 0.0
    %28 = vst.msk [vmem:[#allocation2 + $0x28] sm:$0xff] %vm22, 0.0
    %29 = vst.msk [vmem:[#allocation2 + $0x30] sm:$0xff] %vm22, 0.0
    %30 = vst.msk [vmem:[#allocation2 + $0x38] sm:$0xff] %vm22, 0.0
    %31 = vst.msk [vmem:[#allocation2 + $0x40] sm:$0xff] %vm22, 0.0
    %32 = vst.msk [vmem:[#allocation2 + $0x48] sm:$0xff] %vm22, 0.0
    %33 = vst.msk [vmem:[#allocation2 + $0x50] sm:$0xff] %vm22, 0.0
    %34 = vst.msk [vmem:[#allocation2 + $0x58] sm:$0xff] %vm22, 0.0
    %35 = vst.msk [vmem:[#allocation2 + $0x60] sm:$0xff] %vm22, 0.0
    %36 = vst.msk [vmem:[#allocation2 + $0x68] sm:$0xff] %vm22, 0.0
    %37 = vst.msk [vmem:[#allocation2 + $0x70] sm:$0xff] %vm22, 0.0
    %38 = vst.msk [vmem:[#allocation2 + $0x78] sm:$0xff] %vm22, 0.0
  $region21: #{_lambda_.11} parent=0 // pred_fallthru
    _
  %v39 = vld [vmem:[#allocation2] sm:$0xff]
  %v40 = vld [vmem:[#allocation2 + $0x8] sm:$0xff]
  %v41 = vld [vmem:[#allocation2 + $0x10] sm:$0xff]
  %v42 = vld [vmem:[#allocation2 + $0x18] sm:$0xff]
  %v43 = vld [vmem:[#allocation2 + $0x20] sm:$0xff]
  %v44 = vld [vmem:[#allocation2 + $0x28] sm:$0xff]
  %v45 = vld [vmem:[#allocation2 + $0x30] sm:$0xff]
  %v46 = vld [vmem:[#allocation2 + $0x38] sm:$0xff]
  %v47 = vld [vmem:[#allocation2 + $0x40] sm:$0xff]
  %v48 = vld [vmem:[#allocation2 + $0x48] sm:$0xff]
  %v49 = vld [vmem:[#allocation2 + $0x50] sm:$0xff]
  %v50 = vld [vmem:[#allocation2 + $0x58] sm:$0xff]
  %v51 = vld [vmem:[#allocation2 + $0x60] sm:$0xff]
  %v52 = vld [vmem:[#allocation2 + $0x68] sm:$0xff]
  %v53 = vld [vmem:[#allocation2 + $0x70] sm:$0xff]
  %v54 = vld [vmem:[#allocation2 + $0x78] sm:$0xff]
  %v55 = vld [vmem:[%s0] sm:$0xf]
  %v56 = vld [vmem:[%s0 + $0x4] sm:$0xf]
  %v57 = vld [vmem:[%s0 + $0x8] sm:$0xf]
  %v58 = vld [vmem:[%s0 + $0xc] sm:$0xf]
  %v59 = vld [vmem:[%s0 + $0x10] sm:$0xf]
  %v60 = vld [vmem:[%s0 + $0x14] sm:$0xf]
  %v61 = vld [vmem:[%s0 + $0x18] sm:$0xf]
  %v62 = vld [vmem:[%s0 + $0x1c] sm:$0xf]
  %v63 = vld [vmem:[%s0 + $0x20] sm:$0xf]
  %v64 = vld [vmem:[%s0 + $0x24] sm:$0xf]
  %v65 = vld [vmem:[%s0 + $0x28] sm:$0xf]
  %v66 = vld [vmem:[%s0 + $0x2c] sm:$0xf]
  %v67 = vld [vmem:[%s0 + $0x30] sm:$0xf]
  %v68 = vld [vmem:[%s0 + $0x34] sm:$0xf]
  %v69 = vld [vmem:[%s0 + $0x38] sm:$0xf]
  %v70 = vld [vmem:[%s0 + $0x3c] sm:$0xf]
  %v71 = vld [vmem:[%s1] sm:$0xf]
  %v72 = vld [vmem:[%s1 + $0x4] sm:$0xf]
  %v73 = vld [vmem:[%s1 + $0x8] sm:$0xf]
  %v74 = vld [vmem:[%s1 + $0xc] sm:$0xf]
  %v91 = vunpack.c.l.b16 %v55
  %v92 = vunpack.c.l.b16 %v56
  %v93 = vunpack.c.l.b16 %v57
  %v94 = vunpack.c.l.b16 %v58
  %v95 = vunpack.c.l.b16 %v59
  %v96 = vunpack.c.l.b16 %v60
  %v97 = vunpack.c.l.b16 %v61
  %v98 = vunpack.c.l.b16 %v62
  %v99 = vunpack.c.l.b16 %v63
  %v100 = vunpack.c.l.b16 %v64
  %v101 = vunpack.c.l.b16 %v65
  %v102 = vunpack.c.l.b16 %v66
  %v103 = vunpack.c.l.b16 %v67
  %v104 = vunpack.c.l.b16 %v68
  %v105 = vunpack.c.l.b16 %v69
  %v106 = vunpack.c.l.b16 %v70
  %v107 = vpack.c.b16 %v92, %v91
  %v108 = vpack.c.b16 %v94, %v93
  %v109 = vpack.c.b16 %v96, %v95
  %v110 = vpack.c.b16 %v98, %v97
  %v111 = vpack.c.b16 %v100, %v99
  %v112 = vpack.c.b16 %v102, %v101
  %v113 = vpack.c.b16 %v104, %v103
  %v114 = vpack.c.b16 %v106, %v105
  %v119 = vunpack.c.l.b16 %v71
  %v120 = vunpack.c.l.b16 %v72
  %v121 = vunpack.c.l.b16 %v73
  %v122 = vunpack.c.l.b16 %v74
  %v123 = vpack.c.b16 %v120, %v119
  %v124 = vpack.c.b16 %v122, %v121
  %vm127 = vcmask 261120
  %v129 = vsel %vm127, %v107, 0
  %v132 = vsel %vm127, %v108, 0
  %v135 = vsel %vm127, %v109, 0
  %v138 = vsel %vm127, %v110, 0
  %v141 = vsel %vm127, %v111, 0
  %v144 = vsel %vm127, %v112, 0
  %v147 = vsel %vm127, %v113, 0
  %v150 = vsel %vm127, %v114, 0
  %152 = vmatprep.subr.bf16.mxu0 0
  %153 = vmatpush1.bf16.msra.mxu0 %v123
  %154 = vmatprep.subr.bf16.mxu0 0
  %155 = vmatpush1.bf16.msra.mxu0 %v124
  %156 = vmatprep.subr.bf16.mxu0 0
  %157 = vmatpush1.bf16.msra.mxu0 0
  %158 = vmatprep.subr.bf16.mxu0 0
  %159 = vmatpush1.bf16.msra.mxu0 0
  %160 = vmatprep.subr.bf16.mxu0 0
  %161 = vmatpush1.bf16.msra.mxu0 0
  %162 = vmatprep.subr.bf16.mxu0 0
  %163 = vmatpush1.bf16.msra.mxu0 0
  %164 = vmatprep.subr.bf16.mxu0 0
  %165 = vmatpush1.bf16.msra.mxu0 0
  %166 = vmatprep.subr.bf16.mxu0 0
  %167 = vmatpush1.bf16.msra.mxu0 0
  %168 = vmatprep.subr.bf16.mxu0 0
  %169 = vmatpush1.bf16.msra.mxu0 0
  %170 = vmatprep.subr.bf16.mxu0 0
  %171 = vmatpush1.bf16.msra.mxu0 0
  %172 = vmatprep.subr.bf16.mxu0 0
  %173 = vmatpush1.bf16.msra.mxu0 0
  %174 = vmatprep.subr.bf16.mxu0 0
  %175 = vmatpush1.bf16.msra.mxu0 0
  %176 = vmatprep.subr.bf16.mxu0 0
  %177 = vmatpush1.bf16.msra.mxu0 0
  %178 = vmatprep.subr.bf16.mxu0 0
  %179 = vmatpush1.bf16.msra.mxu0 0
  %180 = vmatprep.subr.bf16.mxu0 0
  %181 = vmatpush1.bf16.msra.mxu0 0
  %182 = vmatprep.subr.bf16.mxu0 0
  %183 = vmatpush1.bf16.msra.mxu0 0
  %184 = vmatprep.mubr.bf16.mxu0 0
  %185 = vmatmul.mubr.bf16.gmra.mrb[0].mxu0 %v129
  %v186 = vpop.f32.mrb[0].mxu0
  %v187 = vadd.f32 0.0, %v186
  %v188 = vpop.f32.mrb[0].mxu0
  %v189 = vpop.f32.mrb[0].mxu0
  %v190 = vadd.f32 0.0, %v189
  %v191 = vpop.f32.mrb[0].mxu0
  %192 = vmatprep.mubr.bf16.mxu0 0
  %193 = vmatmul.mubr.bf16.gmra.mrb[0].mxu0 %v132
  %v194 = vpop.f32.mrb[0].mxu0
  %v195 = vadd.f32 0.0, %v194
  %v196 = vpop.f32.mrb[0].mxu0
  %v197 = vpop.f32.mrb[0].mxu0
  %v198 = vadd.f32 0.0, %v197
  %v199 = vpop.f32.mrb[0].mxu0
  %200 = vmatprep.mubr.bf16.mxu0 0
  %201 = vmatmul.mubr.bf16.gmra.mrb[0].mxu0 %v135
  %v202 = vpop.f32.mrb[0].mxu0
  %v203 = vadd.f32 0.0, %v202
  %v204 = vpop.f32.mrb[0].mxu0
  %v205 = vpop.f32.mrb[0].mxu0
  %v206 = vadd.f32 0.0, %v205
  %v207 = vpop.f32.mrb[0].mxu0
  %208 = vmatprep.mubr.bf16.mxu0 0
  %209 = vmatmul.mubr.bf16.gmra.mrb[0].mxu0 %v138
  %v210 = vpop.f32.mrb[0].mxu0
  %v211 = vadd.f32 0.0, %v210
  %v212 = vpop.f32.mrb[0].mxu0
  %v213 = vpop.f32.mrb[0].mxu0
  %v214 = vadd.f32 0.0, %v213
  %v215 = vpop.f32.mrb[0].mxu0
  %216 = vmatprep.mubr.bf16.mxu0 0
  %217 = vmatmul.mubr.bf16.gmra.mrb[0].mxu0 %v141
  %v218 = vpop.f32.mrb[0].mxu0
  %v219 = vadd.f32 0.0, %v218
  %v220 = vpop.f32.mrb[0].mxu0
  %v221 = vpop.f32.mrb[0].mxu0
  %v222 = vadd.f32 0.0, %v221
  %v223 = vpop.f32.mrb[0].mxu0
  %224 = vmatprep.mubr.bf16.mxu0 0
  %225 = vmatmul.mubr.bf16.gmra.mrb[0].mxu0 %v144
  %v226 = vpop.f32.mrb[0].mxu0
  %v227 = vadd.f32 0.0, %v226
  %v228 = vpop.f32.mrb[0].mxu0
  %v229 = vpop.f32.mrb[0].mxu0
  %v230 = vadd.f32 0.0, %v229
  %v231 = vpop.f32.mrb[0].mxu0
  %232 = vmatprep.mubr.bf16.mxu0 0
  %233 = vmatmul.mubr.bf16.gmra.mrb[0].mxu0 %v147
  %v234 = vpop.f32.mrb[0].mxu0
  %v235 = vadd.f32 0.0, %v234
  %v236 = vpop.f32.mrb[0].mxu0
  %v237 = vpop.f32.mrb[0].mxu0
  %v238 = vadd.f32 0.0, %v237
  %v239 = vpop.f32.mrb[0].mxu0
  %240 = vmatprep.mubr.bf16.mxu0 0
  %241 = vmatmul.mubr.bf16.gmra.mrb[0].mxu0 %v150
  %v242 = vpop.f32.mrb[0].mxu0
  %v243 = vadd.f32 0.0, %v242
  %v244 = vpop.f32.mrb[0].mxu0
  %v245 = vpop.f32.mrb[0].mxu0
  %v246 = vadd.f32 0.0, %v245
  %v247 = vpop.f32.mrb[0].mxu0
  %248 = vdwg.mxu0
  %v249 = vadd.f32 %v39, %v187
  %v250 = vadd.f32 %v40, %v190
  %v251 = vadd.f32 %v41, %v195
  %v252 = vadd.f32 %v42, %v198
  %v253 = vadd.f32 %v43, %v203
  %v254 = vadd.f32 %v44, %v206
  %v255 = vadd.f32 %v45, %v211
  %v256 = vadd.f32 %v46, %v214
  %v257 = vadd.f32 %v47, %v219
  %v258 = vadd.f32 %v48, %v222
  %v259 = vadd.f32 %v49, %v227
  %v260 = vadd.f32 %v50, %v230
  %v261 = vadd.f32 %v51, %v235
  %v262 = vadd.f32 %v52, %v238
  %v263 = vadd.f32 %v53, %v243
  %v264 = vadd.f32 %v54, %v246
  %vm265 = vcmask 64512
  %266 = vst.msk [vmem:[#allocation2] sm:$0xff] %vm265, %v249
  %267 = vst.msk [vmem:[#allocation2 + $0x8] sm:$0xff] %vm265, %v250
  %268 = vst.msk [vmem:[#allocation2 + $0x10] sm:$0xff] %vm265, %v251
  %269 = vst.msk [vmem:[#allocation2 + $0x18] sm:$0xff] %vm265, %v252
  %270 = vst.msk [vmem:[#allocation2 + $0x20] sm:$0xff] %vm265, %v253
  %271 = vst.msk [vmem:[#allocation2 + $0x28] sm:$0xff] %vm265, %v254
  %272 = vst.msk [vmem:[#allocation2 + $0x30] sm:$0xff] %vm265, %v255
  %273 = vst.msk [vmem:[#allocation2 + $0x38] sm:$0xff] %vm265, %v256
  %274 = vst.msk [vmem:[#allocation2 + $0x40] sm:$0xff] %vm265, %v257
  %275 = vst.msk [vmem:[#allocation2 + $0x48] sm:$0xff] %vm265, %v258
  %276 = vst.msk [vmem:[#allocation2 + $0x50] sm:$0xff] %vm265, %v259
  %277 = vst.msk [vmem:[#allocation2 + $0x58] sm:$0xff] %vm265, %v260
  %278 = vst.msk [vmem:[#allocation2 + $0x60] sm:$0xff] %vm265, %v261
  %279 = vst.msk [vmem:[#allocation2 + $0x68] sm:$0xff] %vm265, %v262
  %280 = vst.msk [vmem:[#allocation2 + $0x70] sm:$0xff] %vm265, %v263
  %281 = vst.msk [vmem:[#allocation2 + $0x78] sm:$0xff] %vm265, %v264
  // Predicated region
  $region22: #{_lambda_.11} parent=0 // pred_check
    %p282 = pneg %p18
  $region23: #{_lambda_.11} parent=0 // pred_check_branch
    %284 = sbr.rel (%p282) target = $region25
  $region24: #{_lambda_.11} parent=0 // pred_region
    %v285 = vld [vmem:[#allocation2] sm:$0xff]
    %v286 = vld [vmem:[#allocation2 + $0x8] sm:$0xff]
    %v287 = vld [vmem:[#allocation2 + $0x10] sm:$0xff]
    %v288 = vld [vmem:[#allocation2 + $0x18] sm:$0xff]
    %v289 = vld [vmem:[#allocation2 + $0x20] sm:$0xff]
    %v290 = vld [vmem:[#allocation2 + $0x28] sm:$0xff]
    %v291 = vld [vmem:[#allocation2 + $0x30] sm:$0xff]
    %v292 = vld [vmem:[#allocation2 + $0x38] sm:$0xff]
    %v293 = vld [vmem:[#allocation2 + $0x40] sm:$0xff]
    %v294 = vld [vmem:[#allocation2 + $0x48] sm:$0xff]
    %v295 = vld [vmem:[#allocation2 + $0x50] sm:$0xff]
    %v296 = vld [vmem:[#allocation2 + $0x58] sm:$0xff]
    %v297 = vld [vmem:[#allocation2 + $0x60] sm:$0xff]
    %v298 = vld [vmem:[#allocation2 + $0x68] sm:$0xff]
    %v299 = vld [vmem:[#allocation2 + $0x70] sm:$0xff]
    %v300 = vld [vmem:[#allocation2 + $0x78] sm:$0xff]
    %v301 = vld [vmem:[%s2] sm:$0x1]
    %v303 = vlaneseq
    %v304 = vshrl.u32 %v303, 7
    %v305 = vsub.s32 0, %v304
    %v306 = vrot.slane %v301, %v305
    %v308 = vmul.f32 %v285, %v306
    %v309 = vmul.f32 %v286, %v306
    %v310 = vmul.f32 %v287, %v306
    %v311 = vmul.f32 %v288, %v306
    %v312 = vmul.f32 %v289, %v306
    %v313 = vmul.f32 %v290, %v306
    %v314 = vmul.f32 %v291, %v306
    %v315 = vmul.f32 %v292, %v306
    %v316 = vmul.f32 %v293, %v306
    %v317 = vmul.f32 %v294, %v306
    %v318 = vmul.f32 %v295, %v306
    %v319 = vmul.f32 %v296, %v306
    %v320 = vmul.f32 %v297, %v306
    %v321 = vmul.f32 %v298, %v306
    %v322 = vmul.f32 %v299, %v306
    %v323 = vmul.f32 %v300, %v306
    %v324 = vld [vmem:[%s3] sm:$0x1]
    %v326 = vlaneseq
    %v327 = vshrl.u32 %v326, 7
    %v328 = vsub.s32 0, %v327
    %v329 = vrot.slane %v324, %v328
    %v331 = vadd.f32 %v308, %v329
    %v332 = vadd.f32 %v309, %v329
    %v333 = vadd.f32 %v310, %v329
    %v334 = vadd.f32 %v311, %v329
    %v335 = vadd.f32 %v312, %v329
    %v336 = vadd.f32 %v313, %v329
    %v337 = vadd.f32 %v314, %v329
    %v338 = vadd.f32 %v315, %v329
    %v339 = vadd.f32 %v316, %v329
    %v340 = vadd.f32 %v317, %v329
    %v341 = vadd.f32 %v318, %v329
    %v342 = vadd.f32 %v319, %v329
    %v343 = vadd.f32 %v320, %v329
    %v344 = vadd.f32 %v321, %v329
    %v345 = vadd.f32 %v322, %v329
    %v346 = vadd.f32 %v323, %v329
    %v347 = vmax.f32 %v331, 0.0
    %v348 = vmax.f32 %v332, 0.0
    %v349 = vmax.f32 %v333, 0.0
    %v350 = vmax.f32 %v334, 0.0
    %v351 = vmax.f32 %v335, 0.0
    %v352 = vmax.f32 %v336, 0.0
    %v353 = vmax.f32 %v337, 0.0
    %v354 = vmax.f32 %v338, 0.0
    %v355 = vmax.f32 %v339, 0.0
    %v356 = vmax.f32 %v340, 0.0
    %v357 = vmax.f32 %v341, 0.0
    %v358 = vmax.f32 %v342, 0.0
    %v359 = vmax.f32 %v343, 0.0
    %v360 = vmax.f32 %v344, 0.0
    %v361 = vmax.f32 %v345, 0.0
    %v362 = vmax.f32 %v346, 0.0
    %v363 = vpack.c.bf16 %v348, %v347
    %v364 = vpack.c.bf16 %v350, %v349
    %v365 = vpack.c.bf16 %v352, %v351
    %v366 = vpack.c.bf16 %v354, %v353
    %v367 = vpack.c.bf16 %v356, %v355
    %v368 = vpack.c.bf16 %v358, %v357
    %v369 = vpack.c.bf16 %v360, %v359
    %v370 = vpack.c.bf16 %v362, %v361
    %v379 = vunpack.c.l.b16 %v363
    %v380 = vunpack.c.h.b16 %v363
    %v381 = vunpack.c.l.b16 %v364
    %v382 = vunpack.c.h.b16 %v364
    %v383 = vunpack.c.l.b16 %v365
    %v384 = vunpack.c.h.b16 %v365
    %v385 = vunpack.c.l.b16 %v366
    %v386 = vunpack.c.h.b16 %v366
    %v387 = vunpack.c.l.b16 %v367
    %v388 = vunpack.c.h.b16 %v367
    %v389 = vunpack.c.l.b16 %v368
    %v390 = vunpack.c.h.b16 %v368
    %v391 = vunpack.c.l.b16 %v369
    %v392 = vunpack.c.h.b16 %v369
    %v393 = vunpack.c.l.b16 %v370
    %v394 = vunpack.c.h.b16 %v370
    %v395 = vpack.c.b16 %v379, %v379
    %v396 = vpack.c.b16 %v380, %v380
    %v397 = vpack.c.b16 %v381, %v381
    %v398 = vpack.c.b16 %v382, %v382
    %v399 = vpack.c.b16 %v383, %v383
    %v400 = vpack.c.b16 %v384, %v384
    %v401 = vpack.c.b16 %v385, %v385
    %v402 = vpack.c.b16 %v386, %v386
    %v403 = vpack.c.b16 %v387, %v387
    %v404 = vpack.c.b16 %v388, %v388
    %v405 = vpack.c.b16 %v389, %v389
    %v406 = vpack.c.b16 %v390, %v390
    %v407 = vpack.c.b16 %v391, %v391
    %v408 = vpack.c.b16 %v392, %v392
    %v409 = vpack.c.b16 %v393, %v393
    %v410 = vpack.c.b16 %v394, %v394
    %vm427 = vcmask 60416
    %428 = vst.msk [vmem:[%s4] sm:$0xf] %vm427, %v395
    %429 = vst.msk [vmem:[%s4 + $0x4] sm:$0xf] %vm427, %v396
    %430 = vst.msk [vmem:[%s4 + $0x8] sm:$0xf] %vm427, %v397
    %431 = vst.msk [vmem:[%s4 + $0xc] sm:$0xf] %vm427, %v398
    %432 = vst.msk [vmem:[%s4 + $0x10] sm:$0xf] %vm427, %v399
    %433 = vst.msk [vmem:[%s4 + $0x14] sm:$0xf] %vm427, %v400
    %434 = vst.msk [vmem:[%s4 + $0x18] sm:$0xf] %vm427, %v401
    %435 = vst.msk [vmem:[%s4 + $0x1c] sm:$0xf] %vm427, %v402
    %436 = vst.msk [vmem:[%s4 + $0x20] sm:$0xf] %vm427, %v403
    %437 = vst.msk [vmem:[%s4 + $0x24] sm:$0xf] %vm427, %v404
    %438 = vst.msk [vmem:[%s4 + $0x28] sm:$0xf] %vm427, %v405
    %439 = vst.msk [vmem:[%s4 + $0x2c] sm:$0xf] %vm427, %v406
    %440 = vst.msk [vmem:[%s4 + $0x30] sm:$0xf] %vm427, %v407
    %441 = vst.msk [vmem:[%s4 + $0x34] sm:$0xf] %vm427, %v408
    %442 = vst.msk [vmem:[%s4 + $0x38] sm:$0xf] %vm427, %v409
    %443 = vst.msk [vmem:[%s4 + $0x3c] sm:$0xf] %vm427, %v410
  $region25: #{_lambda_.11} parent=0 // pred_fallthru
    _
  // Predicated region
  $region26: #{_lambda_.11} parent=0 // pred_check
    _
  $region27: #{_lambda_.11} parent=0 // pred_check_branch
    %445 = sbr.rel (0) target = $region29
  $region28: #{_lambda_.11} parent=0 // pred_region
    _
  $region29: #{_lambda_.11} parent=0 // pred_fallthru
    _
  // Predicated region
  $region30: #{_lambda_.11} parent=0 // pred_check
    _
  $region31: #{_lambda_.11} parent=0 // pred_check_branch
    %447 = sbr.rel (0) target = $region33
  $region32: #{_lambda_.11} parent=0 // pred_region
    _
  $region33: #{_lambda_.11} parent=0 // pred_fallthru
    _

// kernel: _lambda_.8
$region0: #{_lambda_.8}
  #allocation0 [shape = 'u32[]', space=smem, size = 0x4, offset = 0x4, fixed_abs, tag = 'smem constant byte address 0x4 - core index']
  #allocation1 [shape = 'u32[144,128]{1,0:T(1,128)}', space=vmem, size = 0x12000, scoped, tag = 'internal scratch']
  #allocation2 [shape = 'f32[288,8]{1,0:T(8,128)}', space=vmem, size = 0x24000, scoped, tag = 'scratch operand']
  %s0 = inlined_call_operand.vmem [shape: bf16[2,342,8], index: 0, kind: input, shape index: {}]
  %s1 = inlined_call_operand.vmem [shape: bf16[9,8,8], index: 1, kind: input, shape index: {}]
  %s2 = inlined_call_operand.vmem [shape: f32[1,8], index: 2, kind: input, shape index: {}]
  %s3 = inlined_call_operand.vmem [shape: f32[1,8], index: 3, kind: input, shape index: {}]
  %s4 = inlined_call_operand.vmem [shape: bf16[2,288,8], index: 4, kind: output, shape index: {}]
  %s5 = sld [smem:[#allocation0]]
  $region49: #{_lambda_.8} parent=0
    _
  %s7 = ssub.s32 1, %s5
  %s8 = scalar_select 0, %s7, %s5
  loop: start=0, step=1, limit=4
  $region2: #{_lambda_.8} parent=0 // loop_pre_header
    _
  $region3: #{_lambda_.8} parent=0 // loop_header
    %s10 = sphi 0, %s14
    %p11 = scmp.ge.s32.totalorder %s10, 4
    %s20 = sphi 0, %s22
    %s23 = sphi 0, %s20
    %s24 = sphi 0, %s23
    %s40 = sphi 0, %s24
    %s44 = sphi 0, %s44
    %s46 = sphi 0, %s44
    %s47 = sphi 0, %s46
    %s61 = sphi 0, %s47
    %s65 = sphi 0, %s65
    %s67 = sphi 0, %s65
    %s68 = sphi 0, %s67
    %s82 = sphi 0, %s68
    %s86 = sphi 0, %s86
    %s88 = sphi 0, %s86
    %s89 = sphi 0, %s88
    %s103 = sphi 0, %s89
    %s109 = sphi 0, %s111
    %s112 = sphi 0, %s109
    %s113 = sphi 0, %s112
    %s129 = sphi 0, %s113
  $region4: #{_lambda_.8} parent=0 // loop_header_branch
    %13 = sbr.rel (%p11) target = $region8
  $region5: #{_lambda_.8} parent=0 // loop_body
    %s15 = ssub.s32 %s10, 1
    %s16 = ssub.s32 %s10, 2
    %s17 = sadd.s32 %s10, 1
    %s18 = ssub.s32 %s10, %s17
    %p19 = scmp.eq.s32.totalorder %s18, 0
    %s21 = sadd.s32 %s20, 1
    %s22 = scalar_select %p19, %s20, %s21
    %p25 = pneg %p19
    %p26 = scmp.eq.s32.totalorder %s10, 1
    %p27 = por %p25, %p26
    %p28 = scmp.ne.s32.totalorder %s20, %s23
    %p29 = scmp.eq.s32.totalorder %s10, 0
    %p30 = por %p28, %p29
    %p31 = scmp.ne.s32.totalorder %s20, %s23
    %p32 = scmp.eq.s32.totalorder %s15, 1
    %p33 = por %p31, %p32
    %p34 = scmp.ne.s32.totalorder %s23, %s24
    %p35 = scmp.eq.s32.totalorder %s15, 0
    %p36 = por %p34, %p35
    %p37 = scmp.ne.s32.totalorder %s23, %s24
    %p38 = scmp.eq.s32.totalorder %s16, 1
    %p39 = por %p37, %p38
    %p41 = scmp.ne.s32.totalorder %s24, %s40
    %p42 = scmp.eq.s32.totalorder %s16, 0
    %p43 = por %p41, %p42
    %s45 = sadd.s32 %s44, 1
    %p48 = scmp.eq.s32.totalorder %s10, 1
    %p49 = scmp.ne.s32.totalorder %s44, %s46
    %p50 = scmp.eq.s32.totalorder %s10, 0
    %p51 = por %p49, %p50
    %p52 = scmp.ne.s32.totalorder %s44, %s46
    %p53 = scmp.eq.s32.totalorder %s15, 1
    %p54 = por %p52, %p53
    %p55 = scmp.ne.s32.totalorder %s46, %s47
    %p56 = scmp.eq.s32.totalorder %s15, 0
    %p57 = por %p55, %p56
    %p58 = scmp.ne.s32.totalorder %s46, %s47
    %p59 = scmp.eq.s32.totalorder %s16, 1
    %p60 = por %p58, %p59
    %p62 = scmp.ne.s32.totalorder %s47, %s61
    %p63 = scmp.eq.s32.totalorder %s16, 0
    %p64 = por %p62, %p63
    %s66 = sadd.s32 %s65, 1
    %p69 = scmp.eq.s32.totalorder %s10, 1
    %p70 = scmp.ne.s32.totalorder %s65, %s67
    %p71 = scmp.eq.s32.totalorder %s10, 0
    %p72 = por %p70, %p71
    %p73 = scmp.ne.s32.totalorder %s65, %s67
    %p74 = scmp.eq.s32.totalorder %s15, 1
    %p75 = por %p73, %p74
    %p76 = scmp.ne.s32.totalorder %s67, %s68
    %p77 = scmp.eq.s32.totalorder %s15, 0
    %p78 = por %p76, %p77
    %p79 = scmp.ne.s32.totalorder %s67, %s68
    %p80 = scmp.eq.s32.totalorder %s16, 1
    %p81 = por %p79, %p80
    %p83 = scmp.ne.s32.totalorder %s68, %s82
    %p84 = scmp.eq.s32.totalorder %s16, 0
    %p85 = por %p83, %p84
    %s87 = sadd.s32 %s86, 1
    %p90 = scmp.eq.s32.totalorder %s10, 1
    %p91 = scmp.ne.s32.totalorder %s86, %s88
    %p92 = scmp.eq.s32.totalorder %s10, 0
    %p93 = por %p91, %p92
    %p94 = scmp.ne.s32.totalorder %s86, %s88
    %p95 = scmp.eq.s32.totalorder %s15, 1
    %p96 = por %p94, %p95
    %p97 = scmp.ne.s32.totalorder %s88, %s89
    %p98 = scmp.eq.s32.totalorder %s15, 0
    %p99 = por %p97, %p98
    %p100 = scmp.ne.s32.totalorder %s88, %s89
    %p101 = scmp.eq.s32.totalorder %s16, 1
    %p102 = por %p100, %p101
    %p104 = scmp.ne.s32.totalorder %s89, %s103
    %p105 = scmp.eq.s32.totalorder %s16, 0
    %p106 = por %p104, %p105
    %s107 = ssub.s32 %s10, %s17
    %p108 = scmp.eq.s32.totalorder %s107, 0
    %s110 = sadd.s32 %s109, 1
    %s111 = scalar_select %p108, %s109, %s110
    %p114 = pneg %p108
    %p115 = scmp.eq.s32.totalorder %s10, 1
    %p116 = por %p114, %p115
    %p117 = scmp.ne.s32.totalorder %s109, %s112
    %p118 = scmp.eq.s32.totalorder %s10, 0
    %p119 = por %p117, %p118
    %p120 = scmp.ne.s32.totalorder %s109, %s112
    %p121 = scmp.eq.s32.totalorder %s15, 1
    %p122 = por %p120, %p121
    %p123 = scmp.ne.s32.totalorder %s112, %s113
    %p124 = scmp.eq.s32.totalorder %s15, 0
    %p125 = por %p123, %p124
    %p126 = scmp.ne.s32.totalorder %s112, %s113
    %p127 = scmp.eq.s32.totalorder %s16, 1
    %p128 = por %p126, %p127
    %p130 = scmp.ne.s32.totalorder %s113, %s129
    %p131 = scmp.eq.s32.totalorder %s16, 0
    %p132 = por %p130, %p131
    %p133 = scmp.le.s32.totalorder 1, %s10
    %p134 = scmp.lt.s32.totalorder %s10, 3
    %p135 = pnand %p133, %p134
    %p136 = pneg %p135
    // Predicated region
    $region9: #{_lambda_.8} parent=5 // pred_check
      _
    $region10: #{_lambda_.8} parent=5 // pred_check_branch
      %138 = sbr.rel (%p135) target = $region12
    $region11: #{_lambda_.8} parent=5 // pred_region
      %s139 = ssub.s32 %s10, 1
      // Predicated region
      $region13: #{_lambda_.8} parent=11 // pred_check
        %p140 = pneg %p57
      $region14: #{_lambda_.8} parent=11 // pred_check_branch
        %142 = sbr.rel (%p140) target = $region16
      $region15: #{_lambda_.8} parent=11 // pred_region
        _
      $region16: #{_lambda_.8} parent=11 // pred_fallthru
        _
      // Predicated region
      $region17: #{_lambda_.8} parent=11 // pred_check
        %p143 = pneg %p78
      $region18: #{_lambda_.8} parent=11 // pred_check_branch
        %145 = sbr.rel (%p143) target = $region20
      $region19: #{_lambda_.8} parent=11 // pred_region
        _
      $region20: #{_lambda_.8} parent=11 // pred_fallthru
        _
      // Predicated region
      $region21: #{_lambda_.8} parent=11 // pred_check
        %p146 = pneg %p99
      $region22: #{_lambda_.8} parent=11 // pred_check_branch
        %148 = sbr.rel (%p146) target = $region24
      $region23: #{_lambda_.8} parent=11 // pred_region
        _
      $region24: #{_lambda_.8} parent=11 // pred_fallthru
        _
    $region12: #{_lambda_.8} parent=5 // pred_fallthru
      _
    %p149 = scmp.lt.s32.totalorder %s10, 2
    // Predicated region
    $region25: #{_lambda_.8} parent=5 // pred_check
      %p150 = pneg %p149
    $region26: #{_lambda_.8} parent=5 // pred_check_branch
      %152 = sbr.rel (%p150) target = $region28
    $region27: #{_lambda_.8} parent=5 // pred_region
      // Predicated region
      $region29: #{_lambda_.8} parent=27 // pred_check
        %p153 = pneg %p30
      $region30: #{_lambda_.8} parent=27 // pred_check_branch
        %155 = sbr.rel (%p153) target = $region32
      $region31: #{_lambda_.8} parent=27 // pred_region
        %p156 = scmp.lt.s32.totalorder %s10, 1
        %s157 = scalar_select %p156, %s10, 1
        %s158 = smul.addr %s157, 43
        %s159 = smul.addr %s158, 4
        %s160 = scalar_lea.vmem %s0, %s159
      $region32: #{_lambda_.8} parent=27 // pred_fallthru
        _
    $region28: #{_lambda_.8} parent=5 // pred_fallthru
      _
    %p161 = scmp.le.s32.totalorder 1, %s10
    %p162 = scmp.lt.s32.totalorder %s10, 3
    %p163 = pnand %p161, %p162
    %p164 = pneg %p163
    // Predicated region
    $region33: #{_lambda_.8} parent=5 // pred_check
      _
    $region34: #{_lambda_.8} parent=5 // pred_check_branch
      %166 = sbr.rel (%p163) target = $region36
    $region35: #{_lambda_.8} parent=5 // pred_region
      %s167 = ssub.s32 %s10, 1
      %p168 = scmp.lt.s32.totalorder %s15, 1
      %s169 = scalar_select %p168, %s15, 1
      %s170 = smul.addr %s169, 43
      %s171 = smul.addr %s170, 4
      %s172 = scalar_lea.vmem %s0, %s171
      %p173 = pneg %p36
      %p174 = pneg %p33
      %p175 = pneg %p57
      %p176 = pneg %p54
      %p177 = pneg %p78
      %p178 = pneg %p75
      %p179 = pneg %p99
      %p180 = pneg %p96
      %p181 = pneg %p125
      %p182 = pneg %p122
      %p183 = scmp.lt.s32.totalorder %s15, 1
      %s184 = scalar_select %p183, %s15, 1
      %s185 = smul.addr %s184, 36
      %s186 = smul.addr %s185, 4
      %s187 = scalar_lea.vmem %s4, %s186
      %p188 = scmp.lt.s32.totalorder %s15, 1
      %s189 = scalar_select %p188, %s15, 1
      %s190 = smul.addr %s189, 43
      %s191 = smul.addr %s190, 4
      %s192 = scalar_lea.vmem %s0, %s191
      %p193 = scmp.lt.s32.totalorder %s15, 1
      %s194 = scalar_select %p193, %s15, 1
      %s195 = smul.addr %s194, 36
      %s196 = smul.addr %s195, 4
      %s197 = scalar_lea.vmem %s4, %s196
      %vm199 = vcmask 64512
      %200 = vst.msk [vmem:[#allocation2] sm:$0xff] %vm199, 0.0
      %201 = vst.msk [vmem:[#allocation2 + $0x8] sm:$0xff] %vm199, 0.0
      %202 = vst.msk [vmem:[#allocation2 + $0x10] sm:$0xff] %vm199, 0.0
      %203 = vst.msk [vmem:[#allocation2 + $0x18] sm:$0xff] %vm199, 0.0
      %204 = vst.msk [vmem:[#allocation2 + $0x20] sm:$0xff] %vm199, 0.0
      %205 = vst.msk [vmem:[#allocation2 + $0x28] sm:$0xff] %vm199, 0.0
      %206 = vst.msk [vmem:[#allocation2 + $0x30] sm:$0xff] %vm199, 0.0
      %207 = vst.msk [vmem:[#allocation2 + $0x38] sm:$0xff] %vm199, 0.0
      %208 = vst.msk [vmem:[#allocation2 + $0x40] sm:$0xff] %vm199, 0.0
      %209 = vst.msk [vmem:[#allocation2 + $0x48] sm:$0xff] %vm199, 0.0
      %210 = vst.msk [vmem:[#allocation2 + $0x50] sm:$0xff] %vm199, 0.0
      %211 = vst.msk [vmem:[#allocation2 + $0x58] sm:$0xff] %vm199, 0.0
      %212 = vst.msk [vmem:[#allocation2 + $0x60] sm:$0xff] %vm199, 0.0
      %213 = vst.msk [vmem:[#allocation2 + $0x68] sm:$0xff] %vm199, 0.0
      %214 = vst.msk [vmem:[#allocation2 + $0x70] sm:$0xff] %vm199, 0.0
      %215 = vst.msk [vmem:[#allocation2 + $0x78] sm:$0xff] %vm199, 0.0
      %216 = vst.msk [vmem:[#allocation2 + $0x80] sm:$0xff] %vm199, 0.0
      %217 = vst.msk [vmem:[#allocation2 + $0x88] sm:$0xff] %vm199, 0.0
      %218 = vst.msk [vmem:[#allocation2 + $0x90] sm:$0xff] %vm199, 0.0
      %219 = vst.msk [vmem:[#allocation2 + $0x98] sm:$0xff] %vm199, 0.0
      %220 = vst.msk [vmem:[#allocation2 + $0xa0] sm:$0xff] %vm199, 0.0
      %221 = vst.msk [vmem:[#allocation2 + $0xa8] sm:$0xff] %vm199, 0.0
      %222 = vst.msk [vmem:[#allocation2 + $0xb0] sm:$0xff] %vm199, 0.0
      %223 = vst.msk [vmem:[#allocation2 + $0xb8] sm:$0xff] %vm199, 0.0
      %224 = vst.msk [vmem:[#allocation2 + $0xc0] sm:$0xff] %vm199, 0.0
      %225 = vst.msk [vmem:[#allocation2 + $0xc8] sm:$0xff] %vm199, 0.0
      %226 = vst.msk [vmem:[#allocation2 + $0xd0] sm:$0xff] %vm199, 0.0
      %227 = vst.msk [vmem:[#allocation2 + $0xd8] sm:$0xff] %vm199, 0.0
      %228 = vst.msk [vmem:[#allocation2 + $0xe0] sm:$0xff] %vm199, 0.0
      %229 = vst.msk [vmem:[#allocation2 + $0xe8] sm:$0xff] %vm199, 0.0
      %230 = vst.msk [vmem:[#allocation2 + $0xf0] sm:$0xff] %vm199, 0.0
      %231 = vst.msk [vmem:[#allocation2 + $0xf8] sm:$0xff] %vm199, 0.0
      %232 = vst.msk [vmem:[#allocation2 + $0x100] sm:$0xff] %vm199, 0.0
      %233 = vst.msk [vmem:[#allocation2 + $0x108] sm:$0xff] %vm199, 0.0
      %234 = vst.msk [vmem:[#allocation2 + $0x110] sm:$0xff] %vm199, 0.0
      %235 = vst.msk [vmem:[#allocation2 + $0x118] sm:$0xff] %vm199, 0.0
      %v236 = vld [vmem:[%s192] sm:$0xf]
      %v237 = vld [vmem:[%s192 + $0x4] sm:$0xf]
      %v238 = vld [vmem:[%s192 + $0x8] sm:$0xf]
      %v239 = vld [vmem:[%s192 + $0xc] sm:$0xf]
      %v240 = vld [vmem:[%s192 + $0x10] sm:$0xf]
      %v241 = vld [vmem:[%s192 + $0x14] sm:$0xf]
      %v242 = vld [vmem:[%s192 + $0x18] sm:$0xf]
      %v243 = vld [vmem:[%s192 + $0x1c] sm:$0xf]
      %v244 = vld [vmem:[%s192 + $0x20] sm:$0xf]
      %v245 = vld [vmem:[%s192 + $0x24] sm:$0xf]
      %v246 = vld [vmem:[%s192 + $0x28] sm:$0xf]
      %v247 = vld [vmem:[%s192 + $0x2c] sm:$0xf]
      %v248 = vld [vmem:[%s192 + $0x30] sm:$0xf]
      %v249 = vld [vmem:[%s192 + $0x34] sm:$0xf]
      %v250 = vld [vmem:[%s192 + $0x38] sm:$0xf]
      %v251 = vld [vmem:[%s192 + $0x3c] sm:$0xf]
      %v252 = vld [vmem:[%s192 + $0x40] sm:$0xf]
      %v253 = vld [vmem:[%s192 + $0x44] sm:$0xf]
      %v254 = vld [vmem:[%s192 + $0x48] sm:$0xf]
      %v255 = vld [vmem:[%s192 + $0x4c] sm:$0xf]
      %v256 = vld [vmem:[%s192 + $0x50] sm:$0xf]
      %v257 = vld [vmem:[%s192 + $0x54] sm:$0xf]
      %v258 = vld [vmem:[%s192 + $0x58] sm:$0xf]
      %v259 = vld [vmem:[%s192 + $0x5c] sm:$0xf]
      %v260 = vld [vmem:[%s192 + $0x60] sm:$0xf]
      %v261 = vld [vmem:[%s192 + $0x64] sm:$0xf]
      %v262 = vld [vmem:[%s192 + $0x68] sm:$0xf]
      %v263 = vld [vmem:[%s192 + $0x6c] sm:$0xf]
      %v264 = vld [vmem:[%s192 + $0x70] sm:$0xf]
      %v265 = vld [vmem:[%s192 + $0x74] sm:$0xf]
      %v266 = vld [vmem:[%s192 + $0x78] sm:$0xf]
      %v267 = vld [vmem:[%s192 + $0x7c] sm:$0xf]
      %v268 = vld [vmem:[%s192 + $0x80] sm:$0xf]
      %v269 = vld [vmem:[%s192 + $0x84] sm:$0xf]
      %v270 = vld [vmem:[%s192 + $0x88] sm:$0xf]
      %v271 = vld [vmem:[%s192 + $0x8c] sm:$0xf]
      %v272 = vld [vmem:[#allocation2] sm:$0xff]
      %v273 = vld [vmem:[#allocation2 + $0x8] sm:$0xff]
      %v274 = vld [vmem:[#allocation2 + $0x10] sm:$0xff]
      %v275 = vld [vmem:[#allocation2 + $0x18] sm:$0xff]
      %v276 = vld [vmem:[#allocation2 + $0x20] sm:$0xff]
      %v277 = vld [vmem:[#allocation2 + $0x28] sm:$0xff]
      %v278 = vld [vmem:[#allocation2 + $0x30] sm:$0xff]
      %v279 = vld [vmem:[#allocation2 + $0x38] sm:$0xff]
      %v280 = vld [vmem:[#allocation2 + $0x40] sm:$0xff]
      %v281 = vld [vmem:[#allocation2 + $0x48] sm:$0xff]
      %v282 = vld [vmem:[#allocation2 + $0x50] sm:$0xff]
      %v283 = vld [vmem:[#allocation2 + $0x58] sm:$0xff]
      %v284 = vld [vmem:[#allocation2 + $0x60] sm:$0xff]
      %v285 = vld [vmem:[#allocation2 + $0x68] sm:$0xff]
      %v286 = vld [vmem:[#allocation2 + $0x70] sm:$0xff]
      %v287 = vld [vmem:[#allocation2 + $0x78] sm:$0xff]
      %v288 = vld [vmem:[#allocation2 + $0x80] sm:$0xff]
      %v289 = vld [vmem:[#allocation2 + $0x88] sm:$0xff]
      %v290 = vld [vmem:[#allocation2 + $0x90] sm:$0xff]
      %v291 = vld [vmem:[#allocation2 + $0x98] sm:$0xff]
      %v292 = vld [vmem:[#allocation2 + $0xa0] sm:$0xff]
      %v293 = vld [vmem:[#allocation2 + $0xa8] sm:$0xff]
      %v294 = vld [vmem:[#allocation2 + $0xb0] sm:$0xff]
      %v295 = vld [vmem:[#allocation2 + $0xb8] sm:$0xff]
      %v296 = vld [vmem:[#allocation2 + $0xc0] sm:$0xff]
      %v297 = vld [vmem:[#allocation2 + $0xc8] sm:$0xff]
      %v298 = vld [vmem:[#allocation2 + $0xd0] sm:$0xff]
      %v299 = vld [vmem:[#allocation2 + $0xd8] sm:$0xff]
      %v300 = vld [vmem:[#allocation2 + $0xe0] sm:$0xff]
      %v301 = vld [vmem:[#allocation2 + $0xe8] sm:$0xff]
      %v302 = vld [vmem:[#allocation2 + $0xf0] sm:$0xff]
      %v303 = vld [vmem:[#allocation2 + $0xf8] sm:$0xff]
      %v304 = vld [vmem:[#allocation2 + $0x100] sm:$0xff]
      %v305 = vld [vmem:[#allocation2 + $0x108] sm:$0xff]
      %v306 = vld [vmem:[#allocation2 + $0x110] sm:$0xff]
      %v307 = vld [vmem:[#allocation2 + $0x118] sm:$0xff]
      %v308 = vld [vmem:[%s1] sm:$0xf]
      %v345 = vunpack.c.l.b16 %v236
      %v346 = vunpack.c.l.b16 %v237
      %v347 = vunpack.c.l.b16 %v238
      %v348 = vunpack.c.l.b16 %v239
      %v349 = vunpack.c.l.b16 %v240
      %v350 = vunpack.c.l.b16 %v241
      %v351 = vunpack.c.l.b16 %v242
      %v352 = vunpack.c.l.b16 %v243
      %v353 = vunpack.c.l.b16 %v244
      %v354 = vunpack.c.l.b16 %v245
      %v355 = vunpack.c.l.b16 %v246
      %v356 = vunpack.c.l.b16 %v247
      %v357 = vunpack.c.l.b16 %v248
      %v358 = vunpack.c.l.b16 %v249
      %v359 = vunpack.c.l.b16 %v250
      %v360 = vunpack.c.l.b16 %v251
      %v361 = vunpack.c.l.b16 %v252
      %v362 = vunpack.c.l.b16 %v253
      %v363 = vunpack.c.l.b16 %v254
      %v364 = vunpack.c.l.b16 %v255
      %v365 = vunpack.c.l.b16 %v256
      %v366 = vunpack.c.l.b16 %v257
      %v367 = vunpack.c.l.b16 %v258
      %v368 = vunpack.c.l.b16 %v259
      %v369 = vunpack.c.l.b16 %v260
      %v370 = vunpack.c.l.b16 %v261
      %v371 = vunpack.c.l.b16 %v262
      %v372 = vunpack.c.l.b16 %v263
      %v373 = vunpack.c.l.b16 %v264
      %v374 = vunpack.c.l.b16 %v265
      %v375 = vunpack.c.l.b16 %v266
      %v376 = vunpack.c.l.b16 %v267
      %v377 = vunpack.c.l.b16 %v268
      %v378 = vunpack.c.l.b16 %v269
      %v379 = vunpack.c.l.b16 %v270
      %v380 = vunpack.c.l.b16 %v271
      %v381 = vpack.c.b16 %v346, %v345
      %v382 = vpack.c.b16 %v348, %v347
      %v383 = vpack.c.b16 %v350, %v349
      %v384 = vpack.c.b16 %v352, %v351
      %v385 = vpack.c.b16 %v354, %v353
      %v386 = vpack.c.b16 %v356, %v355
      %v387 = vpack.c.b16 %v358, %v357
      %v388 = vpack.c.b16 %v360, %v359
      %v389 = vpack.c.b16 %v362, %v361
      %v390 = vpack.c.b16 %v364, %v363
      %v391 = vpack.c.b16 %v366, %v365
      %v392 = vpack.c.b16 %v368, %v367
      %v393 = vpack.c.b16 %v370, %v369
      %v394 = vpack.c.b16 %v372, %v371
      %v395 = vpack.c.b16 %v374, %v373
      %v396 = vpack.c.b16 %v376, %v375
      %v397 = vpack.c.b16 %v378, %v377
      %v398 = vpack.c.b16 %v380, %v379
      %v400 = vsel %vm199, %v381, 0
      %v403 = vsel %vm199, %v382, 0
      %v406 = vsel %vm199, %v383, 0
      %v409 = vsel %vm199, %v384, 0
      %v412 = vsel %vm199, %v385, 0
      %v415 = vsel %vm199, %v386, 0
      %v418 = vsel %vm199, %v387, 0
      %v421 = vsel %vm199, %v388, 0
      %v424 = vsel %vm199, %v389, 0
      %v427 = vsel %vm199, %v390, 0
      %v430 = vsel %vm199, %v391, 0
      %v433 = vsel %vm199, %v392, 0
      %v436 = vsel %vm199, %v393, 0
      %v439 = vsel %vm199, %v394, 0
      %v442 = vsel %vm199, %v395, 0
      %v445 = vsel %vm199, %v396, 0
      %v448 = vsel %vm199, %v397, 0
      %v451 = vsel %vm199, %v398, 0
      %vm453 = vcmask 1043456
      %v455 = vsel %vm453, %v308, 0
      %457 = vmatprep.subr.bf16.mxu0 0
      %458 = vmatpush1.bf16.msra.mxu0 %v455
      %459 = vmatprep.subr.bf16.mxu0 0
      %460 = vmatpush1.bf16.msra.mxu0 0
      %461 = vmatprep.subr.bf16.mxu0 0
      %462 = vmatpush1.bf16.msra.mxu0 0
      %463 = vmatprep.subr.bf16.mxu0 0
      %464 = vmatpush1.bf16.msra.mxu0 0
      %465 = vmatprep.subr.bf16.mxu0 0
      %466 = vmatpush1.bf16.msra.mxu0 0
      %467 = vmatprep.subr.bf16.mxu0 0
      %468 = vmatpush1.bf16.msra.mxu0 0
      %469 = vmatprep.subr.bf16.mxu0 0
      %470 = vmatpush1.bf16.msra.mxu0 0
      %471 = vmatprep.subr.bf16.mxu0 0
      %472 = vmatpush1.bf16.msra.mxu0 0
      %473 = vmatprep.subr.bf16.mxu0 0
      %474 = vmatpush1.bf16.msra.mxu0 0
      %475 = vmatprep.subr.bf16.mxu0 0
      %476 = vmatpush1.bf16.msra.mxu0 0
      %477 = vmatprep.subr.bf16.mxu0 0
      %478 = vmatpush1.bf16.msra.mxu0 0
      %479 = vmatprep.subr.bf16.mxu0 0
      %480 = vmatpush1.bf16.msra.mxu0 0
      %481 = vmatprep.subr.bf16.mxu0 0
      %482 = vmatpush1.bf16.msra.mxu0 0
      %483 = vmatprep.subr.bf16.mxu0 0
      %484 = vmatpush1.bf16.msra.mxu0 0
      %485 = vmatprep.subr.bf16.mxu0 0
      %486 = vmatpush1.bf16.msra.mxu0 0
      %487 = vmatprep.subr.bf16.mxu0 0
      %488 = vmatpush1.bf16.msra.mxu0 0
      %489 = vmatprep.mubr.bf16.mxu0 0
      %490 = vmatmul.mubr.bf16.gmra.mrb[0].mxu0 %v400
      %v491 = vpop.f32.mrb[0].mxu0
      %v492 = vadd.f32 0.0, %v491
      %v493 = vpop.f32.mrb[0].mxu0
      %v494 = vpop.f32.mrb[0].mxu0
      %v495 = vadd.f32 0.0, %v494
      %v496 = vpop.f32.mrb[0].mxu0
      %497 = vmatprep.mubr.bf16.mxu0 0
      %498 = vmatmul.mubr.bf16.gmra.mrb[0].mxu0 %v403
      %v499 = vpop.f32.mrb[0].mxu0
      %v500 = vadd.f32 0.0, %v499
      %v501 = vpop.f32.mrb[0].mxu0
      %v502 = vpop.f32.mrb[0].mxu0
      %v503 = vadd.f32 0.0, %v502
      %v504 = vpop.f32.mrb[0].mxu0
      %505 = vmatprep.mubr.bf16.mxu0 0
      %506 = vmatmul.mubr.bf16.gmra.mrb[0].mxu0 %v406
      %v507 = vpop.f32.mrb[0].mxu0
      %v508 = vadd.f32 0.0, %v507
      %v509 = vpop.f32.mrb[0].mxu0
      %v510 = vpop.f32.mrb[0].mxu0
      %v511 = vadd.f32 0.0, %v510
      %v512 = vpop.f32.mrb[0].mxu0
      %513 = vmatprep.mubr.bf16.mxu0 0
      %514 = vmatmul.mubr.bf16.gmra.mrb[0].mxu0 %v409
      %v515 = vpop.f32.mrb[0].mxu0
      %v516 = vadd.f32 0.0, %v515
      %v517 = vpop.f32.mrb[0].mxu0
      %v518 = vpop.f32.mrb[0].mxu0
      %v519 = vadd.f32 0.0, %v518
      %v520 = vpop.f32.mrb[0].mxu0
      %521 = vmatprep.mubr.bf16.mxu0 0
      %522 = vmatmul.mubr.bf16.gmra.mrb[0].mxu0 %v412
      %v523 = vpop.f32.mrb[0].mxu0
      %v524 = vadd.f32 0.0, %v523
      %v525 = vpop.f32.mrb[0].mxu0
      %v526 = vpop.f32.mrb[0].mxu0
      %v527 = vadd.f32 0.0, %v526
      %v528 = vpop.f32.mrb[0].mxu0
      %529 = vmatprep.mubr.bf16.mxu0 0
      %530 = vmatmul.mubr.bf16.gmra.mrb[0].mxu0 %v415
      %v531 = vpop.f32.mrb[0].mxu0
      %v532 = vadd.f32 0.0, %v531
      %v533 = vpop.f32.mrb[0].mxu0
      %v534 = vpop.f32.mrb[0].mxu0
      %v535 = vadd.f32 0.0, %v534
      %v536 = vpop.f32.mrb[0].mxu0
      %537 = vmatprep.mubr.bf16.mxu0 0
      %538 = vmatmul.mubr.bf16.gmra.mrb[0].mxu0 %v418
      %v539 = vpop.f32.mrb[0].mxu0
      %v540 = vadd.f32 0.0, %v539
      %v541 = vpop.f32.mrb[0].mxu0
      %v542 = vpop.f32.mrb[0].mxu0
      %v543 = vadd.f32 0.0, %v542
      %v544 = vpop.f32.mrb[0].mxu0
      %545 = vmatprep.mubr.bf16.mxu0 0
      %546 = vmatmul.mubr.bf16.gmra.mrb[0].mxu0 %v421
      %v547 = vpop.f32.mrb[0].mxu0
      %v548 = vadd.f32 0.0, %v547
      %v549 = vpop.f32.mrb[0].mxu0
      %v550 = vpop.f32.mrb[0].mxu0
      %v551 = vadd.f32 0.0, %v550
      %v552 = vpop.f32.mrb[0].mxu0
      %553 = vmatprep.mubr.bf16.mxu0 0
      %554 = vmatmul.mubr.bf16.gmra.mrb[0].mxu0 %v424
      %v555 = vpop.f32.mrb[0].mxu0
      %v556 = vadd.f32 0.0, %v555
      %v557 = vpop.f32.mrb[0].mxu0
      %v558 = vpop.f32.mrb[0].mxu0
      %v559 = vadd.f32 0.0, %v558
      %v560 = vpop.f32.mrb[0].mxu0
      %561 = vmatprep.mubr.bf16.mxu0 0
      %562 = vmatmul.mubr.bf16.gmra.mrb[0].mxu0 %v427
      %v563 = vpop.f32.mrb[0].mxu0
      %v564 = vadd.f32 0.0, %v563
      %v565 = vpop.f32.mrb[0].mxu0
      %v566 = vpop.f32.mrb[0].mxu0
      %v567 = vadd.f32 0.0, %v566
      %v568 = vpop.f32.mrb[0].mxu0
      %569 = vmatprep.mubr.bf16.mxu0 0
      %570 = vmatmul.mubr.bf16.gmra.mrb[0].mxu0 %v430
      %v571 = vpop.f32.mrb[0].mxu0
      %v572 = vadd.f32 0.0, %v571
      %v573 = vpop.f32.mrb[0].mxu0
      %v574 = vpop.f32.mrb[0].mxu0
      %v575 = vadd.f32 0.0, %v574
      %v576 = vpop.f32.mrb[0].mxu0
      %577 = vmatprep.mubr.bf16.mxu0 0
      %578 = vmatmul.mubr.bf16.gmra.mrb[0].mxu0 %v433
      %v579 = vpop.f32.mrb[0].mxu0
      %v580 = vadd.f32 0.0, %v579
      %v581 = vpop.f32.mrb[0].mxu0
      %v582 = vpop.f32.mrb[0].mxu0
      %v583 = vadd.f32 0.0, %v582
      %v584 = vpop.f32.mrb[0].mxu0
      %585 = vmatprep.mubr.bf16.mxu0 0
      %586 = vmatmul.mubr.bf16.gmra.mrb[0].mxu0 %v436
      %v587 = vpop.f32.mrb[0].mxu0
      %v588 = vadd.f32 0.0, %v587
      %v589 = vpop.f32.mrb[0].mxu0
      %v590 = vpop.f32.mrb[0].mxu0
      %v591 = vadd.f32 0.0, %v590
      %v592 = vpop.f32.mrb[0].mxu0
      %593 = vmatprep.mubr.bf16.mxu0 0
      %594 = vmatmul.mubr.bf16.gmra.mrb[0].mxu0 %v439
      %v595 = vpop.f32.mrb[0].mxu0
      %v596 = vadd.f32 0.0, %v595
      %v597 = vpop.f32.mrb[0].mxu0
      %v598 = vpop.f32.mrb[0].mxu0
      %v599 = vadd.f32 0.0, %v598
      %v600 = vpop.f32.mrb[0].mxu0
      %601 = vmatprep.mubr.bf16.mxu0 0
      %602 = vmatmul.mubr.bf16.gmra.mrb[0].mxu0 %v442
      %v603 = vpop.f32.mrb[0].mxu0
      %v604 = vadd.f32 0.0, %v603
      %v605 = vpop.f32.mrb[0].mxu0
      %v606 = vpop.f32.mrb[0].mxu0
      %v607 = vadd.f32 0.0, %v606
      %v608 = vpop.f32.mrb[0].mxu0
      %609 = vmatprep.mubr.bf16.mxu0 0
      %610 = vmatmul.mubr.bf16.gmra.mrb[0].mxu0 %v445
      %v611 = vpop.f32.mrb[0].mxu0
      %v612 = vadd.f32 0.0, %v611
      %v613 = vpop.f32.mrb[0].mxu0
      %v614 = vpop.f32.mrb[0].mxu0
      %v615 = vadd.f32 0.0, %v614
      %v616 = vpop.f32.mrb[0].mxu0
      %617 = vmatprep.mubr.bf16.mxu0 0
      %618 = vmatmul.mubr.bf16.gmra.mrb[0].mxu0 %v448
      %v619 = vpop.f32.mrb[0].mxu0
      %v620 = vadd.f32 0.0, %v619
      %v621 = vpop.f32.mrb[0].mxu0
      %v622 = vpop.f32.mrb[0].mxu0
      %v623 = vadd.f32 0.0, %v622
      %v624 = vpop.f32.mrb[0].mxu0
      %625 = vmatprep.mubr.bf16.mxu0 0
      %626 = vmatmul.mubr.bf16.gmra.mrb[0].mxu0 %v451
      %v627 = vpop.f32.mrb[0].mxu0
      %v628 = vadd.f32 0.0, %v627
      %v629 = vpop.f32.mrb[0].mxu0
      %v630 = vpop.f32.mrb[0].mxu0
      %v631 = vadd.f32 0.0, %v630
      %v632 = vpop.f32.mrb[0].mxu0
      %633 = vdwg.mxu0
      %v634 = vadd.f32 %v272, %v492
      %v635 = vadd.f32 %v273, %v495
      %v636 = vadd.f32 %v274, %v500
      %v637 = vadd.f32 %v275, %v503
      %v638 = vadd.f32 %v276, %v508
      %v639 = vadd.f32 %v277, %v511
      %v640 = vadd.f32 %v278, %v516
      %v641 = vadd.f32 %v279, %v519
      %v642 = vadd.f32 %v280, %v524
      %v643 = vadd.f32 %v281, %v527
      %v644 = vadd.f32 %v282, %v532
      %v645 = vadd.f32 %v283, %v535
      %v646 = vadd.f32 %v284, %v540
      %v647 = vadd.f32 %v285, %v543
      %v648 = vadd.f32 %v286, %v548
      %v649 = vadd.f32 %v287, %v551
      %v650 = vadd.f32 %v288, %v556
      %v651 = vadd.f32 %v289, %v559
      %v652 = vadd.f32 %v290, %v564
      %v653 = vadd.f32 %v291, %v567
      %v654 = vadd.f32 %v292, %v572
      %v655 = vadd.f32 %v293, %v575
      %v656 = vadd.f32 %v294, %v580
      %v657 = vadd.f32 %v295, %v583
      %v658 = vadd.f32 %v296, %v588
      %v659 = vadd.f32 %v297, %v591
      %v660 = vadd.f32 %v298, %v596
      %v661 = vadd.f32 %v299, %v599
      %v662 = vadd.f32 %v300, %v604
      %v663 = vadd.f32 %v301, %v607
      %v664 = vadd.f32 %v302, %v612
      %v665 = vadd.f32 %v303, %v615
      %v666 = vadd.f32 %v304, %v620
      %v667 = vadd.f32 %v305, %v623
      %v668 = vadd.f32 %v306, %v628
      %v669 = vadd.f32 %v307, %v631
      %670 = vst.msk [vmem:[#allocation2] sm:$0xff] %vm199, %v634
      %671 = vst.msk [vmem:[#allocation2 + $0x8] sm:$0xff] %vm199, %v635
      %672 = vst.msk [vmem:[#allocation2 + $0x10] sm:$0xff] %vm199, %v636
      %673 = vst.msk [vmem:[#allocation2 + $0x18] sm:$0xff] %vm199, %v637
      %674 = vst.msk [vmem:[#allocation2 + $0x20] sm:$0xff] %vm199, %v638
      %675 = vst.msk [vmem:[#allocation2 + $0x28] sm:$0xff] %vm199, %v639
      %676 = vst.msk [vmem:[#allocation2 + $0x30] sm:$0xff] %vm199, %v640
      %677 = vst.msk [vmem:[#allocation2 + $0x38] sm:$0xff] %vm199, %v641
      %678 = vst.msk [vmem:[#allocation2 + $0x40] sm:$0xff] %vm199, %v642
      %679 = vst.msk [vmem:[#allocation2 + $0x48] sm:$0xff] %vm199, %v643
      %680 = vst.msk [vmem:[#allocation2 + $0x50] sm:$0xff] %vm199, %v644
      %681 = vst.msk [vmem:[#allocation2 + $0x58] sm:$0xff] %vm199, %v645
      %682 = vst.msk [vmem:[#allocation2 + $0x60] sm:$0xff] %vm199, %v646
      %683 = vst.msk [vmem:[#allocation2 + $0x68] sm:$0xff] %vm199, %v647
      %684 = vst.msk [vmem:[#allocation2 + $0x70] sm:$0xff] %vm199, %v648
      %685 = vst.msk [vmem:[#allocation2 + $0x78] sm:$0xff] %vm199, %v649
      %686 = vst.msk [vmem:[#allocation2 + $0x80] sm:$0xff] %vm199, %v650
      %687 = vst.msk [vmem:[#allocation2 + $0x88] sm:$0xff] %vm199, %v651
      %688 = vst.msk [vmem:[#allocation2 + $0x90] sm:$0xff] %vm199, %v652
      %689 = vst.msk [vmem:[#allocation2 + $0x98] sm:$0xff] %vm199, %v653
      %690 = vst.msk [vmem:[#allocation2 + $0xa0] sm:$0xff] %vm199, %v654
      %691 = vst.msk [vmem:[#allocation2 + $0xa8] sm:$0xff] %vm199, %v655
      %692 = vst.msk [vmem:[#allocation2 + $0xb0] sm:$0xff] %vm199, %v656
      %693 = vst.msk [vmem:[#allocation2 + $0xb8] sm:$0xff] %vm199, %v657
      %694 = vst.msk [vmem:[#allocation2 + $0xc0] sm:$0xff] %vm199, %v658
      %695 = vst.msk [vmem:[#allocation2 + $0xc8] sm:$0xff] %vm199, %v659
      %696 = vst.msk [vmem:[#allocation2 + $0xd0] sm:$0xff] %vm199, %v660
      %697 = vst.msk [vmem:[#allocation2 + $0xd8] sm:$0xff] %vm199, %v661
      %698 = vst.msk [vmem:[#allocation2 + $0xe0] sm:$0xff] %vm199, %v662
      %699 = vst.msk [vmem:[#allocation2 + $0xe8] sm:$0xff] %vm199, %v663
      %700 = vst.msk [vmem:[#allocation2 + $0xf0] sm:$0xff] %vm199, %v664
      %701 = vst.msk [vmem:[#allocation2 + $0xf8] sm:$0xff] %vm199, %v665
      %702 = vst.msk [vmem:[#allocation2 + $0x100] sm:$0xff] %vm199, %v666
      %703 = vst.msk [vmem:[#allocation2 + $0x108] sm:$0xff] %vm199, %v667
      %704 = vst.msk [vmem:[#allocation2 + $0x110] sm:$0xff] %vm199, %v668
      %705 = vst.msk [vmem:[#allocation2 + $0x118] sm:$0xff] %vm199, %v669
      %v706 = vld [vmem:[%s192] sm:$0xf]
      %v707 = vld [vmem:[%s192 + $0x4] sm:$0xf]
      %v708 = vld [vmem:[%s192 + $0x8] sm:$0xf]
      %v709 = vld [vmem:[%s192 + $0xc] sm:$0xf]
      %v710 = vld [vmem:[%s192 + $0x10] sm:$0xf]
      %v711 = vld [vmem:[%s192 + $0x14] sm:$0xf]
      %v712 = vld [vmem:[%s192 + $0x18] sm:$0xf]
      %v713 = vld [vmem:[%s192 + $0x1c] sm:$0xf]
      %v714 = vld [vmem:[%s192 + $0x20] sm:$0xf]
      %v715 = vld [vmem:[%s192 + $0x24] sm:$0xf]
      %v716 = vld [vmem:[%s192 + $0x28] sm:$0xf]
      %v717 = vld [vmem:[%s192 + $0x2c] sm:$0xf]
      %v718 = vld [vmem:[%s192 + $0x30] sm:$0xf]
      %v719 = vld [vmem:[%s192 + $0x34] sm:$0xf]
      %v720 = vld [vmem:[%s192 + $0x38] sm:$0xf]
      %v721 = vld [vmem:[%s192 + $0x3c] sm:$0xf]
      %v722 = vld [vmem:[%s192 + $0x40] sm:$0xf]
      %v723 = vld [vmem:[%s192 + $0x44] sm:$0xf]
      %v724 = vld [vmem:[%s192 + $0x48] sm:$0xf]
      %v725 = vld [vmem:[%s192 + $0x4c] sm:$0xf]
      %v726 = vld [vmem:[%s192 + $0x50] sm:$0xf]
      %v727 = vld [vmem:[%s192 + $0x54] sm:$0xf]
      %v728 = vld [vmem:[%s192 + $0x58] sm:$0xf]
      %v729 = vld [vmem:[%s192 + $0x5c] sm:$0xf]
      %v730 = vld [vmem:[%s192 + $0x60] sm:$0xf]
      %v731 = vld [vmem:[%s192 + $0x64] sm:$0xf]
      %v732 = vld [vmem:[%s192 + $0x68] sm:$0xf]
      %v733 = vld [vmem:[%s192 + $0x6c] sm:$0xf]
      %v734 = vld [vmem:[%s192 + $0x70] sm:$0xf]
      %v735 = vld [vmem:[%s192 + $0x74] sm:$0xf]
      %v736 = vld [vmem:[%s192 + $0x78] sm:$0xf]
      %v737 = vld [vmem:[%s192 + $0x7c] sm:$0xf]
      %v738 = vld [vmem:[%s192 + $0x80] sm:$0xf]
      %v739 = vld [vmem:[%s192 + $0x84] sm:$0xf]
      %v740 = vld [vmem:[%s192 + $0x88] sm:$0xf]
      %v741 = vld [vmem:[%s192 + $0x8c] sm:$0xf]
      %v742 = vld [vmem:[%s192 + $0x90] sm:$0x1]
      %v743 = vld [vmem:[#allocation2] sm:$0xff]
      %v744 = vld [vmem:[#allocation2 + $0x8] sm:$0xff]
      %v745 = vld [vmem:[#allocation2 + $0x10] sm:$0xff]
      %v746 = vld [vmem:[#allocation2 + $0x18] sm:$0xff]
      %v747 = vld [vmem:[#allocation2 + $0x20] sm:$0xff]
      %v748 = vld [vmem:[#allocation2 + $0x28] sm:$0xff]
      %v749 = vld [vmem:[#allocation2 + $0x30] sm:$0xff]
      %v750 = vld [vmem:[#allocation2 + $0x38] sm:$0xff]
      %v751 = vld [vmem:[#allocation2 + $0x40] sm:$0xff]
      %v752 = vld [vmem:[#allocation2 + $0x48] sm:$0xff]
      %v753 = vld [vmem:[#allocation2 + $0x50] sm:$0xff]
      %v754 = vld [vmem:[#allocation2 + $0x58] sm:$0xff]
      %v755 = vld [vmem:[#allocation2 + $0x60] sm:$0xff]
      %v756 = vld [vmem:[#allocation2 + $0x68] sm:$0xff]
      %v757 = vld [vmem:[#allocation2 + $0x70] sm:$0xff]
      %v758 = vld [vmem:[#allocation2 + $0x78] sm:$0xff]
      %v759 = vld [vmem:[#allocation2 + $0x80] sm:$0xff]
      %v760 = vld [vmem:[#allocation2 + $0x88] sm:$0xff]
      %v761 = vld [vmem:[#allocation2 + $0x90] sm:$0xff]
      %v762 = vld [vmem:[#allocation2 + $0x98] sm:$0xff]
      %v763 = vld [vmem:[#allocation2 + $0xa0] sm:$0xff]
      %v764 = vld [vmem:[#allocation2 + $0xa8] sm:$0xff]
      %v765 = vld [vmem:[#allocation2 + $0xb0] sm:$0xff]
      %v766 = vld [vmem:[#allocation2 + $0xb8] sm:$0xff]
      %v767 = vld [vmem:[#allocation2 + $0xc0] sm:$0xff]
      %v768 = vld [vmem:[#allocation2 + $0xc8] sm:$0xff]
      %v769 = vld [vmem:[#allocation2 + $0xd0] sm:$0xff]
      %v770 = vld [vmem:[#allocation2 + $0xd8] sm:$0xff]
      %v771 = vld [vmem:[#allocation2 + $0xe0] sm:$0xff]
      %v772 = vld [vmem:[#allocation2 + $0xe8] sm:$0xff]
      %v773 = vld [vmem:[#allocation2 + $0xf0] sm:$0xff]
      %v774 = vld [vmem:[#allocation2 + $0xf8] sm:$0xff]
      %v775 = vld [vmem:[#allocation2 + $0x100] sm:$0xff]
      %v776 = vld [vmem:[#allocation2 + $0x108] sm:$0xff]
      %v777 = vld [vmem:[#allocation2 + $0x110] sm:$0xff]
      %v778 = vld [vmem:[#allocation2 + $0x118] sm:$0xff]
      %s779 = scalar_lea.vmem %s1, 4
      %v780 = vld [vmem:[%s779] sm:$0xf]
      %v818 = vunpack.c.l.b16 %v706
      %v819 = vunpack.c.l.b16 %v707
      %v820 = vunpack.c.l.b16 %v708
      %v821 = vunpack.c.l.b16 %v709
      %v822 = vunpack.c.l.b16 %v710
      %v823 = vunpack.c.l.b16 %v711
      %v824 = vunpack.c.l.b16 %v712
      %v825 = vunpack.c.l.b16 %v713
      %v826 = vunpack.c.l.b16 %v714
      %v827 = vunpack.c.l.b16 %v715
      %v828 = vunpack.c.l.b16 %v716
      %v829 = vunpack.c.l.b16 %v717
      %v830 = vunpack.c.l.b16 %v718
      %v831 = vunpack.c.l.b16 %v719
      %v832 = vunpack.c.l.b16 %v720
      %v833 = vunpack.c.l.b16 %v721
      %v834 = vunpack.c.l.b16 %v722
      %v835 = vunpack.c.l.b16 %v723
      %v836 = vunpack.c.l.b16 %v724
      %v837 = vunpack.c.l.b16 %v725
      %v838 = vunpack.c.l.b16 %v726
      %v839 = vunpack.c.l.b16 %v727
      %v840 = vunpack.c.l.b16 %v728
      %v841 = vunpack.c.l.b16 %v729
      %v842 = vunpack.c.l.b16 %v730
      %v843 = vunpack.c.l.b16 %v731
      %v844 = vunpack.c.l.b16 %v732
      %v845 = vunpack.c.l.b16 %v733
      %v846 = vunpack.c.l.b16 %v734
      %v847 = vunpack.c.l.b16 %v735
      %v848 = vunpack.c.l.b16 %v736
      %v849 = vunpack.c.l.b16 %v737
      %v850 = vunpack.c.l.b16 %v738
      %v851 = vunpack.c.l.b16 %v739
      %v852 = vunpack.c.l.b16 %v740
      %v853 = vunpack.c.l.b16 %v741
      %v854 = vunpack.c.l.b16 %v742
      %v855 = vpack.c.b16 %v819, %v818
      %v856 = vpack.c.b16 %v821, %v820
      %v857 = vpack.c.b16 %v823, %v822
      %v858 = vpack.c.b16 %v825, %v824
      %v859 = vpack.c.b16 %v827, %v826
      %v860 = vpack.c.b16 %v829, %v828
      %v861 = vpack.c.b16 %v831, %v830
      %v862 = vpack.c.b16 %v833, %v832
      %v863 = vpack.c.b16 %v835, %v834
      %v864 = vpack.c.b16 %v837, %v836
      %v865 = vpack.c.b16 %v839, %v838
      %v866 = vpack.c.b16 %v841, %v840
      %v867 = vpack.c.b16 %v843, %v842
      %v868 = vpack.c.b16 %v845, %v844
      %v869 = vpack.c.b16 %v847, %v846
      %v870 = vpack.c.b16 %v849, %v848
      %v871 = vpack.c.b16 %v851, %v850
      %v872 = vpack.c.b16 %v853, %v852
      %v873 = vpack.c.b16 %v854, %v854
      %vm874 = vsmask.f32 7424
      %v876 = vshrl.u32 %v855, 16
      %v878 = vshll.u32 %v855, 16
      %v880 = vrot.slane %v878, 1
      %v881 = vor.u32 %v876, %v880
      %v883 = vshll.u32 %v856, 16
      %v885 = vrot.slane %v883, 1
      %v886 = vsel %vm874, %v881, %v885
      %v887 = vshrl.u32 %v856, 16
      %v889 = vor.u32 %v887, %v885
      %v891 = vshll.u32 %v857, 16
      %v893 = vrot.slane %v891, 1
      %v894 = vsel %vm874, %v889, %v893
      %v895 = vshrl.u32 %v857, 16
      %v897 = vor.u32 %v895, %v893
      %v899 = vshll.u32 %v858, 16
      %v901 = vrot.slane %v899, 1
      %v902 = vsel %vm874, %v897, %v901
      %v903 = vshrl.u32 %v858, 16
      %v905 = vor.u32 %v903, %v901
      %v907 = vshll.u32 %v859, 16
      %v909 = vrot.slane %v907, 1
      %v910 = vsel %vm874, %v905, %v909
      %v911 = vshrl.u32 %v859, 16
      %v913 = vor.u32 %v911, %v909
      %v915 = vshll.u32 %v860, 16
      %v917 = vrot.slane %v915, 1
      %v918 = vsel %vm874, %v913, %v917
      %v919 = vshrl.u32 %v860, 16
      %v921 = vor.u32 %v919, %v917
      %v923 = vshll.u32 %v861, 16
      %v925 = vrot.slane %v923, 1
      %v926 = vsel %vm874, %v921, %v925
      %v927 = vshrl.u32 %v861, 16
      %v929 = vor.u32 %v927, %v925
      %v931 = vshll.u32 %v862, 16
      %v933 = vrot.slane %v931, 1
      %v934 = vsel %vm874, %v929, %v933
      %v935 = vshrl.u32 %v862, 16
      %v937 = vor.u32 %v935, %v933
      %v939 = vshll.u32 %v863, 16
      %v941 = vrot.slane %v939, 1
      %v942 = vsel %vm874, %v937, %v941
      %v943 = vshrl.u32 %v863, 16
      %v945 = vor.u32 %v943, %v941
      %v947 = vshll.u32 %v864, 16
      %v949 = vrot.slane %v947, 1
      %v950 = vsel %vm874, %v945, %v949
      %v951 = vshrl.u32 %v864, 16
      %v953 = vor.u32 %v951, %v949
      %v955 = vshll.u32 %v865, 16
      %v957 = vrot.slane %v955, 1
      %v958 = vsel %vm874, %v953, %v957
      %v959 = vshrl.u32 %v865, 16
      %v961 = vor.u32 %v959, %v957
      %v963 = vshll.u32 %v866, 16
      %v965 = vrot.slane %v963, 1
      %v966 = vsel %vm874, %v961, %v965
      %v967 = vshrl.u32 %v866, 16
      %v969 = vor.u32 %v967, %v965
      %v971 = vshll.u32 %v867, 16
      %v973 = vrot.slane %v971, 1
      %v974 = vsel %vm874, %v969, %v973
      %v975 = vshrl.u32 %v867, 16
      %v977 = vor.u32 %v975, %v973
      %v979 = vshll.u32 %v868, 16
      %v981 = vrot.slane %v979, 1
      %v982 = vsel %vm874, %v977, %v981
      %v983 = vshrl.u32 %v868, 16
      %v985 = vor.u32 %v983, %v981
      %v987 = vshll.u32 %v869, 16
      %v989 = vrot.slane %v987, 1
      %v990 = vsel %vm874, %v985, %v989
      %v991 = vshrl.u32 %v869, 16
      %v993 = vor.u32 %v991, %v989
      %v995 = vshll.u32 %v870, 16
      %v997 = vrot.slane %v995, 1
      %v998 = vsel %vm874, %v993, %v997
      %v999 = vshrl.u32 %v870, 16
      %v1001 = vor.u32 %v999, %v997
      %v1003 = vshll.u32 %v871, 16
      %v1005 = vrot.slane %v1003, 1
      %v1006 = vsel %vm874, %v1001, %v1005
      %v1007 = vshrl.u32 %v871, 16
      %v1009 = vor.u32 %v1007, %v1005
      %v1011 = vshll.u32 %v872, 16
      %v1013 = vrot.slane %v1011, 1
      %v1014 = vsel %vm874, %v1009, %v1013
      %v1015 = vshrl.u32 %v872, 16
      %v1017 = vor.u32 %v1015, %v1013
      %v1019 = vshll.u32 %v873, 16
      %v1021 = vrot.slane %v1019, 1
      %v1022 = vsel %vm874, %v1017, %v1021
      %v1024 = vsel %vm199, %v886, 0
      %v1027 = vsel %vm199, %v894, 0
      %v1030 = vsel %vm199, %v902, 0
      %v1033 = vsel %vm199, %v910, 0
      %v1036 = vsel %vm199, %v918, 0
      %v1039 = vsel %vm199, %v926, 0
      %v1042 = vsel %vm199, %v934, 0
      %v1045 = vsel %vm199, %v942, 0
      %v1048 = vsel %vm199, %v950, 0
      %v1051 = vsel %vm199, %v958, 0
      %v1054 = vsel %vm199, %v966, 0
      %v1057 = vsel %vm199, %v974, 0
      %v1060 = vsel %vm199, %v982, 0
      %v1063 = vsel %vm199, %v990, 0
      %v1066 = vsel %vm199, %v998, 0
      %v1069 = vsel %vm199, %v1006, 0
      %v1072 = vsel %vm199, %v1014, 0
      %v1075 = vsel %vm199, %v1022, 0
      %v1078 = vsel %vm453, %v780, 0
      %1080 = vmatprep.subr.bf16.mxu0 0
      %1081 = vmatpush1.bf16.msra.mxu0 %v1078
      %1082 = vmatprep.subr.bf16.mxu0 0
      %1083 = vmatpush1.bf16.msra.mxu0 0
      %1084 = vmatprep.subr.bf16.mxu0 0
      %1085 = vmatpush1.bf16.msra.mxu0 0
      %1086 = vmatprep.subr.bf16.mxu0 0
      %1087 = vmatpush1.bf16.msra.mxu0 0
      %1088 = vmatprep.subr.bf16.mxu0 0
      %1089 = vmatpush1.bf16.msra.mxu0 0
      %1090 = vmatprep.subr.bf16.mxu0 0
      %1091 = vmatpush1.bf16.msra.mxu0 0
      %1092 = vmatprep.subr.bf16.mxu0 0
      %1093 = vmatpush1.bf16.msra.mxu0 0
      %1094 = vmatprep.subr.bf16.mxu0 0
      %1095 = vmatpush1.bf16.msra.mxu0 0
      %1096 = vmatprep.subr.bf16.mxu0 0
      %1097 = vmatpush1.bf16.msra.mxu0 0
      %1098 = vmatprep.subr.bf16.mxu0 0
      %1099 = vmatpush1.bf16.msra.mxu0 0
      %1100 = vmatprep.subr.bf16.mxu0 0
      %1101 = vmatpush1.bf16.msra.mxu0 0
      %1102 = vmatprep.subr.bf16.mxu0 0
      %1103 = vmatpush1.bf16.msra.mxu0 0
      %1104 = vmatprep.subr.bf16.mxu0 0
      %1105 = vmatpush1.bf16.msra.mxu0 0
      %1106 = vmatprep.subr.bf16.mxu0 0
      %1107 = vmatpush1.bf16.msra.mxu0 0
      %1108 = vmatprep.subr.bf16.mxu0 0
      %1109 = vmatpush1.bf16.msra.mxu0 0
      %1110 = vmatprep.subr.bf16.mxu0 0
      %1111 = vmatpush1.bf16.msra.mxu0 0
      %1112 = vmatprep.mubr.bf16.mxu0 0
      %1113 = vmatmul.mubr.bf16.gmra.mrb[0].mxu0 %v1024
      %v1114 = vpop.f32.mrb[0].mxu0
      %v1115 = vadd.f32 0.0, %v1114
      %v1116 = vpop.f32.mrb[0].mxu0
      %v1117 = vpop.f32.mrb[0].mxu0
      %v1118 = vadd.f32 0.0, %v1117
      %v1119 = vpop.f32.mrb[0].mxu0
      %1120 = vmatprep.mubr.bf16.mxu0 0
      %1121 = vmatmul.mubr.bf16.gmra.mrb[0].mxu0 %v1027
      %v1122 = vpop.f32.mrb[0].mxu0
      %v1123 = vadd.f32 0.0, %v1122
      %v1124 = vpop.f32.mrb[0].mxu0
      %v1125 = vpop.f32.mrb[0].mxu0
      %v1126 = vadd.f32 0.0, %v1125
      %v1127 = vpop.f32.mrb[0].mxu0
      %1128 = vmatprep.mubr.bf16.mxu0 0
      %1129 = vmatmul.mubr.bf16.gmra.mrb[0].mxu0 %v1030
      %v1130 = vpop.f32.mrb[0].mxu0
      %v1131 = vadd.f32 0.0, %v1130
      %v1132 = vpop.f32.mrb[0].mxu0
      %v1133 = vpop.f32.mrb[0].mxu0
      %v1134 = vadd.f32 0.0, %v1133
      %v1135 = vpop.f32.mrb[0].mxu0
      %1136 = vmatprep.mubr.bf16.mxu0 0
      %1137 = vmatmul.mubr.bf16.gmra.mrb[0].mxu0 %v1033
      %v1138 = vpop.f32.mrb[0].mxu0
      %v1139 = vadd.f32 0.0, %v1138
      %v1140 = vpop.f32.mrb[0].mxu0
      %v1141 = vpop.f32.mrb[0].mxu0
      %v1142 = vadd.f32 0.0, %v1141
      %v1143 = vpop.f32.mrb[0].mxu0
      %1144 = vmatprep.mubr.bf16.mxu0 0
      %1145 = vmatmul.mubr.bf16.gmra.mrb[0].mxu0 %v1036
      %v1146 = vpop.f32.mrb[0].mxu0
      %v1147 = vadd.f32 0.0, %v1146
      %v1148 = vpop.f32.mrb[0].mxu0
      %v1149 = vpop.f32.mrb[0].mxu0
      %v1150 = vadd.f32 0.0, %v1149
      %v1151 = vpop.f32.mrb[0].mxu0
      %1152 = vmatprep.mubr.bf16.mxu0 0
      %1153 = vmatmul.mubr.bf16.gmra.mrb[0].mxu0 %v1039
      %v1154 = vpop.f32.mrb[0].mxu0
      %v1155 = vadd.f32 0.0, %v1154
      %v1156 = vpop.f32.mrb[0].mxu0
      %v1157 = vpop.f32.mrb[0].mxu0
      %v1158 = vadd.f32 0.0, %v1157
      %v1159 = vpop.f32.mrb[0].mxu0
      %1160 = vmatprep.mubr.bf16.mxu0 0
      %1161 = vmatmul.mubr.bf16.gmra.mrb[0].mxu0 %v1042
      %v1162 = vpop.f32.mrb[0].mxu0
      %v1163 = vadd.f32 0.0, %v1162
      %v1164 = vpop.f32.mrb[0].mxu0
      %v1165 = vpop.f32.mrb[0].mxu0
      %v1166 = vadd.f32 0.0, %v1165
      %v1167 = vpop.f32.mrb[0].mxu0
      %1168 = vmatprep.mubr.bf16.mxu0 0
      %1169 = vmatmul.mubr.bf16.gmra.mrb[0].mxu0 %v1045
      %v1170 = vpop.f32.mrb[0].mxu0
      %v1171 = vadd.f32 0.0, %v1170
      %v1172 = vpop.f32.mrb[0].mxu0
      %v1173 = vpop.f32.mrb[0].mxu0
      %v1174 = vadd.f32 0.0, %v1173
      %v1175 = vpop.f32.mrb[0].mxu0
      %1176 = vmatprep.mubr.bf16.mxu0 0
      %1177 = vmatmul.mubr.bf16.gmra.mrb[0].mxu0 %v1048
      %v1178 = vpop.f32.mrb[0].mxu0
      %v1179 = vadd.f32 0.0, %v1178
      %v1180 = vpop.f32.mrb[0].mxu0
      %v1181 = vpop.f32.mrb[0].mxu0
      %v1182 = vadd.f32 0.0, %v1181
      %v1183 = vpop.f32.mrb[0].mxu0
      %1184 = vmatprep.mubr.bf16.mxu0 0
      %1185 = vmatmul.mubr.bf16.gmra.mrb[0].mxu0 %v1051
      %v1186 = vpop.f32.mrb[0].mxu0
      %v1187 = vadd.f32 0.0, %v1186
      %v1188 = vpop.f32.mrb[0].mxu0
      %v1189 = vpop.f32.mrb[0].mxu0
      %v1190 = vadd.f32 0.0, %v1189
      %v1191 = vpop.f32.mrb[0].mxu0
      %1192 = vmatprep.mubr.bf16.mxu0 0
      %1193 = vmatmul.mubr.bf16.gmra.mrb[0].mxu0 %v1054
      %v1194 = vpop.f32.mrb[0].mxu0
      %v1195 = vadd.f32 0.0, %v1194
      %v1196 = vpop.f32.mrb[0].mxu0
      %v1197 = vpop.f32.mrb[0].mxu0
      %v1198 = vadd.f32 0.0, %v1197
      %v1199 = vpop.f32.mrb[0].mxu0
      %1200 = vmatprep.mubr.bf16.mxu0 0
      %1201 = vmatmul.mubr.bf16.gmra.mrb[0].mxu0 %v1057
      %v1202 = vpop.f32.mrb[0].mxu0
      %v1203 = vadd.f32 0.0, %v1202
      %v1204 = vpop.f32.mrb[0].mxu0
      %v1205 = vpop.f32.mrb[0].mxu0
      %v1206 = vadd.f32 0.0, %v1205
      %v1207 = vpop.f32.mrb[0].mxu0
      %1208 = vmatprep.mubr.bf16.mxu0 0
      %1209 = vmatmul.mubr.bf16.gmra.mrb[0].mxu0 %v1060
      %v1210 = vpop.f32.mrb[0].mxu0
      %v1211 = vadd.f32 0.0, %v1210
      %v1212 = vpop.f32.mrb[0].mxu0
      %v1213 = vpop.f32.mrb[0].mxu0
      %v1214 = vadd.f32 0.0, %v1213
      %v1215 = vpop.f32.mrb[0].mxu0
      %1216 = vmatprep.mubr.bf16.mxu0 0
      %1217 = vmatmul.mubr.bf16.gmra.mrb[0].mxu0 %v1063
      %v1218 = vpop.f32.mrb[0].mxu0
      %v1219 = vadd.f32 0.0, %v1218
      %v1220 = vpop.f32.mrb[0].mxu0
      %v1221 = vpop.f32.mrb[0].mxu0
      %v1222 = vadd.f32 0.0, %v1221
      %v1223 = vpop.f32.mrb[0].mxu0
      %1224 = vmatprep.mubr.bf16.mxu0 0
      %1225 = vmatmul.mubr.bf16.gmra.mrb[0].mxu0 %v1066
      %v1226 = vpop.f32.mrb[0].mxu0
      %v1227 = vadd.f32 0.0, %v1226
      %v1228 = vpop.f32.mrb[0].mxu0
      %v1229 = vpop.f32.mrb[0].mxu0
      %v1230 = vadd.f32 0.0, %v1229
      %v1231 = vpop.f32.mrb[0].mxu0
      %1232 = vmatprep.mubr.bf16.mxu0 0
      %1233 = vmatmul.mubr.bf16.gmra.mrb[0].mxu0 %v1069
      %v1234 = vpop.f32.mrb[0].mxu0
      %v1235 = vadd.f32 0.0, %v1234
      %v1236 = vpop.f32.mrb[0].mxu0
      %v1237 = vpop.f32.mrb[0].mxu0
      %v1238 = vadd.f32 0.0, %v1237
      %v1239 = vpop.f32.mrb[0].mxu0
      %1240 = vmatprep.mubr.bf16.mxu0 0
      %1241 = vmatmul.mubr.bf16.gmra.mrb[0].mxu0 %v1072
      %v1242 = vpop.f32.mrb[0].mxu0
      %v1243 = vadd.f32 0.0, %v1242
      %v1244 = vpop.f32.mrb[0].mxu0
      %v1245 = vpop.f32.mrb[0].mxu0
      %v1246 = vadd.f32 0.0, %v1245
      %v1247 = vpop.f32.mrb[0].mxu0
      %1248 = vmatprep.mubr.bf16.mxu0 0
      %1249 = vmatmul.mubr.bf16.gmra.mrb[0].mxu0 %v1075
      %v1250 = vpop.f32.mrb[0].mxu0
      %v1251 = vadd.f32 0.0, %v1250
      %v1252 = vpop.f32.mrb[0].mxu0
      %v1253 = vpop.f32.mrb[0].mxu0
      %v1254 = vadd.f32 0.0, %v1253
      %v1255 = vpop.f32.mrb[0].mxu0
      %1256 = vdwg.mxu0
      %v1257 = vadd.f32 %v743, %v1115
      %v1258 = vadd.f32 %v744, %v1118
      %v1259 = vadd.f32 %v745, %v1123
      %v1260 = vadd.f32 %v746, %v1126
      %v1261 = vadd.f32 %v747, %v1131
      %v1262 = vadd.f32 %v748, %v1134
      %v1263 = vadd.f32 %v749, %v1139
      %v1264 = vadd.f32 %v750, %v1142
      %v1265 = vadd.f32 %v751, %v1147
      %v1266 = vadd.f32 %v752, %v1150
      %v1267 = vadd.f32 %v753, %v1155
      %v1268 = vadd.f32 %v754, %v1158
      %v1269 = vadd.f32 %v755, %v1163
      %v1270 = vadd.f32 %v756, %v1166
      %v1271 = vadd.f32 %v757, %v1171
      %v1272 = vadd.f32 %v758, %v1174
      %v1273 = vadd.f32 %v759, %v1179
      %v1274 = vadd.f32 %v760, %v1182
      %v1275 = vadd.f32 %v761, %v1187
      %v1276 = vadd.f32 %v762, %v1190
      %v1277 = vadd.f32 %v763, %v1195
      %v1278 = vadd.f32 %v764, %v1198
      %v1279 = vadd.f32 %v765, %v1203
      %v1280 = vadd.f32 %v766, %v1206
      %v1281 = vadd.f32 %v767, %v1211
      %v1282 = vadd.f32 %v768, %v1214
      %v1283 = vadd.f32 %v769, %v1219
      %v1284 = vadd.f32 %v770, %v1222
      %v1285 = vadd.f32 %v771, %v1227
      %v1286 = vadd.f32 %v772, %v1230
      %v1287 = vadd.f32 %v773, %v1235
      %v1288 = vadd.f32 %v774, %v1238
      %v1289 = vadd.f32 %v775, %v1243
      %v1290 = vadd.f32 %v776, %v1246
      %v1291 = vadd.f32 %v777, %v1251
      %v1292 = vadd.f32 %v778, %v1254
      %1293 = vst.msk [vmem:[#allocation2] sm:$0xff] %vm199, %v1257
      %1294 = vst.msk [vmem:[#allocation2 + $0x8] sm:$0xff] %vm199, %v1258
      %1295 = vst.msk [vmem:[#allocation2 + $0x10] sm:$0xff] %vm199, %v1259
      %1296 = vst.msk [vmem:[#allocation2 + $0x18] sm:$0xff] %vm199, %v1260
      %1297 = vst.msk [vmem:[#allocation2 + $0x20] sm:$0xff] %vm199, %v1261
      %1298 = vst.msk [vmem:[#allocation2 + $0x28] sm:$0xff] %vm199, %v1262
      %1299 = vst.msk [vmem:[#allocation2 + $0x30] sm:$0xff] %vm199, %v1263
      %1300 = vst.msk [vmem:[#allocation2 + $0x38] sm:$0xff] %vm199, %v1264
      %1301 = vst.msk [vmem:[#allocation2 + $0x40] sm:$0xff] %vm199, %v1265
      %1302 = vst.msk [vmem:[#allocation2 + $0x48] sm:$0xff] %vm199, %v1266
      %1303 = vst.msk [vmem:[#allocation2 + $0x50] sm:$0xff] %vm199, %v1267
      %1304 = vst.msk [vmem:[#allocation2 + $0x58] sm:$0xff] %vm199, %v1268
      %1305 = vst.msk [vmem:[#allocation2 + $0x60] sm:$0xff] %vm199, %v1269
      %1306 = vst.msk [vmem:[#allocation2 + $0x68] sm:$0xff] %vm199, %v1270
      %1307 = vst.msk [vmem:[#allocation2 + $0x70] sm:$0xff] %vm199, %v1271
      %1308 = vst.msk [vmem:[#allocation2 + $0x78] sm:$0xff] %vm199, %v1272
      %1309 = vst.msk [vmem:[#allocation2 + $0x80] sm:$0xff] %vm199, %v1273
      %1310 = vst.msk [vmem:[#allocation2 + $0x88] sm:$0xff] %vm199, %v1274
      %1311 = vst.msk [vmem:[#allocation2 + $0x90] sm:$0xff] %vm199, %v1275
      %1312 = vst.msk [vmem:[#allocation2 + $0x98] sm:$0xff] %vm199, %v1276
      %1313 = vst.msk [vmem:[#allocation2 + $0xa0] sm:$0xff] %vm199, %v1277
      %1314 = vst.msk [vmem:[#allocation2 + $0xa8] sm:$0xff] %vm199, %v1278
      %1315 = vst.msk [vmem:[#allocation2 + $0xb0] sm:$0xff] %vm199, %v1279
      %1316 = vst.msk [vmem:[#allocation2 + $0xb8] sm:$0xff] %vm199, %v1280
      %1317 = vst.msk [vmem:[#allocation2 + $0xc0] sm:$0xff] %vm199, %v1281
      %1318 = vst.msk [vmem:[#allocation2 + $0xc8] sm:$0xff] %vm199, %v1282
      %1319 = vst.msk [vmem:[#allocation2 + $0xd0] sm:$0xff] %vm199, %v1283
      %1320 = vst.msk [vmem:[#allocation2 + $0xd8] sm:$0xff] %vm199, %v1284
      %1321 = vst.msk [vmem:[#allocation2 + $0xe0] sm:$0xff] %vm199, %v1285
      %1322 = vst.msk [vmem:[#allocation2 + $0xe8] sm:$0xff] %vm199, %v1286
      %1323 = vst.msk [vmem:[#allocation2 + $0xf0] sm:$0xff] %vm199, %v1287
      %1324 = vst.msk [vmem:[#allocation2 + $0xf8] sm:$0xff] %vm199, %v1288
      %1325 = vst.msk [vmem:[#allocation2 + $0x100] sm:$0xff] %vm199, %v1289
      %1326 = vst.msk [vmem:[#allocation2 + $0x108] sm:$0xff] %vm199, %v1290
      %1327 = vst.msk [vmem:[#allocation2 + $0x110] sm:$0xff] %vm199, %v1291
      %1328 = vst.msk [vmem:[#allocation2 + $0x118] sm:$0xff] %vm199, %v1292
      %v1329 = vld [vmem:[%s192] sm:$0xe]
      %v1330 = vld [vmem:[%s192 + $0x4] sm:$0xf]
      %v1331 = vld [vmem:[%s192 + $0x8] sm:$0xf]
      %v1332 = vld [vmem:[%s192 + $0xc] sm:$0xf]
      %v1333 = vld [vmem:[%s192 + $0x10] sm:$0xf]
      %v1334 = vld [vmem:[%s192 + $0x14] sm:$0xf]
      %v1335 = vld [vmem:[%s192 + $0x18] sm:$0xf]
      %v1336 = vld [vmem:[%s192 + $0x1c] sm:$0xf]
      %v1337 = vld [vmem:[%s192 + $0x20] sm:$0xf]
      %v1338 = vld [vmem:[%s192 + $0x24] sm:$0xf]
      %v1339 = vld [vmem:[%s192 + $0x28] sm:$0xf]
      %v1340 = vld [vmem:[%s192 + $0x2c] sm:$0xf]
      %v1341 = vld [vmem:[%s192 + $0x30] sm:$0xf]
      %v1342 = vld [vmem:[%s192 + $0x34] sm:$0xf]
      %v1343 = vld [vmem:[%s192 + $0x38] sm:$0xf]
      %v1344 = vld [vmem:[%s192 + $0x3c] sm:$0xf]
      %v1345 = vld [vmem:[%s192 + $0x40] sm:$0xf]
      %v1346 = vld [vmem:[%s192 + $0x44] sm:$0xf]
      %v1347 = vld [vmem:[%s192 + $0x48] sm:$0xf]
      %v1348 = vld [vmem:[%s192 + $0x4c] sm:$0xf]
      %v1349 = vld [vmem:[%s192 + $0x50] sm:$0xf]
      %v1350 = vld [vmem:[%s192 + $0x54] sm:$0xf]
      %v1351 = vld [vmem:[%s192 + $0x58] sm:$0xf]
      %v1352 = vld [vmem:[%s192 + $0x5c] sm:$0xf]
      %v1353 = vld [vmem:[%s192 + $0x60] sm:$0xf]
      %v1354 = vld [vmem:[%s192 + $0x64] sm:$0xf]
      %v1355 = vld [vmem:[%s192 + $0x68] sm:$0xf]
      %v1356 = vld [vmem:[%s192 + $0x6c] sm:$0xf]
      %v1357 = vld [vmem:[%s192 + $0x70] sm:$0xf]
      %v1358 = vld [vmem:[%s192 + $0x74] sm:$0xf]
      %v1359 = vld [vmem:[%s192 + $0x78] sm:$0xf]
      %v1360 = vld [vmem:[%s192 + $0x7c] sm:$0xf]
      %v1361 = vld [vmem:[%s192 + $0x80] sm:$0xf]
      %v1362 = vld [vmem:[%s192 + $0x84] sm:$0xf]
      %v1363 = vld [vmem:[%s192 + $0x88] sm:$0xf]
      %v1364 = vld [vmem:[%s192 + $0x8c] sm:$0xf]
      %v1365 = vld [vmem:[%s192 + $0x90] sm:$0x1]
      %v1366 = vld [vmem:[#allocation2] sm:$0xff]
      %v1367 = vld [vmem:[#allocation2 + $0x8] sm:$0xff]
      %v1368 = vld [vmem:[#allocation2 + $0x10] sm:$0xff]
      %v1369 = vld [vmem:[#allocation2 + $0x18] sm:$0xff]
      %v1370 = vld [vmem:[#allocation2 + $0x20] sm:$0xff]
      %v1371 = vld [vmem:[#allocation2 + $0x28] sm:$0xff]
      %v1372 = vld [vmem:[#allocation2 + $0x30] sm:$0xff]
      %v1373 = vld [vmem:[#allocation2 + $0x38] sm:$0xff]
      %v1374 = vld [vmem:[#allocation2 + $0x40] sm:$0xff]
      %v1375 = vld [vmem:[#allocation2 + $0x48] sm:$0xff]
      %v1376 = vld [vmem:[#allocation2 + $0x50] sm:$0xff]
      %v1377 = vld [vmem:[#allocation2 + $0x58] sm:$0xff]
      %v1378 = vld [vmem:[#allocation2 + $0x60] sm:$0xff]
      %v1379 = vld [vmem:[#allocation2 + $0x68] sm:$0xff]
      %v1380 = vld [vmem:[#allocation2 + $0x70] sm:$0xff]
      %v1381 = vld [vmem:[#allocation2 + $0x78] sm:$0xff]
      %v1382 = vld [vmem:[#allocation2 + $0x80] sm:$0xff]
      %v1383 = vld [vmem:[#allocation2 + $0x88] sm:$0xff]
      %v1384 = vld [vmem:[#allocation2 + $0x90] sm:$0xff]
      %v1385 = vld [vmem:[#allocation2 + $0x98] sm:$0xff]
      %v1386 = vld [vmem:[#allocation2 + $0xa0] sm:$0xff]
      %v1387 = vld [vmem:[#allocation2 + $0xa8] sm:$0xff]
      %v1388 = vld [vmem:[#allocation2 + $0xb0] sm:$0xff]
      %v1389 = vld [vmem:[#allocation2 + $0xb8] sm:$0xff]
      %v1390 = vld [vmem:[#allocation2 + $0xc0] sm:$0xff]
      %v1391 = vld [vmem:[#allocation2 + $0xc8] sm:$0xff]
      %v1392 = vld [vmem:[#allocation2 + $0xd0] sm:$0xff]
      %v1393 = vld [vmem:[#allocation2 + $0xd8] sm:$0xff]
      %v1394 = vld [vmem:[#allocation2 + $0xe0] sm:$0xff]
      %v1395 = vld [vmem:[#allocation2 + $0xe8] sm:$0xff]
      %v1396 = vld [vmem:[#allocation2 + $0xf0] sm:$0xff]
      %v1397 = vld [vmem:[#allocation2 + $0xf8] sm:$0xff]
      %v1398 = vld [vmem:[#allocation2 + $0x100] sm:$0xff]
      %v1399 = vld [vmem:[#allocation2 + $0x108] sm:$0xff]
      %v1400 = vld [vmem:[#allocation2 + $0x110] sm:$0xff]
      %v1401 = vld [vmem:[#allocation2 + $0x118] sm:$0xff]
      %s1402 = scalar_lea.vmem %s1, 8
      %v1403 = vld [vmem:[%s1402] sm:$0xf]
      %v1441 = vunpack.c.l.b16 %v1329
      %v1442 = vunpack.c.l.b16 %v1330
      %v1443 = vunpack.c.l.b16 %v1331
      %v1444 = vunpack.c.l.b16 %v1332
      %v1445 = vunpack.c.l.b16 %v1333
      %v1446 = vunpack.c.l.b16 %v1334
      %v1447 = vunpack.c.l.b16 %v1335
      %v1448 = vunpack.c.l.b16 %v1336
      %v1449 = vunpack.c.l.b16 %v1337
      %v1450 = vunpack.c.l.b16 %v1338
      %v1451 = vunpack.c.l.b16 %v1339
      %v1452 = vunpack.c.l.b16 %v1340
      %v1453 = vunpack.c.l.b16 %v1341
      %v1454 = vunpack.c.l.b16 %v1342
      %v1455 = vunpack.c.l.b16 %v1343
      %v1456 = vunpack.c.l.b16 %v1344
      %v1457 = vunpack.c.l.b16 %v1345
      %v1458 = vunpack.c.l.b16 %v1346
      %v1459 = vunpack.c.l.b16 %v1347
      %v1460 = vunpack.c.l.b16 %v1348
      %v1461 = vunpack.c.l.b16 %v1349
      %v1462 = vunpack.c.l.b16 %v1350
      %v1463 = vunpack.c.l.b16 %v1351
      %v1464 = vunpack.c.l.b16 %v1352
      %v1465 = vunpack.c.l.b16 %v1353
      %v1466 = vunpack.c.l.b16 %v1354
      %v1467 = vunpack.c.l.b16 %v1355
      %v1468 = vunpack.c.l.b16 %v1356
      %v1469 = vunpack.c.l.b16 %v1357
      %v1470 = vunpack.c.l.b16 %v1358
      %v1471 = vunpack.c.l.b16 %v1359
      %v1472 = vunpack.c.l.b16 %v1360
      %v1473 = vunpack.c.l.b16 %v1361
      %v1474 = vunpack.c.l.b16 %v1362
      %v1475 = vunpack.c.l.b16 %v1363
      %v1476 = vunpack.c.l.b16 %v1364
      %v1477 = vunpack.c.l.b16 %v1365
      %v1478 = vpack.c.b16 %v1442, %v1441
      %v1479 = vpack.c.b16 %v1444, %v1443
      %v1480 = vpack.c.b16 %v1446, %v1445
      %v1481 = vpack.c.b16 %v1448, %v1447
      %v1482 = vpack.c.b16 %v1450, %v1449
      %v1483 = vpack.c.b16 %v1452, %v1451
      %v1484 = vpack.c.b16 %v1454, %v1453
      %v1485 = vpack.c.b16 %v1456, %v1455
      %v1486 = vpack.c.b16 %v1458, %v1457
      %v1487 = vpack.c.b16 %v1460, %v1459
      %v1488 = vpack.c.b16 %v1462, %v1461
      %v1489 = vpack.c.b16 %v1464, %v1463
      %v1490 = vpack.c.b16 %v1466, %v1465
      %v1491 = vpack.c.b16 %v1468, %v1467
      %v1492 = vpack.c.b16 %v1470, %v1469
      %v1493 = vpack.c.b16 %v1472, %v1471
      %v1494 = vpack.c.b16 %v1474, %v1473
      %v1495 = vpack.c.b16 %v1476, %v1475
      %v1496 = vpack.c.b16 %v1477, %v1477
      %vm1497 = vcmask 1046528
      %v1498 = vrot.slane %v1478, 1
      %v1499 = vrot.slane %v1479, 1
      %v1500 = vsel %vm1497, %v1498, %v1499
      %v1501 = vrot.slane %v1480, 1
      %v1502 = vsel %vm1497, %v1499, %v1501
      %v1503 = vrot.slane %v1481, 1
      %v1504 = vsel %vm1497, %v1501, %v1503
      %v1505 = vrot.slane %v1482, 1
      %v1506 = vsel %vm1497, %v1503, %v1505
      %v1507 = vrot.slane %v1483, 1
      %v1508 = vsel %vm1497, %v1505, %v1507
      %v1509 = vrot.slane %v1484, 1
      %v1510 = vsel %vm1497, %v1507, %v1509
      %v1511 = vrot.slane %v1485, 1
      %v1512 = vsel %vm1497, %v1509, %v1511
      %v1513 = vrot.slane %v1486, 1
      %v1514 = vsel %vm1497, %v1511, %v1513
      %v1515 = vrot.slane %v1487, 1
      %v1516 = vsel %vm1497, %v1513, %v1515
      %v1517 = vrot.slane %v1488, 1
      %v1518 = vsel %vm1497, %v1515, %v1517
      %v1519 = vrot.slane %v1489, 1
      %v1520 = vsel %vm1497, %v1517, %v1519
      %v1521 = vrot.slane %v1490, 1
      %v1522 = vsel %vm1497, %v1519, %v1521
      %v1523 = vrot.slane %v1491, 1
      %v1524 = vsel %vm1497, %v1521, %v1523
      %v1525 = vrot.slane %v1492, 1
      %v1526 = vsel %vm1497, %v1523, %v1525
      %v1527 = vrot.slane %v1493, 1
      %v1528 = vsel %vm1497, %v1525, %v1527
      %v1529 = vrot.slane %v1494, 1
      %v1530 = vsel %vm1497, %v1527, %v1529
      %v1531 = vrot.slane %v1495, 1
      %v1532 = vsel %vm1497, %v1529, %v1531
      %v1533 = vrot.slane %v1496, 1
      %v1534 = vsel %vm1497, %v1531, %v1533
      %v1536 = vsel %vm199, %v1500, 0
      %v1539 = vsel %vm199, %v1502, 0
      %v1542 = vsel %vm199, %v1504, 0
      %v1545 = vsel %vm199, %v1506, 0
      %v1548 = vsel %vm199, %v1508, 0
      %v1551 = vsel %vm199, %v1510, 0
      %v1554 = vsel %vm199, %v1512, 0
      %v1557 = vsel %vm199, %v1514, 0
      %v1560 = vsel %vm199, %v1516, 0
      %v1563 = vsel %vm199, %v1518, 0
      %v1566 = vsel %vm199, %v1520, 0
      %v1569 = vsel %vm199, %v1522, 0
      %v1572 = vsel %vm199, %v1524, 0
      %v1575 = vsel %vm199, %v1526, 0
      %v1578 = vsel %vm199, %v1528, 0
      %v1581 = vsel %vm199, %v1530, 0
      %v1584 = vsel %vm199, %v1532, 0
      %v1587 = vsel %vm199, %v1534, 0
      %v1590 = vsel %vm453, %v1403, 0
      %1592 = vmatprep.subr.bf16.mxu0 0
      %1593 = vmatpush1.bf16.msra.mxu0 %v1590
      %1594 = vmatprep.subr.bf16.mxu0 0
      %1595 = vmatpush1.bf16.msra.mxu0 0
      %1596 = vmatprep.subr.bf16.mxu0 0
      %1597 = vmatpush1.bf16.msra.mxu0 0
      %1598 = vmatprep.subr.bf16.mxu0 0
      %1599 = vmatpush1.bf16.msra.mxu0 0
      %1600 = vmatprep.subr.bf16.mxu0 0
      %1601 = vmatpush1.bf16.msra.mxu0 0
      %1602 = vmatprep.subr.bf16.mxu0 0
      %1603 = vmatpush1.bf16.msra.mxu0 0
      %1604 = vmatprep.subr.bf16.mxu0 0
      %1605 = vmatpush1.bf16.msra.mxu0 0
      %1606 = vmatprep.subr.bf16.mxu0 0
      %1607 = vmatpush1.bf16.msra.mxu0 0
      %1608 = vmatprep.subr.bf16.mxu0 0
      %1609 = vmatpush1.bf16.msra.mxu0 0
      %1610 = vmatprep.subr.bf16.mxu0 0
      %1611 = vmatpush1.bf16.msra.mxu0 0
      %1612 = vmatprep.subr.bf16.mxu0 0
      %1613 = vmatpush1.bf16.msra.mxu0 0
      %1614 = vmatprep.subr.bf16.mxu0 0
      %1615 = vmatpush1.bf16.msra.mxu0 0
      %1616 = vmatprep.subr.bf16.mxu0 0
      %1617 = vmatpush1.bf16.msra.mxu0 0
      %1618 = vmatprep.subr.bf16.mxu0 0
      %1619 = vmatpush1.bf16.msra.mxu0 0
      %1620 = vmatprep.subr.bf16.mxu0 0
      %1621 = vmatpush1.bf16.msra.mxu0 0
      %1622 = vmatprep.subr.bf16.mxu0 0
      %1623 = vmatpush1.bf16.msra.mxu0 0
      %1624 = vmatprep.mubr.bf16.mxu0 0
      %1625 = vmatmul.mubr.bf16.gmra.mrb[0].mxu0 %v1536
      %v1626 = vpop.f32.mrb[0].mxu0
      %v1627 = vadd.f32 0.0, %v1626
      %v1628 = vpop.f32.mrb[0].mxu0
      %v1629 = vpop.f32.mrb[0].mxu0
      %v1630 = vadd.f32 0.0, %v1629
      %v1631 = vpop.f32.mrb[0].mxu0
      %1632 = vmatprep.mubr.bf16.mxu0 0
      %1633 = vmatmul.mubr.bf16.gmra.mrb[0].mxu0 %v1539
      %v1634 = vpop.f32.mrb[0].mxu0
      %v1635 = vadd.f32 0.0, %v1634
      %v1636 = vpop.f32.mrb[0].mxu0
      %v1637 = vpop.f32.mrb[0].mxu0
      %v1638 = vadd.f32 0.0, %v1637
      %v1639 = vpop.f32.mrb[0].mxu0
      %1640 = vmatprep.mubr.bf16.mxu0 0
      %1641 = vmatmul.mubr.bf16.gmra.mrb[0].mxu0 %v1542
      %v1642 = vpop.f32.mrb[0].mxu0
      %v1643 = vadd.f32 0.0, %v1642
      %v1644 = vpop.f32.mrb[0].mxu0
      %v1645 = vpop.f32.mrb[0].mxu0
      %v1646 = vadd.f32 0.0, %v1645
      %v1647 = vpop.f32.mrb[0].mxu0
      %1648 = vmatprep.mubr.bf16.mxu0 0
      %1649 = vmatmul.mubr.bf16.gmra.mrb[0].mxu0 %v1545
      %v1650 = vpop.f32.mrb[0].mxu0
      %v1651 = vadd.f32 0.0, %v1650
      %v1652 = vpop.f32.mrb[0].mxu0
      %v1653 = vpop.f32.mrb[0].mxu0
      %v1654 = vadd.f32 0.0, %v1653
      %v1655 = vpop.f32.mrb[0].mxu0
      %1656 = vmatprep.mubr.bf16.mxu0 0
      %1657 = vmatmul.mubr.bf16.gmra.mrb[0].mxu0 %v1548
      %v1658 = vpop.f32.mrb[0].mxu0
      %v1659 = vadd.f32 0.0, %v1658
      %v1660 = vpop.f32.mrb[0].mxu0
      %v1661 = vpop.f32.mrb[0].mxu0
      %v1662 = vadd.f32 0.0, %v1661
      %v1663 = vpop.f32.mrb[0].mxu0
      %1664 = vmatprep.mubr.bf16.mxu0 0
      %1665 = vmatmul.mubr.bf16.gmra.mrb[0].mxu0 %v1551
      %v1666 = vpop.f32.mrb[0].mxu0
      %v1667 = vadd.f32 0.0, %v1666
      %v1668 = vpop.f32.mrb[0].mxu0
      %v1669 = vpop.f32.mrb[0].mxu0
      %v1670 = vadd.f32 0.0, %v1669
      %v1671 = vpop.f32.mrb[0].mxu0
      %1672 = vmatprep.mubr.bf16.mxu0 0
      %1673 = vmatmul.mubr.bf16.gmra.mrb[0].mxu0 %v1554
      %v1674 = vpop.f32.mrb[0].mxu0
      %v1675 = vadd.f32 0.0, %v1674
      %v1676 = vpop.f32.mrb[0].mxu0
      %v1677 = vpop.f32.mrb[0].mxu0
      %v1678 = vadd.f32 0.0, %v1677
      %v1679 = vpop.f32.mrb[0].mxu0
      %1680 = vmatprep.mubr.bf16.mxu0 0
      %1681 = vmatmul.mubr.bf16.gmra.mrb[0].mxu0 %v1557
      %v1682 = vpop.f32.mrb[0].mxu0
      %v1683 = vadd.f32 0.0, %v1682
      %v1684 = vpop.f32.mrb[0].mxu0
      %v1685 = vpop.f32.mrb[0].mxu0
      %v1686 = vadd.f32 0.0, %v1685
      %v1687 = vpop.f32.mrb[0].mxu0
      %1688 = vmatprep.mubr.bf16.mxu0 0
      %1689 = vmatmul.mubr.bf16.gmra.mrb[0].mxu0 %v1560
      %v1690 = vpop.f32.mrb[0].mxu0
      %v1691 = vadd.f32 0.0, %v1690
      %v1692 = vpop.f32.mrb[0].mxu0
      %v1693 = vpop.f32.mrb[0].mxu0
      %v1694 = vadd.f32 0.0, %v1693
      %v1695 = vpop.f32.mrb[0].mxu0
      %1696 = vmatprep.mubr.bf16.mxu0 0
      %1697 = vmatmul.mubr.bf16.gmra.mrb[0].mxu0 %v1563
      %v1698 = vpop.f32.mrb[0].mxu0
      %v1699 = vadd.f32 0.0, %v1698
      %v1700 = vpop.f32.mrb[0].mxu0
      %v1701 = vpop.f32.mrb[0].mxu0
      %v1702 = vadd.f32 0.0, %v1701
      %v1703 = vpop.f32.mrb[0].mxu0
      %1704 = vmatprep.mubr.bf16.mxu0 0
      %1705 = vmatmul.mubr.bf16.gmra.mrb[0].mxu0 %v1566
      %v1706 = vpop.f32.mrb[0].mxu0
      %v1707 = vadd.f32 0.0, %v1706
      %v1708 = vpop.f32.mrb[0].mxu0
      %v1709 = vpop.f32.mrb[0].mxu0
      %v1710 = vadd.f32 0.0, %v1709
      %v1711 = vpop.f32.mrb[0].mxu0
      %1712 = vmatprep.mubr.bf16.mxu0 0
      %1713 = vmatmul.mubr.bf16.gmra.mrb[0].mxu0 %v1569
      %v1714 = vpop.f32.mrb[0].mxu0
      %v1715 = vadd.f32 0.0, %v1714
      %v1716 = vpop.f32.mrb[0].mxu0
      %v1717 = vpop.f32.mrb[0].mxu0
      %v1718 = vadd.f32 0.0, %v1717
      %v1719 = vpop.f32.mrb[0].mxu0
      %1720 = vmatprep.mubr.bf16.mxu0 0
      %1721 = vmatmul.mubr.bf16.gmra.mrb[0].mxu0 %v1572
      %v1722 = vpop.f32.mrb[0].mxu0
      %v1723 = vadd.f32 0.0, %v1722
      %v1724 = vpop.f32.mrb[0].mxu0
      %v1725 = vpop.f32.mrb[0].mxu0
      %v1726 = vadd.f32 0.0, %v1725
      %v1727 = vpop.f32.mrb[0].mxu0
      %1728 = vmatprep.mubr.bf16.mxu0 0
      %1729 = vmatmul.mubr.bf16.gmra.mrb[0].mxu0 %v1575
      %v1730 = vpop.f32.mrb[0].mxu0
      %v1731 = vadd.f32 0.0, %v1730
      %v1732 = vpop.f32.mrb[0].mxu0
      %v1733 = vpop.f32.mrb[0].mxu0
      %v1734 = vadd.f32 0.0, %v1733
      %v1735 = vpop.f32.mrb[0].mxu0
      %1736 = vmatprep.mubr.bf16.mxu0 0
      %1737 = vmatmul.mubr.bf16.gmra.mrb[0].mxu0 %v1578
      %v1738 = vpop.f32.mrb[0].mxu0
      %v1739 = vadd.f32 0.0, %v1738
      %v1740 = vpop.f32.mrb[0].mxu0
      %v1741 = vpop.f32.mrb[0].mxu0
      %v1742 = vadd.f32 0.0, %v1741
      %v1743 = vpop.f32.mrb[0].mxu0
      %1744 = vmatprep.mubr.bf16.mxu0 0
      %1745 = vmatmul.mubr.bf16.gmra.mrb[0].mxu0 %v1581
      %v1746 = vpop.f32.mrb[0].mxu0
      %v1747 = vadd.f32 0.0, %v1746
      %v1748 = vpop.f32.mrb[0].mxu0
      %v1749 = vpop.f32.mrb[0].mxu0
      %v1750 = vadd.f32 0.0, %v1749
      %v1751 = vpop.f32.mrb[0].mxu0
      %1752 = vmatprep.mubr.bf16.mxu0 0
      %1753 = vmatmul.mubr.bf16.gmra.mrb[0].mxu0 %v1584
      %v1754 = vpop.f32.mrb[0].mxu0
      %v1755 = vadd.f32 0.0, %v1754
      %v1756 = vpop.f32.mrb[0].mxu0
      %v1757 = vpop.f32.mrb[0].mxu0
      %v1758 = vadd.f32 0.0, %v1757
      %v1759 = vpop.f32.mrb[0].mxu0
      %1760 = vmatprep.mubr.bf16.mxu0 0
      %1761 = vmatmul.mubr.bf16.gmra.mrb[0].mxu0 %v1587
      %v1762 = vpop.f32.mrb[0].mxu0
      %v1763 = vadd.f32 0.0, %v1762
      %v1764 = vpop.f32.mrb[0].mxu0
      %v1765 = vpop.f32.mrb[0].mxu0
      %v1766 = vadd.f32 0.0, %v1765
      %v1767 = vpop.f32.mrb[0].mxu0
      %1768 = vdwg.mxu0
      %v1769 = vadd.f32 %v1366, %v1627
      %v1770 = vadd.f32 %v1367, %v1630
      %v1771 = vadd.f32 %v1368, %v1635
      %v1772 = vadd.f32 %v1369, %v1638
      %v1773 = vadd.f32 %v1370, %v1643
      %v1774 = vadd.f32 %v1371, %v1646
      %v1775 = vadd.f32 %v1372, %v1651
      %v1776 = vadd.f32 %v1373, %v1654
      %v1777 = vadd.f32 %v1374, %v1659
      %v1778 = vadd.f32 %v1375, %v1662
      %v1779 = vadd.f32 %v1376, %v1667
      %v1780 = vadd.f32 %v1377, %v1670
      %v1781 = vadd.f32 %v1378, %v1675
      %v1782 = vadd.f32 %v1379, %v1678
      %v1783 = vadd.f32 %v1380, %v1683
      %v1784 = vadd.f32 %v1381, %v1686
      %v1785 = vadd.f32 %v1382, %v1691
      %v1786 = vadd.f32 %v1383, %v1694
      %v1787 = vadd.f32 %v1384, %v1699
      %v1788 = vadd.f32 %v1385, %v1702
      %v1789 = vadd.f32 %v1386, %v1707
      %v1790 = vadd.f32 %v1387, %v1710
      %v1791 = vadd.f32 %v1388, %v1715
      %v1792 = vadd.f32 %v1389, %v1718
      %v1793 = vadd.f32 %v1390, %v1723
      %v1794 = vadd.f32 %v1391, %v1726
      %v1795 = vadd.f32 %v1392, %v1731
      %v1796 = vadd.f32 %v1393, %v1734
      %v1797 = vadd.f32 %v1394, %v1739
      %v1798 = vadd.f32 %v1395, %v1742
      %v1799 = vadd.f32 %v1396, %v1747
      %v1800 = vadd.f32 %v1397, %v1750
      %v1801 = vadd.f32 %v1398, %v1755
      %v1802 = vadd.f32 %v1399, %v1758
      %v1803 = vadd.f32 %v1400, %v1763
      %v1804 = vadd.f32 %v1401, %v1766
      %1805 = vst.msk [vmem:[#allocation2] sm:$0xff] %vm199, %v1769
      %1806 = vst.msk [vmem:[#allocation2 + $0x8] sm:$0xff] %vm199, %v1770
      %1807 = vst.msk [vmem:[#allocation2 + $0x10] sm:$0xff] %vm199, %v1771
      %1808 = vst.msk [vmem:[#allocation2 + $0x18] sm:$0xff] %vm199, %v1772
      %1809 = vst.msk [vmem:[#allocation2 + $0x20] sm:$0xff] %vm199, %v1773
      %1810 = vst.msk [vmem:[#allocation2 + $0x28] sm:$0xff] %vm199, %v1774
      %1811 = vst.msk [vmem:[#allocation2 + $0x30] sm:$0xff] %vm199, %v1775
      %1812 = vst.msk [vmem:[#allocation2 + $0x38] sm:$0xff] %vm199, %v1776
      %1813 = vst.msk [vmem:[#allocation2 + $0x40] sm:$0xff] %vm199, %v1777
      %1814 = vst.msk [vmem:[#allocation2 + $0x48] sm:$0xff] %vm199, %v1778
      %1815 = vst.msk [vmem:[#allocation2 + $0x50] sm:$0xff] %vm199, %v1779
      %1816 = vst.msk [vmem:[#allocation2 + $0x58] sm:$0xff] %vm199, %v1780
      %1817 = vst.msk [vmem:[#allocation2 + $0x60] sm:$0xff] %vm199, %v1781
      %1818 = vst.msk [vmem:[#allocation2 + $0x68] sm:$0xff] %vm199, %v1782
      %1819 = vst.msk [vmem:[#allocation2 + $0x70] sm:$0xff] %vm199, %v1783
      %1820 = vst.msk [vmem:[#allocation2 + $0x78] sm:$0xff] %vm199, %v1784
      %1821 = vst.msk [vmem:[#allocation2 + $0x80] sm:$0xff] %vm199, %v1785
      %1822 = vst.msk [vmem:[#allocation2 + $0x88] sm:$0xff] %vm199, %v1786
      %1823 = vst.msk [vmem:[#allocation2 + $0x90] sm:$0xff] %vm199, %v1787
      %1824 = vst.msk [vmem:[#allocation2 + $0x98] sm:$0xff] %vm199, %v1788
      %1825 = vst.msk [vmem:[#allocation2 + $0xa0] sm:$0xff] %vm199, %v1789
      %1826 = vst.msk [vmem:[#allocation2 + $0xa8] sm:$0xff] %vm199, %v1790
      %1827 = vst.msk [vmem:[#allocation2 + $0xb0] sm:$0xff] %vm199, %v1791
      %1828 = vst.msk [vmem:[#allocation2 + $0xb8] sm:$0xff] %vm199, %v1792
      %1829 = vst.msk [vmem:[#allocation2 + $0xc0] sm:$0xff] %vm199, %v1793
      %1830 = vst.msk [vmem:[#allocation2 + $0xc8] sm:$0xff] %vm199, %v1794
      %1831 = vst.msk [vmem:[#allocation2 + $0xd0] sm:$0xff] %vm199, %v1795
      %1832 = vst.msk [vmem:[#allocation2 + $0xd8] sm:$0xff] %vm199, %v1796
      %1833 = vst.msk [vmem:[#allocation2 + $0xe0] sm:$0xff] %vm199, %v1797
      %1834 = vst.msk [vmem:[#allocation2 + $0xe8] sm:$0xff] %vm199, %v1798
      %1835 = vst.msk [vmem:[#allocation2 + $0xf0] sm:$0xff] %vm199, %v1799
      %1836 = vst.msk [vmem:[#allocation2 + $0xf8] sm:$0xff] %vm199, %v1800
      %1837 = vst.msk [vmem:[#allocation2 + $0x100] sm:$0xff] %vm199, %v1801
      %1838 = vst.msk [vmem:[#allocation2 + $0x108] sm:$0xff] %vm199, %v1802
      %1839 = vst.msk [vmem:[#allocation2 + $0x110] sm:$0xff] %vm199, %v1803
      %1840 = vst.msk [vmem:[#allocation2 + $0x118] sm:$0xff] %vm199, %v1804
      %v1841 = vld [vmem:[%s192 + $0x8] sm:$0xe]
      %v1842 = vld [vmem:[%s192 + $0xc] sm:$0xf]
      %v1843 = vld [vmem:[%s192 + $0x10] sm:$0xf]
      %v1844 = vld [vmem:[%s192 + $0x14] sm:$0xf]
      %v1845 = vld [vmem:[%s192 + $0x18] sm:$0xf]
      %v1846 = vld [vmem:[%s192 + $0x1c] sm:$0xf]
      %v1847 = vld [vmem:[%s192 + $0x20] sm:$0xf]
      %v1848 = vld [vmem:[%s192 + $0x24] sm:$0xf]
      %v1849 = vld [vmem:[%s192 + $0x28] sm:$0xf]
      %v1850 = vld [vmem:[%s192 + $0x2c] sm:$0xf]
      %v1851 = vld [vmem:[%s192 + $0x30] sm:$0xf]
      %v1852 = vld [vmem:[%s192 + $0x34] sm:$0xf]
      %v1853 = vld [vmem:[%s192 + $0x38] sm:$0xf]
      %v1854 = vld [vmem:[%s192 + $0x3c] sm:$0xf]
      %v1855 = vld [vmem:[%s192 + $0x40] sm:$0xf]
      %v1856 = vld [vmem:[%s192 + $0x44] sm:$0xf]
      %v1857 = vld [vmem:[%s192 + $0x48] sm:$0xf]
      %v1858 = vld [vmem:[%s192 + $0x4c] sm:$0xf]
      %v1859 = vld [vmem:[%s192 + $0x50] sm:$0xf]
      %v1860 = vld [vmem:[%s192 + $0x54] sm:$0xf]
      %v1861 = vld [vmem:[%s192 + $0x58] sm:$0xf]
      %v1862 = vld [vmem:[%s192 + $0x5c] sm:$0xf]
      %v1863 = vld [vmem:[%s192 + $0x60] sm:$0xf]
      %v1864 = vld [vmem:[%s192 + $0x64] sm:$0xf]
      %v1865 = vld [vmem:[%s192 + $0x68] sm:$0xf]
      %v1866 = vld [vmem:[%s192 + $0x6c] sm:$0xf]
      %v1867 = vld [vmem:[%s192 + $0x70] sm:$0xf]
      %v1868 = vld [vmem:[%s192 + $0x74] sm:$0xf]
      %v1869 = vld [vmem:[%s192 + $0x78] sm:$0xf]
      %v1870 = vld [vmem:[%s192 + $0x7c] sm:$0xf]
      %v1871 = vld [vmem:[%s192 + $0x80] sm:$0xf]
      %v1872 = vld [vmem:[%s192 + $0x84] sm:$0xf]
      %v1873 = vld [vmem:[%s192 + $0x88] sm:$0xf]
      %v1874 = vld [vmem:[%s192 + $0x8c] sm:$0xf]
      %v1875 = vld [vmem:[%s192 + $0x90] sm:$0xf]
      %v1876 = vld [vmem:[%s192 + $0x94] sm:$0xf]
      %v1877 = vld [vmem:[%s192 + $0x98] sm:$0x1]
      %v1878 = vld [vmem:[#allocation2] sm:$0xff]
      %v1879 = vld [vmem:[#allocation2 + $0x8] sm:$0xff]
      %v1880 = vld [vmem:[#allocation2 + $0x10] sm:$0xff]
      %v1881 = vld [vmem:[#allocation2 + $0x18] sm:$0xff]
      %v1882 = vld [vmem:[#allocation2 + $0x20] sm:$0xff]
      %v1883 = vld [vmem:[#allocation2 + $0x28] sm:$0xff]
      %v1884 = vld [vmem:[#allocation2 + $0x30] sm:$0xff]
      %v1885 = vld [vmem:[#allocation2 + $0x38] sm:$0xff]
      %v1886 = vld [vmem:[#allocation2 + $0x40] sm:$0xff]
      %v1887 = vld [vmem:[#allocation2 + $0x48] sm:$0xff]
      %v1888 = vld [vmem:[#allocation2 + $0x50] sm:$0xff]
      %v1889 = vld [vmem:[#allocation2 + $0x58] sm:$0xff]
      %v1890 = vld [vmem:[#allocation2 + $0x60] sm:$0xff]
      %v1891 = vld [vmem:[#allocation2 + $0x68] sm:$0xff]
      %v1892 = vld [vmem:[#allocation2 + $0x70] sm:$0xff]
      %v1893 = vld [vmem:[#allocation2 + $0x78] sm:$0xff]
      %v1894 = vld [vmem:[#allocation2 + $0x80] sm:$0xff]
      %v1895 = vld [vmem:[#allocation2 + $0x88] sm:$0xff]
      %v1896 = vld [vmem:[#allocation2 + $0x90] sm:$0xff]
      %v1897 = vld [vmem:[#allocation2 + $0x98] sm:$0xff]
      %v1898 = vld [vmem:[#allocation2 + $0xa0] sm:$0xff]
      %v1899 = vld [vmem:[#allocation2 + $0xa8] sm:$0xff]
      %v1900 = vld [vmem:[#allocation2 + $0xb0] sm:$0xff]
      %v1901 = vld [vmem:[#allocation2 + $0xb8] sm:$0xff]
      %v1902 = vld [vmem:[#allocation2 + $0xc0] sm:$0xff]
      %v1903 = vld [vmem:[#allocation2 + $0xc8] sm:$0xff]
      %v1904 = vld [vmem:[#allocation2 + $0xd0] sm:$0xff]
      %v1905 = vld [vmem:[#allocation2 + $0xd8] sm:$0xff]
      %v1906 = vld [vmem:[#allocation2 + $0xe0] sm:$0xff]
      %v1907 = vld [vmem:[#allocation2 + $0xe8] sm:$0xff]
      %v1908 = vld [vmem:[#allocation2 + $0xf0] sm:$0xff]
      %v1909 = vld [vmem:[#allocation2 + $0xf8] sm:$0xff]
      %v1910 = vld [vmem:[#allocation2 + $0x100] sm:$0xff]
      %v1911 = vld [vmem:[#allocation2 + $0x108] sm:$0xff]
      %v1912 = vld [vmem:[#allocation2 + $0x110] sm:$0xff]
      %v1913 = vld [vmem:[#allocation2 + $0x118] sm:$0xff]
      %s1914 = scalar_lea.vmem %s1, 12
      %v1915 = vld [vmem:[%s1914] sm:$0xf]
      %v1953 = vunpack.c.l.b16 %v1841
      %v1954 = vunpack.c.l.b16 %v1842
      %v1955 = vunpack.c.l.b16 %v1843
      %v1956 = vunpack.c.l.b16 %v1844
      %v1957 = vunpack.c.l.b16 %v1845
      %v1958 = vunpack.c.l.b16 %v1846
      %v1959 = vunpack.c.l.b16 %v1847
      %v1960 = vunpack.c.l.b16 %v1848
      %v1961 = vunpack.c.l.b16 %v1849
      %v1962 = vunpack.c.l.b16 %v1850
      %v1963 = vunpack.c.l.b16 %v1851
      %v1964 = vunpack.c.l.b16 %v1852
      %v1965 = vunpack.c.l.b16 %v1853
      %v1966 = vunpack.c.l.b16 %v1854
      %v1967 = vunpack.c.l.b16 %v1855
      %v1968 = vunpack.c.l.b16 %v1856
      %v1969 = vunpack.c.l.b16 %v1857
      %v1970 = vunpack.c.l.b16 %v1858
      %v1971 = vunpack.c.l.b16 %v1859
      %v1972 = vunpack.c.l.b16 %v1860
      %v1973 = vunpack.c.l.b16 %v1861
      %v1974 = vunpack.c.l.b16 %v1862
      %v1975 = vunpack.c.l.b16 %v1863
      %v1976 = vunpack.c.l.b16 %v1864
      %v1977 = vunpack.c.l.b16 %v1865
      %v1978 = vunpack.c.l.b16 %v1866
      %v1979 = vunpack.c.l.b16 %v1867
      %v1980 = vunpack.c.l.b16 %v1868
      %v1981 = vunpack.c.l.b16 %v1869
      %v1982 = vunpack.c.l.b16 %v1870
      %v1983 = vunpack.c.l.b16 %v1871
      %v1984 = vunpack.c.l.b16 %v1872
      %v1985 = vunpack.c.l.b16 %v1873
      %v1986 = vunpack.c.l.b16 %v1874
      %v1987 = vunpack.c.l.b16 %v1875
      %v1988 = vunpack.c.l.b16 %v1876
      %v1989 = vunpack.c.l.b16 %v1877
      %v1990 = vpack.c.b16 %v1954, %v1953
      %v1991 = vpack.c.b16 %v1956, %v1955
      %v1992 = vpack.c.b16 %v1958, %v1957
      %v1993 = vpack.c.b16 %v1960, %v1959
      %v1994 = vpack.c.b16 %v1962, %v1961
      %v1995 = vpack.c.b16 %v1964, %v1963
      %v1996 = vpack.c.b16 %v1966, %v1965
      %v1997 = vpack.c.b16 %v1968, %v1967
      %v1998 = vpack.c.b16 %v1970, %v1969
      %v1999 = vpack.c.b16 %v1972, %v1971
      %v2000 = vpack.c.b16 %v1974, %v1973
      %v2001 = vpack.c.b16 %v1976, %v1975
      %v2002 = vpack.c.b16 %v1978, %v1977
      %v2003 = vpack.c.b16 %v1980, %v1979
      %v2004 = vpack.c.b16 %v1982, %v1981
      %v2005 = vpack.c.b16 %v1984, %v1983
      %v2006 = vpack.c.b16 %v1986, %v1985
      %v2007 = vpack.c.b16 %v1988, %v1987
      %v2008 = vpack.c.b16 %v1989, %v1989
      %v2009 = vrot.slane %v1990, 1
      %v2010 = vrot.slane %v1991, 1
      %v2011 = vsel %vm1497, %v2009, %v2010
      %v2012 = vrot.slane %v1992, 1
      %v2013 = vsel %vm1497, %v2010, %v2012
      %v2014 = vrot.slane %v1993, 1
      %v2015 = vsel %vm1497, %v2012, %v2014
      %v2016 = vrot.slane %v1994, 1
      %v2017 = vsel %vm1497, %v2014, %v2016
      %v2018 = vrot.slane %v1995, 1
      %v2019 = vsel %vm1497, %v2016, %v2018
      %v2020 = vrot.slane %v1996, 1
      %v2021 = vsel %vm1497, %v2018, %v2020
      %v2022 = vrot.slane %v1997, 1
      %v2023 = vsel %vm1497, %v2020, %v2022
      %v2024 = vrot.slane %v1998, 1
      %v2025 = vsel %vm1497, %v2022, %v2024
      %v2026 = vrot.slane %v1999, 1
      %v2027 = vsel %vm1497, %v2024, %v2026
      %v2028 = vrot.slane %v2000, 1
      %v2029 = vsel %vm1497, %v2026, %v2028
      %v2030 = vrot.slane %v2001, 1
      %v2031 = vsel %vm1497, %v2028, %v2030
      %v2032 = vrot.slane %v2002, 1
      %v2033 = vsel %vm1497, %v2030, %v2032
      %v2034 = vrot.slane %v2003, 1
      %v2035 = vsel %vm1497, %v2032, %v2034
      %v2036 = vrot.slane %v2004, 1
      %v2037 = vsel %vm1497, %v2034, %v2036
      %v2038 = vrot.slane %v2005, 1
      %v2039 = vsel %vm1497, %v2036, %v2038
      %v2040 = vrot.slane %v2006, 1
      %v2041 = vsel %vm1497, %v2038, %v2040
      %v2042 = vrot.slane %v2007, 1
      %v2043 = vsel %vm1497, %v2040, %v2042
      %v2044 = vrot.slane %v2008, 1
      %v2045 = vsel %vm1497, %v2042, %v2044
      %v2047 = vsel %vm199, %v2011, 0
      %v2050 = vsel %vm199, %v2013, 0
      %v2053 = vsel %vm199, %v2015, 0
      %v2056 = vsel %vm199, %v2017, 0
      %v2059 = vsel %vm199, %v2019, 0
      %v2062 = vsel %vm199, %v2021, 0
      %v2065 = vsel %vm199, %v2023, 0
      %v2068 = vsel %vm199, %v2025, 0
      %v2071 = vsel %vm199, %v2027, 0
      %v2074 = vsel %vm199, %v2029, 0
      %v2077 = vsel %vm199, %v2031, 0
      %v2080 = vsel %vm199, %v2033, 0
      %v2083 = vsel %vm199, %v2035, 0
      %v2086 = vsel %vm199, %v2037, 0
      %v2089 = vsel %vm199, %v2039, 0
      %v2092 = vsel %vm199, %v2041, 0
      %v2095 = vsel %vm199, %v2043, 0
      %v2098 = vsel %vm199, %v2045, 0
      %v2101 = vsel %vm453, %v1915, 0
      %2103 = vmatprep.subr.bf16.mxu0 0
      %2104 = vmatpush1.bf16.msra.mxu0 %v2101
      %2105 = vmatprep.subr.bf16.mxu0 0
      %2106 = vmatpush1.bf16.msra.mxu0 0
      %2107 = vmatprep.subr.bf16.mxu0 0
      %2108 = vmatpush1.bf16.msra.mxu0 0
      %2109 = vmatprep.subr.bf16.mxu0 0
      %2110 = vmatpush1.bf16.msra.mxu0 0
      %2111 = vmatprep.subr.bf16.mxu0 0
      %2112 = vmatpush1.bf16.msra.mxu0 0
      %2113 = vmatprep.subr.bf16.mxu0 0
      %2114 = vmatpush1.bf16.msra.mxu0 0
      %2115 = vmatprep.subr.bf16.mxu0 0
      %2116 = vmatpush1.bf16.msra.mxu0 0
      %2117 = vmatprep.subr.bf16.mxu0 0
      %2118 = vmatpush1.bf16.msra.mxu0 0
      %2119 = vmatprep.subr.bf16.mxu0 0
      %2120 = vmatpush1.bf16.msra.mxu0 0
      %2121 = vmatprep.subr.bf16.mxu0 0
      %2122 = vmatpush1.bf16.msra.mxu0 0
      %2123 = vmatprep.subr.bf16.mxu0 0
      %2124 = vmatpush1.bf16.msra.mxu0 0
      %2125 = vmatprep.subr.bf16.mxu0 0
      %2126 = vmatpush1.bf16.msra.mxu0 0
      %2127 = vmatprep.subr.bf16.mxu0 0
      %2128 = vmatpush1.bf16.msra.mxu0 0
      %2129 = vmatprep.subr.bf16.mxu0 0
      %2130 = vmatpush1.bf16.msra.mxu0 0
      %2131 = vmatprep.subr.bf16.mxu0 0
      %2132 = vmatpush1.bf16.msra.mxu0 0
      %2133 = vmatprep.subr.bf16.mxu0 0
      %2134 = vmatpush1.bf16.msra.mxu0 0
      %2135 = vmatprep.mubr.bf16.mxu0 0
      %2136 = vmatmul.mubr.bf16.gmra.mrb[0].mxu0 %v2047
      %v2137 = vpop.f32.mrb[0].mxu0
      %v2138 = vadd.f32 0.0, %v2137
      %v2139 = vpop.f32.mrb[0].mxu0
      %v2140 = vpop.f32.mrb[0].mxu0
      %v2141 = vadd.f32 0.0, %v2140
      %v2142 = vpop.f32.mrb[0].mxu0
      %2143 = vmatprep.mubr.bf16.mxu0 0
      %2144 = vmatmul.mubr.bf16.gmra.mrb[0].mxu0 %v2050
      %v2145 = vpop.f32.mrb[0].mxu0
      %v2146 = vadd.f32 0.0, %v2145
      %v2147 = vpop.f32.mrb[0].mxu0
      %v2148 = vpop.f32.mrb[0].mxu0
      %v2149 = vadd.f32 0.0, %v2148
      %v2150 = vpop.f32.mrb[0].mxu0
      %2151 = vmatprep.mubr.bf16.mxu0 0
      %2152 = vmatmul.mubr.bf16.gmra.mrb[0].mxu0 %v2053
      %v2153 = vpop.f32.mrb[0].mxu0
      %v2154 = vadd.f32 0.0, %v2153
      %v2155 = vpop.f32.mrb[0].mxu0
      %v2156 = vpop.f32.mrb[0].mxu0
      %v2157 = vadd.f32 0.0, %v2156
      %v2158 = vpop.f32.mrb[0].mxu0
      %2159 = vmatprep.mubr.bf16.mxu0 0
      %2160 = vmatmul.mubr.bf16.gmra.mrb[0].mxu0 %v2056
      %v2161 = vpop.f32.mrb[0].mxu0
      %v2162 = vadd.f32 0.0, %v2161
      %v2163 = vpop.f32.mrb[0].mxu0
      %v2164 = vpop.f32.mrb[0].mxu0
      %v2165 = vadd.f32 0.0, %v2164
      %v2166 = vpop.f32.mrb[0].mxu0
      %2167 = vmatprep.mubr.bf16.mxu0 0
      %2168 = vmatmul.mubr.bf16.gmra.mrb[0].mxu0 %v2059
      %v2169 = vpop.f32.mrb[0].mxu0
      %v2170 = vadd.f32 0.0, %v2169
      %v2171 = vpop.f32.mrb[0].mxu0
      %v2172 = vpop.f32.mrb[0].mxu0
      %v2173 = vadd.f32 0.0, %v2172
      %v2174 = vpop.f32.mrb[0].mxu0
      %2175 = vmatprep.mubr.bf16.mxu0 0
      %2176 = vmatmul.mubr.bf16.gmra.mrb[0].mxu0 %v2062
      %v2177 = vpop.f32.mrb[0].mxu0
      %v2178 = vadd.f32 0.0, %v2177
      %v2179 = vpop.f32.mrb[0].mxu0
      %v2180 = vpop.f32.mrb[0].mxu0
      %v2181 = vadd.f32 0.0, %v2180
      %v2182 = vpop.f32.mrb[0].mxu0
      %2183 = vmatprep.mubr.bf16.mxu0 0
      %2184 = vmatmul.mubr.bf16.gmra.mrb[0].mxu0 %v2065
      %v2185 = vpop.f32.mrb[0].mxu0
      %v2186 = vadd.f32 0.0, %v2185
      %v2187 = vpop.f32.mrb[0].mxu0
      %v2188 = vpop.f32.mrb[0].mxu0
      %v2189 = vadd.f32 0.0, %v2188
      %v2190 = vpop.f32.mrb[0].mxu0
      %2191 = vmatprep.mubr.bf16.mxu0 0
      %2192 = vmatmul.mubr.bf16.gmra.mrb[0].mxu0 %v2068
      %v2193 = vpop.f32.mrb[0].mxu0
      %v2194 = vadd.f32 0.0, %v2193
      %v2195 = vpop.f32.mrb[0].mxu0
      %v2196 = vpop.f32.mrb[0].mxu0
      %v2197 = vadd.f32 0.0, %v2196
      %v2198 = vpop.f32.mrb[0].mxu0
      %2199 = vmatprep.mubr.bf16.mxu0 0
      %2200 = vmatmul.mubr.bf16.gmra.mrb[0].mxu0 %v2071
      %v2201 = vpop.f32.mrb[0].mxu0
      %v2202 = vadd.f32 0.0, %v2201
      %v2203 = vpop.f32.mrb[0].mxu0
      %v2204 = vpop.f32.mrb[0].mxu0
      %v2205 = vadd.f32 0.0, %v2204
      %v2206 = vpop.f32.mrb[0].mxu0
      %2207 = vmatprep.mubr.bf16.mxu0 0
      %2208 = vmatmul.mubr.bf16.gmra.mrb[0].mxu0 %v2074
      %v2209 = vpop.f32.mrb[0].mxu0
      %v2210 = vadd.f32 0.0, %v2209
      %v2211 = vpop.f32.mrb[0].mxu0
      %v2212 = vpop.f32.mrb[0].mxu0
      %v2213 = vadd.f32 0.0, %v2212
      %v2214 = vpop.f32.mrb[0].mxu0
      %2215 = vmatprep.mubr.bf16.mxu0 0
      %2216 = vmatmul.mubr.bf16.gmra.mrb[0].mxu0 %v2077
      %v2217 = vpop.f32.mrb[0].mxu0
      %v2218 = vadd.f32 0.0, %v2217
      %v2219 = vpop.f32.mrb[0].mxu0
      %v2220 = vpop.f32.mrb[0].mxu0
      %v2221 = vadd.f32 0.0, %v2220
      %v2222 = vpop.f32.mrb[0].mxu0
      %2223 = vmatprep.mubr.bf16.mxu0 0
      %2224 = vmatmul.mubr.bf16.gmra.mrb[0].mxu0 %v2080
      %v2225 = vpop.f32.mrb[0].mxu0
      %v2226 = vadd.f32 0.0, %v2225
      %v2227 = vpop.f32.mrb[0].mxu0
      %v2228 = vpop.f32.mrb[0].mxu0
      %v2229 = vadd.f32 0.0, %v2228
      %v2230 = vpop.f32.mrb[0].mxu0
      %2231 = vmatprep.mubr.bf16.mxu0 0
      %2232 = vmatmul.mubr.bf16.gmra.mrb[0].mxu0 %v2083
      %v2233 = vpop.f32.mrb[0].mxu0
      %v2234 = vadd.f32 0.0, %v2233
      %v2235 = vpop.f32.mrb[0].mxu0
      %v2236 = vpop.f32.mrb[0].mxu0
      %v2237 = vadd.f32 0.0, %v2236
      %v2238 = vpop.f32.mrb[0].mxu0
      %2239 = vmatprep.mubr.bf16.mxu0 0
      %2240 = vmatmul.mubr.bf16.gmra.mrb[0].mxu0 %v2086
      %v2241 = vpop.f32.mrb[0].mxu0
      %v2242 = vadd.f32 0.0, %v2241
      %v2243 = vpop.f32.mrb[0].mxu0
      %v2244 = vpop.f32.mrb[0].mxu0
      %v2245 = vadd.f32 0.0, %v2244
      %v2246 = vpop.f32.mrb[0].mxu0
      %2247 = vmatprep.mubr.bf16.mxu0 0
      %2248 = vmatmul.mubr.bf16.gmra.mrb[0].mxu0 %v2089
      %v2249 = vpop.f32.mrb[0].mxu0
      %v2250 = vadd.f32 0.0, %v2249
      %v2251 = vpop.f32.mrb[0].mxu0
      %v2252 = vpop.f32.mrb[0].mxu0
      %v2253 = vadd.f32 0.0, %v2252
      %v2254 = vpop.f32.mrb[0].mxu0
      %2255 = vmatprep.mubr.bf16.mxu0 0
      %2256 = vmatmul.mubr.bf16.gmra.mrb[0].mxu0 %v2092
      %v2257 = vpop.f32.mrb[0].mxu0
      %v2258 = vadd.f32 0.0, %v2257
      %v2259 = vpop.f32.mrb[0].mxu0
      %v2260 = vpop.f32.mrb[0].mxu0
      %v2261 = vadd.f32 0.0, %v2260
      %v2262 = vpop.f32.mrb[0].mxu0
      %2263 = vmatprep.mubr.bf16.mxu0 0
      %2264 = vmatmul.mubr.bf16.gmra.mrb[0].mxu0 %v2095
      %v2265 = vpop.f32.mrb[0].mxu0
      %v2266 = vadd.f32 0.0, %v2265
      %v2267 = vpop.f32.mrb[0].mxu0
      %v2268 = vpop.f32.mrb[0].mxu0
      %v2269 = vadd.f32 0.0, %v2268
      %v2270 = vpop.f32.mrb[0].mxu0
      %2271 = vmatprep.mubr.bf16.mxu0 0
      %2272 = vmatmul.mubr.bf16.gmra.mrb[0].mxu0 %v2098
      %v2273 = vpop.f32.mrb[0].mxu0
      %v2274 = vadd.f32 0.0, %v2273
      %v2275 = vpop.f32.mrb[0].mxu0
      %v2276 = vpop.f32.mrb[0].mxu0
      %v2277 = vadd.f32 0.0, %v2276
      %v2278 = vpop.f32.mrb[0].mxu0
      %2279 = vdwg.mxu0
      %v2280 = vadd.f32 %v1878, %v2138
      %v2281 = vadd.f32 %v1879, %v2141
      %v2282 = vadd.f32 %v1880, %v2146
      %v2283 = vadd.f32 %v1881, %v2149
      %v2284 = vadd.f32 %v1882, %v2154
      %v2285 = vadd.f32 %v1883, %v2157
      %v2286 = vadd.f32 %v1884, %v2162
      %v2287 = vadd.f32 %v1885, %v2165
      %v2288 = vadd.f32 %v1886, %v2170
      %v2289 = vadd.f32 %v1887, %v2173
      %v2290 = vadd.f32 %v1888, %v2178
      %v2291 = vadd.f32 %v1889, %v2181
      %v2292 = vadd.f32 %v1890, %v2186
      %v2293 = vadd.f32 %v1891, %v2189
      %v2294 = vadd.f32 %v1892, %v2194
      %v2295 = vadd.f32 %v1893, %v2197
      %v2296 = vadd.f32 %v1894, %v2202
      %v2297 = vadd.f32 %v1895, %v2205
      %v2298 = vadd.f32 %v1896, %v2210
      %v2299 = vadd.f32 %v1897, %v2213
      %v2300 = vadd.f32 %v1898, %v2218
      %v2301 = vadd.f32 %v1899, %v2221
      %v2302 = vadd.f32 %v1900, %v2226
      %v2303 = vadd.f32 %v1901, %v2229
      %v2304 = vadd.f32 %v1902, %v2234
      %v2305 = vadd.f32 %v1903, %v2237
      %v2306 = vadd.f32 %v1904, %v2242
      %v2307 = vadd.f32 %v1905, %v2245
      %v2308 = vadd.f32 %v1906, %v2250
      %v2309 = vadd.f32 %v1907, %v2253
      %v2310 = vadd.f32 %v1908, %v2258
      %v2311 = vadd.f32 %v1909, %v2261
      %v2312 = vadd.f32 %v1910, %v2266
      %v2313 = vadd.f32 %v1911, %v2269
      %v2314 = vadd.f32 %v1912, %v2274
      %v2315 = vadd.f32 %v1913, %v2277
      %2316 = vst.msk [vmem:[#allocation2] sm:$0xff] %vm199, %v2280
      %2317 = vst.msk [vmem:[#allocation2 + $0x8] sm:$0xff] %vm199, %v2281
      %2318 = vst.msk [vmem:[#allocation2 + $0x10] sm:$0xff] %vm199, %v2282
      %2319 = vst.msk [vmem:[#allocation2 + $0x18] sm:$0xff] %vm199, %v2283
      %2320 = vst.msk [vmem:[#allocation2 + $0x20] sm:$0xff] %vm199, %v2284
      %2321 = vst.msk [vmem:[#allocation2 + $0x28] sm:$0xff] %vm199, %v2285
      %2322 = vst.msk [vmem:[#allocation2 + $0x30] sm:$0xff] %vm199, %v2286
      %2323 = vst.msk [vmem:[#allocation2 + $0x38] sm:$0xff] %vm199, %v2287
      %2324 = vst.msk [vmem:[#allocation2 + $0x40] sm:$0xff] %vm199, %v2288
      %2325 = vst.msk [vmem:[#allocation2 + $0x48] sm:$0xff] %vm199, %v2289
      %2326 = vst.msk [vmem:[#allocation2 + $0x50] sm:$0xff] %vm199, %v2290
      %2327 = vst.msk [vmem:[#allocation2 + $0x58] sm:$0xff] %vm199, %v2291
      %2328 = vst.msk [vmem:[#allocation2 + $0x60] sm:$0xff] %vm199, %v2292
      %2329 = vst.msk [vmem:[#allocation2 + $0x68] sm:$0xff] %vm199, %v2293
      %2330 = vst.msk [vmem:[#allocation2 + $0x70] sm:$0xff] %vm199, %v2294
      %2331 = vst.msk [vmem:[#allocation2 + $0x78] sm:$0xff] %vm199, %v2295
      %2332 = vst.msk [vmem:[#allocation2 + $0x80] sm:$0xff] %vm199, %v2296
      %2333 = vst.msk [vmem:[#allocation2 + $0x88] sm:$0xff] %vm199, %v2297
      %2334 = vst.msk [vmem:[#allocation2 + $0x90] sm:$0xff] %vm199, %v2298
      %2335 = vst.msk [vmem:[#allocation2 + $0x98] sm:$0xff] %vm199, %v2299
      %2336 = vst.msk [vmem:[#allocation2 + $0xa0] sm:$0xff] %vm199, %v2300
      %2337 = vst.msk [vmem:[#allocation2 + $0xa8] sm:$0xff] %vm199, %v2301
      %2338 = vst.msk [vmem:[#allocation2 + $0xb0] sm:$0xff] %vm199, %v2302
      %2339 = vst.msk [vmem:[#allocation2 + $0xb8] sm:$0xff] %vm199, %v2303
      %2340 = vst.msk [vmem:[#allocation2 + $0xc0] sm:$0xff] %vm199, %v2304
      %2341 = vst.msk [vmem:[#allocation2 + $0xc8] sm:$0xff] %vm199, %v2305
      %2342 = vst.msk [vmem:[#allocation2 + $0xd0] sm:$0xff] %vm199, %v2306
      %2343 = vst.msk [vmem:[#allocation2 + $0xd8] sm:$0xff] %vm199, %v2307
      %2344 = vst.msk [vmem:[#allocation2 + $0xe0] sm:$0xff] %vm199, %v2308
      %2345 = vst.msk [vmem:[#allocation2 + $0xe8] sm:$0xff] %vm199, %v2309
      %2346 = vst.msk [vmem:[#allocation2 + $0xf0] sm:$0xff] %vm199, %v2310
      %2347 = vst.msk [vmem:[#allocation2 + $0xf8] sm:$0xff] %vm199, %v2311
      %2348 = vst.msk [vmem:[#allocation2 + $0x100] sm:$0xff] %vm199, %v2312
      %2349 = vst.msk [vmem:[#allocation2 + $0x108] sm:$0xff] %vm199, %v2313
      %2350 = vst.msk [vmem:[#allocation2 + $0x110] sm:$0xff] %vm199, %v2314
      %2351 = vst.msk [vmem:[#allocation2 + $0x118] sm:$0xff] %vm199, %v2315
      %v2352 = vld [vmem:[%s192 + $0x8] sm:$0xe]
      %v2353 = vld [vmem:[%s192 + $0xc] sm:$0xf]
      %v2354 = vld [vmem:[%s192 + $0x10] sm:$0xf]
      %v2355 = vld [vmem:[%s192 + $0x14] sm:$0xf]
      %v2356 = vld [vmem:[%s192 + $0x18] sm:$0xf]
      %v2357 = vld [vmem:[%s192 + $0x1c] sm:$0xf]
      %v2358 = vld [vmem:[%s192 + $0x20] sm:$0xf]
      %v2359 = vld [vmem:[%s192 + $0x24] sm:$0xf]
      %v2360 = vld [vmem:[%s192 + $0x28] sm:$0xf]
      %v2361 = vld [vmem:[%s192 + $0x2c] sm:$0xf]
      %v2362 = vld [vmem:[%s192 + $0x30] sm:$0xf]
      %v2363 = vld [vmem:[%s192 + $0x34] sm:$0xf]
      %v2364 = vld [vmem:[%s192 + $0x38] sm:$0xf]
      %v2365 = vld [vmem:[%s192 + $0x3c] sm:$0xf]
      %v2366 = vld [vmem:[%s192 + $0x40] sm:$0xf]
      %v2367 = vld [vmem:[%s192 + $0x44] sm:$0xf]
      %v2368 = vld [vmem:[%s192 + $0x48] sm:$0xf]
      %v2369 = vld [vmem:[%s192 + $0x4c] sm:$0xf]
      %v2370 = vld [vmem:[%s192 + $0x50] sm:$0xf]
      %v2371 = vld [vmem:[%s192 + $0x54] sm:$0xf]
      %v2372 = vld [vmem:[%s192 + $0x58] sm:$0xf]
      %v2373 = vld [vmem:[%s192 + $0x5c] sm:$0xf]
      %v2374 = vld [vmem:[%s192 + $0x60] sm:$0xf]
      %v2375 = vld [vmem:[%s192 + $0x64] sm:$0xf]
      %v2376 = vld [vmem:[%s192 + $0x68] sm:$0xf]
      %v2377 = vld [vmem:[%s192 + $0x6c] sm:$0xf]
      %v2378 = vld [vmem:[%s192 + $0x70] sm:$0xf]
      %v2379 = vld [vmem:[%s192 + $0x74] sm:$0xf]
      %v2380 = vld [vmem:[%s192 + $0x78] sm:$0xf]
      %v2381 = vld [vmem:[%s192 + $0x7c] sm:$0xf]
      %v2382 = vld [vmem:[%s192 + $0x80] sm:$0xf]
      %v2383 = vld [vmem:[%s192 + $0x84] sm:$0xf]
      %v2384 = vld [vmem:[%s192 + $0x88] sm:$0xf]
      %v2385 = vld [vmem:[%s192 + $0x8c] sm:$0xf]
      %v2386 = vld [vmem:[%s192 + $0x90] sm:$0xf]
      %v2387 = vld [vmem:[%s192 + $0x94] sm:$0xf]
      %v2388 = vld [vmem:[%s192 + $0x98] sm:$0x3]
      %v2389 = vld [vmem:[#allocation2] sm:$0xff]
      %v2390 = vld [vmem:[#allocation2 + $0x8] sm:$0xff]
      %v2391 = vld [vmem:[#allocation2 + $0x10] sm:$0xff]
      %v2392 = vld [vmem:[#allocation2 + $0x18] sm:$0xff]
      %v2393 = vld [vmem:[#allocation2 + $0x20] sm:$0xff]
      %v2394 = vld [vmem:[#allocation2 + $0x28] sm:$0xff]
      %v2395 = vld [vmem:[#allocation2 + $0x30] sm:$0xff]
      %v2396 = vld [vmem:[#allocation2 + $0x38] sm:$0xff]
      %v2397 = vld [vmem:[#allocation2 + $0x40] sm:$0xff]
      %v2398 = vld [vmem:[#allocation2 + $0x48] sm:$0xff]
      %v2399 = vld [vmem:[#allocation2 + $0x50] sm:$0xff]
      %v2400 = vld [vmem:[#allocation2 + $0x58] sm:$0xff]
      %v2401 = vld [vmem:[#allocation2 + $0x60] sm:$0xff]
      %v2402 = vld [vmem:[#allocation2 + $0x68] sm:$0xff]
      %v2403 = vld [vmem:[#allocation2 + $0x70] sm:$0xff]
      %v2404 = vld [vmem:[#allocation2 + $0x78] sm:$0xff]
      %v2405 = vld [vmem:[#allocation2 + $0x80] sm:$0xff]
      %v2406 = vld [vmem:[#allocation2 + $0x88] sm:$0xff]
      %v2407 = vld [vmem:[#allocation2 + $0x90] sm:$0xff]
      %v2408 = vld [vmem:[#allocation2 + $0x98] sm:$0xff]
      %v2409 = vld [vmem:[#allocation2 + $0xa0] sm:$0xff]
      %v2410 = vld [vmem:[#allocation2 + $0xa8] sm:$0xff]
      %v2411 = vld [vmem:[#allocation2 + $0xb0] sm:$0xff]
      %v2412 = vld [vmem:[#allocation2 + $0xb8] sm:$0xff]
      %v2413 = vld [vmem:[#allocation2 + $0xc0] sm:$0xff]
      %v2414 = vld [vmem:[#allocation2 + $0xc8] sm:$0xff]
      %v2415 = vld [vmem:[#allocation2 + $0xd0] sm:$0xff]
      %v2416 = vld [vmem:[#allocation2 + $0xd8] sm:$0xff]
      %v2417 = vld [vmem:[#allocation2 + $0xe0] sm:$0xff]
      %v2418 = vld [vmem:[#allocation2 + $0xe8] sm:$0xff]
      %v2419 = vld [vmem:[#allocation2 + $0xf0] sm:$0xff]
      %v2420 = vld [vmem:[#allocation2 + $0xf8] sm:$0xff]
      %v2421 = vld [vmem:[#allocation2 + $0x100] sm:$0xff]
      %v2422 = vld [vmem:[#allocation2 + $0x108] sm:$0xff]
      %v2423 = vld [vmem:[#allocation2 + $0x110] sm:$0xff]
      %v2424 = vld [vmem:[#allocation2 + $0x118] sm:$0xff]
      %s2425 = scalar_lea.vmem %s1, 16
      %v2426 = vld [vmem:[%s2425] sm:$0xf]
      %v2464 = vunpack.c.l.b16 %v2352
      %v2465 = vunpack.c.l.b16 %v2353
      %v2466 = vunpack.c.l.b16 %v2354
      %v2467 = vunpack.c.l.b16 %v2355
      %v2468 = vunpack.c.l.b16 %v2356
      %v2469 = vunpack.c.l.b16 %v2357
      %v2470 = vunpack.c.l.b16 %v2358
      %v2471 = vunpack.c.l.b16 %v2359
      %v2472 = vunpack.c.l.b16 %v2360
      %v2473 = vunpack.c.l.b16 %v2361
      %v2474 = vunpack.c.l.b16 %v2362
      %v2475 = vunpack.c.l.b16 %v2363
      %v2476 = vunpack.c.l.b16 %v2364
      %v2477 = vunpack.c.l.b16 %v2365
      %v2478 = vunpack.c.l.b16 %v2366
      %v2479 = vunpack.c.l.b16 %v2367
      %v2480 = vunpack.c.l.b16 %v2368
      %v2481 = vunpack.c.l.b16 %v2369
      %v2482 = vunpack.c.l.b16 %v2370
      %v2483 = vunpack.c.l.b16 %v2371
      %v2484 = vunpack.c.l.b16 %v2372
      %v2485 = vunpack.c.l.b16 %v2373
      %v2486 = vunpack.c.l.b16 %v2374
      %v2487 = vunpack.c.l.b16 %v2375
      %v2488 = vunpack.c.l.b16 %v2376
      %v2489 = vunpack.c.l.b16 %v2377
      %v2490 = vunpack.c.l.b16 %v2378
      %v2491 = vunpack.c.l.b16 %v2379
      %v2492 = vunpack.c.l.b16 %v2380
      %v2493 = vunpack.c.l.b16 %v2381
      %v2494 = vunpack.c.l.b16 %v2382
      %v2495 = vunpack.c.l.b16 %v2383
      %v2496 = vunpack.c.l.b16 %v2384
      %v2497 = vunpack.c.l.b16 %v2385
      %v2498 = vunpack.c.l.b16 %v2386
      %v2499 = vunpack.c.l.b16 %v2387
      %v2500 = vunpack.c.l.b16 %v2388
      %v2501 = vpack.c.b16 %v2465, %v2464
      %v2502 = vpack.c.b16 %v2467, %v2466
      %v2503 = vpack.c.b16 %v2469, %v2468
      %v2504 = vpack.c.b16 %v2471, %v2470
      %v2505 = vpack.c.b16 %v2473, %v2472
      %v2506 = vpack.c.b16 %v2475, %v2474
      %v2507 = vpack.c.b16 %v2477, %v2476
      %v2508 = vpack.c.b16 %v2479, %v2478
      %v2509 = vpack.c.b16 %v2481, %v2480
      %v2510 = vpack.c.b16 %v2483, %v2482
      %v2511 = vpack.c.b16 %v2485, %v2484
      %v2512 = vpack.c.b16 %v2487, %v2486
      %v2513 = vpack.c.b16 %v2489, %v2488
      %v2514 = vpack.c.b16 %v2491, %v2490
      %v2515 = vpack.c.b16 %v2493, %v2492
      %v2516 = vpack.c.b16 %v2495, %v2494
      %v2517 = vpack.c.b16 %v2497, %v2496
      %v2518 = vpack.c.b16 %v2499, %v2498
      %v2519 = vpack.c.b16 %v2500, %v2500
      %vm2520 = vsmask.f32 6400
      %v2522 = vshrl.u32 %v2501, 16
      %v2524 = vrot.slane %v2522, 1
      %v2525 = vshll.u32 %v2501, 16
      %v2527 = vrot.slane %v2525, 2
      %v2528 = vor.u32 %v2524, %v2527
      %v2530 = vshrl.u32 %v2502, 16
      %v2532 = vrot.slane %v2530, 1
      %v2533 = vshll.u32 %v2502, 16
      %v2535 = vrot.slane %v2533, 2
      %v2536 = vor.u32 %v2532, %v2535
      %v2537 = vsel %vm2520, %v2528, %v2536
      %v2539 = vshrl.u32 %v2503, 16
      %v2541 = vrot.slane %v2539, 1
      %v2542 = vshll.u32 %v2503, 16
      %v2544 = vrot.slane %v2542, 2
      %v2545 = vor.u32 %v2541, %v2544
      %v2546 = vsel %vm2520, %v2536, %v2545
      %v2548 = vshrl.u32 %v2504, 16
      %v2550 = vrot.slane %v2548, 1
      %v2551 = vshll.u32 %v2504, 16
      %v2553 = vrot.slane %v2551, 2
      %v2554 = vor.u32 %v2550, %v2553
      %v2555 = vsel %vm2520, %v2545, %v2554
      %v2557 = vshrl.u32 %v2505, 16
      %v2559 = vrot.slane %v2557, 1
      %v2560 = vshll.u32 %v2505, 16
      %v2562 = vrot.slane %v2560, 2
      %v2563 = vor.u32 %v2559, %v2562
      %v2564 = vsel %vm2520, %v2554, %v2563
      %v2566 = vshrl.u32 %v2506, 16
      %v2568 = vrot.slane %v2566, 1
      %v2569 = vshll.u32 %v2506, 16
      %v2571 = vrot.slane %v2569, 2
      %v2572 = vor.u32 %v2568, %v2571
      %v2573 = vsel %vm2520, %v2563, %v2572
      %v2575 = vshrl.u32 %v2507, 16
      %v2577 = vrot.slane %v2575, 1
      %v2578 = vshll.u32 %v2507, 16
      %v2580 = vrot.slane %v2578, 2
      %v2581 = vor.u32 %v2577, %v2580
      %v2582 = vsel %vm2520, %v2572, %v2581
      %v2584 = vshrl.u32 %v2508, 16
      %v2586 = vrot.slane %v2584, 1
      %v2587 = vshll.u32 %v2508, 16
      %v2589 = vrot.slane %v2587, 2
      %v2590 = vor.u32 %v2586, %v2589
      %v2591 = vsel %vm2520, %v2581, %v2590
      %v2593 = vshrl.u32 %v2509, 16
      %v2595 = vrot.slane %v2593, 1
      %v2596 = vshll.u32 %v2509, 16
      %v2598 = vrot.slane %v2596, 2
      %v2599 = vor.u32 %v2595, %v2598
      %v2600 = vsel %vm2520, %v2590, %v2599
      %v2602 = vshrl.u32 %v2510, 16
      %v2604 = vrot.slane %v2602, 1
      %v2605 = vshll.u32 %v2510, 16
      %v2607 = vrot.slane %v2605, 2
      %v2608 = vor.u32 %v2604, %v2607
      %v2609 = vsel %vm2520, %v2599, %v2608
      %v2611 = vshrl.u32 %v2511, 16
      %v2613 = vrot.slane %v2611, 1
      %v2614 = vshll.u32 %v2511, 16
      %v2616 = vrot.slane %v2614, 2
      %v2617 = vor.u32 %v2613, %v2616
      %v2618 = vsel %vm2520, %v2608, %v2617
      %v2620 = vshrl.u32 %v2512, 16
      %v2622 = vrot.slane %v2620, 1
      %v2623 = vshll.u32 %v2512, 16
      %v2625 = vrot.slane %v2623, 2
      %v2626 = vor.u32 %v2622, %v2625
      %v2627 = vsel %vm2520, %v2617, %v2626
      %v2629 = vshrl.u32 %v2513, 16
      %v2631 = vrot.slane %v2629, 1
      %v2632 = vshll.u32 %v2513, 16
      %v2634 = vrot.slane %v2632, 2
      %v2635 = vor.u32 %v2631, %v2634
      %v2636 = vsel %vm2520, %v2626, %v2635
      %v2638 = vshrl.u32 %v2514, 16
      %v2640 = vrot.slane %v2638, 1
      %v2641 = vshll.u32 %v2514, 16
      %v2643 = vrot.slane %v2641, 2
      %v2644 = vor.u32 %v2640, %v2643
      %v2645 = vsel %vm2520, %v2635, %v2644
      %v2647 = vshrl.u32 %v2515, 16
      %v2649 = vrot.slane %v2647, 1
      %v2650 = vshll.u32 %v2515, 16
      %v2652 = vrot.slane %v2650, 2
      %v2653 = vor.u32 %v2649, %v2652
      %v2654 = vsel %vm2520, %v2644, %v2653
      %v2656 = vshrl.u32 %v2516, 16
      %v2658 = vrot.slane %v2656, 1
      %v2659 = vshll.u32 %v2516, 16
      %v2661 = vrot.slane %v2659, 2
      %v2662 = vor.u32 %v2658, %v2661
      %v2663 = vsel %vm2520, %v2653, %v2662
      %v2665 = vshrl.u32 %v2517, 16
      %v2667 = vrot.slane %v2665, 1
      %v2668 = vshll.u32 %v2517, 16
      %v2670 = vrot.slane %v2668, 2
      %v2671 = vor.u32 %v2667, %v2670
      %v2672 = vsel %vm2520, %v2662, %v2671
      %v2674 = vshrl.u32 %v2518, 16
      %v2676 = vrot.slane %v2674, 1
      %v2677 = vshll.u32 %v2518, 16
      %v2679 = vrot.slane %v2677, 2
      %v2680 = vor.u32 %v2676, %v2679
      %v2681 = vsel %vm2520, %v2671, %v2680
      %v2683 = vshrl.u32 %v2519, 16
      %v2685 = vrot.slane %v2683, 1
      %v2686 = vshll.u32 %v2519, 16
      %v2688 = vrot.slane %v2686, 2
      %v2689 = vor.u32 %v2685, %v2688
      %v2690 = vsel %vm2520, %v2680, %v2689
      %v2692 = vsel %vm199, %v2537, 0
      %v2695 = vsel %vm199, %v2546, 0
      %v2698 = vsel %vm199, %v2555, 0
      %v2701 = vsel %vm199, %v2564, 0
      %v2704 = vsel %vm199, %v2573, 0
      %v2707 = vsel %vm199, %v2582, 0
      %v2710 = vsel %vm199, %v2591, 0
      %v2713 = vsel %vm199, %v2600, 0
      %v2716 = vsel %vm199, %v2609, 0
      %v2719 = vsel %vm199, %v2618, 0
      %v2722 = vsel %vm199, %v2627, 0
      %v2725 = vsel %vm199, %v2636, 0
      %v2728 = vsel %vm199, %v2645, 0
      %v2731 = vsel %vm199, %v2654, 0
      %v2734 = vsel %vm199, %v2663, 0
      %v2737 = vsel %vm199, %v2672, 0
      %v2740 = vsel %vm199, %v2681, 0
      %v2743 = vsel %vm199, %v2690, 0
      %v2746 = vsel %vm453, %v2426, 0
      %2748 = vmatprep.subr.bf16.mxu0 0
      %2749 = vmatpush1.bf16.msra.mxu0 %v2746
      %2750 = vmatprep.subr.bf16.mxu0 0
      %2751 = vmatpush1.bf16.msra.mxu0 0
      %2752 = vmatprep.subr.bf16.mxu0 0
      %2753 = vmatpush1.bf16.msra.mxu0 0
      %2754 = vmatprep.subr.bf16.mxu0 0
      %2755 = vmatpush1.bf16.msra.mxu0 0
      %2756 = vmatprep.subr.bf16.mxu0 0
      %2757 = vmatpush1.bf16.msra.mxu0 0
      %2758 = vmatprep.subr.bf16.mxu0 0
      %2759 = vmatpush1.bf16.msra.mxu0 0
      %2760 = vmatprep.subr.bf16.mxu0 0
      %2761 = vmatpush1.bf16.msra.mxu0 0
      %2762 = vmatprep.subr.bf16.mxu0 0
      %2763 = vmatpush1.bf16.msra.mxu0 0
      %2764 = vmatprep.subr.bf16.mxu0 0
      %2765 = vmatpush1.bf16.msra.mxu0 0
      %2766 = vmatprep.subr.bf16.mxu0 0
      %2767 = vmatpush1.bf16.msra.mxu0 0
      %2768 = vmatprep.subr.bf16.mxu0 0
      %2769 = vmatpush1.bf16.msra.mxu0 0
      %2770 = vmatprep.subr.bf16.mxu0 0
      %2771 = vmatpush1.bf16.msra.mxu0 0
      %2772 = vmatprep.subr.bf16.mxu0 0
      %2773 = vmatpush1.bf16.msra.mxu0 0
      %2774 = vmatprep.subr.bf16.mxu0 0
      %2775 = vmatpush1.bf16.msra.mxu0 0
      %2776 = vmatprep.subr.bf16.mxu0 0
      %2777 = vmatpush1.bf16.msra.mxu0 0
      %2778 = vmatprep.subr.bf16.mxu0 0
      %2779 = vmatpush1.bf16.msra.mxu0 0
      %2780 = vmatprep.mubr.bf16.mxu0 0
      %2781 = vmatmul.mubr.bf16.gmra.mrb[0].mxu0 %v2692
      %v2782 = vpop.f32.mrb[0].mxu0
      %v2783 = vadd.f32 0.0, %v2782
      %v2784 = vpop.f32.mrb[0].mxu0
      %v2785 = vpop.f32.mrb[0].mxu0
      %v2786 = vadd.f32 0.0, %v2785
      %v2787 = vpop.f32.mrb[0].mxu0
      %2788 = vmatprep.mubr.bf16.mxu0 0
      %2789 = vmatmul.mubr.bf16.gmra.mrb[0].mxu0 %v2695
      %v2790 = vpop.f32.mrb[0].mxu0
      %v2791 = vadd.f32 0.0, %v2790
      %v2792 = vpop.f32.mrb[0].mxu0
      %v2793 = vpop.f32.mrb[0].mxu0
      %v2794 = vadd.f32 0.0, %v2793
      %v2795 = vpop.f32.mrb[0].mxu0
      %2796 = vmatprep.mubr.bf16.mxu0 0
      %2797 = vmatmul.mubr.bf16.gmra.mrb[0].mxu0 %v2698
      %v2798 = vpop.f32.mrb[0].mxu0
      %v2799 = vadd.f32 0.0, %v2798
      %v2800 = vpop.f32.mrb[0].mxu0
      %v2801 = vpop.f32.mrb[0].mxu0
      %v2802 = vadd.f32 0.0, %v2801
      %v2803 = vpop.f32.mrb[0].mxu0
      %2804 = vmatprep.mubr.bf16.mxu0 0
      %2805 = vmatmul.mubr.bf16.gmra.mrb[0].mxu0 %v2701
      %v2806 = vpop.f32.mrb[0].mxu0
      %v2807 = vadd.f32 0.0, %v2806
      %v2808 = vpop.f32.mrb[0].mxu0
      %v2809 = vpop.f32.mrb[0].mxu0
      %v2810 = vadd.f32 0.0, %v2809
      %v2811 = vpop.f32.mrb[0].mxu0
      %2812 = vmatprep.mubr.bf16.mxu0 0
      %2813 = vmatmul.mubr.bf16.gmra.mrb[0].mxu0 %v2704
      %v2814 = vpop.f32.mrb[0].mxu0
      %v2815 = vadd.f32 0.0, %v2814
      %v2816 = vpop.f32.mrb[0].mxu0
      %v2817 = vpop.f32.mrb[0].mxu0
      %v2818 = vadd.f32 0.0, %v2817
      %v2819 = vpop.f32.mrb[0].mxu0
      %2820 = vmatprep.mubr.bf16.mxu0 0
      %2821 = vmatmul.mubr.bf16.gmra.mrb[0].mxu0 %v2707
      %v2822 = vpop.f32.mrb[0].mxu0
      %v2823 = vadd.f32 0.0, %v2822
      %v2824 = vpop.f32.mrb[0].mxu0
      %v2825 = vpop.f32.mrb[0].mxu0
      %v2826 = vadd.f32 0.0, %v2825
      %v2827 = vpop.f32.mrb[0].mxu0
      %2828 = vmatprep.mubr.bf16.mxu0 0
      %2829 = vmatmul.mubr.bf16.gmra.mrb[0].mxu0 %v2710
      %v2830 = vpop.f32.mrb[0].mxu0
      %v2831 = vadd.f32 0.0, %v2830
      %v2832 = vpop.f32.mrb[0].mxu0
      %v2833 = vpop.f32.mrb[0].mxu0
      %v2834 = vadd.f32 0.0, %v2833
      %v2835 = vpop.f32.mrb[0].mxu0
      %2836 = vmatprep.mubr.bf16.mxu0 0
      %2837 = vmatmul.mubr.bf16.gmra.mrb[0].mxu0 %v2713
      %v2838 = vpop.f32.mrb[0].mxu0
      %v2839 = vadd.f32 0.0, %v2838
      %v2840 = vpop.f32.mrb[0].mxu0
      %v2841 = vpop.f32.mrb[0].mxu0
      %v2842 = vadd.f32 0.0, %v2841
      %v2843 = vpop.f32.mrb[0].mxu0
      %2844 = vmatprep.mubr.bf16.mxu0 0
      %2845 = vmatmul.mubr.bf16.gmra.mrb[0].mxu0 %v2716
      %v2846 = vpop.f32.mrb[0].mxu0
      %v2847 = vadd.f32 0.0, %v2846
      %v2848 = vpop.f32.mrb[0].mxu0
      %v2849 = vpop.f32.mrb[0].mxu0
      %v2850 = vadd.f32 0.0, %v2849
      %v2851 = vpop.f32.mrb[0].mxu0
      %2852 = vmatprep.mubr.bf16.mxu0 0
      %2853 = vmatmul.mubr.bf16.gmra.mrb[0].mxu0 %v2719
      %v2854 = vpop.f32.mrb[0].mxu0
      %v2855 = vadd.f32 0.0, %v2854
      %v2856 = vpop.f32.mrb[0].mxu0
      %v2857 = vpop.f32.mrb[0].mxu0
      %v2858 = vadd.f32 0.0, %v2857
      %v2859 = vpop.f32.mrb[0].mxu0
      %2860 = vmatprep.mubr.bf16.mxu0 0
      %2861 = vmatmul.mubr.bf16.gmra.mrb[0].mxu0 %v2722
      %v2862 = vpop.f32.mrb[0].mxu0
      %v2863 = vadd.f32 0.0, %v2862
      %v2864 = vpop.f32.mrb[0].mxu0
      %v2865 = vpop.f32.mrb[0].mxu0
      %v2866 = vadd.f32 0.0, %v2865
      %v2867 = vpop.f32.mrb[0].mxu0
      %2868 = vmatprep.mubr.bf16.mxu0 0
      %2869 = vmatmul.mubr.bf16.gmra.mrb[0].mxu0 %v2725
      %v2870 = vpop.f32.mrb[0].mxu0
      %v2871 = vadd.f32 0.0, %v2870
      %v2872 = vpop.f32.mrb[0].mxu0
      %v2873 = vpop.f32.mrb[0].mxu0
      %v2874 = vadd.f32 0.0, %v2873
      %v2875 = vpop.f32.mrb[0].mxu0
      %2876 = vmatprep.mubr.bf16.mxu0 0
      %2877 = vmatmul.mubr.bf16.gmra.mrb[0].mxu0 %v2728
      %v2878 = vpop.f32.mrb[0].mxu0
      %v2879 = vadd.f32 0.0, %v2878
      %v2880 = vpop.f32.mrb[0].mxu0
      %v2881 = vpop.f32.mrb[0].mxu0
      %v2882 = vadd.f32 0.0, %v2881
      %v2883 = vpop.f32.mrb[0].mxu0
      %2884 = vmatprep.mubr.bf16.mxu0 0
      %2885 = vmatmul.mubr.bf16.gmra.mrb[0].mxu0 %v2731
      %v2886 = vpop.f32.mrb[0].mxu0
      %v2887 = vadd.f32 0.0, %v2886
      %v2888 = vpop.f32.mrb[0].mxu0
      %v2889 = vpop.f32.mrb[0].mxu0
      %v2890 = vadd.f32 0.0, %v2889
      %v2891 = vpop.f32.mrb[0].mxu0
      %2892 = vmatprep.mubr.bf16.mxu0 0
      %2893 = vmatmul.mubr.bf16.gmra.mrb[0].mxu0 %v2734
      %v2894 = vpop.f32.mrb[0].mxu0
      %v2895 = vadd.f32 0.0, %v2894
      %v2896 = vpop.f32.mrb[0].mxu0
      %v2897 = vpop.f32.mrb[0].mxu0
      %v2898 = vadd.f32 0.0, %v2897
      %v2899 = vpop.f32.mrb[0].mxu0
      %2900 = vmatprep.mubr.bf16.mxu0 0
      %2901 = vmatmul.mubr.bf16.gmra.mrb[0].mxu0 %v2737
      %v2902 = vpop.f32.mrb[0].mxu0
      %v2903 = vadd.f32 0.0, %v2902
      %v2904 = vpop.f32.mrb[0].mxu0
      %v2905 = vpop.f32.mrb[0].mxu0
      %v2906 = vadd.f32 0.0, %v2905
      %v2907 = vpop.f32.mrb[0].mxu0
      %2908 = vmatprep.mubr.bf16.mxu0 0
      %2909 = vmatmul.mubr.bf16.gmra.mrb[0].mxu0 %v2740
      %v2910 = vpop.f32.mrb[0].mxu0
      %v2911 = vadd.f32 0.0, %v2910
      %v2912 = vpop.f32.mrb[0].mxu0
      %v2913 = vpop.f32.mrb[0].mxu0
      %v2914 = vadd.f32 0.0, %v2913
      %v2915 = vpop.f32.mrb[0].mxu0
      %2916 = vmatprep.mubr.bf16.mxu0 0
      %2917 = vmatmul.mubr.bf16.gmra.mrb[0].mxu0 %v2743
      %v2918 = vpop.f32.mrb[0].mxu0
      %v2919 = vadd.f32 0.0, %v2918
      %v2920 = vpop.f32.mrb[0].mxu0
      %v2921 = vpop.f32.mrb[0].mxu0
      %v2922 = vadd.f32 0.0, %v2921
      %v2923 = vpop.f32.mrb[0].mxu0
      %2924 = vdwg.mxu0
      %v2925 = vadd.f32 %v2389, %v2783
      %v2926 = vadd.f32 %v2390, %v2786
      %v2927 = vadd.f32 %v2391, %v2791
      %v2928 = vadd.f32 %v2392, %v2794
      %v2929 = vadd.f32 %v2393, %v2799
      %v2930 = vadd.f32 %v2394, %v2802
      %v2931 = vadd.f32 %v2395, %v2807
      %v2932 = vadd.f32 %v2396, %v2810
      %v2933 = vadd.f32 %v2397, %v2815
      %v2934 = vadd.f32 %v2398, %v2818
      %v2935 = vadd.f32 %v2399, %v2823
      %v2936 = vadd.f32 %v2400, %v2826
      %v2937 = vadd.f32 %v2401, %v2831
      %v2938 = vadd.f32 %v2402, %v2834
      %v2939 = vadd.f32 %v2403, %v2839
      %v2940 = vadd.f32 %v2404, %v2842
      %v2941 = vadd.f32 %v2405, %v2847
      %v2942 = vadd.f32 %v2406, %v2850
      %v2943 = vadd.f32 %v2407, %v2855
      %v2944 = vadd.f32 %v2408, %v2858
      %v2945 = vadd.f32 %v2409, %v2863
      %v2946 = vadd.f32 %v2410, %v2866
      %v2947 = vadd.f32 %v2411, %v2871
      %v2948 = vadd.f32 %v2412, %v2874
      %v2949 = vadd.f32 %v2413, %v2879
      %v2950 = vadd.f32 %v2414, %v2882
      %v2951 = vadd.f32 %v2415, %v2887
      %v2952 = vadd.f32 %v2416, %v2890
      %v2953 = vadd.f32 %v2417, %v2895
      %v2954 = vadd.f32 %v2418, %v2898
      %v2955 = vadd.f32 %v2419, %v2903
      %v2956 = vadd.f32 %v2420, %v2906
      %v2957 = vadd.f32 %v2421, %v2911
      %v2958 = vadd.f32 %v2422, %v2914
      %v2959 = vadd.f32 %v2423, %v2919
      %v2960 = vadd.f32 %v2424, %v2922
      %2961 = vst.msk [vmem:[#allocation2] sm:$0xff] %vm199, %v2925
      %2962 = vst.msk [vmem:[#allocation2 + $0x8] sm:$0xff] %vm199, %v2926
      %2963 = vst.msk [vmem:[#allocation2 + $0x10] sm:$0xff] %vm199, %v2927
      %2964 = vst.msk [vmem:[#allocation2 + $0x18] sm:$0xff] %vm199, %v2928
      %2965 = vst.msk [vmem:[#allocation2 + $0x20] sm:$0xff] %vm199, %v2929
      %2966 = vst.msk [vmem:[#allocation2 + $0x28] sm:$0xff] %vm199, %v2930
      %2967 = vst.msk [vmem:[#allocation2 + $0x30] sm:$0xff] %vm199, %v2931
      %2968 = vst.msk [vmem:[#allocation2 + $0x38] sm:$0xff] %vm199, %v2932
      %2969 = vst.msk [vmem:[#allocation2 + $0x40] sm:$0xff] %vm199, %v2933
      %2970 = vst.msk [vmem:[#allocation2 + $0x48] sm:$0xff] %vm199, %v2934
      %2971 = vst.msk [vmem:[#allocation2 + $0x50] sm:$0xff] %vm199, %v2935
      %2972 = vst.msk [vmem:[#allocation2 + $0x58] sm:$0xff] %vm199, %v2936
      %2973 = vst.msk [vmem:[#allocation2 + $0x60] sm:$0xff] %vm199, %v2937
      %2974 = vst.msk [vmem:[#allocation2 + $0x68] sm:$0xff] %vm199, %v2938
      %2975 = vst.msk [vmem:[#allocation2 + $0x70] sm:$0xff] %vm199, %v2939
      %2976 = vst.msk [vmem:[#allocation2 + $0x78] sm:$0xff] %vm199, %v2940
      %2977 = vst.msk [vmem:[#allocation2 + $0x80] sm:$0xff] %vm199, %v2941
      %2978 = vst.msk [vmem:[#allocation2 + $0x88] sm:$0xff] %vm199, %v2942
      %2979 = vst.msk [vmem:[#allocation2 + $0x90] sm:$0xff] %vm199, %v2943
      %2980 = vst.msk [vmem:[#allocation2 + $0x98] sm:$0xff] %vm199, %v2944
      %2981 = vst.msk [vmem:[#allocation2 + $0xa0] sm:$0xff] %vm199, %v2945
      %2982 = vst.msk [vmem:[#allocation2 + $0xa8] sm:$0xff] %vm199, %v2946
      %2983 = vst.msk [vmem:[#allocation2 + $0xb0] sm:$0xff] %vm199, %v2947
      %2984 = vst.msk [vmem:[#allocation2 + $0xb8] sm:$0xff] %vm199, %v2948
      %2985 = vst.msk [vmem:[#allocation2 + $0xc0] sm:$0xff] %vm199, %v2949
      %2986 = vst.msk [vmem:[#allocation2 + $0xc8] sm:$0xff] %vm199, %v2950
      %2987 = vst.msk [vmem:[#allocation2 + $0xd0] sm:$0xff] %vm199, %v2951
      %2988 = vst.msk [vmem:[#allocation2 + $0xd8] sm:$0xff] %vm199, %v2952
      %2989 = vst.msk [vmem:[#allocation2 + $0xe0] sm:$0xff] %vm199, %v2953
      %2990 = vst.msk [vmem:[#allocation2 + $0xe8] sm:$0xff] %vm199, %v2954
      %2991 = vst.msk [vmem:[#allocation2 + $0xf0] sm:$0xff] %vm199, %v2955
      %2992 = vst.msk [vmem:[#allocation2 + $0xf8] sm:$0xff] %vm199, %v2956
      %2993 = vst.msk [vmem:[#allocation2 + $0x100] sm:$0xff] %vm199, %v2957
      %2994 = vst.msk [vmem:[#allocation2 + $0x108] sm:$0xff] %vm199, %v2958
      %2995 = vst.msk [vmem:[#allocation2 + $0x110] sm:$0xff] %vm199, %v2959
      %2996 = vst.msk [vmem:[#allocation2 + $0x118] sm:$0xff] %vm199, %v2960
      %v2997 = vld [vmem:[%s192 + $0x8] sm:$0xc]
      %v2998 = vld [vmem:[%s192 + $0xc] sm:$0xf]
      %v2999 = vld [vmem:[%s192 + $0x10] sm:$0xf]
      %v3000 = vld [vmem:[%s192 + $0x14] sm:$0xf]
      %v3001 = vld [vmem:[%s192 + $0x18] sm:$0xf]
      %v3002 = vld [vmem:[%s192 + $0x1c] sm:$0xf]
      %v3003 = vld [vmem:[%s192 + $0x20] sm:$0xf]
      %v3004 = vld [vmem:[%s192 + $0x24] sm:$0xf]
      %v3005 = vld [vmem:[%s192 + $0x28] sm:$0xf]
      %v3006 = vld [vmem:[%s192 + $0x2c] sm:$0xf]
      %v3007 = vld [vmem:[%s192 + $0x30] sm:$0xf]
      %v3008 = vld [vmem:[%s192 + $0x34] sm:$0xf]
      %v3009 = vld [vmem:[%s192 + $0x38] sm:$0xf]
      %v3010 = vld [vmem:[%s192 + $0x3c] sm:$0xf]
      %v3011 = vld [vmem:[%s192 + $0x40] sm:$0xf]
      %v3012 = vld [vmem:[%s192 + $0x44] sm:$0xf]
      %v3013 = vld [vmem:[%s192 + $0x48] sm:$0xf]
      %v3014 = vld [vmem:[%s192 + $0x4c] sm:$0xf]
      %v3015 = vld [vmem:[%s192 + $0x50] sm:$0xf]
      %v3016 = vld [vmem:[%s192 + $0x54] sm:$0xf]
      %v3017 = vld [vmem:[%s192 + $0x58] sm:$0xf]
      %v3018 = vld [vmem:[%s192 + $0x5c] sm:$0xf]
      %v3019 = vld [vmem:[%s192 + $0x60] sm:$0xf]
      %v3020 = vld [vmem:[%s192 + $0x64] sm:$0xf]
      %v3021 = vld [vmem:[%s192 + $0x68] sm:$0xf]
      %v3022 = vld [vmem:[%s192 + $0x6c] sm:$0xf]
      %v3023 = vld [vmem:[%s192 + $0x70] sm:$0xf]
      %v3024 = vld [vmem:[%s192 + $0x74] sm:$0xf]
      %v3025 = vld [vmem:[%s192 + $0x78] sm:$0xf]
      %v3026 = vld [vmem:[%s192 + $0x7c] sm:$0xf]
      %v3027 = vld [vmem:[%s192 + $0x80] sm:$0xf]
      %v3028 = vld [vmem:[%s192 + $0x84] sm:$0xf]
      %v3029 = vld [vmem:[%s192 + $0x88] sm:$0xf]
      %v3030 = vld [vmem:[%s192 + $0x8c] sm:$0xf]
      %v3031 = vld [vmem:[%s192 + $0x90] sm:$0xf]
      %v3032 = vld [vmem:[%s192 + $0x94] sm:$0xf]
      %v3033 = vld [vmem:[%s192 + $0x98] sm:$0x3]
      %v3034 = vld [vmem:[#allocation2] sm:$0xff]
      %v3035 = vld [vmem:[#allocation2 + $0x8] sm:$0xff]
      %v3036 = vld [vmem:[#allocation2 + $0x10] sm:$0xff]
      %v3037 = vld [vmem:[#allocation2 + $0x18] sm:$0xff]
      %v3038 = vld [vmem:[#allocation2 + $0x20] sm:$0xff]
      %v3039 = vld [vmem:[#allocation2 + $0x28] sm:$0xff]
      %v3040 = vld [vmem:[#allocation2 + $0x30] sm:$0xff]
      %v3041 = vld [vmem:[#allocation2 + $0x38] sm:$0xff]
      %v3042 = vld [vmem:[#allocation2 + $0x40] sm:$0xff]
      %v3043 = vld [vmem:[#allocation2 + $0x48] sm:$0xff]
      %v3044 = vld [vmem:[#allocation2 + $0x50] sm:$0xff]
      %v3045 = vld [vmem:[#allocation2 + $0x58] sm:$0xff]
      %v3046 = vld [vmem:[#allocation2 + $0x60] sm:$0xff]
      %v3047 = vld [vmem:[#allocation2 + $0x68] sm:$0xff]
      %v3048 = vld [vmem:[#allocation2 + $0x70] sm:$0xff]
      %v3049 = vld [vmem:[#allocation2 + $0x78] sm:$0xff]
      %v3050 = vld [vmem:[#allocation2 + $0x80] sm:$0xff]
      %v3051 = vld [vmem:[#allocation2 + $0x88] sm:$0xff]
      %v3052 = vld [vmem:[#allocation2 + $0x90] sm:$0xff]
      %v3053 = vld [vmem:[#allocation2 + $0x98] sm:$0xff]
      %v3054 = vld [vmem:[#allocation2 + $0xa0] sm:$0xff]
      %v3055 = vld [vmem:[#allocation2 + $0xa8] sm:$0xff]
      %v3056 = vld [vmem:[#allocation2 + $0xb0] sm:$0xff]
      %v3057 = vld [vmem:[#allocation2 + $0xb8] sm:$0xff]
      %v3058 = vld [vmem:[#allocation2 + $0xc0] sm:$0xff]
      %v3059 = vld [vmem:[#allocation2 + $0xc8] sm:$0xff]
      %v3060 = vld [vmem:[#allocation2 + $0xd0] sm:$0xff]
      %v3061 = vld [vmem:[#allocation2 + $0xd8] sm:$0xff]
      %v3062 = vld [vmem:[#allocation2 + $0xe0] sm:$0xff]
      %v3063 = vld [vmem:[#allocation2 + $0xe8] sm:$0xff]
      %v3064 = vld [vmem:[#allocation2 + $0xf0] sm:$0xff]
      %v3065 = vld [vmem:[#allocation2 + $0xf8] sm:$0xff]
      %v3066 = vld [vmem:[#allocation2 + $0x100] sm:$0xff]
      %v3067 = vld [vmem:[#allocation2 + $0x108] sm:$0xff]
      %v3068 = vld [vmem:[#allocation2 + $0x110] sm:$0xff]
      %v3069 = vld [vmem:[#allocation2 + $0x118] sm:$0xff]
      %s3070 = scalar_lea.vmem %s1, 20
      %v3071 = vld [vmem:[%s3070] sm:$0xf]
      %v3109 = vunpack.c.l.b16 %v2997
      %v3110 = vunpack.c.l.b16 %v2998
      %v3111 = vunpack.c.l.b16 %v2999
      %v3112 = vunpack.c.l.b16 %v3000
      %v3113 = vunpack.c.l.b16 %v3001
      %v3114 = vunpack.c.l.b16 %v3002
      %v3115 = vunpack.c.l.b16 %v3003
      %v3116 = vunpack.c.l.b16 %v3004
      %v3117 = vunpack.c.l.b16 %v3005
      %v3118 = vunpack.c.l.b16 %v3006
      %v3119 = vunpack.c.l.b16 %v3007
      %v3120 = vunpack.c.l.b16 %v3008
      %v3121 = vunpack.c.l.b16 %v3009
      %v3122 = vunpack.c.l.b16 %v3010
      %v3123 = vunpack.c.l.b16 %v3011
      %v3124 = vunpack.c.l.b16 %v3012
      %v3125 = vunpack.c.l.b16 %v3013
      %v3126 = vunpack.c.l.b16 %v3014
      %v3127 = vunpack.c.l.b16 %v3015
      %v3128 = vunpack.c.l.b16 %v3016
      %v3129 = vunpack.c.l.b16 %v3017
      %v3130 = vunpack.c.l.b16 %v3018
      %v3131 = vunpack.c.l.b16 %v3019
      %v3132 = vunpack.c.l.b16 %v3020
      %v3133 = vunpack.c.l.b16 %v3021
      %v3134 = vunpack.c.l.b16 %v3022
      %v3135 = vunpack.c.l.b16 %v3023
      %v3136 = vunpack.c.l.b16 %v3024
      %v3137 = vunpack.c.l.b16 %v3025
      %v3138 = vunpack.c.l.b16 %v3026
      %v3139 = vunpack.c.l.b16 %v3027
      %v3140 = vunpack.c.l.b16 %v3028
      %v3141 = vunpack.c.l.b16 %v3029
      %v3142 = vunpack.c.l.b16 %v3030
      %v3143 = vunpack.c.l.b16 %v3031
      %v3144 = vunpack.c.l.b16 %v3032
      %v3145 = vunpack.c.l.b16 %v3033
      %v3146 = vpack.c.b16 %v3110, %v3109
      %v3147 = vpack.c.b16 %v3112, %v3111
      %v3148 = vpack.c.b16 %v3114, %v3113
      %v3149 = vpack.c.b16 %v3116, %v3115
      %v3150 = vpack.c.b16 %v3118, %v3117
      %v3151 = vpack.c.b16 %v3120, %v3119
      %v3152 = vpack.c.b16 %v3122, %v3121
      %v3153 = vpack.c.b16 %v3124, %v3123
      %v3154 = vpack.c.b16 %v3126, %v3125
      %v3155 = vpack.c.b16 %v3128, %v3127
      %v3156 = vpack.c.b16 %v3130, %v3129
      %v3157 = vpack.c.b16 %v3132, %v3131
      %v3158 = vpack.c.b16 %v3134, %v3133
      %v3159 = vpack.c.b16 %v3136, %v3135
      %v3160 = vpack.c.b16 %v3138, %v3137
      %v3161 = vpack.c.b16 %v3140, %v3139
      %v3162 = vpack.c.b16 %v3142, %v3141
      %v3163 = vpack.c.b16 %v3144, %v3143
      %v3164 = vpack.c.b16 %v3145, %v3145
      %vm3165 = vcmask 1045504
      %v3166 = vrot.slane %v3146, 2
      %v3167 = vrot.slane %v3147, 2
      %v3168 = vsel %vm3165, %v3166, %v3167
      %v3169 = vrot.slane %v3148, 2
      %v3170 = vsel %vm3165, %v3167, %v3169
      %v3171 = vrot.slane %v3149, 2
      %v3172 = vsel %vm3165, %v3169, %v3171
      %v3173 = vrot.slane %v3150, 2
      %v3174 = vsel %vm3165, %v3171, %v3173
      %v3175 = vrot.slane %v3151, 2
      %v3176 = vsel %vm3165, %v3173, %v3175
      %v3177 = vrot.slane %v3152, 2
      %v3178 = vsel %vm3165, %v3175, %v3177
      %v3179 = vrot.slane %v3153, 2
      %v3180 = vsel %vm3165, %v3177, %v3179
      %v3181 = vrot.slane %v3154, 2
      %v3182 = vsel %vm3165, %v3179, %v3181
      %v3183 = vrot.slane %v3155, 2
      %v3184 = vsel %vm3165, %v3181, %v3183
      %v3185 = vrot.slane %v3156, 2
      %v3186 = vsel %vm3165, %v3183, %v3185
      %v3187 = vrot.slane %v3157, 2
      %v3188 = vsel %vm3165, %v3185, %v3187
      %v3189 = vrot.slane %v3158, 2
      %v3190 = vsel %vm3165, %v3187, %v3189
      %v3191 = vrot.slane %v3159, 2
      %v3192 = vsel %vm3165, %v3189, %v3191
      %v3193 = vrot.slane %v3160, 2
      %v3194 = vsel %vm3165, %v3191, %v3193
      %v3195 = vrot.slane %v3161, 2
      %v3196 = vsel %vm3165, %v3193, %v3195
      %v3197 = vrot.slane %v3162, 2
      %v3198 = vsel %vm3165, %v3195, %v3197
      %v3199 = vrot.slane %v3163, 2
      %v3200 = vsel %vm3165, %v3197, %v3199
      %v3201 = vrot.slane %v3164, 2
      %v3202 = vsel %vm3165, %v3199, %v3201
      %v3204 = vsel %vm199, %v3168, 0
      %v3207 = vsel %vm199, %v3170, 0
      %v3210 = vsel %vm199, %v3172, 0
      %v3213 = vsel %vm199, %v3174, 0
      %v3216 = vsel %vm199, %v3176, 0
      %v3219 = vsel %vm199, %v3178, 0
      %v3222 = vsel %vm199, %v3180, 0
      %v3225 = vsel %vm199, %v3182, 0
      %v3228 = vsel %vm199, %v3184, 0
      %v3231 = vsel %vm199, %v3186, 0
      %v3234 = vsel %vm199, %v3188, 0
      %v3237 = vsel %vm199, %v3190, 0
      %v3240 = vsel %vm199, %v3192, 0
      %v3243 = vsel %vm199, %v3194, 0
      %v3246 = vsel %vm199, %v3196, 0
      %v3249 = vsel %vm199, %v3198, 0
      %v3252 = vsel %vm199, %v3200, 0
      %v3255 = vsel %vm199, %v3202, 0
      %v3258 = vsel %vm453, %v3071, 0
      %3260 = vmatprep.subr.bf16.mxu0 0
      %3261 = vmatpush1.bf16.msra.mxu0 %v3258
      %3262 = vmatprep.subr.bf16.mxu0 0
      %3263 = vmatpush1.bf16.msra.mxu0 0
      %3264 = vmatprep.subr.bf16.mxu0 0
      %3265 = vmatpush1.bf16.msra.mxu0 0
      %3266 = vmatprep.subr.bf16.mxu0 0
      %3267 = vmatpush1.bf16.msra.mxu0 0
      %3268 = vmatprep.subr.bf16.mxu0 0
      %3269 = vmatpush1.bf16.msra.mxu0 0
      %3270 = vmatprep.subr.bf16.mxu0 0
      %3271 = vmatpush1.bf16.msra.mxu0 0
      %3272 = vmatprep.subr.bf16.mxu0 0
      %3273 = vmatpush1.bf16.msra.mxu0 0
      %3274 = vmatprep.subr.bf16.mxu0 0
      %3275 = vmatpush1.bf16.msra.mxu0 0
      %3276 = vmatprep.subr.bf16.mxu0 0
      %3277 = vmatpush1.bf16.msra.mxu0 0
      %3278 = vmatprep.subr.bf16.mxu0 0
      %3279 = vmatpush1.bf16.msra.mxu0 0
      %3280 = vmatprep.subr.bf16.mxu0 0
      %3281 = vmatpush1.bf16.msra.mxu0 0
      %3282 = vmatprep.subr.bf16.mxu0 0
      %3283 = vmatpush1.bf16.msra.mxu0 0
      %3284 = vmatprep.subr.bf16.mxu0 0
      %3285 = vmatpush1.bf16.msra.mxu0 0
      %3286 = vmatprep.subr.bf16.mxu0 0
      %3287 = vmatpush1.bf16.msra.mxu0 0
      %3288 = vmatprep.subr.bf16.mxu0 0
      %3289 = vmatpush1.bf16.msra.mxu0 0
      %3290 = vmatprep.subr.bf16.mxu0 0
      %3291 = vmatpush1.bf16.msra.mxu0 0
      %3292 = vmatprep.mubr.bf16.mxu0 0
      %3293 = vmatmul.mubr.bf16.gmra.mrb[0].mxu0 %v3204
      %v3294 = vpop.f32.mrb[0].mxu0
      %v3295 = vadd.f32 0.0, %v3294
      %v3296 = vpop.f32.mrb[0].mxu0
      %v3297 = vpop.f32.mrb[0].mxu0
      %v3298 = vadd.f32 0.0, %v3297
      %v3299 = vpop.f32.mrb[0].mxu0
      %3300 = vmatprep.mubr.bf16.mxu0 0
      %3301 = vmatmul.mubr.bf16.gmra.mrb[0].mxu0 %v3207
      %v3302 = vpop.f32.mrb[0].mxu0
      %v3303 = vadd.f32 0.0, %v3302
      %v3304 = vpop.f32.mrb[0].mxu0
      %v3305 = vpop.f32.mrb[0].mxu0
      %v3306 = vadd.f32 0.0, %v3305
      %v3307 = vpop.f32.mrb[0].mxu0
      %3308 = vmatprep.mubr.bf16.mxu0 0
      %3309 = vmatmul.mubr.bf16.gmra.mrb[0].mxu0 %v3210
      %v3310 = vpop.f32.mrb[0].mxu0
      %v3311 = vadd.f32 0.0, %v3310
      %v3312 = vpop.f32.mrb[0].mxu0
      %v3313 = vpop.f32.mrb[0].mxu0
      %v3314 = vadd.f32 0.0, %v3313
      %v3315 = vpop.f32.mrb[0].mxu0
      %3316 = vmatprep.mubr.bf16.mxu0 0
      %3317 = vmatmul.mubr.bf16.gmra.mrb[0].mxu0 %v3213
      %v3318 = vpop.f32.mrb[0].mxu0
      %v3319 = vadd.f32 0.0, %v3318
      %v3320 = vpop.f32.mrb[0].mxu0
      %v3321 = vpop.f32.mrb[0].mxu0
      %v3322 = vadd.f32 0.0, %v3321
      %v3323 = vpop.f32.mrb[0].mxu0
      %3324 = vmatprep.mubr.bf16.mxu0 0
      %3325 = vmatmul.mubr.bf16.gmra.mrb[0].mxu0 %v3216
      %v3326 = vpop.f32.mrb[0].mxu0
      %v3327 = vadd.f32 0.0, %v3326
      %v3328 = vpop.f32.mrb[0].mxu0
      %v3329 = vpop.f32.mrb[0].mxu0
      %v3330 = vadd.f32 0.0, %v3329
      %v3331 = vpop.f32.mrb[0].mxu0
      %3332 = vmatprep.mubr.bf16.mxu0 0
      %3333 = vmatmul.mubr.bf16.gmra.mrb[0].mxu0 %v3219
      %v3334 = vpop.f32.mrb[0].mxu0
      %v3335 = vadd.f32 0.0, %v3334
      %v3336 = vpop.f32.mrb[0].mxu0
      %v3337 = vpop.f32.mrb[0].mxu0
      %v3338 = vadd.f32 0.0, %v3337
      %v3339 = vpop.f32.mrb[0].mxu0
      %3340 = vmatprep.mubr.bf16.mxu0 0
      %3341 = vmatmul.mubr.bf16.gmra.mrb[0].mxu0 %v3222
      %v3342 = vpop.f32.mrb[0].mxu0
      %v3343 = vadd.f32 0.0, %v3342
      %v3344 = vpop.f32.mrb[0].mxu0
      %v3345 = vpop.f32.mrb[0].mxu0
      %v3346 = vadd.f32 0.0, %v3345
      %v3347 = vpop.f32.mrb[0].mxu0
      %3348 = vmatprep.mubr.bf16.mxu0 0
      %3349 = vmatmul.mubr.bf16.gmra.mrb[0].mxu0 %v3225
      %v3350 = vpop.f32.mrb[0].mxu0
      %v3351 = vadd.f32 0.0, %v3350
      %v3352 = vpop.f32.mrb[0].mxu0
      %v3353 = vpop.f32.mrb[0].mxu0
      %v3354 = vadd.f32 0.0, %v3353
      %v3355 = vpop.f32.mrb[0].mxu0
      %3356 = vmatprep.mubr.bf16.mxu0 0
      %3357 = vmatmul.mubr.bf16.gmra.mrb[0].mxu0 %v3228
      %v3358 = vpop.f32.mrb[0].mxu0
      %v3359 = vadd.f32 0.0, %v3358
      %v3360 = vpop.f32.mrb[0].mxu0
      %v3361 = vpop.f32.mrb[0].mxu0
      %v3362 = vadd.f32 0.0, %v3361
      %v3363 = vpop.f32.mrb[0].mxu0
      %3364 = vmatprep.mubr.bf16.mxu0 0
      %3365 = vmatmul.mubr.bf16.gmra.mrb[0].mxu0 %v3231
      %v3366 = vpop.f32.mrb[0].mxu0
      %v3367 = vadd.f32 0.0, %v3366
      %v3368 = vpop.f32.mrb[0].mxu0
      %v3369 = vpop.f32.mrb[0].mxu0
      %v3370 = vadd.f32 0.0, %v3369
      %v3371 = vpop.f32.mrb[0].mxu0
      %3372 = vmatprep.mubr.bf16.mxu0 0
      %3373 = vmatmul.mubr.bf16.gmra.mrb[0].mxu0 %v3234
      %v3374 = vpop.f32.mrb[0].mxu0
      %v3375 = vadd.f32 0.0, %v3374
      %v3376 = vpop.f32.mrb[0].mxu0
      %v3377 = vpop.f32.mrb[0].mxu0
      %v3378 = vadd.f32 0.0, %v3377
      %v3379 = vpop.f32.mrb[0].mxu0
      %3380 = vmatprep.mubr.bf16.mxu0 0
      %3381 = vmatmul.mubr.bf16.gmra.mrb[0].mxu0 %v3237
      %v3382 = vpop.f32.mrb[0].mxu0
      %v3383 = vadd.f32 0.0, %v3382
      %v3384 = vpop.f32.mrb[0].mxu0
      %v3385 = vpop.f32.mrb[0].mxu0
      %v3386 = vadd.f32 0.0, %v3385
      %v3387 = vpop.f32.mrb[0].mxu0
      %3388 = vmatprep.mubr.bf16.mxu0 0
      %3389 = vmatmul.mubr.bf16.gmra.mrb[0].mxu0 %v3240
      %v3390 = vpop.f32.mrb[0].mxu0
      %v3391 = vadd.f32 0.0, %v3390
      %v3392 = vpop.f32.mrb[0].mxu0
      %v3393 = vpop.f32.mrb[0].mxu0
      %v3394 = vadd.f32 0.0, %v3393
      %v3395 = vpop.f32.mrb[0].mxu0
      %3396 = vmatprep.mubr.bf16.mxu0 0
      %3397 = vmatmul.mubr.bf16.gmra.mrb[0].mxu0 %v3243
      %v3398 = vpop.f32.mrb[0].mxu0
      %v3399 = vadd.f32 0.0, %v3398
      %v3400 = vpop.f32.mrb[0].mxu0
      %v3401 = vpop.f32.mrb[0].mxu0
      %v3402 = vadd.f32 0.0, %v3401
      %v3403 = vpop.f32.mrb[0].mxu0
      %3404 = vmatprep.mubr.bf16.mxu0 0
      %3405 = vmatmul.mubr.bf16.gmra.mrb[0].mxu0 %v3246
      %v3406 = vpop.f32.mrb[0].mxu0
      %v3407 = vadd.f32 0.0, %v3406
      %v3408 = vpop.f32.mrb[0].mxu0
      %v3409 = vpop.f32.mrb[0].mxu0
      %v3410 = vadd.f32 0.0, %v3409
      %v3411 = vpop.f32.mrb[0].mxu0
      %3412 = vmatprep.mubr.bf16.mxu0 0
      %3413 = vmatmul.mubr.bf16.gmra.mrb[0].mxu0 %v3249
      %v3414 = vpop.f32.mrb[0].mxu0
      %v3415 = vadd.f32 0.0, %v3414
      %v3416 = vpop.f32.mrb[0].mxu0
      %v3417 = vpop.f32.mrb[0].mxu0
      %v3418 = vadd.f32 0.0, %v3417
      %v3419 = vpop.f32.mrb[0].mxu0
      %3420 = vmatprep.mubr.bf16.mxu0 0
      %3421 = vmatmul.mubr.bf16.gmra.mrb[0].mxu0 %v3252
      %v3422 = vpop.f32.mrb[0].mxu0
      %v3423 = vadd.f32 0.0, %v3422
      %v3424 = vpop.f32.mrb[0].mxu0
      %v3425 = vpop.f32.mrb[0].mxu0
      %v3426 = vadd.f32 0.0, %v3425
      %v3427 = vpop.f32.mrb[0].mxu0
      %3428 = vmatprep.mubr.bf16.mxu0 0
      %3429 = vmatmul.mubr.bf16.gmra.mrb[0].mxu0 %v3255
      %v3430 = vpop.f32.mrb[0].mxu0
      %v3431 = vadd.f32 0.0, %v3430
      %v3432 = vpop.f32.mrb[0].mxu0
      %v3433 = vpop.f32.mrb[0].mxu0
      %v3434 = vadd.f32 0.0, %v3433
      %v3435 = vpop.f32.mrb[0].mxu0
      %3436 = vdwg.mxu0
      %v3437 = vadd.f32 %v3034, %v3295
      %v3438 = vadd.f32 %v3035, %v3298
      %v3439 = vadd.f32 %v3036, %v3303
      %v3440 = vadd.f32 %v3037, %v3306
      %v3441 = vadd.f32 %v3038, %v3311
      %v3442 = vadd.f32 %v3039, %v3314
      %v3443 = vadd.f32 %v3040, %v3319
      %v3444 = vadd.f32 %v3041, %v3322
      %v3445 = vadd.f32 %v3042, %v3327
      %v3446 = vadd.f32 %v3043, %v3330
      %v3447 = vadd.f32 %v3044, %v3335
      %v3448 = vadd.f32 %v3045, %v3338
      %v3449 = vadd.f32 %v3046, %v3343
      %v3450 = vadd.f32 %v3047, %v3346
      %v3451 = vadd.f32 %v3048, %v3351
      %v3452 = vadd.f32 %v3049, %v3354
      %v3453 = vadd.f32 %v3050, %v3359
      %v3454 = vadd.f32 %v3051, %v3362
      %v3455 = vadd.f32 %v3052, %v3367
      %v3456 = vadd.f32 %v3053, %v3370
      %v3457 = vadd.f32 %v3054, %v3375
      %v3458 = vadd.f32 %v3055, %v3378
      %v3459 = vadd.f32 %v3056, %v3383
      %v3460 = vadd.f32 %v3057, %v3386
      %v3461 = vadd.f32 %v3058, %v3391
      %v3462 = vadd.f32 %v3059, %v3394
      %v3463 = vadd.f32 %v3060, %v3399
      %v3464 = vadd.f32 %v3061, %v3402
      %v3465 = vadd.f32 %v3062, %v3407
      %v3466 = vadd.f32 %v3063, %v3410
      %v3467 = vadd.f32 %v3064, %v3415
      %v3468 = vadd.f32 %v3065, %v3418
      %v3469 = vadd.f32 %v3066, %v3423
      %v3470 = vadd.f32 %v3067, %v3426
      %v3471 = vadd.f32 %v3068, %v3431
      %v3472 = vadd.f32 %v3069, %v3434
      %3473 = vst.msk [vmem:[#allocation2] sm:$0xff] %vm199, %v3437
      %3474 = vst.msk [vmem:[#allocation2 + $0x8] sm:$0xff] %vm199, %v3438
      %3475 = vst.msk [vmem:[#allocation2 + $0x10] sm:$0xff] %vm199, %v3439
      %3476 = vst.msk [vmem:[#allocation2 + $0x18] sm:$0xff] %vm199, %v3440
      %3477 = vst.msk [vmem:[#allocation2 + $0x20] sm:$0xff] %vm199, %v3441
      %3478 = vst.msk [vmem:[#allocation2 + $0x28] sm:$0xff] %vm199, %v3442
      %3479 = vst.msk [vmem:[#allocation2 + $0x30] sm:$0xff] %vm199, %v3443
      %3480 = vst.msk [vmem:[#allocation2 + $0x38] sm:$0xff] %vm199, %v3444
      %3481 = vst.msk [vmem:[#allocation2 + $0x40] sm:$0xff] %vm199, %v3445
      %3482 = vst.msk [vmem:[#allocation2 + $0x48] sm:$0xff] %vm199, %v3446
      %3483 = vst.msk [vmem:[#allocation2 + $0x50] sm:$0xff] %vm199, %v3447
      %3484 = vst.msk [vmem:[#allocation2 + $0x58] sm:$0xff] %vm199, %v3448
      %3485 = vst.msk [vmem:[#allocation2 + $0x60] sm:$0xff] %vm199, %v3449
      %3486 = vst.msk [vmem:[#allocation2 + $0x68] sm:$0xff] %vm199, %v3450
      %3487 = vst.msk [vmem:[#allocation2 + $0x70] sm:$0xff] %vm199, %v3451
      %3488 = vst.msk [vmem:[#allocation2 + $0x78] sm:$0xff] %vm199, %v3452
      %3489 = vst.msk [vmem:[#allocation2 + $0x80] sm:$0xff] %vm199, %v3453
      %3490 = vst.msk [vmem:[#allocation2 + $0x88] sm:$0xff] %vm199, %v3454
      %3491 = vst.msk [vmem:[#allocation2 + $0x90] sm:$0xff] %vm199, %v3455
      %3492 = vst.msk [vmem:[#allocation2 + $0x98] sm:$0xff] %vm199, %v3456
      %3493 = vst.msk [vmem:[#allocation2 + $0xa0] sm:$0xff] %vm199, %v3457
      %3494 = vst.msk [vmem:[#allocation2 + $0xa8] sm:$0xff] %vm199, %v3458
      %3495 = vst.msk [vmem:[#allocation2 + $0xb0] sm:$0xff] %vm199, %v3459
      %3496 = vst.msk [vmem:[#allocation2 + $0xb8] sm:$0xff] %vm199, %v3460
      %3497 = vst.msk [vmem:[#allocation2 + $0xc0] sm:$0xff] %vm199, %v3461
      %3498 = vst.msk [vmem:[#allocation2 + $0xc8] sm:$0xff] %vm199, %v3462
      %3499 = vst.msk [vmem:[#allocation2 + $0xd0] sm:$0xff] %vm199, %v3463
      %3500 = vst.msk [vmem:[#allocation2 + $0xd8] sm:$0xff] %vm199, %v3464
      %3501 = vst.msk [vmem:[#allocation2 + $0xe0] sm:$0xff] %vm199, %v3465
      %3502 = vst.msk [vmem:[#allocation2 + $0xe8] sm:$0xff] %vm199, %v3466
      %3503 = vst.msk [vmem:[#allocation2 + $0xf0] sm:$0xff] %vm199, %v3467
      %3504 = vst.msk [vmem:[#allocation2 + $0xf8] sm:$0xff] %vm199, %v3468
      %3505 = vst.msk [vmem:[#allocation2 + $0x100] sm:$0xff] %vm199, %v3469
      %3506 = vst.msk [vmem:[#allocation2 + $0x108] sm:$0xff] %vm199, %v3470
      %3507 = vst.msk [vmem:[#allocation2 + $0x110] sm:$0xff] %vm199, %v3471
      %3508 = vst.msk [vmem:[#allocation2 + $0x118] sm:$0xff] %vm199, %v3472
      %v3509 = vld [vmem:[%s192 + $0x10] sm:$0xc]
      %v3510 = vld [vmem:[%s192 + $0x14] sm:$0xf]
      %v3511 = vld [vmem:[%s192 + $0x18] sm:$0xf]
      %v3512 = vld [vmem:[%s192 + $0x1c] sm:$0xf]
      %v3513 = vld [vmem:[%s192 + $0x20] sm:$0xf]
      %v3514 = vld [vmem:[%s192 + $0x24] sm:$0xf]
      %v3515 = vld [vmem:[%s192 + $0x28] sm:$0xf]
      %v3516 = vld [vmem:[%s192 + $0x2c] sm:$0xf]
      %v3517 = vld [vmem:[%s192 + $0x30] sm:$0xf]
      %v3518 = vld [vmem:[%s192 + $0x34] sm:$0xf]
      %v3519 = vld [vmem:[%s192 + $0x38] sm:$0xf]
      %v3520 = vld [vmem:[%s192 + $0x3c] sm:$0xf]
      %v3521 = vld [vmem:[%s192 + $0x40] sm:$0xf]
      %v3522 = vld [vmem:[%s192 + $0x44] sm:$0xf]
      %v3523 = vld [vmem:[%s192 + $0x48] sm:$0xf]
      %v3524 = vld [vmem:[%s192 + $0x4c] sm:$0xf]
      %v3525 = vld [vmem:[%s192 + $0x50] sm:$0xf]
      %v3526 = vld [vmem:[%s192 + $0x54] sm:$0xf]
      %v3527 = vld [vmem:[%s192 + $0x58] sm:$0xf]
      %v3528 = vld [vmem:[%s192 + $0x5c] sm:$0xf]
      %v3529 = vld [vmem:[%s192 + $0x60] sm:$0xf]
      %v3530 = vld [vmem:[%s192 + $0x64] sm:$0xf]
      %v3531 = vld [vmem:[%s192 + $0x68] sm:$0xf]
      %v3532 = vld [vmem:[%s192 + $0x6c] sm:$0xf]
      %v3533 = vld [vmem:[%s192 + $0x70] sm:$0xf]
      %v3534 = vld [vmem:[%s192 + $0x74] sm:$0xf]
      %v3535 = vld [vmem:[%s192 + $0x78] sm:$0xf]
      %v3536 = vld [vmem:[%s192 + $0x7c] sm:$0xf]
      %v3537 = vld [vmem:[%s192 + $0x80] sm:$0xf]
      %v3538 = vld [vmem:[%s192 + $0x84] sm:$0xf]
      %v3539 = vld [vmem:[%s192 + $0x88] sm:$0xf]
      %v3540 = vld [vmem:[%s192 + $0x8c] sm:$0xf]
      %v3541 = vld [vmem:[%s192 + $0x90] sm:$0xf]
      %v3542 = vld [vmem:[%s192 + $0x94] sm:$0xf]
      %v3543 = vld [vmem:[%s192 + $0x98] sm:$0xf]
      %v3544 = vld [vmem:[%s192 + $0x9c] sm:$0xf]
      %v3545 = vld [vmem:[%s192 + $0xa0] sm:$0x3]
      %v3546 = vld [vmem:[#allocation2] sm:$0xff]
      %v3547 = vld [vmem:[#allocation2 + $0x8] sm:$0xff]
      %v3548 = vld [vmem:[#allocation2 + $0x10] sm:$0xff]
      %v3549 = vld [vmem:[#allocation2 + $0x18] sm:$0xff]
      %v3550 = vld [vmem:[#allocation2 + $0x20] sm:$0xff]
      %v3551 = vld [vmem:[#allocation2 + $0x28] sm:$0xff]
      %v3552 = vld [vmem:[#allocation2 + $0x30] sm:$0xff]
      %v3553 = vld [vmem:[#allocation2 + $0x38] sm:$0xff]
      %v3554 = vld [vmem:[#allocation2 + $0x40] sm:$0xff]
      %v3555 = vld [vmem:[#allocation2 + $0x48] sm:$0xff]
      %v3556 = vld [vmem:[#allocation2 + $0x50] sm:$0xff]
      %v3557 = vld [vmem:[#allocation2 + $0x58] sm:$0xff]
      %v3558 = vld [vmem:[#allocation2 + $0x60] sm:$0xff]
      %v3559 = vld [vmem:[#allocation2 + $0x68] sm:$0xff]
      %v3560 = vld [vmem:[#allocation2 + $0x70] sm:$0xff]
      %v3561 = vld [vmem:[#allocation2 + $0x78] sm:$0xff]
      %v3562 = vld [vmem:[#allocation2 + $0x80] sm:$0xff]
      %v3563 = vld [vmem:[#allocation2 + $0x88] sm:$0xff]
      %v3564 = vld [vmem:[#allocation2 + $0x90] sm:$0xff]
      %v3565 = vld [vmem:[#allocation2 + $0x98] sm:$0xff]
      %v3566 = vld [vmem:[#allocation2 + $0xa0] sm:$0xff]
      %v3567 = vld [vmem:[#allocation2 + $0xa8] sm:$0xff]
      %v3568 = vld [vmem:[#allocation2 + $0xb0] sm:$0xff]
      %v3569 = vld [vmem:[#allocation2 + $0xb8] sm:$0xff]
      %v3570 = vld [vmem:[#allocation2 + $0xc0] sm:$0xff]
      %v3571 = vld [vmem:[#allocation2 + $0xc8] sm:$0xff]
      %v3572 = vld [vmem:[#allocation2 + $0xd0] sm:$0xff]
      %v3573 = vld [vmem:[#allocation2 + $0xd8] sm:$0xff]
      %v3574 = vld [vmem:[#allocation2 + $0xe0] sm:$0xff]
      %v3575 = vld [vmem:[#allocation2 + $0xe8] sm:$0xff]
      %v3576 = vld [vmem:[#allocation2 + $0xf0] sm:$0xff]
      %v3577 = vld [vmem:[#allocation2 + $0xf8] sm:$0xff]
      %v3578 = vld [vmem:[#allocation2 + $0x100] sm:$0xff]
      %v3579 = vld [vmem:[#allocation2 + $0x108] sm:$0xff]
      %v3580 = vld [vmem:[#allocation2 + $0x110] sm:$0xff]
      %v3581 = vld [vmem:[#allocation2 + $0x118] sm:$0xff]
      %s3582 = scalar_lea.vmem %s1, 24
      %v3583 = vld [vmem:[%s3582] sm:$0xf]
      %v3621 = vunpack.c.l.b16 %v3509
      %v3622 = vunpack.c.l.b16 %v3510
      %v3623 = vunpack.c.l.b16 %v3511
      %v3624 = vunpack.c.l.b16 %v3512
      %v3625 = vunpack.c.l.b16 %v3513
      %v3626 = vunpack.c.l.b16 %v3514
      %v3627 = vunpack.c.l.b16 %v3515
      %v3628 = vunpack.c.l.b16 %v3516
      %v3629 = vunpack.c.l.b16 %v3517
      %v3630 = vunpack.c.l.b16 %v3518
      %v3631 = vunpack.c.l.b16 %v3519
      %v3632 = vunpack.c.l.b16 %v3520
      %v3633 = vunpack.c.l.b16 %v3521
      %v3634 = vunpack.c.l.b16 %v3522
      %v3635 = vunpack.c.l.b16 %v3523
      %v3636 = vunpack.c.l.b16 %v3524
      %v3637 = vunpack.c.l.b16 %v3525
      %v3638 = vunpack.c.l.b16 %v3526
      %v3639 = vunpack.c.l.b16 %v3527
      %v3640 = vunpack.c.l.b16 %v3528
      %v3641 = vunpack.c.l.b16 %v3529
      %v3642 = vunpack.c.l.b16 %v3530
      %v3643 = vunpack.c.l.b16 %v3531
      %v3644 = vunpack.c.l.b16 %v3532
      %v3645 = vunpack.c.l.b16 %v3533
      %v3646 = vunpack.c.l.b16 %v3534
      %v3647 = vunpack.c.l.b16 %v3535
      %v3648 = vunpack.c.l.b16 %v3536
      %v3649 = vunpack.c.l.b16 %v3537
      %v3650 = vunpack.c.l.b16 %v3538
      %v3651 = vunpack.c.l.b16 %v3539
      %v3652 = vunpack.c.l.b16 %v3540
      %v3653 = vunpack.c.l.b16 %v3541
      %v3654 = vunpack.c.l.b16 %v3542
      %v3655 = vunpack.c.l.b16 %v3543
      %v3656 = vunpack.c.l.b16 %v3544
      %v3657 = vunpack.c.l.b16 %v3545
      %v3658 = vpack.c.b16 %v3622, %v3621
      %v3659 = vpack.c.b16 %v3624, %v3623
      %v3660 = vpack.c.b16 %v3626, %v3625
      %v3661 = vpack.c.b16 %v3628, %v3627
      %v3662 = vpack.c.b16 %v3630, %v3629
      %v3663 = vpack.c.b16 %v3632, %v3631
      %v3664 = vpack.c.b16 %v3634, %v3633
      %v3665 = vpack.c.b16 %v3636, %v3635
      %v3666 = vpack.c.b16 %v3638, %v3637
      %v3667 = vpack.c.b16 %v3640, %v3639
      %v3668 = vpack.c.b16 %v3642, %v3641
      %v3669 = vpack.c.b16 %v3644, %v3643
      %v3670 = vpack.c.b16 %v3646, %v3645
      %v3671 = vpack.c.b16 %v3648, %v3647
      %v3672 = vpack.c.b16 %v3650, %v3649
      %v3673 = vpack.c.b16 %v3652, %v3651
      %v3674 = vpack.c.b16 %v3654, %v3653
      %v3675 = vpack.c.b16 %v3656, %v3655
      %v3676 = vpack.c.b16 %v3657, %v3657
      %v3677 = vrot.slane %v3658, 2
      %v3678 = vrot.slane %v3659, 2
      %v3679 = vsel %vm3165, %v3677, %v3678
      %v3680 = vrot.slane %v3660, 2
      %v3681 = vsel %vm3165, %v3678, %v3680
      %v3682 = vrot.slane %v3661, 2
      %v3683 = vsel %vm3165, %v3680, %v3682
      %v3684 = vrot.slane %v3662, 2
      %v3685 = vsel %vm3165, %v3682, %v3684
      %v3686 = vrot.slane %v3663, 2
      %v3687 = vsel %vm3165, %v3684, %v3686
      %v3688 = vrot.slane %v3664, 2
      %v3689 = vsel %vm3165, %v3686, %v3688
      %v3690 = vrot.slane %v3665, 2
      %v3691 = vsel %vm3165, %v3688, %v3690
      %v3692 = vrot.slane %v3666, 2
      %v3693 = vsel %vm3165, %v3690, %v3692
      %v3694 = vrot.slane %v3667, 2
      %v3695 = vsel %vm3165, %v3692, %v3694
      %v3696 = vrot.slane %v3668, 2
      %v3697 = vsel %vm3165, %v3694, %v3696
      %v3698 = vrot.slane %v3669, 2
      %v3699 = vsel %vm3165, %v3696, %v3698
      %v3700 = vrot.slane %v3670, 2
      %v3701 = vsel %vm3165, %v3698, %v3700
      %v3702 = vrot.slane %v3671, 2
      %v3703 = vsel %vm3165, %v3700, %v3702
      %v3704 = vrot.slane %v3672, 2
      %v3705 = vsel %vm3165, %v3702, %v3704
      %v3706 = vrot.slane %v3673, 2
      %v3707 = vsel %vm3165, %v3704, %v3706
      %v3708 = vrot.slane %v3674, 2
      %v3709 = vsel %vm3165, %v3706, %v3708
      %v3710 = vrot.slane %v3675, 2
      %v3711 = vsel %vm3165, %v3708, %v3710
      %v3712 = vrot.slane %v3676, 2
      %v3713 = vsel %vm3165, %v3710, %v3712
      %v3715 = vsel %vm199, %v3679, 0
      %v3718 = vsel %vm199, %v3681, 0
      %v3721 = vsel %vm199, %v3683, 0
      %v3724 = vsel %vm199, %v3685, 0
      %v3727 = vsel %vm199, %v3687, 0
      %v3730 = vsel %vm199, %v3689, 0
      %v3733 = vsel %vm199, %v3691, 0
      %v3736 = vsel %vm199, %v3693, 0
      %v3739 = vsel %vm199, %v3695, 0
      %v3742 = vsel %vm199, %v3697, 0
      %v3745 = vsel %vm199, %v3699, 0
      %v3748 = vsel %vm199, %v3701, 0
      %v3751 = vsel %vm199, %v3703, 0
      %v3754 = vsel %vm199, %v3705, 0
      %v3757 = vsel %vm199, %v3707, 0
      %v3760 = vsel %vm199, %v3709, 0
      %v3763 = vsel %vm199, %v3711, 0
      %v3766 = vsel %vm199, %v3713, 0
      %v3769 = vsel %vm453, %v3583, 0
      %3771 = vmatprep.subr.bf16.mxu0 0
      %3772 = vmatpush1.bf16.msra.mxu0 %v3769
      %3773 = vmatprep.subr.bf16.mxu0 0
      %3774 = vmatpush1.bf16.msra.mxu0 0
      %3775 = vmatprep.subr.bf16.mxu0 0
      %3776 = vmatpush1.bf16.msra.mxu0 0
      %3777 = vmatprep.subr.bf16.mxu0 0
      %3778 = vmatpush1.bf16.msra.mxu0 0
      %3779 = vmatprep.subr.bf16.mxu0 0
      %3780 = vmatpush1.bf16.msra.mxu0 0
      %3781 = vmatprep.subr.bf16.mxu0 0
      %3782 = vmatpush1.bf16.msra.mxu0 0
      %3783 = vmatprep.subr.bf16.mxu0 0
      %3784 = vmatpush1.bf16.msra.mxu0 0
      %3785 = vmatprep.subr.bf16.mxu0 0
      %3786 = vmatpush1.bf16.msra.mxu0 0
      %3787 = vmatprep.subr.bf16.mxu0 0
      %3788 = vmatpush1.bf16.msra.mxu0 0
      %3789 = vmatprep.subr.bf16.mxu0 0
      %3790 = vmatpush1.bf16.msra.mxu0 0
      %3791 = vmatprep.subr.bf16.mxu0 0
      %3792 = vmatpush1.bf16.msra.mxu0 0
      %3793 = vmatprep.subr.bf16.mxu0 0
      %3794 = vmatpush1.bf16.msra.mxu0 0
      %3795 = vmatprep.subr.bf16.mxu0 0
      %3796 = vmatpush1.bf16.msra.mxu0 0
      %3797 = vmatprep.subr.bf16.mxu0 0
      %3798 = vmatpush1.bf16.msra.mxu0 0
      %3799 = vmatprep.subr.bf16.mxu0 0
      %3800 = vmatpush1.bf16.msra.mxu0 0
      %3801 = vmatprep.subr.bf16.mxu0 0
      %3802 = vmatpush1.bf16.msra.mxu0 0
      %3803 = vmatprep.mubr.bf16.mxu0 0
      %3804 = vmatmul.mubr.bf16.gmra.mrb[0].mxu0 %v3715
      %v3805 = vpop.f32.mrb[0].mxu0
      %v3806 = vadd.f32 0.0, %v3805
      %v3807 = vpop.f32.mrb[0].mxu0
      %v3808 = vpop.f32.mrb[0].mxu0
      %v3809 = vadd.f32 0.0, %v3808
      %v3810 = vpop.f32.mrb[0].mxu0
      %3811 = vmatprep.mubr.bf16.mxu0 0
      %3812 = vmatmul.mubr.bf16.gmra.mrb[0].mxu0 %v3718
      %v3813 = vpop.f32.mrb[0].mxu0
      %v3814 = vadd.f32 0.0, %v3813
      %v3815 = vpop.f32.mrb[0].mxu0
      %v3816 = vpop.f32.mrb[0].mxu0
      %v3817 = vadd.f32 0.0, %v3816
      %v3818 = vpop.f32.mrb[0].mxu0
      %3819 = vmatprep.mubr.bf16.mxu0 0
      %3820 = vmatmul.mubr.bf16.gmra.mrb[0].mxu0 %v3721
      %v3821 = vpop.f32.mrb[0].mxu0
      %v3822 = vadd.f32 0.0, %v3821
      %v3823 = vpop.f32.mrb[0].mxu0
      %v3824 = vpop.f32.mrb[0].mxu0
      %v3825 = vadd.f32 0.0, %v3824
      %v3826 = vpop.f32.mrb[0].mxu0
      %3827 = vmatprep.mubr.bf16.mxu0 0
      %3828 = vmatmul.mubr.bf16.gmra.mrb[0].mxu0 %v3724
      %v3829 = vpop.f32.mrb[0].mxu0
      %v3830 = vadd.f32 0.0, %v3829
      %v3831 = vpop.f32.mrb[0].mxu0
      %v3832 = vpop.f32.mrb[0].mxu0
      %v3833 = vadd.f32 0.0, %v3832
      %v3834 = vpop.f32.mrb[0].mxu0
      %3835 = vmatprep.mubr.bf16.mxu0 0
      %3836 = vmatmul.mubr.bf16.gmra.mrb[0].mxu0 %v3727
      %v3837 = vpop.f32.mrb[0].mxu0
      %v3838 = vadd.f32 0.0, %v3837
      %v3839 = vpop.f32.mrb[0].mxu0
      %v3840 = vpop.f32.mrb[0].mxu0
      %v3841 = vadd.f32 0.0, %v3840
      %v3842 = vpop.f32.mrb[0].mxu0
      %3843 = vmatprep.mubr.bf16.mxu0 0
      %3844 = vmatmul.mubr.bf16.gmra.mrb[0].mxu0 %v3730
      %v3845 = vpop.f32.mrb[0].mxu0
      %v3846 = vadd.f32 0.0, %v3845
      %v3847 = vpop.f32.mrb[0].mxu0
      %v3848 = vpop.f32.mrb[0].mxu0
      %v3849 = vadd.f32 0.0, %v3848
      %v3850 = vpop.f32.mrb[0].mxu0
      %3851 = vmatprep.mubr.bf16.mxu0 0
      %3852 = vmatmul.mubr.bf16.gmra.mrb[0].mxu0 %v3733
      %v3853 = vpop.f32.mrb[0].mxu0
      %v3854 = vadd.f32 0.0, %v3853
      %v3855 = vpop.f32.mrb[0].mxu0
      %v3856 = vpop.f32.mrb[0].mxu0
      %v3857 = vadd.f32 0.0, %v3856
      %v3858 = vpop.f32.mrb[0].mxu0
      %3859 = vmatprep.mubr.bf16.mxu0 0
      %3860 = vmatmul.mubr.bf16.gmra.mrb[0].mxu0 %v3736
      %v3861 = vpop.f32.mrb[0].mxu0
      %v3862 = vadd.f32 0.0, %v3861
      %v3863 = vpop.f32.mrb[0].mxu0
      %v3864 = vpop.f32.mrb[0].mxu0
      %v3865 = vadd.f32 0.0, %v3864
      %v3866 = vpop.f32.mrb[0].mxu0
      %3867 = vmatprep.mubr.bf16.mxu0 0
      %3868 = vmatmul.mubr.bf16.gmra.mrb[0].mxu0 %v3739
      %v3869 = vpop.f32.mrb[0].mxu0
      %v3870 = vadd.f32 0.0, %v3869
      %v3871 = vpop.f32.mrb[0].mxu0
      %v3872 = vpop.f32.mrb[0].mxu0
      %v3873 = vadd.f32 0.0, %v3872
      %v3874 = vpop.f32.mrb[0].mxu0
      %3875 = vmatprep.mubr.bf16.mxu0 0
      %3876 = vmatmul.mubr.bf16.gmra.mrb[0].mxu0 %v3742
      %v3877 = vpop.f32.mrb[0].mxu0
      %v3878 = vadd.f32 0.0, %v3877
      %v3879 = vpop.f32.mrb[0].mxu0
      %v3880 = vpop.f32.mrb[0].mxu0
      %v3881 = vadd.f32 0.0, %v3880
      %v3882 = vpop.f32.mrb[0].mxu0
      %3883 = vmatprep.mubr.bf16.mxu0 0
      %3884 = vmatmul.mubr.bf16.gmra.mrb[0].mxu0 %v3745
      %v3885 = vpop.f32.mrb[0].mxu0
      %v3886 = vadd.f32 0.0, %v3885
      %v3887 = vpop.f32.mrb[0].mxu0
      %v3888 = vpop.f32.mrb[0].mxu0
      %v3889 = vadd.f32 0.0, %v3888
      %v3890 = vpop.f32.mrb[0].mxu0
      %3891 = vmatprep.mubr.bf16.mxu0 0
      %3892 = vmatmul.mubr.bf16.gmra.mrb[0].mxu0 %v3748
      %v3893 = vpop.f32.mrb[0].mxu0
      %v3894 = vadd.f32 0.0, %v3893
      %v3895 = vpop.f32.mrb[0].mxu0
      %v3896 = vpop.f32.mrb[0].mxu0
      %v3897 = vadd.f32 0.0, %v3896
      %v3898 = vpop.f32.mrb[0].mxu0
      %3899 = vmatprep.mubr.bf16.mxu0 0
      %3900 = vmatmul.mubr.bf16.gmra.mrb[0].mxu0 %v3751
      %v3901 = vpop.f32.mrb[0].mxu0
      %v3902 = vadd.f32 0.0, %v3901
      %v3903 = vpop.f32.mrb[0].mxu0
      %v3904 = vpop.f32.mrb[0].mxu0
      %v3905 = vadd.f32 0.0, %v3904
      %v3906 = vpop.f32.mrb[0].mxu0
      %3907 = vmatprep.mubr.bf16.mxu0 0
      %3908 = vmatmul.mubr.bf16.gmra.mrb[0].mxu0 %v3754
      %v3909 = vpop.f32.mrb[0].mxu0
      %v3910 = vadd.f32 0.0, %v3909
      %v3911 = vpop.f32.mrb[0].mxu0
      %v3912 = vpop.f32.mrb[0].mxu0
      %v3913 = vadd.f32 0.0, %v3912
      %v3914 = vpop.f32.mrb[0].mxu0
      %3915 = vmatprep.mubr.bf16.mxu0 0
      %3916 = vmatmul.mubr.bf16.gmra.mrb[0].mxu0 %v3757
      %v3917 = vpop.f32.mrb[0].mxu0
      %v3918 = vadd.f32 0.0, %v3917
      %v3919 = vpop.f32.mrb[0].mxu0
      %v3920 = vpop.f32.mrb[0].mxu0
      %v3921 = vadd.f32 0.0, %v3920
      %v3922 = vpop.f32.mrb[0].mxu0
      %3923 = vmatprep.mubr.bf16.mxu0 0
      %3924 = vmatmul.mubr.bf16.gmra.mrb[0].mxu0 %v3760
      %v3925 = vpop.f32.mrb[0].mxu0
      %v3926 = vadd.f32 0.0, %v3925
      %v3927 = vpop.f32.mrb[0].mxu0
      %v3928 = vpop.f32.mrb[0].mxu0
      %v3929 = vadd.f32 0.0, %v3928
      %v3930 = vpop.f32.mrb[0].mxu0
      %3931 = vmatprep.mubr.bf16.mxu0 0
      %3932 = vmatmul.mubr.bf16.gmra.mrb[0].mxu0 %v3763
      %v3933 = vpop.f32.mrb[0].mxu0
      %v3934 = vadd.f32 0.0, %v3933
      %v3935 = vpop.f32.mrb[0].mxu0
      %v3936 = vpop.f32.mrb[0].mxu0
      %v3937 = vadd.f32 0.0, %v3936
      %v3938 = vpop.f32.mrb[0].mxu0
      %3939 = vmatprep.mubr.bf16.mxu0 0
      %3940 = vmatmul.mubr.bf16.gmra.mrb[0].mxu0 %v3766
      %v3941 = vpop.f32.mrb[0].mxu0
      %v3942 = vadd.f32 0.0, %v3941
      %v3943 = vpop.f32.mrb[0].mxu0
      %v3944 = vpop.f32.mrb[0].mxu0
      %v3945 = vadd.f32 0.0, %v3944
      %v3946 = vpop.f32.mrb[0].mxu0
      %3947 = vdwg.mxu0
      %v3948 = vadd.f32 %v3546, %v3806
      %v3949 = vadd.f32 %v3547, %v3809
      %v3950 = vadd.f32 %v3548, %v3814
      %v3951 = vadd.f32 %v3549, %v3817
      %v3952 = vadd.f32 %v3550, %v3822
      %v3953 = vadd.f32 %v3551, %v3825
      %v3954 = vadd.f32 %v3552, %v3830
      %v3955 = vadd.f32 %v3553, %v3833
      %v3956 = vadd.f32 %v3554, %v3838
      %v3957 = vadd.f32 %v3555, %v3841
      %v3958 = vadd.f32 %v3556, %v3846
      %v3959 = vadd.f32 %v3557, %v3849
      %v3960 = vadd.f32 %v3558, %v3854
      %v3961 = vadd.f32 %v3559, %v3857
      %v3962 = vadd.f32 %v3560, %v3862
      %v3963 = vadd.f32 %v3561, %v3865
      %v3964 = vadd.f32 %v3562, %v3870
      %v3965 = vadd.f32 %v3563, %v3873
      %v3966 = vadd.f32 %v3564, %v3878
      %v3967 = vadd.f32 %v3565, %v3881
      %v3968 = vadd.f32 %v3566, %v3886
      %v3969 = vadd.f32 %v3567, %v3889
      %v3970 = vadd.f32 %v3568, %v3894
      %v3971 = vadd.f32 %v3569, %v3897
      %v3972 = vadd.f32 %v3570, %v3902
      %v3973 = vadd.f32 %v3571, %v3905
      %v3974 = vadd.f32 %v3572, %v3910
      %v3975 = vadd.f32 %v3573, %v3913
      %v3976 = vadd.f32 %v3574, %v3918
      %v3977 = vadd.f32 %v3575, %v3921
      %v3978 = vadd.f32 %v3576, %v3926
      %v3979 = vadd.f32 %v3577, %v3929
      %v3980 = vadd.f32 %v3578, %v3934
      %v3981 = vadd.f32 %v3579, %v3937
      %v3982 = vadd.f32 %v3580, %v3942
      %v3983 = vadd.f32 %v3581, %v3945
      %3984 = vst.msk [vmem:[#allocation2] sm:$0xff] %vm199, %v3948
      %3985 = vst.msk [vmem:[#allocation2 + $0x8] sm:$0xff] %vm199, %v3949
      %3986 = vst.msk [vmem:[#allocation2 + $0x10] sm:$0xff] %vm199, %v3950
      %3987 = vst.msk [vmem:[#allocation2 + $0x18] sm:$0xff] %vm199, %v3951
      %3988 = vst.msk [vmem:[#allocation2 + $0x20] sm:$0xff] %vm199, %v3952
      %3989 = vst.msk [vmem:[#allocation2 + $0x28] sm:$0xff] %vm199, %v3953
      %3990 = vst.msk [vmem:[#allocation2 + $0x30] sm:$0xff] %vm199, %v3954
      %3991 = vst.msk [vmem:[#allocation2 + $0x38] sm:$0xff] %vm199, %v3955
      %3992 = vst.msk [vmem:[#allocation2 + $0x40] sm:$0xff] %vm199, %v3956
      %3993 = vst.msk [vmem:[#allocation2 + $0x48] sm:$0xff] %vm199, %v3957
      %3994 = vst.msk [vmem:[#allocation2 + $0x50] sm:$0xff] %vm199, %v3958
      %3995 = vst.msk [vmem:[#allocation2 + $0x58] sm:$0xff] %vm199, %v3959
      %3996 = vst.msk [vmem:[#allocation2 + $0x60] sm:$0xff] %vm199, %v3960
      %3997 = vst.msk [vmem:[#allocation2 + $0x68] sm:$0xff] %vm199, %v3961
      %3998 = vst.msk [vmem:[#allocation2 + $0x70] sm:$0xff] %vm199, %v3962
      %3999 = vst.msk [vmem:[#allocation2 + $0x78] sm:$0xff] %vm199, %v3963
      %4000 = vst.msk [vmem:[#allocation2 + $0x80] sm:$0xff] %vm199, %v3964
      %4001 = vst.msk [vmem:[#allocation2 + $0x88] sm:$0xff] %vm199, %v3965
      %4002 = vst.msk [vmem:[#allocation2 + $0x90] sm:$0xff] %vm199, %v3966
      %4003 = vst.msk [vmem:[#allocation2 + $0x98] sm:$0xff] %vm199, %v3967
      %4004 = vst.msk [vmem:[#allocation2 + $0xa0] sm:$0xff] %vm199, %v3968
      %4005 = vst.msk [vmem:[#allocation2 + $0xa8] sm:$0xff] %vm199, %v3969
      %4006 = vst.msk [vmem:[#allocation2 + $0xb0] sm:$0xff] %vm199, %v3970
      %4007 = vst.msk [vmem:[#allocation2 + $0xb8] sm:$0xff] %vm199, %v3971
      %4008 = vst.msk [vmem:[#allocation2 + $0xc0] sm:$0xff] %vm199, %v3972
      %4009 = vst.msk [vmem:[#allocation2 + $0xc8] sm:$0xff] %vm199, %v3973
      %4010 = vst.msk [vmem:[#allocation2 + $0xd0] sm:$0xff] %vm199, %v3974
      %4011 = vst.msk [vmem:[#allocation2 + $0xd8] sm:$0xff] %vm199, %v3975
      %4012 = vst.msk [vmem:[#allocation2 + $0xe0] sm:$0xff] %vm199, %v3976
      %4013 = vst.msk [vmem:[#allocation2 + $0xe8] sm:$0xff] %vm199, %v3977
      %4014 = vst.msk [vmem:[#allocation2 + $0xf0] sm:$0xff] %vm199, %v3978
      %4015 = vst.msk [vmem:[#allocation2 + $0xf8] sm:$0xff] %vm199, %v3979
      %4016 = vst.msk [vmem:[#allocation2 + $0x100] sm:$0xff] %vm199, %v3980
      %4017 = vst.msk [vmem:[#allocation2 + $0x108] sm:$0xff] %vm199, %v3981
      %4018 = vst.msk [vmem:[#allocation2 + $0x110] sm:$0xff] %vm199, %v3982
      %4019 = vst.msk [vmem:[#allocation2 + $0x118] sm:$0xff] %vm199, %v3983
      %v4020 = vld [vmem:[%s192 + $0x10] sm:$0xc]
      %v4021 = vld [vmem:[%s192 + $0x14] sm:$0xf]
      %v4022 = vld [vmem:[%s192 + $0x18] sm:$0xf]
      %v4023 = vld [vmem:[%s192 + $0x1c] sm:$0xf]
      %v4024 = vld [vmem:[%s192 + $0x20] sm:$0xf]
      %v4025 = vld [vmem:[%s192 + $0x24] sm:$0xf]
      %v4026 = vld [vmem:[%s192 + $0x28] sm:$0xf]
      %v4027 = vld [vmem:[%s192 + $0x2c] sm:$0xf]
      %v4028 = vld [vmem:[%s192 + $0x30] sm:$0xf]
      %v4029 = vld [vmem:[%s192 + $0x34] sm:$0xf]
      %v4030 = vld [vmem:[%s192 + $0x38] sm:$0xf]
      %v4031 = vld [vmem:[%s192 + $0x3c] sm:$0xf]
      %v4032 = vld [vmem:[%s192 + $0x40] sm:$0xf]
      %v4033 = vld [vmem:[%s192 + $0x44] sm:$0xf]
      %v4034 = vld [vmem:[%s192 + $0x48] sm:$0xf]
      %v4035 = vld [vmem:[%s192 + $0x4c] sm:$0xf]
      %v4036 = vld [vmem:[%s192 + $0x50] sm:$0xf]
      %v4037 = vld [vmem:[%s192 + $0x54] sm:$0xf]
      %v4038 = vld [vmem:[%s192 + $0x58] sm:$0xf]
      %v4039 = vld [vmem:[%s192 + $0x5c] sm:$0xf]
      %v4040 = vld [vmem:[%s192 + $0x60] sm:$0xf]
      %v4041 = vld [vmem:[%s192 + $0x64] sm:$0xf]
      %v4042 = vld [vmem:[%s192 + $0x68] sm:$0xf]
      %v4043 = vld [vmem:[%s192 + $0x6c] sm:$0xf]
      %v4044 = vld [vmem:[%s192 + $0x70] sm:$0xf]
      %v4045 = vld [vmem:[%s192 + $0x74] sm:$0xf]
      %v4046 = vld [vmem:[%s192 + $0x78] sm:$0xf]
      %v4047 = vld [vmem:[%s192 + $0x7c] sm:$0xf]
      %v4048 = vld [vmem:[%s192 + $0x80] sm:$0xf]
      %v4049 = vld [vmem:[%s192 + $0x84] sm:$0xf]
      %v4050 = vld [vmem:[%s192 + $0x88] sm:$0xf]
      %v4051 = vld [vmem:[%s192 + $0x8c] sm:$0xf]
      %v4052 = vld [vmem:[%s192 + $0x90] sm:$0xf]
      %v4053 = vld [vmem:[%s192 + $0x94] sm:$0xf]
      %v4054 = vld [vmem:[%s192 + $0x98] sm:$0xf]
      %v4055 = vld [vmem:[%s192 + $0x9c] sm:$0xf]
      %v4056 = vld [vmem:[%s192 + $0xa0] sm:$0x7]
      %v4057 = vld [vmem:[#allocation2] sm:$0xff]
      %v4058 = vld [vmem:[#allocation2 + $0x8] sm:$0xff]
      %v4059 = vld [vmem:[#allocation2 + $0x10] sm:$0xff]
      %v4060 = vld [vmem:[#allocation2 + $0x18] sm:$0xff]
      %v4061 = vld [vmem:[#allocation2 + $0x20] sm:$0xff]
      %v4062 = vld [vmem:[#allocation2 + $0x28] sm:$0xff]
      %v4063 = vld [vmem:[#allocation2 + $0x30] sm:$0xff]
      %v4064 = vld [vmem:[#allocation2 + $0x38] sm:$0xff]
      %v4065 = vld [vmem:[#allocation2 + $0x40] sm:$0xff]
      %v4066 = vld [vmem:[#allocation2 + $0x48] sm:$0xff]
      %v4067 = vld [vmem:[#allocation2 + $0x50] sm:$0xff]
      %v4068 = vld [vmem:[#allocation2 + $0x58] sm:$0xff]
      %v4069 = vld [vmem:[#allocation2 + $0x60] sm:$0xff]
      %v4070 = vld [vmem:[#allocation2 + $0x68] sm:$0xff]
      %v4071 = vld [vmem:[#allocation2 + $0x70] sm:$0xff]
      %v4072 = vld [vmem:[#allocation2 + $0x78] sm:$0xff]
      %v4073 = vld [vmem:[#allocation2 + $0x80] sm:$0xff]
      %v4074 = vld [vmem:[#allocation2 + $0x88] sm:$0xff]
      %v4075 = vld [vmem:[#allocation2 + $0x90] sm:$0xff]
      %v4076 = vld [vmem:[#allocation2 + $0x98] sm:$0xff]
      %v4077 = vld [vmem:[#allocation2 + $0xa0] sm:$0xff]
      %v4078 = vld [vmem:[#allocation2 + $0xa8] sm:$0xff]
      %v4079 = vld [vmem:[#allocation2 + $0xb0] sm:$0xff]
      %v4080 = vld [vmem:[#allocation2 + $0xb8] sm:$0xff]
      %v4081 = vld [vmem:[#allocation2 + $0xc0] sm:$0xff]
      %v4082 = vld [vmem:[#allocation2 + $0xc8] sm:$0xff]
      %v4083 = vld [vmem:[#allocation2 + $0xd0] sm:$0xff]
      %v4084 = vld [vmem:[#allocation2 + $0xd8] sm:$0xff]
      %v4085 = vld [vmem:[#allocation2 + $0xe0] sm:$0xff]
      %v4086 = vld [vmem:[#allocation2 + $0xe8] sm:$0xff]
      %v4087 = vld [vmem:[#allocation2 + $0xf0] sm:$0xff]
      %v4088 = vld [vmem:[#allocation2 + $0xf8] sm:$0xff]
      %v4089 = vld [vmem:[#allocation2 + $0x100] sm:$0xff]
      %v4090 = vld [vmem:[#allocation2 + $0x108] sm:$0xff]
      %v4091 = vld [vmem:[#allocation2 + $0x110] sm:$0xff]
      %v4092 = vld [vmem:[#allocation2 + $0x118] sm:$0xff]
      %s4093 = scalar_lea.vmem %s1, 28
      %v4094 = vld [vmem:[%s4093] sm:$0xf]
      %v4132 = vunpack.c.l.b16 %v4020
      %v4133 = vunpack.c.l.b16 %v4021
      %v4134 = vunpack.c.l.b16 %v4022
      %v4135 = vunpack.c.l.b16 %v4023
      %v4136 = vunpack.c.l.b16 %v4024
      %v4137 = vunpack.c.l.b16 %v4025
      %v4138 = vunpack.c.l.b16 %v4026
      %v4139 = vunpack.c.l.b16 %v4027
      %v4140 = vunpack.c.l.b16 %v4028
      %v4141 = vunpack.c.l.b16 %v4029
      %v4142 = vunpack.c.l.b16 %v4030
      %v4143 = vunpack.c.l.b16 %v4031
      %v4144 = vunpack.c.l.b16 %v4032
      %v4145 = vunpack.c.l.b16 %v4033
      %v4146 = vunpack.c.l.b16 %v4034
      %v4147 = vunpack.c.l.b16 %v4035
      %v4148 = vunpack.c.l.b16 %v4036
      %v4149 = vunpack.c.l.b16 %v4037
      %v4150 = vunpack.c.l.b16 %v4038
      %v4151 = vunpack.c.l.b16 %v4039
      %v4152 = vunpack.c.l.b16 %v4040
      %v4153 = vunpack.c.l.b16 %v4041
      %v4154 = vunpack.c.l.b16 %v4042
      %v4155 = vunpack.c.l.b16 %v4043
      %v4156 = vunpack.c.l.b16 %v4044
      %v4157 = vunpack.c.l.b16 %v4045
      %v4158 = vunpack.c.l.b16 %v4046
      %v4159 = vunpack.c.l.b16 %v4047
      %v4160 = vunpack.c.l.b16 %v4048
      %v4161 = vunpack.c.l.b16 %v4049
      %v4162 = vunpack.c.l.b16 %v4050
      %v4163 = vunpack.c.l.b16 %v4051
      %v4164 = vunpack.c.l.b16 %v4052
      %v4165 = vunpack.c.l.b16 %v4053
      %v4166 = vunpack.c.l.b16 %v4054
      %v4167 = vunpack.c.l.b16 %v4055
      %v4168 = vunpack.c.l.b16 %v4056
      %v4169 = vpack.c.b16 %v4133, %v4132
      %v4170 = vpack.c.b16 %v4135, %v4134
      %v4171 = vpack.c.b16 %v4137, %v4136
      %v4172 = vpack.c.b16 %v4139, %v4138
      %v4173 = vpack.c.b16 %v4141, %v4140
      %v4174 = vpack.c.b16 %v4143, %v4142
      %v4175 = vpack.c.b16 %v4145, %v4144
      %v4176 = vpack.c.b16 %v4147, %v4146
      %v4177 = vpack.c.b16 %v4149, %v4148
      %v4178 = vpack.c.b16 %v4151, %v4150
      %v4179 = vpack.c.b16 %v4153, %v4152
      %v4180 = vpack.c.b16 %v4155, %v4154
      %v4181 = vpack.c.b16 %v4157, %v4156
      %v4182 = vpack.c.b16 %v4159, %v4158
      %v4183 = vpack.c.b16 %v4161, %v4160
      %v4184 = vpack.c.b16 %v4163, %v4162
      %v4185 = vpack.c.b16 %v4165, %v4164
      %v4186 = vpack.c.b16 %v4167, %v4166
      %v4187 = vpack.c.b16 %v4168, %v4168
      %vm4188 = vsmask.f32 5376
      %v4190 = vshrl.u32 %v4169, 16
      %v4192 = vrot.slane %v4190, 2
      %v4193 = vshll.u32 %v4169, 16
      %v4195 = vrot.slane %v4193, 3
      %v4196 = vor.u32 %v4192, %v4195
      %v4198 = vshrl.u32 %v4170, 16
      %v4200 = vrot.slane %v4198, 2
      %v4201 = vshll.u32 %v4170, 16
      %v4203 = vrot.slane %v4201, 3
      %v4204 = vor.u32 %v4200, %v4203
      %v4205 = vsel %vm4188, %v4196, %v4204
      %v4207 = vshrl.u32 %v4171, 16
      %v4209 = vrot.slane %v4207, 2
      %v4210 = vshll.u32 %v4171, 16
      %v4212 = vrot.slane %v4210, 3
      %v4213 = vor.u32 %v4209, %v4212
      %v4214 = vsel %vm4188, %v4204, %v4213
      %v4216 = vshrl.u32 %v4172, 16
      %v4218 = vrot.slane %v4216, 2
      %v4219 = vshll.u32 %v4172, 16
      %v4221 = vrot.slane %v4219, 3
      %v4222 = vor.u32 %v4218, %v4221
      %v4223 = vsel %vm4188, %v4213, %v4222
      %v4225 = vshrl.u32 %v4173, 16
      %v4227 = vrot.slane %v4225, 2
      %v4228 = vshll.u32 %v4173, 16
      %v4230 = vrot.slane %v4228, 3
      %v4231 = vor.u32 %v4227, %v4230
      %v4232 = vsel %vm4188, %v4222, %v4231
      %v4234 = vshrl.u32 %v4174, 16
      %v4236 = vrot.slane %v4234, 2
      %v4237 = vshll.u32 %v4174, 16
      %v4239 = vrot.slane %v4237, 3
      %v4240 = vor.u32 %v4236, %v4239
      %v4241 = vsel %vm4188, %v4231, %v4240
      %v4243 = vshrl.u32 %v4175, 16
      %v4245 = vrot.slane %v4243, 2
      %v4246 = vshll.u32 %v4175, 16
      %v4248 = vrot.slane %v4246, 3
      %v4249 = vor.u32 %v4245, %v4248
      %v4250 = vsel %vm4188, %v4240, %v4249
      %v4252 = vshrl.u32 %v4176, 16
      %v4254 = vrot.slane %v4252, 2
      %v4255 = vshll.u32 %v4176, 16
      %v4257 = vrot.slane %v4255, 3
      %v4258 = vor.u32 %v4254, %v4257
      %v4259 = vsel %vm4188, %v4249, %v4258
      %v4261 = vshrl.u32 %v4177, 16
      %v4263 = vrot.slane %v4261, 2
      %v4264 = vshll.u32 %v4177, 16
      %v4266 = vrot.slane %v4264, 3
      %v4267 = vor.u32 %v4263, %v4266
      %v4268 = vsel %vm4188, %v4258, %v4267
      %v4270 = vshrl.u32 %v4178, 16
      %v4272 = vrot.slane %v4270, 2
      %v4273 = vshll.u32 %v4178, 16
      %v4275 = vrot.slane %v4273, 3
      %v4276 = vor.u32 %v4272, %v4275
      %v4277 = vsel %vm4188, %v4267, %v4276
      %v4279 = vshrl.u32 %v4179, 16
      %v4281 = vrot.slane %v4279, 2
      %v4282 = vshll.u32 %v4179, 16
      %v4284 = vrot.slane %v4282, 3
      %v4285 = vor.u32 %v4281, %v4284
      %v4286 = vsel %vm4188, %v4276, %v4285
      %v4288 = vshrl.u32 %v4180, 16
      %v4290 = vrot.slane %v4288, 2
      %v4291 = vshll.u32 %v4180, 16
      %v4293 = vrot.slane %v4291, 3
      %v4294 = vor.u32 %v4290, %v4293
      %v4295 = vsel %vm4188, %v4285, %v4294
      %v4297 = vshrl.u32 %v4181, 16
      %v4299 = vrot.slane %v4297, 2
      %v4300 = vshll.u32 %v4181, 16
      %v4302 = vrot.slane %v4300, 3
      %v4303 = vor.u32 %v4299, %v4302
      %v4304 = vsel %vm4188, %v4294, %v4303
      %v4306 = vshrl.u32 %v4182, 16
      %v4308 = vrot.slane %v4306, 2
      %v4309 = vshll.u32 %v4182, 16
      %v4311 = vrot.slane %v4309, 3
      %v4312 = vor.u32 %v4308, %v4311
      %v4313 = vsel %vm4188, %v4303, %v4312
      %v4315 = vshrl.u32 %v4183, 16
      %v4317 = vrot.slane %v4315, 2
      %v4318 = vshll.u32 %v4183, 16
      %v4320 = vrot.slane %v4318, 3
      %v4321 = vor.u32 %v4317, %v4320
      %v4322 = vsel %vm4188, %v4312, %v4321
      %v4324 = vshrl.u32 %v4184, 16
      %v4326 = vrot.slane %v4324, 2
      %v4327 = vshll.u32 %v4184, 16
      %v4329 = vrot.slane %v4327, 3
      %v4330 = vor.u32 %v4326, %v4329
      %v4331 = vsel %vm4188, %v4321, %v4330
      %v4333 = vshrl.u32 %v4185, 16
      %v4335 = vrot.slane %v4333, 2
      %v4336 = vshll.u32 %v4185, 16
      %v4338 = vrot.slane %v4336, 3
      %v4339 = vor.u32 %v4335, %v4338
      %v4340 = vsel %vm4188, %v4330, %v4339
      %v4342 = vshrl.u32 %v4186, 16
      %v4344 = vrot.slane %v4342, 2
      %v4345 = vshll.u32 %v4186, 16
      %v4347 = vrot.slane %v4345, 3
      %v4348 = vor.u32 %v4344, %v4347
      %v4349 = vsel %vm4188, %v4339, %v4348
      %v4351 = vshrl.u32 %v4187, 16
      %v4353 = vrot.slane %v4351, 2
      %v4354 = vshll.u32 %v4187, 16
      %v4356 = vrot.slane %v4354, 3
      %v4357 = vor.u32 %v4353, %v4356
      %v4358 = vsel %vm4188, %v4348, %v4357
      %v4360 = vsel %vm199, %v4205, 0
      %v4363 = vsel %vm199, %v4214, 0
      %v4366 = vsel %vm199, %v4223, 0
      %v4369 = vsel %vm199, %v4232, 0
      %v4372 = vsel %vm199, %v4241, 0
      %v4375 = vsel %vm199, %v4250, 0
      %v4378 = vsel %vm199, %v4259, 0
      %v4381 = vsel %vm199, %v4268, 0
      %v4384 = vsel %vm199, %v4277, 0
      %v4387 = vsel %vm199, %v4286, 0
      %v4390 = vsel %vm199, %v4295, 0
      %v4393 = vsel %vm199, %v4304, 0
      %v4396 = vsel %vm199, %v4313, 0
      %v4399 = vsel %vm199, %v4322, 0
      %v4402 = vsel %vm199, %v4331, 0
      %v4405 = vsel %vm199, %v4340, 0
      %v4408 = vsel %vm199, %v4349, 0
      %v4411 = vsel %vm199, %v4358, 0
      %v4414 = vsel %vm453, %v4094, 0
      %4416 = vmatprep.subr.bf16.mxu0 0
      %4417 = vmatpush1.bf16.msra.mxu0 %v4414
      %4418 = vmatprep.subr.bf16.mxu0 0
      %4419 = vmatpush1.bf16.msra.mxu0 0
      %4420 = vmatprep.subr.bf16.mxu0 0
      %4421 = vmatpush1.bf16.msra.mxu0 0
      %4422 = vmatprep.subr.bf16.mxu0 0
      %4423 = vmatpush1.bf16.msra.mxu0 0
      %4424 = vmatprep.subr.bf16.mxu0 0
      %4425 = vmatpush1.bf16.msra.mxu0 0
      %4426 = vmatprep.subr.bf16.mxu0 0
      %4427 = vmatpush1.bf16.msra.mxu0 0
      %4428 = vmatprep.subr.bf16.mxu0 0
      %4429 = vmatpush1.bf16.msra.mxu0 0
      %4430 = vmatprep.subr.bf16.mxu0 0
      %4431 = vmatpush1.bf16.msra.mxu0 0
      %4432 = vmatprep.subr.bf16.mxu0 0
      %4433 = vmatpush1.bf16.msra.mxu0 0
      %4434 = vmatprep.subr.bf16.mxu0 0
      %4435 = vmatpush1.bf16.msra.mxu0 0
      %4436 = vmatprep.subr.bf16.mxu0 0
      %4437 = vmatpush1.bf16.msra.mxu0 0
      %4438 = vmatprep.subr.bf16.mxu0 0
      %4439 = vmatpush1.bf16.msra.mxu0 0
      %4440 = vmatprep.subr.bf16.mxu0 0
      %4441 = vmatpush1.bf16.msra.mxu0 0
      %4442 = vmatprep.subr.bf16.mxu0 0
      %4443 = vmatpush1.bf16.msra.mxu0 0
      %4444 = vmatprep.subr.bf16.mxu0 0
      %4445 = vmatpush1.bf16.msra.mxu0 0
      %4446 = vmatprep.subr.bf16.mxu0 0
      %4447 = vmatpush1.bf16.msra.mxu0 0
      %4448 = vmatprep.mubr.bf16.mxu0 0
      %4449 = vmatmul.mubr.bf16.gmra.mrb[0].mxu0 %v4360
      %v4450 = vpop.f32.mrb[0].mxu0
      %v4451 = vadd.f32 0.0, %v4450
      %v4452 = vpop.f32.mrb[0].mxu0
      %v4453 = vpop.f32.mrb[0].mxu0
      %v4454 = vadd.f32 0.0, %v4453
      %v4455 = vpop.f32.mrb[0].mxu0
      %4456 = vmatprep.mubr.bf16.mxu0 0
      %4457 = vmatmul.mubr.bf16.gmra.mrb[0].mxu0 %v4363
      %v4458 = vpop.f32.mrb[0].mxu0
      %v4459 = vadd.f32 0.0, %v4458
      %v4460 = vpop.f32.mrb[0].mxu0
      %v4461 = vpop.f32.mrb[0].mxu0
      %v4462 = vadd.f32 0.0, %v4461
      %v4463 = vpop.f32.mrb[0].mxu0
      %4464 = vmatprep.mubr.bf16.mxu0 0
      %4465 = vmatmul.mubr.bf16.gmra.mrb[0].mxu0 %v4366
      %v4466 = vpop.f32.mrb[0].mxu0
      %v4467 = vadd.f32 0.0, %v4466
      %v4468 = vpop.f32.mrb[0].mxu0
      %v4469 = vpop.f32.mrb[0].mxu0
      %v4470 = vadd.f32 0.0, %v4469
      %v4471 = vpop.f32.mrb[0].mxu0
      %4472 = vmatprep.mubr.bf16.mxu0 0
      %4473 = vmatmul.mubr.bf16.gmra.mrb[0].mxu0 %v4369
      %v4474 = vpop.f32.mrb[0].mxu0
      %v4475 = vadd.f32 0.0, %v4474
      %v4476 = vpop.f32.mrb[0].mxu0
      %v4477 = vpop.f32.mrb[0].mxu0
      %v4478 = vadd.f32 0.0, %v4477
      %v4479 = vpop.f32.mrb[0].mxu0
      %4480 = vmatprep.mubr.bf16.mxu0 0
      %4481 = vmatmul.mubr.bf16.gmra.mrb[0].mxu0 %v4372
      %v4482 = vpop.f32.mrb[0].mxu0
      %v4483 = vadd.f32 0.0, %v4482
      %v4484 = vpop.f32.mrb[0].mxu0
      %v4485 = vpop.f32.mrb[0].mxu0
      %v4486 = vadd.f32 0.0, %v4485
      %v4487 = vpop.f32.mrb[0].mxu0
      %4488 = vmatprep.mubr.bf16.mxu0 0
      %4489 = vmatmul.mubr.bf16.gmra.mrb[0].mxu0 %v4375
      %v4490 = vpop.f32.mrb[0].mxu0
      %v4491 = vadd.f32 0.0, %v4490
      %v4492 = vpop.f32.mrb[0].mxu0
      %v4493 = vpop.f32.mrb[0].mxu0
      %v4494 = vadd.f32 0.0, %v4493
      %v4495 = vpop.f32.mrb[0].mxu0
      %4496 = vmatprep.mubr.bf16.mxu0 0
      %4497 = vmatmul.mubr.bf16.gmra.mrb[0].mxu0 %v4378
      %v4498 = vpop.f32.mrb[0].mxu0
      %v4499 = vadd.f32 0.0, %v4498
      %v4500 = vpop.f32.mrb[0].mxu0
      %v4501 = vpop.f32.mrb[0].mxu0
      %v4502 = vadd.f32 0.0, %v4501
      %v4503 = vpop.f32.mrb[0].mxu0
      %4504 = vmatprep.mubr.bf16.mxu0 0
      %4505 = vmatmul.mubr.bf16.gmra.mrb[0].mxu0 %v4381
      %v4506 = vpop.f32.mrb[0].mxu0
      %v4507 = vadd.f32 0.0, %v4506
      %v4508 = vpop.f32.mrb[0].mxu0
      %v4509 = vpop.f32.mrb[0].mxu0
      %v4510 = vadd.f32 0.0, %v4509
      %v4511 = vpop.f32.mrb[0].mxu0
      %4512 = vmatprep.mubr.bf16.mxu0 0
      %4513 = vmatmul.mubr.bf16.gmra.mrb[0].mxu0 %v4384
      %v4514 = vpop.f32.mrb[0].mxu0
      %v4515 = vadd.f32 0.0, %v4514
      %v4516 = vpop.f32.mrb[0].mxu0
      %v4517 = vpop.f32.mrb[0].mxu0
      %v4518 = vadd.f32 0.0, %v4517
      %v4519 = vpop.f32.mrb[0].mxu0
      %4520 = vmatprep.mubr.bf16.mxu0 0
      %4521 = vmatmul.mubr.bf16.gmra.mrb[0].mxu0 %v4387
      %v4522 = vpop.f32.mrb[0].mxu0
      %v4523 = vadd.f32 0.0, %v4522
      %v4524 = vpop.f32.mrb[0].mxu0
      %v4525 = vpop.f32.mrb[0].mxu0
      %v4526 = vadd.f32 0.0, %v4525
      %v4527 = vpop.f32.mrb[0].mxu0
      %4528 = vmatprep.mubr.bf16.mxu0 0
      %4529 = vmatmul.mubr.bf16.gmra.mrb[0].mxu0 %v4390
      %v4530 = vpop.f32.mrb[0].mxu0
      %v4531 = vadd.f32 0.0, %v4530
      %v4532 = vpop.f32.mrb[0].mxu0
      %v4533 = vpop.f32.mrb[0].mxu0
      %v4534 = vadd.f32 0.0, %v4533
      %v4535 = vpop.f32.mrb[0].mxu0
      %4536 = vmatprep.mubr.bf16.mxu0 0
      %4537 = vmatmul.mubr.bf16.gmra.mrb[0].mxu0 %v4393
      %v4538 = vpop.f32.mrb[0].mxu0
      %v4539 = vadd.f32 0.0, %v4538
      %v4540 = vpop.f32.mrb[0].mxu0
      %v4541 = vpop.f32.mrb[0].mxu0
      %v4542 = vadd.f32 0.0, %v4541
      %v4543 = vpop.f32.mrb[0].mxu0
      %4544 = vmatprep.mubr.bf16.mxu0 0
      %4545 = vmatmul.mubr.bf16.gmra.mrb[0].mxu0 %v4396
      %v4546 = vpop.f32.mrb[0].mxu0
      %v4547 = vadd.f32 0.0, %v4546
      %v4548 = vpop.f32.mrb[0].mxu0
      %v4549 = vpop.f32.mrb[0].mxu0
      %v4550 = vadd.f32 0.0, %v4549
      %v4551 = vpop.f32.mrb[0].mxu0
      %4552 = vmatprep.mubr.bf16.mxu0 0
      %4553 = vmatmul.mubr.bf16.gmra.mrb[0].mxu0 %v4399
      %v4554 = vpop.f32.mrb[0].mxu0
      %v4555 = vadd.f32 0.0, %v4554
      %v4556 = vpop.f32.mrb[0].mxu0
      %v4557 = vpop.f32.mrb[0].mxu0
      %v4558 = vadd.f32 0.0, %v4557
      %v4559 = vpop.f32.mrb[0].mxu0
      %4560 = vmatprep.mubr.bf16.mxu0 0
      %4561 = vmatmul.mubr.bf16.gmra.mrb[0].mxu0 %v4402
      %v4562 = vpop.f32.mrb[0].mxu0
      %v4563 = vadd.f32 0.0, %v4562
      %v4564 = vpop.f32.mrb[0].mxu0
      %v4565 = vpop.f32.mrb[0].mxu0
      %v4566 = vadd.f32 0.0, %v4565
      %v4567 = vpop.f32.mrb[0].mxu0
      %4568 = vmatprep.mubr.bf16.mxu0 0
      %4569 = vmatmul.mubr.bf16.gmra.mrb[0].mxu0 %v4405
      %v4570 = vpop.f32.mrb[0].mxu0
      %v4571 = vadd.f32 0.0, %v4570
      %v4572 = vpop.f32.mrb[0].mxu0
      %v4573 = vpop.f32.mrb[0].mxu0
      %v4574 = vadd.f32 0.0, %v4573
      %v4575 = vpop.f32.mrb[0].mxu0
      %4576 = vmatprep.mubr.bf16.mxu0 0
      %4577 = vmatmul.mubr.bf16.gmra.mrb[0].mxu0 %v4408
      %v4578 = vpop.f32.mrb[0].mxu0
      %v4579 = vadd.f32 0.0, %v4578
      %v4580 = vpop.f32.mrb[0].mxu0
      %v4581 = vpop.f32.mrb[0].mxu0
      %v4582 = vadd.f32 0.0, %v4581
      %v4583 = vpop.f32.mrb[0].mxu0
      %4584 = vmatprep.mubr.bf16.mxu0 0
      %4585 = vmatmul.mubr.bf16.gmra.mrb[0].mxu0 %v4411
      %v4586 = vpop.f32.mrb[0].mxu0
      %v4587 = vadd.f32 0.0, %v4586
      %v4588 = vpop.f32.mrb[0].mxu0
      %v4589 = vpop.f32.mrb[0].mxu0
      %v4590 = vadd.f32 0.0, %v4589
      %v4591 = vpop.f32.mrb[0].mxu0
      %4592 = vdwg.mxu0
      %v4593 = vadd.f32 %v4057, %v4451
      %v4594 = vadd.f32 %v4058, %v4454
      %v4595 = vadd.f32 %v4059, %v4459
      %v4596 = vadd.f32 %v4060, %v4462
      %v4597 = vadd.f32 %v4061, %v4467
      %v4598 = vadd.f32 %v4062, %v4470
      %v4599 = vadd.f32 %v4063, %v4475
      %v4600 = vadd.f32 %v4064, %v4478
      %v4601 = vadd.f32 %v4065, %v4483
      %v4602 = vadd.f32 %v4066, %v4486
      %v4603 = vadd.f32 %v4067, %v4491
      %v4604 = vadd.f32 %v4068, %v4494
      %v4605 = vadd.f32 %v4069, %v4499
      %v4606 = vadd.f32 %v4070, %v4502
      %v4607 = vadd.f32 %v4071, %v4507
      %v4608 = vadd.f32 %v4072, %v4510
      %v4609 = vadd.f32 %v4073, %v4515
      %v4610 = vadd.f32 %v4074, %v4518
      %v4611 = vadd.f32 %v4075, %v4523
      %v4612 = vadd.f32 %v4076, %v4526
      %v4613 = vadd.f32 %v4077, %v4531
      %v4614 = vadd.f32 %v4078, %v4534
      %v4615 = vadd.f32 %v4079, %v4539
      %v4616 = vadd.f32 %v4080, %v4542
      %v4617 = vadd.f32 %v4081, %v4547
      %v4618 = vadd.f32 %v4082, %v4550
      %v4619 = vadd.f32 %v4083, %v4555
      %v4620 = vadd.f32 %v4084, %v4558
      %v4621 = vadd.f32 %v4085, %v4563
      %v4622 = vadd.f32 %v4086, %v4566
      %v4623 = vadd.f32 %v4087, %v4571
      %v4624 = vadd.f32 %v4088, %v4574
      %v4625 = vadd.f32 %v4089, %v4579
      %v4626 = vadd.f32 %v4090, %v4582
      %v4627 = vadd.f32 %v4091, %v4587
      %v4628 = vadd.f32 %v4092, %v4590
      %4629 = vst.msk [vmem:[#allocation2] sm:$0xff] %vm199, %v4593
      %4630 = vst.msk [vmem:[#allocation2 + $0x8] sm:$0xff] %vm199, %v4594
      %4631 = vst.msk [vmem:[#allocation2 + $0x10] sm:$0xff] %vm199, %v4595
      %4632 = vst.msk [vmem:[#allocation2 + $0x18] sm:$0xff] %vm199, %v4596
      %4633 = vst.msk [vmem:[#allocation2 + $0x20] sm:$0xff] %vm199, %v4597
      %4634 = vst.msk [vmem:[#allocation2 + $0x28] sm:$0xff] %vm199, %v4598
      %4635 = vst.msk [vmem:[#allocation2 + $0x30] sm:$0xff] %vm199, %v4599
      %4636 = vst.msk [vmem:[#allocation2 + $0x38] sm:$0xff] %vm199, %v4600
      %4637 = vst.msk [vmem:[#allocation2 + $0x40] sm:$0xff] %vm199, %v4601
      %4638 = vst.msk [vmem:[#allocation2 + $0x48] sm:$0xff] %vm199, %v4602
      %4639 = vst.msk [vmem:[#allocation2 + $0x50] sm:$0xff] %vm199, %v4603
      %4640 = vst.msk [vmem:[#allocation2 + $0x58] sm:$0xff] %vm199, %v4604
      %4641 = vst.msk [vmem:[#allocation2 + $0x60] sm:$0xff] %vm199, %v4605
      %4642 = vst.msk [vmem:[#allocation2 + $0x68] sm:$0xff] %vm199, %v4606
      %4643 = vst.msk [vmem:[#allocation2 + $0x70] sm:$0xff] %vm199, %v4607
      %4644 = vst.msk [vmem:[#allocation2 + $0x78] sm:$0xff] %vm199, %v4608
      %4645 = vst.msk [vmem:[#allocation2 + $0x80] sm:$0xff] %vm199, %v4609
      %4646 = vst.msk [vmem:[#allocation2 + $0x88] sm:$0xff] %vm199, %v4610
      %4647 = vst.msk [vmem:[#allocation2 + $0x90] sm:$0xff] %vm199, %v4611
      %4648 = vst.msk [vmem:[#allocation2 + $0x98] sm:$0xff] %vm199, %v4612
      %4649 = vst.msk [vmem:[#allocation2 + $0xa0] sm:$0xff] %vm199, %v4613
      %4650 = vst.msk [vmem:[#allocation2 + $0xa8] sm:$0xff] %vm199, %v4614
      %4651 = vst.msk [vmem:[#allocation2 + $0xb0] sm:$0xff] %vm199, %v4615
      %4652 = vst.msk [vmem:[#allocation2 + $0xb8] sm:$0xff] %vm199, %v4616
      %4653 = vst.msk [vmem:[#allocation2 + $0xc0] sm:$0xff] %vm199, %v4617
      %4654 = vst.msk [vmem:[#allocation2 + $0xc8] sm:$0xff] %vm199, %v4618
      %4655 = vst.msk [vmem:[#allocation2 + $0xd0] sm:$0xff] %vm199, %v4619
      %4656 = vst.msk [vmem:[#allocation2 + $0xd8] sm:$0xff] %vm199, %v4620
      %4657 = vst.msk [vmem:[#allocation2 + $0xe0] sm:$0xff] %vm199, %v4621
      %4658 = vst.msk [vmem:[#allocation2 + $0xe8] sm:$0xff] %vm199, %v4622
      %4659 = vst.msk [vmem:[#allocation2 + $0xf0] sm:$0xff] %vm199, %v4623
      %4660 = vst.msk [vmem:[#allocation2 + $0xf8] sm:$0xff] %vm199, %v4624
      %4661 = vst.msk [vmem:[#allocation2 + $0x100] sm:$0xff] %vm199, %v4625
      %4662 = vst.msk [vmem:[#allocation2 + $0x108] sm:$0xff] %vm199, %v4626
      %4663 = vst.msk [vmem:[#allocation2 + $0x110] sm:$0xff] %vm199, %v4627
      %4664 = vst.msk [vmem:[#allocation2 + $0x118] sm:$0xff] %vm199, %v4628
      %v4665 = vld [vmem:[%s192 + $0x10] sm:$0x8]
      %v4666 = vld [vmem:[%s192 + $0x14] sm:$0xf]
      %v4667 = vld [vmem:[%s192 + $0x18] sm:$0xf]
      %v4668 = vld [vmem:[%s192 + $0x1c] sm:$0xf]
      %v4669 = vld [vmem:[%s192 + $0x20] sm:$0xf]
      %v4670 = vld [vmem:[%s192 + $0x24] sm:$0xf]
      %v4671 = vld [vmem:[%s192 + $0x28] sm:$0xf]
      %v4672 = vld [vmem:[%s192 + $0x2c] sm:$0xf]
      %v4673 = vld [vmem:[%s192 + $0x30] sm:$0xf]
      %v4674 = vld [vmem:[%s192 + $0x34] sm:$0xf]
      %v4675 = vld [vmem:[%s192 + $0x38] sm:$0xf]
      %v4676 = vld [vmem:[%s192 + $0x3c] sm:$0xf]
      %v4677 = vld [vmem:[%s192 + $0x40] sm:$0xf]
      %v4678 = vld [vmem:[%s192 + $0x44] sm:$0xf]
      %v4679 = vld [vmem:[%s192 + $0x48] sm:$0xf]
      %v4680 = vld [vmem:[%s192 + $0x4c] sm:$0xf]
      %v4681 = vld [vmem:[%s192 + $0x50] sm:$0xf]
      %v4682 = vld [vmem:[%s192 + $0x54] sm:$0xf]
      %v4683 = vld [vmem:[%s192 + $0x58] sm:$0xf]
      %v4684 = vld [vmem:[%s192 + $0x5c] sm:$0xf]
      %v4685 = vld [vmem:[%s192 + $0x60] sm:$0xf]
      %v4686 = vld [vmem:[%s192 + $0x64] sm:$0xf]
      %v4687 = vld [vmem:[%s192 + $0x68] sm:$0xf]
      %v4688 = vld [vmem:[%s192 + $0x6c] sm:$0xf]
      %v4689 = vld [vmem:[%s192 + $0x70] sm:$0xf]
      %v4690 = vld [vmem:[%s192 + $0x74] sm:$0xf]
      %v4691 = vld [vmem:[%s192 + $0x78] sm:$0xf]
      %v4692 = vld [vmem:[%s192 + $0x7c] sm:$0xf]
      %v4693 = vld [vmem:[%s192 + $0x80] sm:$0xf]
      %v4694 = vld [vmem:[%s192 + $0x84] sm:$0xf]
      %v4695 = vld [vmem:[%s192 + $0x88] sm:$0xf]
      %v4696 = vld [vmem:[%s192 + $0x8c] sm:$0xf]
      %v4697 = vld [vmem:[%s192 + $0x90] sm:$0xf]
      %v4698 = vld [vmem:[%s192 + $0x94] sm:$0xf]
      %v4699 = vld [vmem:[%s192 + $0x98] sm:$0xf]
      %v4700 = vld [vmem:[%s192 + $0x9c] sm:$0xf]
      %v4701 = vld [vmem:[%s192 + $0xa0] sm:$0x7]
      %v4702 = vld [vmem:[#allocation2] sm:$0xff]
      %v4703 = vld [vmem:[#allocation2 + $0x8] sm:$0xff]
      %v4704 = vld [vmem:[#allocation2 + $0x10] sm:$0xff]
      %v4705 = vld [vmem:[#allocation2 + $0x18] sm:$0xff]
      %v4706 = vld [vmem:[#allocation2 + $0x20] sm:$0xff]
      %v4707 = vld [vmem:[#allocation2 + $0x28] sm:$0xff]
      %v4708 = vld [vmem:[#allocation2 + $0x30] sm:$0xff]
      %v4709 = vld [vmem:[#allocation2 + $0x38] sm:$0xff]
      %v4710 = vld [vmem:[#allocation2 + $0x40] sm:$0xff]
      %v4711 = vld [vmem:[#allocation2 + $0x48] sm:$0xff]
      %v4712 = vld [vmem:[#allocation2 + $0x50] sm:$0xff]
      %v4713 = vld [vmem:[#allocation2 + $0x58] sm:$0xff]
      %v4714 = vld [vmem:[#allocation2 + $0x60] sm:$0xff]
      %v4715 = vld [vmem:[#allocation2 + $0x68] sm:$0xff]
      %v4716 = vld [vmem:[#allocation2 + $0x70] sm:$0xff]
      %v4717 = vld [vmem:[#allocation2 + $0x78] sm:$0xff]
      %v4718 = vld [vmem:[#allocation2 + $0x80] sm:$0xff]
      %v4719 = vld [vmem:[#allocation2 + $0x88] sm:$0xff]
      %v4720 = vld [vmem:[#allocation2 + $0x90] sm:$0xff]
      %v4721 = vld [vmem:[#allocation2 + $0x98] sm:$0xff]
      %v4722 = vld [vmem:[#allocation2 + $0xa0] sm:$0xff]
      %v4723 = vld [vmem:[#allocation2 + $0xa8] sm:$0xff]
      %v4724 = vld [vmem:[#allocation2 + $0xb0] sm:$0xff]
      %v4725 = vld [vmem:[#allocation2 + $0xb8] sm:$0xff]
      %v4726 = vld [vmem:[#allocation2 + $0xc0] sm:$0xff]
      %v4727 = vld [vmem:[#allocation2 + $0xc8] sm:$0xff]
      %v4728 = vld [vmem:[#allocation2 + $0xd0] sm:$0xff]
      %v4729 = vld [vmem:[#allocation2 + $0xd8] sm:$0xff]
      %v4730 = vld [vmem:[#allocation2 + $0xe0] sm:$0xff]
      %v4731 = vld [vmem:[#allocation2 + $0xe8] sm:$0xff]
      %v4732 = vld [vmem:[#allocation2 + $0xf0] sm:$0xff]
      %v4733 = vld [vmem:[#allocation2 + $0xf8] sm:$0xff]
      %v4734 = vld [vmem:[#allocation2 + $0x100] sm:$0xff]
      %v4735 = vld [vmem:[#allocation2 + $0x108] sm:$0xff]
      %v4736 = vld [vmem:[#allocation2 + $0x110] sm:$0xff]
      %v4737 = vld [vmem:[#allocation2 + $0x118] sm:$0xff]
      %s4738 = scalar_lea.vmem %s1, 32
      %v4739 = vld [vmem:[%s4738] sm:$0xf]
      %v4777 = vunpack.c.l.b16 %v4665
      %v4778 = vunpack.c.l.b16 %v4666
      %v4779 = vunpack.c.l.b16 %v4667
      %v4780 = vunpack.c.l.b16 %v4668
      %v4781 = vunpack.c.l.b16 %v4669
      %v4782 = vunpack.c.l.b16 %v4670
      %v4783 = vunpack.c.l.b16 %v4671
      %v4784 = vunpack.c.l.b16 %v4672
      %v4785 = vunpack.c.l.b16 %v4673
      %v4786 = vunpack.c.l.b16 %v4674
      %v4787 = vunpack.c.l.b16 %v4675
      %v4788 = vunpack.c.l.b16 %v4676
      %v4789 = vunpack.c.l.b16 %v4677
      %v4790 = vunpack.c.l.b16 %v4678
      %v4791 = vunpack.c.l.b16 %v4679
      %v4792 = vunpack.c.l.b16 %v4680
      %v4793 = vunpack.c.l.b16 %v4681
      %v4794 = vunpack.c.l.b16 %v4682
      %v4795 = vunpack.c.l.b16 %v4683
      %v4796 = vunpack.c.l.b16 %v4684
      %v4797 = vunpack.c.l.b16 %v4685
      %v4798 = vunpack.c.l.b16 %v4686
      %v4799 = vunpack.c.l.b16 %v4687
      %v4800 = vunpack.c.l.b16 %v4688
      %v4801 = vunpack.c.l.b16 %v4689
      %v4802 = vunpack.c.l.b16 %v4690
      %v4803 = vunpack.c.l.b16 %v4691
      %v4804 = vunpack.c.l.b16 %v4692
      %v4805 = vunpack.c.l.b16 %v4693
      %v4806 = vunpack.c.l.b16 %v4694
      %v4807 = vunpack.c.l.b16 %v4695
      %v4808 = vunpack.c.l.b16 %v4696
      %v4809 = vunpack.c.l.b16 %v4697
      %v4810 = vunpack.c.l.b16 %v4698
      %v4811 = vunpack.c.l.b16 %v4699
      %v4812 = vunpack.c.l.b16 %v4700
      %v4813 = vunpack.c.l.b16 %v4701
      %v4814 = vpack.c.b16 %v4778, %v4777
      %v4815 = vpack.c.b16 %v4780, %v4779
      %v4816 = vpack.c.b16 %v4782, %v4781
      %v4817 = vpack.c.b16 %v4784, %v4783
      %v4818 = vpack.c.b16 %v4786, %v4785
      %v4819 = vpack.c.b16 %v4788, %v4787
      %v4820 = vpack.c.b16 %v4790, %v4789
      %v4821 = vpack.c.b16 %v4792, %v4791
      %v4822 = vpack.c.b16 %v4794, %v4793
      %v4823 = vpack.c.b16 %v4796, %v4795
      %v4824 = vpack.c.b16 %v4798, %v4797
      %v4825 = vpack.c.b16 %v4800, %v4799
      %v4826 = vpack.c.b16 %v4802, %v4801
      %v4827 = vpack.c.b16 %v4804, %v4803
      %v4828 = vpack.c.b16 %v4806, %v4805
      %v4829 = vpack.c.b16 %v4808, %v4807
      %v4830 = vpack.c.b16 %v4810, %v4809
      %v4831 = vpack.c.b16 %v4812, %v4811
      %v4832 = vpack.c.b16 %v4813, %v4813
      %vm4833 = vcmask 1044480
      %v4834 = vrot.slane %v4814, 3
      %v4835 = vrot.slane %v4815, 3
      %v4836 = vsel %vm4833, %v4834, %v4835
      %v4837 = vrot.slane %v4816, 3
      %v4838 = vsel %vm4833, %v4835, %v4837
      %v4839 = vrot.slane %v4817, 3
      %v4840 = vsel %vm4833, %v4837, %v4839
      %v4841 = vrot.slane %v4818, 3
      %v4842 = vsel %vm4833, %v4839, %v4841
      %v4843 = vrot.slane %v4819, 3
      %v4844 = vsel %vm4833, %v4841, %v4843
      %v4845 = vrot.slane %v4820, 3
      %v4846 = vsel %vm4833, %v4843, %v4845
      %v4847 = vrot.slane %v4821, 3
      %v4848 = vsel %vm4833, %v4845, %v4847
      %v4849 = vrot.slane %v4822, 3
      %v4850 = vsel %vm4833, %v4847, %v4849
      %v4851 = vrot.slane %v4823, 3
      %v4852 = vsel %vm4833, %v4849, %v4851
      %v4853 = vrot.slane %v4824, 3
      %v4854 = vsel %vm4833, %v4851, %v4853
      %v4855 = vrot.slane %v4825, 3
      %v4856 = vsel %vm4833, %v4853, %v4855
      %v4857 = vrot.slane %v4826, 3
      %v4858 = vsel %vm4833, %v4855, %v4857
      %v4859 = vrot.slane %v4827, 3
      %v4860 = vsel %vm4833, %v4857, %v4859
      %v4861 = vrot.slane %v4828, 3
      %v4862 = vsel %vm4833, %v4859, %v4861
      %v4863 = vrot.slane %v4829, 3
      %v4864 = vsel %vm4833, %v4861, %v4863
      %v4865 = vrot.slane %v4830, 3
      %v4866 = vsel %vm4833, %v4863, %v4865
      %v4867 = vrot.slane %v4831, 3
      %v4868 = vsel %vm4833, %v4865, %v4867
      %v4869 = vrot.slane %v4832, 3
      %v4870 = vsel %vm4833, %v4867, %v4869
      %v4872 = vsel %vm199, %v4836, 0
      %v4875 = vsel %vm199, %v4838, 0
      %v4878 = vsel %vm199, %v4840, 0
      %v4881 = vsel %vm199, %v4842, 0
      %v4884 = vsel %vm199, %v4844, 0
      %v4887 = vsel %vm199, %v4846, 0
      %v4890 = vsel %vm199, %v4848, 0
      %v4893 = vsel %vm199, %v4850, 0
      %v4896 = vsel %vm199, %v4852, 0
      %v4899 = vsel %vm199, %v4854, 0
      %v4902 = vsel %vm199, %v4856, 0
      %v4905 = vsel %vm199, %v4858, 0
      %v4908 = vsel %vm199, %v4860, 0
      %v4911 = vsel %vm199, %v4862, 0
      %v4914 = vsel %vm199, %v4864, 0
      %v4917 = vsel %vm199, %v4866, 0
      %v4920 = vsel %vm199, %v4868, 0
      %v4923 = vsel %vm199, %v4870, 0
      %v4926 = vsel %vm453, %v4739, 0
      %4928 = vmatprep.subr.bf16.mxu0 0
      %4929 = vmatpush1.bf16.msra.mxu0 %v4926
      %4930 = vmatprep.subr.bf16.mxu0 0
      %4931 = vmatpush1.bf16.msra.mxu0 0
      %4932 = vmatprep.subr.bf16.mxu0 0
      %4933 = vmatpush1.bf16.msra.mxu0 0
      %4934 = vmatprep.subr.bf16.mxu0 0
      %4935 = vmatpush1.bf16.msra.mxu0 0
      %4936 = vmatprep.subr.bf16.mxu0 0
      %4937 = vmatpush1.bf16.msra.mxu0 0
      %4938 = vmatprep.subr.bf16.mxu0 0
      %4939 = vmatpush1.bf16.msra.mxu0 0
      %4940 = vmatprep.subr.bf16.mxu0 0
      %4941 = vmatpush1.bf16.msra.mxu0 0
      %4942 = vmatprep.subr.bf16.mxu0 0
      %4943 = vmatpush1.bf16.msra.mxu0 0
      %4944 = vmatprep.subr.bf16.mxu0 0
      %4945 = vmatpush1.bf16.msra.mxu0 0
      %4946 = vmatprep.subr.bf16.mxu0 0
      %4947 = vmatpush1.bf16.msra.mxu0 0
      %4948 = vmatprep.subr.bf16.mxu0 0
      %4949 = vmatpush1.bf16.msra.mxu0 0
      %4950 = vmatprep.subr.bf16.mxu0 0
      %4951 = vmatpush1.bf16.msra.mxu0 0
      %4952 = vmatprep.subr.bf16.mxu0 0
      %4953 = vmatpush1.bf16.msra.mxu0 0
      %4954 = vmatprep.subr.bf16.mxu0 0
      %4955 = vmatpush1.bf16.msra.mxu0 0
      %4956 = vmatprep.subr.bf16.mxu0 0
      %4957 = vmatpush1.bf16.msra.mxu0 0
      %4958 = vmatprep.subr.bf16.mxu0 0
      %4959 = vmatpush1.bf16.msra.mxu0 0
      %4960 = vmatprep.mubr.bf16.mxu0 0
      %4961 = vmatmul.mubr.bf16.gmra.mrb[0].mxu0 %v4872
      %v4962 = vpop.f32.mrb[0].mxu0
      %v4963 = vadd.f32 0.0, %v4962
      %v4964 = vpop.f32.mrb[0].mxu0
      %v4965 = vpop.f32.mrb[0].mxu0
      %v4966 = vadd.f32 0.0, %v4965
      %v4967 = vpop.f32.mrb[0].mxu0
      %4968 = vmatprep.mubr.bf16.mxu0 0
      %4969 = vmatmul.mubr.bf16.gmra.mrb[0].mxu0 %v4875
      %v4970 = vpop.f32.mrb[0].mxu0
      %v4971 = vadd.f32 0.0, %v4970
      %v4972 = vpop.f32.mrb[0].mxu0
      %v4973 = vpop.f32.mrb[0].mxu0
      %v4974 = vadd.f32 0.0, %v4973
      %v4975 = vpop.f32.mrb[0].mxu0
      %4976 = vmatprep.mubr.bf16.mxu0 0
      %4977 = vmatmul.mubr.bf16.gmra.mrb[0].mxu0 %v4878
      %v4978 = vpop.f32.mrb[0].mxu0
      %v4979 = vadd.f32 0.0, %v4978
      %v4980 = vpop.f32.mrb[0].mxu0
      %v4981 = vpop.f32.mrb[0].mxu0
      %v4982 = vadd.f32 0.0, %v4981
      %v4983 = vpop.f32.mrb[0].mxu0
      %4984 = vmatprep.mubr.bf16.mxu0 0
      %4985 = vmatmul.mubr.bf16.gmra.mrb[0].mxu0 %v4881
      %v4986 = vpop.f32.mrb[0].mxu0
      %v4987 = vadd.f32 0.0, %v4986
      %v4988 = vpop.f32.mrb[0].mxu0
      %v4989 = vpop.f32.mrb[0].mxu0
      %v4990 = vadd.f32 0.0, %v4989
      %v4991 = vpop.f32.mrb[0].mxu0
      %4992 = vmatprep.mubr.bf16.mxu0 0
      %4993 = vmatmul.mubr.bf16.gmra.mrb[0].mxu0 %v4884
      %v4994 = vpop.f32.mrb[0].mxu0
      %v4995 = vadd.f32 0.0, %v4994
      %v4996 = vpop.f32.mrb[0].mxu0
      %v4997 = vpop.f32.mrb[0].mxu0
      %v4998 = vadd.f32 0.0, %v4997
      %v4999 = vpop.f32.mrb[0].mxu0
      %5000 = vmatprep.mubr.bf16.mxu0 0
      %5001 = vmatmul.mubr.bf16.gmra.mrb[0].mxu0 %v4887
      %v5002 = vpop.f32.mrb[0].mxu0
      %v5003 = vadd.f32 0.0, %v5002
      %v5004 = vpop.f32.mrb[0].mxu0
      %v5005 = vpop.f32.mrb[0].mxu0
      %v5006 = vadd.f32 0.0, %v5005
      %v5007 = vpop.f32.mrb[0].mxu0
      %5008 = vmatprep.mubr.bf16.mxu0 0
      %5009 = vmatmul.mubr.bf16.gmra.mrb[0].mxu0 %v4890
      %v5010 = vpop.f32.mrb[0].mxu0
      %v5011 = vadd.f32 0.0, %v5010
      %v5012 = vpop.f32.mrb[0].mxu0
      %v5013 = vpop.f32.mrb[0].mxu0
      %v5014 = vadd.f32 0.0, %v5013
      %v5015 = vpop.f32.mrb[0].mxu0
      %5016 = vmatprep.mubr.bf16.mxu0 0
      %5017 = vmatmul.mubr.bf16.gmra.mrb[0].mxu0 %v4893
      %v5018 = vpop.f32.mrb[0].mxu0
      %v5019 = vadd.f32 0.0, %v5018
      %v5020 = vpop.f32.mrb[0].mxu0
      %v5021 = vpop.f32.mrb[0].mxu0
      %v5022 = vadd.f32 0.0, %v5021
      %v5023 = vpop.f32.mrb[0].mxu0
      %5024 = vmatprep.mubr.bf16.mxu0 0
      %5025 = vmatmul.mubr.bf16.gmra.mrb[0].mxu0 %v4896
      %v5026 = vpop.f32.mrb[0].mxu0
      %v5027 = vadd.f32 0.0, %v5026
      %v5028 = vpop.f32.mrb[0].mxu0
      %v5029 = vpop.f32.mrb[0].mxu0
      %v5030 = vadd.f32 0.0, %v5029
      %v5031 = vpop.f32.mrb[0].mxu0
      %5032 = vmatprep.mubr.bf16.mxu0 0
      %5033 = vmatmul.mubr.bf16.gmra.mrb[0].mxu0 %v4899
      %v5034 = vpop.f32.mrb[0].mxu0
      %v5035 = vadd.f32 0.0, %v5034
      %v5036 = vpop.f32.mrb[0].mxu0
      %v5037 = vpop.f32.mrb[0].mxu0
      %v5038 = vadd.f32 0.0, %v5037
      %v5039 = vpop.f32.mrb[0].mxu0
      %5040 = vmatprep.mubr.bf16.mxu0 0
      %5041 = vmatmul.mubr.bf16.gmra.mrb[0].mxu0 %v4902
      %v5042 = vpop.f32.mrb[0].mxu0
      %v5043 = vadd.f32 0.0, %v5042
      %v5044 = vpop.f32.mrb[0].mxu0
      %v5045 = vpop.f32.mrb[0].mxu0
      %v5046 = vadd.f32 0.0, %v5045
      %v5047 = vpop.f32.mrb[0].mxu0
      %5048 = vmatprep.mubr.bf16.mxu0 0
      %5049 = vmatmul.mubr.bf16.gmra.mrb[0].mxu0 %v4905
      %v5050 = vpop.f32.mrb[0].mxu0
      %v5051 = vadd.f32 0.0, %v5050
      %v5052 = vpop.f32.mrb[0].mxu0
      %v5053 = vpop.f32.mrb[0].mxu0
      %v5054 = vadd.f32 0.0, %v5053
      %v5055 = vpop.f32.mrb[0].mxu0
      %5056 = vmatprep.mubr.bf16.mxu0 0
      %5057 = vmatmul.mubr.bf16.gmra.mrb[0].mxu0 %v4908
      %v5058 = vpop.f32.mrb[0].mxu0
      %v5059 = vadd.f32 0.0, %v5058
      %v5060 = vpop.f32.mrb[0].mxu0
      %v5061 = vpop.f32.mrb[0].mxu0
      %v5062 = vadd.f32 0.0, %v5061
      %v5063 = vpop.f32.mrb[0].mxu0
      %5064 = vmatprep.mubr.bf16.mxu0 0
      %5065 = vmatmul.mubr.bf16.gmra.mrb[0].mxu0 %v4911
      %v5066 = vpop.f32.mrb[0].mxu0
      %v5067 = vadd.f32 0.0, %v5066
      %v5068 = vpop.f32.mrb[0].mxu0
      %v5069 = vpop.f32.mrb[0].mxu0
      %v5070 = vadd.f32 0.0, %v5069
      %v5071 = vpop.f32.mrb[0].mxu0
      %5072 = vmatprep.mubr.bf16.mxu0 0
      %5073 = vmatmul.mubr.bf16.gmra.mrb[0].mxu0 %v4914
      %v5074 = vpop.f32.mrb[0].mxu0
      %v5075 = vadd.f32 0.0, %v5074
      %v5076 = vpop.f32.mrb[0].mxu0
      %v5077 = vpop.f32.mrb[0].mxu0
      %v5078 = vadd.f32 0.0, %v5077
      %v5079 = vpop.f32.mrb[0].mxu0
      %5080 = vmatprep.mubr.bf16.mxu0 0
      %5081 = vmatmul.mubr.bf16.gmra.mrb[0].mxu0 %v4917
      %v5082 = vpop.f32.mrb[0].mxu0
      %v5083 = vadd.f32 0.0, %v5082
      %v5084 = vpop.f32.mrb[0].mxu0
      %v5085 = vpop.f32.mrb[0].mxu0
      %v5086 = vadd.f32 0.0, %v5085
      %v5087 = vpop.f32.mrb[0].mxu0
      %5088 = vmatprep.mubr.bf16.mxu0 0
      %5089 = vmatmul.mubr.bf16.gmra.mrb[0].mxu0 %v4920
      %v5090 = vpop.f32.mrb[0].mxu0
      %v5091 = vadd.f32 0.0, %v5090
      %v5092 = vpop.f32.mrb[0].mxu0
      %v5093 = vpop.f32.mrb[0].mxu0
      %v5094 = vadd.f32 0.0, %v5093
      %v5095 = vpop.f32.mrb[0].mxu0
      %5096 = vmatprep.mubr.bf16.mxu0 0
      %5097 = vmatmul.mubr.bf16.gmra.mrb[0].mxu0 %v4923
      %v5098 = vpop.f32.mrb[0].mxu0
      %v5099 = vadd.f32 0.0, %v5098
      %v5100 = vpop.f32.mrb[0].mxu0
      %v5101 = vpop.f32.mrb[0].mxu0
      %v5102 = vadd.f32 0.0, %v5101
      %v5103 = vpop.f32.mrb[0].mxu0
      %5104 = vdwg.mxu0
      %v5105 = vadd.f32 %v4702, %v4963
      %v5106 = vadd.f32 %v4703, %v4966
      %v5107 = vadd.f32 %v4704, %v4971
      %v5108 = vadd.f32 %v4705, %v4974
      %v5109 = vadd.f32 %v4706, %v4979
      %v5110 = vadd.f32 %v4707, %v4982
      %v5111 = vadd.f32 %v4708, %v4987
      %v5112 = vadd.f32 %v4709, %v4990
      %v5113 = vadd.f32 %v4710, %v4995
      %v5114 = vadd.f32 %v4711, %v4998
      %v5115 = vadd.f32 %v4712, %v5003
      %v5116 = vadd.f32 %v4713, %v5006
      %v5117 = vadd.f32 %v4714, %v5011
      %v5118 = vadd.f32 %v4715, %v5014
      %v5119 = vadd.f32 %v4716, %v5019
      %v5120 = vadd.f32 %v4717, %v5022
      %v5121 = vadd.f32 %v4718, %v5027
      %v5122 = vadd.f32 %v4719, %v5030
      %v5123 = vadd.f32 %v4720, %v5035
      %v5124 = vadd.f32 %v4721, %v5038
      %v5125 = vadd.f32 %v4722, %v5043
      %v5126 = vadd.f32 %v4723, %v5046
      %v5127 = vadd.f32 %v4724, %v5051
      %v5128 = vadd.f32 %v4725, %v5054
      %v5129 = vadd.f32 %v4726, %v5059
      %v5130 = vadd.f32 %v4727, %v5062
      %v5131 = vadd.f32 %v4728, %v5067
      %v5132 = vadd.f32 %v4729, %v5070
      %v5133 = vadd.f32 %v4730, %v5075
      %v5134 = vadd.f32 %v4731, %v5078
      %v5135 = vadd.f32 %v4732, %v5083
      %v5136 = vadd.f32 %v4733, %v5086
      %v5137 = vadd.f32 %v4734, %v5091
      %v5138 = vadd.f32 %v4735, %v5094
      %v5139 = vadd.f32 %v4736, %v5099
      %v5140 = vadd.f32 %v4737, %v5102
      %5141 = vst.msk [vmem:[#allocation2] sm:$0xff] %vm199, %v5105
      %5142 = vst.msk [vmem:[#allocation2 + $0x8] sm:$0xff] %vm199, %v5106
      %5143 = vst.msk [vmem:[#allocation2 + $0x10] sm:$0xff] %vm199, %v5107
      %5144 = vst.msk [vmem:[#allocation2 + $0x18] sm:$0xff] %vm199, %v5108
      %5145 = vst.msk [vmem:[#allocation2 + $0x20] sm:$0xff] %vm199, %v5109
      %5146 = vst.msk [vmem:[#allocation2 + $0x28] sm:$0xff] %vm199, %v5110
      %5147 = vst.msk [vmem:[#allocation2 + $0x30] sm:$0xff] %vm199, %v5111
      %5148 = vst.msk [vmem:[#allocation2 + $0x38] sm:$0xff] %vm199, %v5112
      %5149 = vst.msk [vmem:[#allocation2 + $0x40] sm:$0xff] %vm199, %v5113
      %5150 = vst.msk [vmem:[#allocation2 + $0x48] sm:$0xff] %vm199, %v5114
      %5151 = vst.msk [vmem:[#allocation2 + $0x50] sm:$0xff] %vm199, %v5115
      %5152 = vst.msk [vmem:[#allocation2 + $0x58] sm:$0xff] %vm199, %v5116
      %5153 = vst.msk [vmem:[#allocation2 + $0x60] sm:$0xff] %vm199, %v5117
      %5154 = vst.msk [vmem:[#allocation2 + $0x68] sm:$0xff] %vm199, %v5118
      %5155 = vst.msk [vmem:[#allocation2 + $0x70] sm:$0xff] %vm199, %v5119
      %5156 = vst.msk [vmem:[#allocation2 + $0x78] sm:$0xff] %vm199, %v5120
      %5157 = vst.msk [vmem:[#allocation2 + $0x80] sm:$0xff] %vm199, %v5121
      %5158 = vst.msk [vmem:[#allocation2 + $0x88] sm:$0xff] %vm199, %v5122
      %5159 = vst.msk [vmem:[#allocation2 + $0x90] sm:$0xff] %vm199, %v5123
      %5160 = vst.msk [vmem:[#allocation2 + $0x98] sm:$0xff] %vm199, %v5124
      %5161 = vst.msk [vmem:[#allocation2 + $0xa0] sm:$0xff] %vm199, %v5125
      %5162 = vst.msk [vmem:[#allocation2 + $0xa8] sm:$0xff] %vm199, %v5126
      %5163 = vst.msk [vmem:[#allocation2 + $0xb0] sm:$0xff] %vm199, %v5127
      %5164 = vst.msk [vmem:[#allocation2 + $0xb8] sm:$0xff] %vm199, %v5128
      %5165 = vst.msk [vmem:[#allocation2 + $0xc0] sm:$0xff] %vm199, %v5129
      %5166 = vst.msk [vmem:[#allocation2 + $0xc8] sm:$0xff] %vm199, %v5130
      %5167 = vst.msk [vmem:[#allocation2 + $0xd0] sm:$0xff] %vm199, %v5131
      %5168 = vst.msk [vmem:[#allocation2 + $0xd8] sm:$0xff] %vm199, %v5132
      %5169 = vst.msk [vmem:[#allocation2 + $0xe0] sm:$0xff] %vm199, %v5133
      %5170 = vst.msk [vmem:[#allocation2 + $0xe8] sm:$0xff] %vm199, %v5134
      %5171 = vst.msk [vmem:[#allocation2 + $0xf0] sm:$0xff] %vm199, %v5135
      %5172 = vst.msk [vmem:[#allocation2 + $0xf8] sm:$0xff] %vm199, %v5136
      %5173 = vst.msk [vmem:[#allocation2 + $0x100] sm:$0xff] %vm199, %v5137
      %5174 = vst.msk [vmem:[#allocation2 + $0x108] sm:$0xff] %vm199, %v5138
      %5175 = vst.msk [vmem:[#allocation2 + $0x110] sm:$0xff] %vm199, %v5139
      %5176 = vst.msk [vmem:[#allocation2 + $0x118] sm:$0xff] %vm199, %v5140
      %v5177 = vld [vmem:[#allocation2] sm:$0xff]
      %v5178 = vld [vmem:[#allocation2 + $0x8] sm:$0xff]
      %v5179 = vld [vmem:[#allocation2 + $0x10] sm:$0xff]
      %v5180 = vld [vmem:[#allocation2 + $0x18] sm:$0xff]
      %v5181 = vld [vmem:[#allocation2 + $0x20] sm:$0xff]
      %v5182 = vld [vmem:[#allocation2 + $0x28] sm:$0xff]
      %v5183 = vld [vmem:[#allocation2 + $0x30] sm:$0xff]
      %v5184 = vld [vmem:[#allocation2 + $0x38] sm:$0xff]
      %v5185 = vld [vmem:[#allocation2 + $0x40] sm:$0xff]
      %v5186 = vld [vmem:[#allocation2 + $0x48] sm:$0xff]
      %v5187 = vld [vmem:[#allocation2 + $0x50] sm:$0xff]
      %v5188 = vld [vmem:[#allocation2 + $0x58] sm:$0xff]
      %v5189 = vld [vmem:[#allocation2 + $0x60] sm:$0xff]
      %v5190 = vld [vmem:[#allocation2 + $0x68] sm:$0xff]
      %v5191 = vld [vmem:[#allocation2 + $0x70] sm:$0xff]
      %v5192 = vld [vmem:[#allocation2 + $0x78] sm:$0xff]
      %v5193 = vld [vmem:[#allocation2 + $0x80] sm:$0xff]
      %v5194 = vld [vmem:[#allocation2 + $0x88] sm:$0xff]
      %v5195 = vld [vmem:[#allocation2 + $0x90] sm:$0xff]
      %v5196 = vld [vmem:[#allocation2 + $0x98] sm:$0xff]
      %v5197 = vld [vmem:[#allocation2 + $0xa0] sm:$0xff]
      %v5198 = vld [vmem:[#allocation2 + $0xa8] sm:$0xff]
      %v5199 = vld [vmem:[#allocation2 + $0xb0] sm:$0xff]
      %v5200 = vld [vmem:[#allocation2 + $0xb8] sm:$0xff]
      %v5201 = vld [vmem:[#allocation2 + $0xc0] sm:$0xff]
      %v5202 = vld [vmem:[#allocation2 + $0xc8] sm:$0xff]
      %v5203 = vld [vmem:[#allocation2 + $0xd0] sm:$0xff]
      %v5204 = vld [vmem:[#allocation2 + $0xd8] sm:$0xff]
      %v5205 = vld [vmem:[#allocation2 + $0xe0] sm:$0xff]
      %v5206 = vld [vmem:[#allocation2 + $0xe8] sm:$0xff]
      %v5207 = vld [vmem:[#allocation2 + $0xf0] sm:$0xff]
      %v5208 = vld [vmem:[#allocation2 + $0xf8] sm:$0xff]
      %v5209 = vld [vmem:[#allocation2 + $0x100] sm:$0xff]
      %v5210 = vld [vmem:[#allocation2 + $0x108] sm:$0xff]
      %v5211 = vld [vmem:[#allocation2 + $0x110] sm:$0xff]
      %v5212 = vld [vmem:[#allocation2 + $0x118] sm:$0xff]
      %v5213 = vld [vmem:[%s2] sm:$0x1]
      %v5215 = vlaneseq
      %v5216 = vshrl.u32 %v5215, 7
      %v5217 = vsub.s32 0, %v5216
      %v5218 = vrot.slane %v5213, %v5217
      %v5220 = vmul.f32 %v5177, %v5218
      %v5221 = vmul.f32 %v5178, %v5218
      %v5222 = vmul.f32 %v5179, %v5218
      %v5223 = vmul.f32 %v5180, %v5218
      %v5224 = vmul.f32 %v5181, %v5218
      %v5225 = vmul.f32 %v5182, %v5218
      %v5226 = vmul.f32 %v5183, %v5218
      %v5227 = vmul.f32 %v5184, %v5218
      %v5228 = vmul.f32 %v5185, %v5218
      %v5229 = vmul.f32 %v5186, %v5218
      %v5230 = vmul.f32 %v5187, %v5218
      %v5231 = vmul.f32 %v5188, %v5218
      %v5232 = vmul.f32 %v5189, %v5218
      %v5233 = vmul.f32 %v5190, %v5218
      %v5234 = vmul.f32 %v5191, %v5218
      %v5235 = vmul.f32 %v5192, %v5218
      %v5236 = vmul.f32 %v5193, %v5218
      %v5237 = vmul.f32 %v5194, %v5218
      %v5238 = vmul.f32 %v5195, %v5218
      %v5239 = vmul.f32 %v5196, %v5218
      %v5240 = vmul.f32 %v5197, %v5218
      %v5241 = vmul.f32 %v5198, %v5218
      %v5242 = vmul.f32 %v5199, %v5218
      %v5243 = vmul.f32 %v5200, %v5218
      %v5244 = vmul.f32 %v5201, %v5218
      %v5245 = vmul.f32 %v5202, %v5218
      %v5246 = vmul.f32 %v5203, %v5218
      %v5247 = vmul.f32 %v5204, %v5218
      %v5248 = vmul.f32 %v5205, %v5218
      %v5249 = vmul.f32 %v5206, %v5218
      %v5250 = vmul.f32 %v5207, %v5218
      %v5251 = vmul.f32 %v5208, %v5218
      %v5252 = vmul.f32 %v5209, %v5218
      %v5253 = vmul.f32 %v5210, %v5218
      %v5254 = vmul.f32 %v5211, %v5218
      %v5255 = vmul.f32 %v5212, %v5218
      %v5256 = vld [vmem:[%s3] sm:$0x1]
      %v5258 = vlaneseq
      %v5259 = vshrl.u32 %v5258, 7
      %v5260 = vsub.s32 0, %v5259
      %v5261 = vrot.slane %v5256, %v5260
      %v5263 = vadd.f32 %v5220, %v5261
      %v5264 = vadd.f32 %v5221, %v5261
      %v5265 = vadd.f32 %v5222, %v5261
      %v5266 = vadd.f32 %v5223, %v5261
      %v5267 = vadd.f32 %v5224, %v5261
      %v5268 = vadd.f32 %v5225, %v5261
      %v5269 = vadd.f32 %v5226, %v5261
      %v5270 = vadd.f32 %v5227, %v5261
      %v5271 = vadd.f32 %v5228, %v5261
      %v5272 = vadd.f32 %v5229, %v5261
      %v5273 = vadd.f32 %v5230, %v5261
      %v5274 = vadd.f32 %v5231, %v5261
      %v5275 = vadd.f32 %v5232, %v5261
      %v5276 = vadd.f32 %v5233, %v5261
      %v5277 = vadd.f32 %v5234, %v5261
      %v5278 = vadd.f32 %v5235, %v5261
      %v5279 = vadd.f32 %v5236, %v5261
      %v5280 = vadd.f32 %v5237, %v5261
      %v5281 = vadd.f32 %v5238, %v5261
      %v5282 = vadd.f32 %v5239, %v5261
      %v5283 = vadd.f32 %v5240, %v5261
      %v5284 = vadd.f32 %v5241, %v5261
      %v5285 = vadd.f32 %v5242, %v5261
      %v5286 = vadd.f32 %v5243, %v5261
      %v5287 = vadd.f32 %v5244, %v5261
      %v5288 = vadd.f32 %v5245, %v5261
      %v5289 = vadd.f32 %v5246, %v5261
      %v5290 = vadd.f32 %v5247, %v5261
      %v5291 = vadd.f32 %v5248, %v5261
      %v5292 = vadd.f32 %v5249, %v5261
      %v5293 = vadd.f32 %v5250, %v5261
      %v5294 = vadd.f32 %v5251, %v5261
      %v5295 = vadd.f32 %v5252, %v5261
      %v5296 = vadd.f32 %v5253, %v5261
      %v5297 = vadd.f32 %v5254, %v5261
      %v5298 = vadd.f32 %v5255, %v5261
      %v5299 = vmax.f32 %v5263, 0.0
      %v5300 = vmax.f32 %v5264, 0.0
      %v5301 = vmax.f32 %v5265, 0.0
      %v5302 = vmax.f32 %v5266, 0.0
      %v5303 = vmax.f32 %v5267, 0.0
      %v5304 = vmax.f32 %v5268, 0.0
      %v5305 = vmax.f32 %v5269, 0.0
      %v5306 = vmax.f32 %v5270, 0.0
      %v5307 = vmax.f32 %v5271, 0.0
      %v5308 = vmax.f32 %v5272, 0.0
      %v5309 = vmax.f32 %v5273, 0.0
      %v5310 = vmax.f32 %v5274, 0.0
      %v5311 = vmax.f32 %v5275, 0.0
      %v5312 = vmax.f32 %v5276, 0.0
      %v5313 = vmax.f32 %v5277, 0.0
      %v5314 = vmax.f32 %v5278, 0.0
      %v5315 = vmax.f32 %v5279, 0.0
      %v5316 = vmax.f32 %v5280, 0.0
      %v5317 = vmax.f32 %v5281, 0.0
      %v5318 = vmax.f32 %v5282, 0.0
      %v5319 = vmax.f32 %v5283, 0.0
      %v5320 = vmax.f32 %v5284, 0.0
      %v5321 = vmax.f32 %v5285, 0.0
      %v5322 = vmax.f32 %v5286, 0.0
      %v5323 = vmax.f32 %v5287, 0.0
      %v5324 = vmax.f32 %v5288, 0.0
      %v5325 = vmax.f32 %v5289, 0.0
      %v5326 = vmax.f32 %v5290, 0.0
      %v5327 = vmax.f32 %v5291, 0.0
      %v5328 = vmax.f32 %v5292, 0.0
      %v5329 = vmax.f32 %v5293, 0.0
      %v5330 = vmax.f32 %v5294, 0.0
      %v5331 = vmax.f32 %v5295, 0.0
      %v5332 = vmax.f32 %v5296, 0.0
      %v5333 = vmax.f32 %v5297, 0.0
      %v5334 = vmax.f32 %v5298, 0.0
      %v5335 = vpack.c.bf16 %v5300, %v5299
      %v5336 = vpack.c.bf16 %v5302, %v5301
      %v5337 = vpack.c.bf16 %v5304, %v5303
      %v5338 = vpack.c.bf16 %v5306, %v5305
      %v5339 = vpack.c.bf16 %v5308, %v5307
      %v5340 = vpack.c.bf16 %v5310, %v5309
      %v5341 = vpack.c.bf16 %v5312, %v5311
      %v5342 = vpack.c.bf16 %v5314, %v5313
      %v5343 = vpack.c.bf16 %v5316, %v5315
      %v5344 = vpack.c.bf16 %v5318, %v5317
      %v5345 = vpack.c.bf16 %v5320, %v5319
      %v5346 = vpack.c.bf16 %v5322, %v5321
      %v5347 = vpack.c.bf16 %v5324, %v5323
      %v5348 = vpack.c.bf16 %v5326, %v5325
      %v5349 = vpack.c.bf16 %v5328, %v5327
      %v5350 = vpack.c.bf16 %v5330, %v5329
      %v5351 = vpack.c.bf16 %v5332, %v5331
      %v5352 = vpack.c.bf16 %v5334, %v5333
      %v5371 = vunpack.c.l.b16 %v5335
      %v5372 = vunpack.c.h.b16 %v5335
      %v5373 = vunpack.c.l.b16 %v5336
      %v5374 = vunpack.c.h.b16 %v5336
      %v5375 = vunpack.c.l.b16 %v5337
      %v5376 = vunpack.c.h.b16 %v5337
      %v5377 = vunpack.c.l.b16 %v5338
      %v5378 = vunpack.c.h.b16 %v5338
      %v5379 = vunpack.c.l.b16 %v5339
      %v5380 = vunpack.c.h.b16 %v5339
      %v5381 = vunpack.c.l.b16 %v5340
      %v5382 = vunpack.c.h.b16 %v5340
      %v5383 = vunpack.c.l.b16 %v5341
      %v5384 = vunpack.c.h.b16 %v5341
      %v5385 = vunpack.c.l.b16 %v5342
      %v5386 = vunpack.c.h.b16 %v5342
      %v5387 = vunpack.c.l.b16 %v5343
      %v5388 = vunpack.c.h.b16 %v5343
      %v5389 = vunpack.c.l.b16 %v5344
      %v5390 = vunpack.c.h.b16 %v5344
      %v5391 = vunpack.c.l.b16 %v5345
      %v5392 = vunpack.c.h.b16 %v5345
      %v5393 = vunpack.c.l.b16 %v5346
      %v5394 = vunpack.c.h.b16 %v5346
      %v5395 = vunpack.c.l.b16 %v5347
      %v5396 = vunpack.c.h.b16 %v5347
      %v5397 = vunpack.c.l.b16 %v5348
      %v5398 = vunpack.c.h.b16 %v5348
      %v5399 = vunpack.c.l.b16 %v5349
      %v5400 = vunpack.c.h.b16 %v5349
      %v5401 = vunpack.c.l.b16 %v5350
      %v5402 = vunpack.c.h.b16 %v5350
      %v5403 = vunpack.c.l.b16 %v5351
      %v5404 = vunpack.c.h.b16 %v5351
      %v5405 = vunpack.c.l.b16 %v5352
      %v5406 = vunpack.c.h.b16 %v5352
      %v5407 = vpack.c.b16 %v5371, %v5371
      %v5408 = vpack.c.b16 %v5372, %v5372
      %v5409 = vpack.c.b16 %v5373, %v5373
      %v5410 = vpack.c.b16 %v5374, %v5374
      %v5411 = vpack.c.b16 %v5375, %v5375
      %v5412 = vpack.c.b16 %v5376, %v5376
      %v5413 = vpack.c.b16 %v5377, %v5377
      %v5414 = vpack.c.b16 %v5378, %v5378
      %v5415 = vpack.c.b16 %v5379, %v5379
      %v5416 = vpack.c.b16 %v5380, %v5380
      %v5417 = vpack.c.b16 %v5381, %v5381
      %v5418 = vpack.c.b16 %v5382, %v5382
      %v5419 = vpack.c.b16 %v5383, %v5383
      %v5420 = vpack.c.b16 %v5384, %v5384
      %v5421 = vpack.c.b16 %v5385, %v5385
      %v5422 = vpack.c.b16 %v5386, %v5386
      %v5423 = vpack.c.b16 %v5387, %v5387
      %v5424 = vpack.c.b16 %v5388, %v5388
      %v5425 = vpack.c.b16 %v5389, %v5389
      %v5426 = vpack.c.b16 %v5390, %v5390
      %v5427 = vpack.c.b16 %v5391, %v5391
      %v5428 = vpack.c.b16 %v5392, %v5392
      %v5429 = vpack.c.b16 %v5393, %v5393
      %v5430 = vpack.c.b16 %v5394, %v5394
      %v5431 = vpack.c.b16 %v5395, %v5395
      %v5432 = vpack.c.b16 %v5396, %v5396
      %v5433 = vpack.c.b16 %v5397, %v5397
      %v5434 = vpack.c.b16 %v5398, %v5398
      %v5435 = vpack.c.b16 %v5399, %v5399
      %v5436 = vpack.c.b16 %v5400, %v5400
      %v5437 = vpack.c.b16 %v5401, %v5401
      %v5438 = vpack.c.b16 %v5402, %v5402
      %v5439 = vpack.c.b16 %v5403, %v5403
      %v5440 = vpack.c.b16 %v5404, %v5404
      %v5441 = vpack.c.b16 %v5405, %v5405
      %v5442 = vpack.c.b16 %v5406, %v5406
      %vm5479 = vcmask 60416
      %5480 = vst.msk [vmem:[%s197] sm:$0xf] %vm5479, %v5407
      %5481 = vst.msk [vmem:[%s197 + $0x4] sm:$0xf] %vm5479, %v5408
      %5482 = vst.msk [vmem:[%s197 + $0x8] sm:$0xf] %vm5479, %v5409
      %5483 = vst.msk [vmem:[%s197 + $0xc] sm:$0xf] %vm5479, %v5410
      %5484 = vst.msk [vmem:[%s197 + $0x10] sm:$0xf] %vm5479, %v5411
      %5485 = vst.msk [vmem:[%s197 + $0x14] sm:$0xf] %vm5479, %v5412
      %5486 = vst.msk [vmem:[%s197 + $0x18] sm:$0xf] %vm5479, %v5413
      %5487 = vst.msk [vmem:[%s197 + $0x1c] sm:$0xf] %vm5479, %v5414
      %5488 = vst.msk [vmem:[%s197 + $0x20] sm:$0xf] %vm5479, %v5415
      %5489 = vst.msk [vmem:[%s197 + $0x24] sm:$0xf] %vm5479, %v5416
      %5490 = vst.msk [vmem:[%s197 + $0x28] sm:$0xf] %vm5479, %v5417
      %5491 = vst.msk [vmem:[%s197 + $0x2c] sm:$0xf] %vm5479, %v5418
      %5492 = vst.msk [vmem:[%s197 + $0x30] sm:$0xf] %vm5479, %v5419
      %5493 = vst.msk [vmem:[%s197 + $0x34] sm:$0xf] %vm5479, %v5420
      %5494 = vst.msk [vmem:[%s197 + $0x38] sm:$0xf] %vm5479, %v5421
      %5495 = vst.msk [vmem:[%s197 + $0x3c] sm:$0xf] %vm5479, %v5422
      %5496 = vst.msk [vmem:[%s197 + $0x40] sm:$0xf] %vm5479, %v5423
      %5497 = vst.msk [vmem:[%s197 + $0x44] sm:$0xf] %vm5479, %v5424
      %5498 = vst.msk [vmem:[%s197 + $0x48] sm:$0xf] %vm5479, %v5425
      %5499 = vst.msk [vmem:[%s197 + $0x4c] sm:$0xf] %vm5479, %v5426
      %5500 = vst.msk [vmem:[%s197 + $0x50] sm:$0xf] %vm5479, %v5427
      %5501 = vst.msk [vmem:[%s197 + $0x54] sm:$0xf] %vm5479, %v5428
      %5502 = vst.msk [vmem:[%s197 + $0x58] sm:$0xf] %vm5479, %v5429
      %5503 = vst.msk [vmem:[%s197 + $0x5c] sm:$0xf] %vm5479, %v5430
      %5504 = vst.msk [vmem:[%s197 + $0x60] sm:$0xf] %vm5479, %v5431
      %5505 = vst.msk [vmem:[%s197 + $0x64] sm:$0xf] %vm5479, %v5432
      %5506 = vst.msk [vmem:[%s197 + $0x68] sm:$0xf] %vm5479, %v5433
      %5507 = vst.msk [vmem:[%s197 + $0x6c] sm:$0xf] %vm5479, %v5434
      %5508 = vst.msk [vmem:[%s197 + $0x70] sm:$0xf] %vm5479, %v5435
      %5509 = vst.msk [vmem:[%s197 + $0x74] sm:$0xf] %vm5479, %v5436
      %5510 = vst.msk [vmem:[%s197 + $0x78] sm:$0xf] %vm5479, %v5437
      %5511 = vst.msk [vmem:[%s197 + $0x7c] sm:$0xf] %vm5479, %v5438
      %5512 = vst.msk [vmem:[%s197 + $0x80] sm:$0xf] %vm5479, %v5439
      %5513 = vst.msk [vmem:[%s197 + $0x84] sm:$0xf] %vm5479, %v5440
      %5514 = vst.msk [vmem:[%s197 + $0x88] sm:$0xf] %vm5479, %v5441
      %5515 = vst.msk [vmem:[%s197 + $0x8c] sm:$0xf] %vm5479, %v5442
      %p5516 = scmp.lt.s32.totalorder %s15, 1
      %s5517 = scalar_select %p5516, %s15, 1
      %s5518 = smul.addr %s5517, 36
      %s5519 = smul.addr %s5518, 4
      %s5520 = scalar_lea.vmem %s4, %s5519
      // Predicated region
      $region37: #{_lambda_.8} parent=35 // pred_check
        %p5521 = pneg %p122
      $region38: #{_lambda_.8} parent=35 // pred_check_branch
        %5523 = sbr.rel (%p5521) target = $region40
      $region39: #{_lambda_.8} parent=35 // pred_region
        _
      $region40: #{_lambda_.8} parent=35 // pred_fallthru
        _
    $region36: #{_lambda_.8} parent=5 // pred_fallthru
      _
    %p5524 = scmp.le.s32.totalorder 2, %s10
    // Predicated region
    $region41: #{_lambda_.8} parent=5 // pred_check
      %p5525 = pneg %p5524
    $region42: #{_lambda_.8} parent=5 // pred_check_branch
      %5527 = sbr.rel (%p5525) target = $region44
    $region43: #{_lambda_.8} parent=5 // pred_region
      %s5528 = ssub.s32 %s10, 2
      // Predicated region
      $region45: #{_lambda_.8} parent=43 // pred_check
        %p5529 = pneg %p128
      $region46: #{_lambda_.8} parent=43 // pred_check_branch
        %5531 = sbr.rel (%p5529) target = $region48
      $region47: #{_lambda_.8} parent=43 // pred_region
        %p5532 = scmp.lt.s32.totalorder %s16, 1
        %s5533 = scalar_select %p5532, %s16, 1
        %s5534 = smul.addr %s5533, 36
        %s5535 = smul.addr %s5534, 4
        %s5536 = scalar_lea.vmem %s4, %s5535
      $region48: #{_lambda_.8} parent=43 // pred_fallthru
        _
    $region44: #{_lambda_.8} parent=5 // pred_fallthru
      _
  $region6: #{_lambda_.8} parent=0 // loop_footer
    %s14 = sadd.s32 1, %s10
  $region7: #{_lambda_.8} parent=0 // loop_footer_branch
    %9 = sbr.rel target = $region3
  $region8: #{_lambda_.8} parent=0 // loop_exit
    _

// kernel: _lambda_.13
$region0: #{_lambda_.13}
  #allocation0 [shape = 'u32[]', space=smem, size = 0x4, offset = 0x4, fixed_abs, tag = 'smem constant byte address 0x4 - core index']
  #allocation1 [shape = 'u32[144,128]{1,0:T(1,128)}', space=vmem, size = 0x12000, scoped, tag = 'internal scratch']
  #allocation2 [shape = 'f32[128,32]{1,0:T(8,128)}', space=vmem, size = 0x10000, scoped, tag = 'scratch operand']
  %s0 = inlined_call_operand.vmem [shape: bf16[128,8], index: 0, kind: input, shape index: {}]
  %s1 = inlined_call_operand.vmem [shape: bf16[8,32], index: 1, kind: input, shape index: {}]
  %s2 = inlined_call_operand.vmem [shape: f32[1,32], index: 2, kind: input, shape index: {}]
  %s3 = inlined_call_operand.vmem [shape: f32[1,32], index: 3, kind: input, shape index: {}]
  %s4 = inlined_call_operand.vmem [shape: bf16[128,32], index: 4, kind: input, shape index: {}]
  %s5 = inlined_call_operand.hbm [shape: f32[128,32], index: 5, kind: output, shape index: {}]
  %s6 = sld [smem:[#allocation0]]
  $region38: #{_lambda_.13} parent=0
    _
  %s8 = ssub.s32 1, %s6
  %s9 = scalar_select 0, %s8, %s6
  $region1: #{_lambda_.13} parent=0
    #allocation3 [shape = 'u8[65536]{0}', space=vmem, size = 0x10000, scoped, tag = 'output window, operand 0, single buffered']
    #allocation4 [shape = 's32[1]{0}', space=sflag, size = 0x4, scoped, tag = 'scoped memory for _lambda_.13']
    %10 = vsyncpa [#allocation4], 0
    // Predicated region
    $region2: #{_lambda_.13} parent=1 // pred_check
      _
    $region3: #{_lambda_.13} parent=1 // pred_check_branch
      %12 = sbr.rel (0) target = $region5
    $region4: #{_lambda_.13} parent=1 // pred_region
      _
    $region5: #{_lambda_.13} parent=1 // pred_fallthru
      _
    // Predicated region
    $region6: #{_lambda_.13} parent=1 // pred_check
      _
    $region7: #{_lambda_.13} parent=1 // pred_check_branch
      %14 = sbr.rel (0) target = $region9
    $region8: #{_lambda_.13} parent=1 // pred_region
      _
    $region9: #{_lambda_.13} parent=1 // pred_fallthru
      _
    // Predicated region
    $region10: #{_lambda_.13} parent=1 // pred_check
      _
    $region11: #{_lambda_.13} parent=1 // pred_check_branch
      %16 = sbr.rel (0) target = $region13
    $region12: #{_lambda_.13} parent=1 // pred_region
      _
    $region13: #{_lambda_.13} parent=1 // pred_fallthru
      _
    // Predicated region
    $region14: #{_lambda_.13} parent=1 // pred_check
      _
    $region15: #{_lambda_.13} parent=1 // pred_check_branch
      %18 = sbr.rel (0) target = $region17
    $region16: #{_lambda_.13} parent=1 // pred_region
      _
    $region17: #{_lambda_.13} parent=1 // pred_fallthru
      _
    // Predicated region
    $region18: #{_lambda_.13} parent=1 // pred_check
      _
    $region19: #{_lambda_.13} parent=1 // pred_check_branch
      %20 = sbr.rel (0) target = $region21
    $region20: #{_lambda_.13} parent=1 // pred_region
      _
    $region21: #{_lambda_.13} parent=1 // pred_fallthru
      _
    %p22 = scmp.eq.s32.totalorder 0, 0
    // Predicated region
    $region22: #{_lambda_.13} parent=1 // pred_check
      %p23 = pneg %p22
    $region23: #{_lambda_.13} parent=1 // pred_check_branch
      %25 = sbr.rel (%p23) target = $region25
    $region24: #{_lambda_.13} parent=1 // pred_region
      %vm26 = vcmask 261120
      %27 = vst.msk [vmem:[#allocation2] sm:$0xff] %vm26, 0.0
      %28 = vst.msk [vmem:[#allocation2 + $0x8] sm:$0xff] %vm26, 0.0
      %29 = vst.msk [vmem:[#allocation2 + $0x10] sm:$0xff] %vm26, 0.0
      %30 = vst.msk [vmem:[#allocation2 + $0x18] sm:$0xff] %vm26, 0.0
      %31 = vst.msk [vmem:[#allocation2 + $0x20] sm:$0xff] %vm26, 0.0
      %32 = vst.msk [vmem:[#allocation2 + $0x28] sm:$0xff] %vm26, 0.0
      %33 = vst.msk [vmem:[#allocation2 + $0x30] sm:$0xff] %vm26, 0.0
      %34 = vst.msk [vmem:[#allocation2 + $0x38] sm:$0xff] %vm26, 0.0
      %35 = vst.msk [vmem:[#allocation2 + $0x40] sm:$0xff] %vm26, 0.0
      %36 = vst.msk [vmem:[#allocation2 + $0x48] sm:$0xff] %vm26, 0.0
      %37 = vst.msk [vmem:[#allocation2 + $0x50] sm:$0xff] %vm26, 0.0
      %38 = vst.msk [vmem:[#allocation2 + $0x58] sm:$0xff] %vm26, 0.0
      %39 = vst.msk [vmem:[#allocation2 + $0x60] sm:$0xff] %vm26, 0.0
      %40 = vst.msk [vmem:[#allocation2 + $0x68] sm:$0xff] %vm26, 0.0
      %41 = vst.msk [vmem:[#allocation2 + $0x70] sm:$0xff] %vm26, 0.0
      %42 = vst.msk [vmem:[#allocation2 + $0x78] sm:$0xff] %vm26, 0.0
    $region25: #{_lambda_.13} parent=1 // pred_fallthru
      _
    %v43 = vld [vmem:[#allocation2] sm:$0xff]
    %v44 = vld [vmem:[#allocation2 + $0x8] sm:$0xff]
    %v45 = vld [vmem:[#allocation2 + $0x10] sm:$0xff]
    %v46 = vld [vmem:[#allocation2 + $0x18] sm:$0xff]
    %v47 = vld [vmem:[#allocation2 + $0x20] sm:$0xff]
    %v48 = vld [vmem:[#allocation2 + $0x28] sm:$0xff]
    %v49 = vld [vmem:[#allocation2 + $0x30] sm:$0xff]
    %v50 = vld [vmem:[#allocation2 + $0x38] sm:$0xff]
    %v51 = vld [vmem:[#allocation2 + $0x40] sm:$0xff]
    %v52 = vld [vmem:[#allocation2 + $0x48] sm:$0xff]
    %v53 = vld [vmem:[#allocation2 + $0x50] sm:$0xff]
    %v54 = vld [vmem:[#allocation2 + $0x58] sm:$0xff]
    %v55 = vld [vmem:[#allocation2 + $0x60] sm:$0xff]
    %v56 = vld [vmem:[#allocation2 + $0x68] sm:$0xff]
    %v57 = vld [vmem:[#allocation2 + $0x70] sm:$0xff]
    %v58 = vld [vmem:[#allocation2 + $0x78] sm:$0xff]
    %v59 = vld [vmem:[%s0] sm:$0xf]
    %v60 = vld [vmem:[%s0 + $0x4] sm:$0xf]
    %v61 = vld [vmem:[%s0 + $0x8] sm:$0xf]
    %v62 = vld [vmem:[%s0 + $0xc] sm:$0xf]
    %v63 = vld [vmem:[%s0 + $0x10] sm:$0xf]
    %v64 = vld [vmem:[%s0 + $0x14] sm:$0xf]
    %v65 = vld [vmem:[%s0 + $0x18] sm:$0xf]
    %v66 = vld [vmem:[%s0 + $0x1c] sm:$0xf]
    %v67 = vld [vmem:[%s0 + $0x20] sm:$0xf]
    %v68 = vld [vmem:[%s0 + $0x24] sm:$0xf]
    %v69 = vld [vmem:[%s0 + $0x28] sm:$0xf]
    %v70 = vld [vmem:[%s0 + $0x2c] sm:$0xf]
    %v71 = vld [vmem:[%s0 + $0x30] sm:$0xf]
    %v72 = vld [vmem:[%s0 + $0x34] sm:$0xf]
    %v73 = vld [vmem:[%s0 + $0x38] sm:$0xf]
    %v74 = vld [vmem:[%s0 + $0x3c] sm:$0xf]
    %v75 = vld [vmem:[%s1] sm:$0xf]
    %v92 = vunpack.c.l.b16 %v59
    %v93 = vunpack.c.l.b16 %v60
    %v94 = vunpack.c.l.b16 %v61
    %v95 = vunpack.c.l.b16 %v62
    %v96 = vunpack.c.l.b16 %v63
    %v97 = vunpack.c.l.b16 %v64
    %v98 = vunpack.c.l.b16 %v65
    %v99 = vunpack.c.l.b16 %v66
    %v100 = vunpack.c.l.b16 %v67
    %v101 = vunpack.c.l.b16 %v68
    %v102 = vunpack.c.l.b16 %v69
    %v103 = vunpack.c.l.b16 %v70
    %v104 = vunpack.c.l.b16 %v71
    %v105 = vunpack.c.l.b16 %v72
    %v106 = vunpack.c.l.b16 %v73
    %v107 = vunpack.c.l.b16 %v74
    %v108 = vpack.c.b16 %v93, %v92
    %v109 = vpack.c.b16 %v95, %v94
    %v110 = vpack.c.b16 %v97, %v96
    %v111 = vpack.c.b16 %v99, %v98
    %v112 = vpack.c.b16 %v101, %v100
    %v113 = vpack.c.b16 %v103, %v102
    %v114 = vpack.c.b16 %v105, %v104
    %v115 = vpack.c.b16 %v107, %v106
    %vm116 = vcmask 64512
    %v118 = vsel %vm116, %v108, 0
    %v121 = vsel %vm116, %v109, 0
    %v124 = vsel %vm116, %v110, 0
    %v127 = vsel %vm116, %v111, 0
    %v130 = vsel %vm116, %v112, 0
    %v133 = vsel %vm116, %v113, 0
    %v136 = vsel %vm116, %v114, 0
    %v139 = vsel %vm116, %v115, 0
    %vm141 = vcmask 1043456
    %v143 = vsel %vm141, %v75, 0
    %145 = vmatprep.subr.bf16.mxu0 0
    %146 = vmatpush1.bf16.msra.mxu0 %v143
    %147 = vmatprep.subr.bf16.mxu0 0
    %148 = vmatpush1.bf16.msra.mxu0 0
    %149 = vmatprep.subr.bf16.mxu0 0
    %150 = vmatpush1.bf16.msra.mxu0 0
    %151 = vmatprep.subr.bf16.mxu0 0
    %152 = vmatpush1.bf16.msra.mxu0 0
    %153 = vmatprep.subr.bf16.mxu0 0
    %154 = vmatpush1.bf16.msra.mxu0 0
    %155 = vmatprep.subr.bf16.mxu0 0
    %156 = vmatpush1.bf16.msra.mxu0 0
    %157 = vmatprep.subr.bf16.mxu0 0
    %158 = vmatpush1.bf16.msra.mxu0 0
    %159 = vmatprep.subr.bf16.mxu0 0
    %160 = vmatpush1.bf16.msra.mxu0 0
    %161 = vmatprep.subr.bf16.mxu0 0
    %162 = vmatpush1.bf16.msra.mxu0 0
    %163 = vmatprep.subr.bf16.mxu0 0
    %164 = vmatpush1.bf16.msra.mxu0 0
    %165 = vmatprep.subr.bf16.mxu0 0
    %166 = vmatpush1.bf16.msra.mxu0 0
    %167 = vmatprep.subr.bf16.mxu0 0
    %168 = vmatpush1.bf16.msra.mxu0 0
    %169 = vmatprep.subr.bf16.mxu0 0
    %170 = vmatpush1.bf16.msra.mxu0 0
    %171 = vmatprep.subr.bf16.mxu0 0
    %172 = vmatpush1.bf16.msra.mxu0 0
    %173 = vmatprep.subr.bf16.mxu0 0
    %174 = vmatpush1.bf16.msra.mxu0 0
    %175 = vmatprep.subr.bf16.mxu0 0
    %176 = vmatpush1.bf16.msra.mxu0 0
    %177 = vmatprep.mubr.bf16.mxu0 0
    %178 = vmatmul.mubr.bf16.gmra.mrb[0].mxu0 %v118
    %v179 = vpop.f32.mrb[0].mxu0
    %v180 = vadd.f32 0.0, %v179
    %v181 = vpop.f32.mrb[0].mxu0
    %v182 = vpop.f32.mrb[0].mxu0
    %v183 = vadd.f32 0.0, %v182
    %v184 = vpop.f32.mrb[0].mxu0
    %185 = vmatprep.mubr.bf16.mxu0 0
    %186 = vmatmul.mubr.bf16.gmra.mrb[0].mxu0 %v121
    %v187 = vpop.f32.mrb[0].mxu0
    %v188 = vadd.f32 0.0, %v187
    %v189 = vpop.f32.mrb[0].mxu0
    %v190 = vpop.f32.mrb[0].mxu0
    %v191 = vadd.f32 0.0, %v190
    %v192 = vpop.f32.mrb[0].mxu0
    %193 = vmatprep.mubr.bf16.mxu0 0
    %194 = vmatmul.mubr.bf16.gmra.mrb[0].mxu0 %v124
    %v195 = vpop.f32.mrb[0].mxu0
    %v196 = vadd.f32 0.0, %v195
    %v197 = vpop.f32.mrb[0].mxu0
    %v198 = vpop.f32.mrb[0].mxu0
    %v199 = vadd.f32 0.0, %v198
    %v200 = vpop.f32.mrb[0].mxu0
    %201 = vmatprep.mubr.bf16.mxu0 0
    %202 = vmatmul.mubr.bf16.gmra.mrb[0].mxu0 %v127
    %v203 = vpop.f32.mrb[0].mxu0
    %v204 = vadd.f32 0.0, %v203
    %v205 = vpop.f32.mrb[0].mxu0
    %v206 = vpop.f32.mrb[0].mxu0
    %v207 = vadd.f32 0.0, %v206
    %v208 = vpop.f32.mrb[0].mxu0
    %209 = vmatprep.mubr.bf16.mxu0 0
    %210 = vmatmul.mubr.bf16.gmra.mrb[0].mxu0 %v130
    %v211 = vpop.f32.mrb[0].mxu0
    %v212 = vadd.f32 0.0, %v211
    %v213 = vpop.f32.mrb[0].mxu0
    %v214 = vpop.f32.mrb[0].mxu0
    %v215 = vadd.f32 0.0, %v214
    %v216 = vpop.f32.mrb[0].mxu0
    %217 = vmatprep.mubr.bf16.mxu0 0
    %218 = vmatmul.mubr.bf16.gmra.mrb[0].mxu0 %v133
    %v219 = vpop.f32.mrb[0].mxu0
    %v220 = vadd.f32 0.0, %v219
    %v221 = vpop.f32.mrb[0].mxu0
    %v222 = vpop.f32.mrb[0].mxu0
    %v223 = vadd.f32 0.0, %v222
    %v224 = vpop.f32.mrb[0].mxu0
    %225 = vmatprep.mubr.bf16.mxu0 0
    %226 = vmatmul.mubr.bf16.gmra.mrb[0].mxu0 %v136
    %v227 = vpop.f32.mrb[0].mxu0
    %v228 = vadd.f32 0.0, %v227
    %v229 = vpop.f32.mrb[0].mxu0
    %v230 = vpop.f32.mrb[0].mxu0
    %v231 = vadd.f32 0.0, %v230
    %v232 = vpop.f32.mrb[0].mxu0
    %233 = vmatprep.mubr.bf16.mxu0 0
    %234 = vmatmul.mubr.bf16.gmra.mrb[0].mxu0 %v139
    %v235 = vpop.f32.mrb[0].mxu0
    %v236 = vadd.f32 0.0, %v235
    %v237 = vpop.f32.mrb[0].mxu0
    %v238 = vpop.f32.mrb[0].mxu0
    %v239 = vadd.f32 0.0, %v238
    %v240 = vpop.f32.mrb[0].mxu0
    %241 = vdwg.mxu0
    %v242 = vadd.f32 %v43, %v180
    %v243 = vadd.f32 %v44, %v183
    %v244 = vadd.f32 %v45, %v188
    %v245 = vadd.f32 %v46, %v191
    %v246 = vadd.f32 %v47, %v196
    %v247 = vadd.f32 %v48, %v199
    %v248 = vadd.f32 %v49, %v204
    %v249 = vadd.f32 %v50, %v207
    %v250 = vadd.f32 %v51, %v212
    %v251 = vadd.f32 %v52, %v215
    %v252 = vadd.f32 %v53, %v220
    %v253 = vadd.f32 %v54, %v223
    %v254 = vadd.f32 %v55, %v228
    %v255 = vadd.f32 %v56, %v231
    %v256 = vadd.f32 %v57, %v236
    %v257 = vadd.f32 %v58, %v239
    %vm258 = vcmask 261120
    %259 = vst.msk [vmem:[#allocation2] sm:$0xff] %vm258, %v242
    %260 = vst.msk [vmem:[#allocation2 + $0x8] sm:$0xff] %vm258, %v243
    %261 = vst.msk [vmem:[#allocation2 + $0x10] sm:$0xff] %vm258, %v244
    %262 = vst.msk [vmem:[#allocation2 + $0x18] sm:$0xff] %vm258, %v245
    %263 = vst.msk [vmem:[#allocation2 + $0x20] sm:$0xff] %vm258, %v246
    %264 = vst.msk [vmem:[#allocation2 + $0x28] sm:$0xff] %vm258, %v247
    %265 = vst.msk [vmem:[#allocation2 + $0x30] sm:$0xff] %vm258, %v248
    %266 = vst.msk [vmem:[#allocation2 + $0x38] sm:$0xff] %vm258, %v249
    %267 = vst.msk [vmem:[#allocation2 + $0x40] sm:$0xff] %vm258, %v250
    %268 = vst.msk [vmem:[#allocation2 + $0x48] sm:$0xff] %vm258, %v251
    %269 = vst.msk [vmem:[#allocation2 + $0x50] sm:$0xff] %vm258, %v252
    %270 = vst.msk [vmem:[#allocation2 + $0x58] sm:$0xff] %vm258, %v253
    %271 = vst.msk [vmem:[#allocation2 + $0x60] sm:$0xff] %vm258, %v254
    %272 = vst.msk [vmem:[#allocation2 + $0x68] sm:$0xff] %vm258, %v255
    %273 = vst.msk [vmem:[#allocation2 + $0x70] sm:$0xff] %vm258, %v256
    %274 = vst.msk [vmem:[#allocation2 + $0x78] sm:$0xff] %vm258, %v257
    // Predicated region
    $region26: #{_lambda_.13} parent=1 // pred_check
      %p275 = pneg %p22
    $region27: #{_lambda_.13} parent=1 // pred_check_branch
      %277 = sbr.rel (%p275) target = $region29
    $region28: #{_lambda_.13} parent=1 // pred_region
      %v278 = vld [vmem:[#allocation2] sm:$0xff]
      %v279 = vld [vmem:[#allocation2 + $0x8] sm:$0xff]
      %v280 = vld [vmem:[#allocation2 + $0x10] sm:$0xff]
      %v281 = vld [vmem:[#allocation2 + $0x18] sm:$0xff]
      %v282 = vld [vmem:[#allocation2 + $0x20] sm:$0xff]
      %v283 = vld [vmem:[#allocation2 + $0x28] sm:$0xff]
      %v284 = vld [vmem:[#allocation2 + $0x30] sm:$0xff]
      %v285 = vld [vmem:[#allocation2 + $0x38] sm:$0xff]
      %v286 = vld [vmem:[#allocation2 + $0x40] sm:$0xff]
      %v287 = vld [vmem:[#allocation2 + $0x48] sm:$0xff]
      %v288 = vld [vmem:[#allocation2 + $0x50] sm:$0xff]
      %v289 = vld [vmem:[#allocation2 + $0x58] sm:$0xff]
      %v290 = vld [vmem:[#allocation2 + $0x60] sm:$0xff]
      %v291 = vld [vmem:[#allocation2 + $0x68] sm:$0xff]
      %v292 = vld [vmem:[#allocation2 + $0x70] sm:$0xff]
      %v293 = vld [vmem:[#allocation2 + $0x78] sm:$0xff]
      %v294 = vld [vmem:[%s2] sm:$0x1]
      %v296 = vlaneseq
      %v297 = vshrl.u32 %v296, 7
      %v298 = vsub.s32 0, %v297
      %v299 = vrot.slane %v294, %v298
      %v301 = vmul.f32 %v278, %v299
      %v302 = vmul.f32 %v279, %v299
      %v303 = vmul.f32 %v280, %v299
      %v304 = vmul.f32 %v281, %v299
      %v305 = vmul.f32 %v282, %v299
      %v306 = vmul.f32 %v283, %v299
      %v307 = vmul.f32 %v284, %v299
      %v308 = vmul.f32 %v285, %v299
      %v309 = vmul.f32 %v286, %v299
      %v310 = vmul.f32 %v287, %v299
      %v311 = vmul.f32 %v288, %v299
      %v312 = vmul.f32 %v289, %v299
      %v313 = vmul.f32 %v290, %v299
      %v314 = vmul.f32 %v291, %v299
      %v315 = vmul.f32 %v292, %v299
      %v316 = vmul.f32 %v293, %v299
      %v317 = vld [vmem:[%s3] sm:$0x1]
      %v319 = vlaneseq
      %v320 = vshrl.u32 %v319, 7
      %v321 = vsub.s32 0, %v320
      %v322 = vrot.slane %v317, %v321
      %v324 = vadd.f32 %v301, %v322
      %v325 = vadd.f32 %v302, %v322
      %v326 = vadd.f32 %v303, %v322
      %v327 = vadd.f32 %v304, %v322
      %v328 = vadd.f32 %v305, %v322
      %v329 = vadd.f32 %v306, %v322
      %v330 = vadd.f32 %v307, %v322
      %v331 = vadd.f32 %v308, %v322
      %v332 = vadd.f32 %v309, %v322
      %v333 = vadd.f32 %v310, %v322
      %v334 = vadd.f32 %v311, %v322
      %v335 = vadd.f32 %v312, %v322
      %v336 = vadd.f32 %v313, %v322
      %v337 = vadd.f32 %v314, %v322
      %v338 = vadd.f32 %v315, %v322
      %v339 = vadd.f32 %v316, %v322
      %v340 = vld [vmem:[%s4] sm:$0xf]
      %v341 = vld [vmem:[%s4 + $0x4] sm:$0xf]
      %v342 = vld [vmem:[%s4 + $0x8] sm:$0xf]
      %v343 = vld [vmem:[%s4 + $0xc] sm:$0xf]
      %v344 = vld [vmem:[%s4 + $0x10] sm:$0xf]
      %v345 = vld [vmem:[%s4 + $0x14] sm:$0xf]
      %v346 = vld [vmem:[%s4 + $0x18] sm:$0xf]
      %v347 = vld [vmem:[%s4 + $0x1c] sm:$0xf]
      %v348 = vld [vmem:[%s4 + $0x20] sm:$0xf]
      %v349 = vld [vmem:[%s4 + $0x24] sm:$0xf]
      %v350 = vld [vmem:[%s4 + $0x28] sm:$0xf]
      %v351 = vld [vmem:[%s4 + $0x2c] sm:$0xf]
      %v352 = vld [vmem:[%s4 + $0x30] sm:$0xf]
      %v353 = vld [vmem:[%s4 + $0x34] sm:$0xf]
      %v354 = vld [vmem:[%s4 + $0x38] sm:$0xf]
      %v355 = vld [vmem:[%s4 + $0x3c] sm:$0xf]
      %v356 = vunpack.c.l.bf16 %v340
      %v357 = vunpack.c.l.bf16 %v341
      %v358 = vunpack.c.l.bf16 %v342
      %v359 = vunpack.c.l.bf16 %v343
      %v360 = vunpack.c.l.bf16 %v344
      %v361 = vunpack.c.l.bf16 %v345
      %v362 = vunpack.c.l.bf16 %v346
      %v363 = vunpack.c.l.bf16 %v347
      %v364 = vunpack.c.l.bf16 %v348
      %v365 = vunpack.c.l.bf16 %v349
      %v366 = vunpack.c.l.bf16 %v350
      %v367 = vunpack.c.l.bf16 %v351
      %v368 = vunpack.c.l.bf16 %v352
      %v369 = vunpack.c.l.bf16 %v353
      %v370 = vunpack.c.l.bf16 %v354
      %v371 = vunpack.c.l.bf16 %v355
      %v372 = vadd.f32 %v324, %v356
      %v373 = vadd.f32 %v325, %v357
      %v374 = vadd.f32 %v326, %v358
      %v375 = vadd.f32 %v327, %v359
      %v376 = vadd.f32 %v328, %v360
      %v377 = vadd.f32 %v329, %v361
      %v378 = vadd.f32 %v330, %v362
      %v379 = vadd.f32 %v331, %v363
      %v380 = vadd.f32 %v332, %v364
      %v381 = vadd.f32 %v333, %v365
      %v382 = vadd.f32 %v334, %v366
      %v383 = vadd.f32 %v335, %v367
      %v384 = vadd.f32 %v336, %v368
      %v385 = vadd.f32 %v337, %v369
      %v386 = vadd.f32 %v338, %v370
      %v387 = vadd.f32 %v339, %v371
      %v388 = vmax.f32 %v372, 0.0
      %v389 = vmax.f32 %v373, 0.0
      %v390 = vmax.f32 %v374, 0.0
      %v391 = vmax.f32 %v375, 0.0
      %v392 = vmax.f32 %v376, 0.0
      %v393 = vmax.f32 %v377, 0.0
      %v394 = vmax.f32 %v378, 0.0
      %v395 = vmax.f32 %v379, 0.0
      %v396 = vmax.f32 %v380, 0.0
      %v397 = vmax.f32 %v381, 0.0
      %v398 = vmax.f32 %v382, 0.0
      %v399 = vmax.f32 %v383, 0.0
      %v400 = vmax.f32 %v384, 0.0
      %v401 = vmax.f32 %v385, 0.0
      %v402 = vmax.f32 %v386, 0.0
      %v403 = vmax.f32 %v387, 0.0
      %404 = vst.msk [vmem:[#allocation3] sm:$0xff] %vm258, %v388
      %405 = vst.msk [vmem:[#allocation3 + $0x8] sm:$0xff] %vm258, %v389
      %406 = vst.msk [vmem:[#allocation3 + $0x10] sm:$0xff] %vm258, %v390
      %407 = vst.msk [vmem:[#allocation3 + $0x18] sm:$0xff] %vm258, %v391
      %408 = vst.msk [vmem:[#allocation3 + $0x20] sm:$0xff] %vm258, %v392
      %409 = vst.msk [vmem:[#allocation3 + $0x28] sm:$0xff] %vm258, %v393
      %410 = vst.msk [vmem:[#allocation3 + $0x30] sm:$0xff] %vm258, %v394
      %411 = vst.msk [vmem:[#allocation3 + $0x38] sm:$0xff] %vm258, %v395
      %412 = vst.msk [vmem:[#allocation3 + $0x40] sm:$0xff] %vm258, %v396
      %413 = vst.msk [vmem:[#allocation3 + $0x48] sm:$0xff] %vm258, %v397
      %414 = vst.msk [vmem:[#allocation3 + $0x50] sm:$0xff] %vm258, %v398
      %415 = vst.msk [vmem:[#allocation3 + $0x58] sm:$0xff] %vm258, %v399
      %416 = vst.msk [vmem:[#allocation3 + $0x60] sm:$0xff] %vm258, %v400
      %417 = vst.msk [vmem:[#allocation3 + $0x68] sm:$0xff] %vm258, %v401
      %418 = vst.msk [vmem:[#allocation3 + $0x70] sm:$0xff] %vm258, %v402
      %419 = vst.msk [vmem:[#allocation3 + $0x78] sm:$0xff] %vm258, %v403
    $region29: #{_lambda_.13} parent=1 // pred_fallthru
      _
    // Predicated region
    $region30: #{_lambda_.13} parent=1 // pred_check
      _
    $region31: #{_lambda_.13} parent=1 // pred_check_branch
      %421 = sbr.rel (0) target = $region33
    $region32: #{_lambda_.13} parent=1 // pred_region
      %s423 = ssub.s32 2048, 2048
      %424 = vsyncadd [#allocation4], %s423
      %s425 = sshll.u32 [#allocation3], 4
      %s426 = int_to_ptr.vmem [resolvable:$true] %s425
      %431 = dma.vmem_to_hbm [thread:$0]  %s426, 2048, %s5, [#allocation4], 128, 128, 8
    $region33: #{_lambda_.13} parent=1 // pred_fallthru
      _
    // Predicated region
    $region34: #{_lambda_.13} parent=1 // pred_check
      _
    $region35: #{_lambda_.13} parent=1 // pred_check_branch
      %433 = sbr.rel (0) target = $region37
    $region36: #{_lambda_.13} parent=1 // pred_region
      %434 = dma.done [#allocation4], 2048
    $region37: #{_lambda_.13} parent=1 // pred_fallthru
      _
    %435 = vsyncpa [#allocation4], 1

// kernel: _lambda_.12
$region0: #{_lambda_.12}
  #allocation0 [shape = 'u32[]', space=smem, size = 0x4, offset = 0x4, fixed_abs, tag = 'smem constant byte address 0x4 - core index']
  #allocation1 [shape = 'u32[144,128]{1,0:T(1,128)}', space=vmem, size = 0x12000, scoped, tag = 'internal scratch']
  #allocation2 [shape = 'f32[80,8]{1,0:T(8,128)}', space=vmem, size = 0xa000, scoped, tag = 'scratch operand']
  %s0 = inlined_call_operand.vmem [shape: bf16[2,110,8], index: 0, kind: input, shape index: {}]
  %s1 = inlined_call_operand.vmem [shape: bf16[9,8,8], index: 1, kind: input, shape index: {}]
  %s2 = inlined_call_operand.vmem [shape: f32[1,8], index: 2, kind: input, shape index: {}]
  %s3 = inlined_call_operand.vmem [shape: f32[1,8], index: 3, kind: input, shape index: {}]
  %s4 = inlined_call_operand.vmem [shape: bf16[2,80,8], index: 4, kind: output, shape index: {}]
  %s5 = sld [smem:[#allocation0]]
  $region49: #{_lambda_.12} parent=0
    _
  %s7 = ssub.s32 1, %s5
  %s8 = scalar_select 0, %s7, %s5
  loop: start=0, step=1, limit=4
  $region2: #{_lambda_.12} parent=0 // loop_pre_header
    _
  $region3: #{_lambda_.12} parent=0 // loop_header
    %s10 = sphi 0, %s14
    %p11 = scmp.ge.s32.totalorder %s10, 4
    %s20 = sphi 0, %s22
    %s23 = sphi 0, %s20
    %s24 = sphi 0, %s23
    %s40 = sphi 0, %s24
    %s44 = sphi 0, %s44
    %s46 = sphi 0, %s44
    %s47 = sphi 0, %s46
    %s61 = sphi 0, %s47
    %s65 = sphi 0, %s65
    %s67 = sphi 0, %s65
    %s68 = sphi 0, %s67
    %s82 = sphi 0, %s68
    %s86 = sphi 0, %s86
    %s88 = sphi 0, %s86
    %s89 = sphi 0, %s88
    %s103 = sphi 0, %s89
    %s109 = sphi 0, %s111
    %s112 = sphi 0, %s109
    %s113 = sphi 0, %s112
    %s129 = sphi 0, %s113
  $region4: #{_lambda_.12} parent=0 // loop_header_branch
    %13 = sbr.rel (%p11) target = $region8
  $region5: #{_lambda_.12} parent=0 // loop_body
    %s15 = ssub.s32 %s10, 1
    %s16 = ssub.s32 %s10, 2
    %s17 = sadd.s32 %s10, 1
    %s18 = ssub.s32 %s10, %s17
    %p19 = scmp.eq.s32.totalorder %s18, 0
    %s21 = sadd.s32 %s20, 1
    %s22 = scalar_select %p19, %s20, %s21
    %p25 = pneg %p19
    %p26 = scmp.eq.s32.totalorder %s10, 1
    %p27 = por %p25, %p26
    %p28 = scmp.ne.s32.totalorder %s20, %s23
    %p29 = scmp.eq.s32.totalorder %s10, 0
    %p30 = por %p28, %p29
    %p31 = scmp.ne.s32.totalorder %s20, %s23
    %p32 = scmp.eq.s32.totalorder %s15, 1
    %p33 = por %p31, %p32
    %p34 = scmp.ne.s32.totalorder %s23, %s24
    %p35 = scmp.eq.s32.totalorder %s15, 0
    %p36 = por %p34, %p35
    %p37 = scmp.ne.s32.totalorder %s23, %s24
    %p38 = scmp.eq.s32.totalorder %s16, 1
    %p39 = por %p37, %p38
    %p41 = scmp.ne.s32.totalorder %s24, %s40
    %p42 = scmp.eq.s32.totalorder %s16, 0
    %p43 = por %p41, %p42
    %s45 = sadd.s32 %s44, 1
    %p48 = scmp.eq.s32.totalorder %s10, 1
    %p49 = scmp.ne.s32.totalorder %s44, %s46
    %p50 = scmp.eq.s32.totalorder %s10, 0
    %p51 = por %p49, %p50
    %p52 = scmp.ne.s32.totalorder %s44, %s46
    %p53 = scmp.eq.s32.totalorder %s15, 1
    %p54 = por %p52, %p53
    %p55 = scmp.ne.s32.totalorder %s46, %s47
    %p56 = scmp.eq.s32.totalorder %s15, 0
    %p57 = por %p55, %p56
    %p58 = scmp.ne.s32.totalorder %s46, %s47
    %p59 = scmp.eq.s32.totalorder %s16, 1
    %p60 = por %p58, %p59
    %p62 = scmp.ne.s32.totalorder %s47, %s61
    %p63 = scmp.eq.s32.totalorder %s16, 0
    %p64 = por %p62, %p63
    %s66 = sadd.s32 %s65, 1
    %p69 = scmp.eq.s32.totalorder %s10, 1
    %p70 = scmp.ne.s32.totalorder %s65, %s67
    %p71 = scmp.eq.s32.totalorder %s10, 0
    %p72 = por %p70, %p71
    %p73 = scmp.ne.s32.totalorder %s65, %s67
    %p74 = scmp.eq.s32.totalorder %s15, 1
    %p75 = por %p73, %p74
    %p76 = scmp.ne.s32.totalorder %s67, %s68
    %p77 = scmp.eq.s32.totalorder %s15, 0
    %p78 = por %p76, %p77
    %p79 = scmp.ne.s32.totalorder %s67, %s68
    %p80 = scmp.eq.s32.totalorder %s16, 1
    %p81 = por %p79, %p80
    %p83 = scmp.ne.s32.totalorder %s68, %s82
    %p84 = scmp.eq.s32.totalorder %s16, 0
    %p85 = por %p83, %p84
    %s87 = sadd.s32 %s86, 1
    %p90 = scmp.eq.s32.totalorder %s10, 1
    %p91 = scmp.ne.s32.totalorder %s86, %s88
    %p92 = scmp.eq.s32.totalorder %s10, 0
    %p93 = por %p91, %p92
    %p94 = scmp.ne.s32.totalorder %s86, %s88
    %p95 = scmp.eq.s32.totalorder %s15, 1
    %p96 = por %p94, %p95
    %p97 = scmp.ne.s32.totalorder %s88, %s89
    %p98 = scmp.eq.s32.totalorder %s15, 0
    %p99 = por %p97, %p98
    %p100 = scmp.ne.s32.totalorder %s88, %s89
    %p101 = scmp.eq.s32.totalorder %s16, 1
    %p102 = por %p100, %p101
    %p104 = scmp.ne.s32.totalorder %s89, %s103
    %p105 = scmp.eq.s32.totalorder %s16, 0
    %p106 = por %p104, %p105
    %s107 = ssub.s32 %s10, %s17
    %p108 = scmp.eq.s32.totalorder %s107, 0
    %s110 = sadd.s32 %s109, 1
    %s111 = scalar_select %p108, %s109, %s110
    %p114 = pneg %p108
    %p115 = scmp.eq.s32.totalorder %s10, 1
    %p116 = por %p114, %p115
    %p117 = scmp.ne.s32.totalorder %s109, %s112
    %p118 = scmp.eq.s32.totalorder %s10, 0
    %p119 = por %p117, %p118
    %p120 = scmp.ne.s32.totalorder %s109, %s112
    %p121 = scmp.eq.s32.totalorder %s15, 1
    %p122 = por %p120, %p121
    %p123 = scmp.ne.s32.totalorder %s112, %s113
    %p124 = scmp.eq.s32.totalorder %s15, 0
    %p125 = por %p123, %p124
    %p126 = scmp.ne.s32.totalorder %s112, %s113
    %p127 = scmp.eq.s32.totalorder %s16, 1
    %p128 = por %p126, %p127
    %p130 = scmp.ne.s32.totalorder %s113, %s129
    %p131 = scmp.eq.s32.totalorder %s16, 0
    %p132 = por %p130, %p131
    %p133 = scmp.le.s32.totalorder 1, %s10
    %p134 = scmp.lt.s32.totalorder %s10, 3
    %p135 = pnand %p133, %p134
    %p136 = pneg %p135
    // Predicated region
    $region9: #{_lambda_.12} parent=5 // pred_check
      _
    $region10: #{_lambda_.12} parent=5 // pred_check_branch
      %138 = sbr.rel (%p135) target = $region12
    $region11: #{_lambda_.12} parent=5 // pred_region
      %s139 = ssub.s32 %s10, 1
      // Predicated region
      $region13: #{_lambda_.12} parent=11 // pred_check
        %p140 = pneg %p57
      $region14: #{_lambda_.12} parent=11 // pred_check_branch
        %142 = sbr.rel (%p140) target = $region16
      $region15: #{_lambda_.12} parent=11 // pred_region
        _
      $region16: #{_lambda_.12} parent=11 // pred_fallthru
        _
      // Predicated region
      $region17: #{_lambda_.12} parent=11 // pred_check
        %p143 = pneg %p78
      $region18: #{_lambda_.12} parent=11 // pred_check_branch
        %145 = sbr.rel (%p143) target = $region20
      $region19: #{_lambda_.12} parent=11 // pred_region
        _
      $region20: #{_lambda_.12} parent=11 // pred_fallthru
        _
      // Predicated region
      $region21: #{_lambda_.12} parent=11 // pred_check
        %p146 = pneg %p99
      $region22: #{_lambda_.12} parent=11 // pred_check_branch
        %148 = sbr.rel (%p146) target = $region24
      $region23: #{_lambda_.12} parent=11 // pred_region
        _
      $region24: #{_lambda_.12} parent=11 // pred_fallthru
        _
    $region12: #{_lambda_.12} parent=5 // pred_fallthru
      _
    %p149 = scmp.lt.s32.totalorder %s10, 2
    // Predicated region
    $region25: #{_lambda_.12} parent=5 // pred_check
      %p150 = pneg %p149
    $region26: #{_lambda_.12} parent=5 // pred_check_branch
      %152 = sbr.rel (%p150) target = $region28
    $region27: #{_lambda_.12} parent=5 // pred_region
      // Predicated region
      $region29: #{_lambda_.12} parent=27 // pred_check
        %p153 = pneg %p30
      $region30: #{_lambda_.12} parent=27 // pred_check_branch
        %155 = sbr.rel (%p153) target = $region32
      $region31: #{_lambda_.12} parent=27 // pred_region
        %p156 = scmp.lt.s32.totalorder %s10, 1
        %s157 = scalar_select %p156, %s10, 1
        %s158 = smul.addr %s157, 14
        %s159 = smul.addr %s158, 4
        %s160 = scalar_lea.vmem %s0, %s159
      $region32: #{_lambda_.12} parent=27 // pred_fallthru
        _
    $region28: #{_lambda_.12} parent=5 // pred_fallthru
      _
    %p161 = scmp.le.s32.totalorder 1, %s10
    %p162 = scmp.lt.s32.totalorder %s10, 3
    %p163 = pnand %p161, %p162
    %p164 = pneg %p163
    // Predicated region
    $region33: #{_lambda_.12} parent=5 // pred_check
      _
    $region34: #{_lambda_.12} parent=5 // pred_check_branch
      %166 = sbr.rel (%p163) target = $region36
    $region35: #{_lambda_.12} parent=5 // pred_region
      %s167 = ssub.s32 %s10, 1
      %p168 = scmp.lt.s32.totalorder %s15, 1
      %s169 = scalar_select %p168, %s15, 1
      %s170 = smul.addr %s169, 14
      %s171 = smul.addr %s170, 4
      %s172 = scalar_lea.vmem %s0, %s171
      %p173 = pneg %p36
      %p174 = pneg %p33
      %p175 = pneg %p57
      %p176 = pneg %p54
      %p177 = pneg %p78
      %p178 = pneg %p75
      %p179 = pneg %p99
      %p180 = pneg %p96
      %p181 = pneg %p125
      %p182 = pneg %p122
      %p183 = scmp.lt.s32.totalorder %s15, 1
      %s184 = scalar_select %p183, %s15, 1
      %s185 = smul.addr %s184, 10
      %s186 = smul.addr %s185, 4
      %s187 = scalar_lea.vmem %s4, %s186
      %p188 = scmp.lt.s32.totalorder %s15, 1
      %s189 = scalar_select %p188, %s15, 1
      %s190 = smul.addr %s189, 14
      %s191 = smul.addr %s190, 4
      %s192 = scalar_lea.vmem %s0, %s191
      %p193 = scmp.lt.s32.totalorder %s15, 1
      %s194 = scalar_select %p193, %s15, 1
      %s195 = smul.addr %s194, 10
      %s196 = smul.addr %s195, 4
      %s197 = scalar_lea.vmem %s4, %s196
      %vm199 = vcmask 64512
      %200 = vst.msk [vmem:[#allocation2] sm:$0xff] %vm199, 0.0
      %201 = vst.msk [vmem:[#allocation2 + $0x8] sm:$0xff] %vm199, 0.0
      %202 = vst.msk [vmem:[#allocation2 + $0x10] sm:$0xff] %vm199, 0.0
      %203 = vst.msk [vmem:[#allocation2 + $0x18] sm:$0xff] %vm199, 0.0
      %204 = vst.msk [vmem:[#allocation2 + $0x20] sm:$0xff] %vm199, 0.0
      %205 = vst.msk [vmem:[#allocation2 + $0x28] sm:$0xff] %vm199, 0.0
      %206 = vst.msk [vmem:[#allocation2 + $0x30] sm:$0xff] %vm199, 0.0
      %207 = vst.msk [vmem:[#allocation2 + $0x38] sm:$0xff] %vm199, 0.0
      %208 = vst.msk [vmem:[#allocation2 + $0x40] sm:$0xff] %vm199, 0.0
      %209 = vst.msk [vmem:[#allocation2 + $0x48] sm:$0xff] %vm199, 0.0
      %v210 = vld [vmem:[%s192] sm:$0xf]
      %v211 = vld [vmem:[%s192 + $0x4] sm:$0xf]
      %v212 = vld [vmem:[%s192 + $0x8] sm:$0xf]
      %v213 = vld [vmem:[%s192 + $0xc] sm:$0xf]
      %v214 = vld [vmem:[%s192 + $0x10] sm:$0xf]
      %v215 = vld [vmem:[%s192 + $0x14] sm:$0xf]
      %v216 = vld [vmem:[%s192 + $0x18] sm:$0xf]
      %v217 = vld [vmem:[%s192 + $0x1c] sm:$0xf]
      %v218 = vld [vmem:[%s192 + $0x20] sm:$0xf]
      %v219 = vld [vmem:[%s192 + $0x24] sm:$0xf]
      %v220 = vld [vmem:[#allocation2] sm:$0xff]
      %v221 = vld [vmem:[#allocation2 + $0x8] sm:$0xff]
      %v222 = vld [vmem:[#allocation2 + $0x10] sm:$0xff]
      %v223 = vld [vmem:[#allocation2 + $0x18] sm:$0xff]
      %v224 = vld [vmem:[#allocation2 + $0x20] sm:$0xff]
      %v225 = vld [vmem:[#allocation2 + $0x28] sm:$0xff]
      %v226 = vld [vmem:[#allocation2 + $0x30] sm:$0xff]
      %v227 = vld [vmem:[#allocation2 + $0x38] sm:$0xff]
      %v228 = vld [vmem:[#allocation2 + $0x40] sm:$0xff]
      %v229 = vld [vmem:[#allocation2 + $0x48] sm:$0xff]
      %v230 = vld [vmem:[%s1] sm:$0xf]
      %v241 = vunpack.c.l.b16 %v210
      %v242 = vunpack.c.l.b16 %v211
      %v243 = vunpack.c.l.b16 %v212
      %v244 = vunpack.c.l.b16 %v213
      %v245 = vunpack.c.l.b16 %v214
      %v246 = vunpack.c.l.b16 %v215
      %v247 = vunpack.c.l.b16 %v216
      %v248 = vunpack.c.l.b16 %v217
      %v249 = vunpack.c.l.b16 %v218
      %v250 = vunpack.c.l.b16 %v219
      %v251 = vpack.c.b16 %v242, %v241
      %v252 = vpack.c.b16 %v244, %v243
      %v253 = vpack.c.b16 %v246, %v245
      %v254 = vpack.c.b16 %v248, %v247
      %v255 = vpack.c.b16 %v250, %v249
      %v257 = vsel %vm199, %v251, 0
      %v260 = vsel %vm199, %v252, 0
      %v263 = vsel %vm199, %v253, 0
      %v266 = vsel %vm199, %v254, 0
      %v269 = vsel %vm199, %v255, 0
      %vm271 = vcmask 1043456
      %v273 = vsel %vm271, %v230, 0
      %275 = vmatprep.subr.bf16.mxu0 0
      %276 = vmatpush1.bf16.msra.mxu0 %v273
      %277 = vmatprep.subr.bf16.mxu0 0
      %278 = vmatpush1.bf16.msra.mxu0 0
      %279 = vmatprep.subr.bf16.mxu0 0
      %280 = vmatpush1.bf16.msra.mxu0 0
      %281 = vmatprep.subr.bf16.mxu0 0
      %282 = vmatpush1.bf16.msra.mxu0 0
      %283 = vmatprep.subr.bf16.mxu0 0
      %284 = vmatpush1.bf16.msra.mxu0 0
      %285 = vmatprep.subr.bf16.mxu0 0
      %286 = vmatpush1.bf16.msra.mxu0 0
      %287 = vmatprep.subr.bf16.mxu0 0
      %288 = vmatpush1.bf16.msra.mxu0 0
      %289 = vmatprep.subr.bf16.mxu0 0
      %290 = vmatpush1.bf16.msra.mxu0 0
      %291 = vmatprep.subr.bf16.mxu0 0
      %292 = vmatpush1.bf16.msra.mxu0 0
      %293 = vmatprep.subr.bf16.mxu0 0
      %294 = vmatpush1.bf16.msra.mxu0 0
      %295 = vmatprep.subr.bf16.mxu0 0
      %296 = vmatpush1.bf16.msra.mxu0 0
      %297 = vmatprep.subr.bf16.mxu0 0
      %298 = vmatpush1.bf16.msra.mxu0 0
      %299 = vmatprep.subr.bf16.mxu0 0
      %300 = vmatpush1.bf16.msra.mxu0 0
      %301 = vmatprep.subr.bf16.mxu0 0
      %302 = vmatpush1.bf16.msra.mxu0 0
      %303 = vmatprep.subr.bf16.mxu0 0
      %304 = vmatpush1.bf16.msra.mxu0 0
      %305 = vmatprep.subr.bf16.mxu0 0
      %306 = vmatpush1.bf16.msra.mxu0 0
      %307 = vmatprep.mubr.bf16.mxu0 0
      %308 = vmatmul.mubr.bf16.gmra.mrb[0].mxu0 %v257
      %v309 = vpop.f32.mrb[0].mxu0
      %v310 = vadd.f32 0.0, %v309
      %v311 = vpop.f32.mrb[0].mxu0
      %v312 = vpop.f32.mrb[0].mxu0
      %v313 = vadd.f32 0.0, %v312
      %v314 = vpop.f32.mrb[0].mxu0
      %315 = vmatprep.mubr.bf16.mxu0 0
      %316 = vmatmul.mubr.bf16.gmra.mrb[0].mxu0 %v260
      %v317 = vpop.f32.mrb[0].mxu0
      %v318 = vadd.f32 0.0, %v317
      %v319 = vpop.f32.mrb[0].mxu0
      %v320 = vpop.f32.mrb[0].mxu0
      %v321 = vadd.f32 0.0, %v320
      %v322 = vpop.f32.mrb[0].mxu0
      %323 = vmatprep.mubr.bf16.mxu0 0
      %324 = vmatmul.mubr.bf16.gmra.mrb[0].mxu0 %v263
      %v325 = vpop.f32.mrb[0].mxu0
      %v326 = vadd.f32 0.0, %v325
      %v327 = vpop.f32.mrb[0].mxu0
      %v328 = vpop.f32.mrb[0].mxu0
      %v329 = vadd.f32 0.0, %v328
      %v330 = vpop.f32.mrb[0].mxu0
      %331 = vmatprep.mubr.bf16.mxu0 0
      %332 = vmatmul.mubr.bf16.gmra.mrb[0].mxu0 %v266
      %v333 = vpop.f32.mrb[0].mxu0
      %v334 = vadd.f32 0.0, %v333
      %v335 = vpop.f32.mrb[0].mxu0
      %v336 = vpop.f32.mrb[0].mxu0
      %v337 = vadd.f32 0.0, %v336
      %v338 = vpop.f32.mrb[0].mxu0
      %339 = vmatprep.mubr.bf16.mxu0 0
      %340 = vmatmul.mubr.bf16.gmra.mrb[0].mxu0 %v269
      %v341 = vpop.f32.mrb[0].mxu0
      %v342 = vadd.f32 0.0, %v341
      %v343 = vpop.f32.mrb[0].mxu0
      %v344 = vpop.f32.mrb[0].mxu0
      %v345 = vadd.f32 0.0, %v344
      %v346 = vpop.f32.mrb[0].mxu0
      %347 = vdwg.mxu0
      %v348 = vadd.f32 %v220, %v310
      %v349 = vadd.f32 %v221, %v313
      %v350 = vadd.f32 %v222, %v318
      %v351 = vadd.f32 %v223, %v321
      %v352 = vadd.f32 %v224, %v326
      %v353 = vadd.f32 %v225, %v329
      %v354 = vadd.f32 %v226, %v334
      %v355 = vadd.f32 %v227, %v337
      %v356 = vadd.f32 %v228, %v342
      %v357 = vadd.f32 %v229, %v345
      %358 = vst.msk [vmem:[#allocation2] sm:$0xff] %vm199, %v348
      %359 = vst.msk [vmem:[#allocation2 + $0x8] sm:$0xff] %vm199, %v349
      %360 = vst.msk [vmem:[#allocation2 + $0x10] sm:$0xff] %vm199, %v350
      %361 = vst.msk [vmem:[#allocation2 + $0x18] sm:$0xff] %vm199, %v351
      %362 = vst.msk [vmem:[#allocation2 + $0x20] sm:$0xff] %vm199, %v352
      %363 = vst.msk [vmem:[#allocation2 + $0x28] sm:$0xff] %vm199, %v353
      %364 = vst.msk [vmem:[#allocation2 + $0x30] sm:$0xff] %vm199, %v354
      %365 = vst.msk [vmem:[#allocation2 + $0x38] sm:$0xff] %vm199, %v355
      %366 = vst.msk [vmem:[#allocation2 + $0x40] sm:$0xff] %vm199, %v356
      %367 = vst.msk [vmem:[#allocation2 + $0x48] sm:$0xff] %vm199, %v357
      %v368 = vld [vmem:[%s192] sm:$0xf]
      %v369 = vld [vmem:[%s192 + $0x4] sm:$0xf]
      %v370 = vld [vmem:[%s192 + $0x8] sm:$0xf]
      %v371 = vld [vmem:[%s192 + $0xc] sm:$0xf]
      %v372 = vld [vmem:[%s192 + $0x10] sm:$0xf]
      %v373 = vld [vmem:[%s192 + $0x14] sm:$0xf]
      %v374 = vld [vmem:[%s192 + $0x18] sm:$0xf]
      %v375 = vld [vmem:[%s192 + $0x1c] sm:$0xf]
      %v376 = vld [vmem:[%s192 + $0x20] sm:$0xf]
      %v377 = vld [vmem:[%s192 + $0x24] sm:$0xf]
      %v378 = vld [vmem:[%s192 + $0x28] sm:$0x1]
      %v379 = vld [vmem:[#allocation2] sm:$0xff]
      %v380 = vld [vmem:[#allocation2 + $0x8] sm:$0xff]
      %v381 = vld [vmem:[#allocation2 + $0x10] sm:$0xff]
      %v382 = vld [vmem:[#allocation2 + $0x18] sm:$0xff]
      %v383 = vld [vmem:[#allocation2 + $0x20] sm:$0xff]
      %v384 = vld [vmem:[#allocation2 + $0x28] sm:$0xff]
      %v385 = vld [vmem:[#allocation2 + $0x30] sm:$0xff]
      %v386 = vld [vmem:[#allocation2 + $0x38] sm:$0xff]
      %v387 = vld [vmem:[#allocation2 + $0x40] sm:$0xff]
      %v388 = vld [vmem:[#allocation2 + $0x48] sm:$0xff]
      %s389 = scalar_lea.vmem %s1, 4
      %v390 = vld [vmem:[%s389] sm:$0xf]
      %v402 = vunpack.c.l.b16 %v368
      %v403 = vunpack.c.l.b16 %v369
      %v404 = vunpack.c.l.b16 %v370
      %v405 = vunpack.c.l.b16 %v371
      %v406 = vunpack.c.l.b16 %v372
      %v407 = vunpack.c.l.b16 %v373
      %v408 = vunpack.c.l.b16 %v374
      %v409 = vunpack.c.l.b16 %v375
      %v410 = vunpack.c.l.b16 %v376
      %v411 = vunpack.c.l.b16 %v377
      %v412 = vunpack.c.l.b16 %v378
      %v413 = vpack.c.b16 %v403, %v402
      %v414 = vpack.c.b16 %v405, %v404
      %v415 = vpack.c.b16 %v407, %v406
      %v416 = vpack.c.b16 %v409, %v408
      %v417 = vpack.c.b16 %v411, %v410
      %v418 = vpack.c.b16 %v412, %v412
      %vm419 = vsmask.f32 7424
      %v421 = vshrl.u32 %v413, 16
      %v423 = vshll.u32 %v413, 16
      %v425 = vrot.slane %v423, 1
      %v426 = vor.u32 %v421, %v425
      %v428 = vshll.u32 %v414, 16
      %v430 = vrot.slane %v428, 1
      %v431 = vsel %vm419, %v426, %v430
      %v432 = vshrl.u32 %v414, 16
      %v434 = vor.u32 %v432, %v430
      %v436 = vshll.u32 %v415, 16
      %v438 = vrot.slane %v436, 1
      %v439 = vsel %vm419, %v434, %v438
      %v440 = vshrl.u32 %v415, 16
      %v442 = vor.u32 %v440, %v438
      %v444 = vshll.u32 %v416, 16
      %v446 = vrot.slane %v444, 1
      %v447 = vsel %vm419, %v442, %v446
      %v448 = vshrl.u32 %v416, 16
      %v450 = vor.u32 %v448, %v446
      %v452 = vshll.u32 %v417, 16
      %v454 = vrot.slane %v452, 1
      %v455 = vsel %vm419, %v450, %v454
      %v456 = vshrl.u32 %v417, 16
      %v458 = vor.u32 %v456, %v454
      %v460 = vshll.u32 %v418, 16
      %v462 = vrot.slane %v460, 1
      %v463 = vsel %vm419, %v458, %v462
      %v465 = vsel %vm199, %v431, 0
      %v468 = vsel %vm199, %v439, 0
      %v471 = vsel %vm199, %v447, 0
      %v474 = vsel %vm199, %v455, 0
      %v477 = vsel %vm199, %v463, 0
      %v480 = vsel %vm271, %v390, 0
      %482 = vmatprep.subr.bf16.mxu0 0
      %483 = vmatpush1.bf16.msra.mxu0 %v480
      %484 = vmatprep.subr.bf16.mxu0 0
      %485 = vmatpush1.bf16.msra.mxu0 0
      %486 = vmatprep.subr.bf16.mxu0 0
      %487 = vmatpush1.bf16.msra.mxu0 0
      %488 = vmatprep.subr.bf16.mxu0 0
      %489 = vmatpush1.bf16.msra.mxu0 0
      %490 = vmatprep.subr.bf16.mxu0 0
      %491 = vmatpush1.bf16.msra.mxu0 0
      %492 = vmatprep.subr.bf16.mxu0 0
      %493 = vmatpush1.bf16.msra.mxu0 0
      %494 = vmatprep.subr.bf16.mxu0 0
      %495 = vmatpush1.bf16.msra.mxu0 0
      %496 = vmatprep.subr.bf16.mxu0 0
      %497 = vmatpush1.bf16.msra.mxu0 0
      %498 = vmatprep.subr.bf16.mxu0 0
      %499 = vmatpush1.bf16.msra.mxu0 0
      %500 = vmatprep.subr.bf16.mxu0 0
      %501 = vmatpush1.bf16.msra.mxu0 0
      %502 = vmatprep.subr.bf16.mxu0 0
      %503 = vmatpush1.bf16.msra.mxu0 0
      %504 = vmatprep.subr.bf16.mxu0 0
      %505 = vmatpush1.bf16.msra.mxu0 0
      %506 = vmatprep.subr.bf16.mxu0 0
      %507 = vmatpush1.bf16.msra.mxu0 0
      %508 = vmatprep.subr.bf16.mxu0 0
      %509 = vmatpush1.bf16.msra.mxu0 0
      %510 = vmatprep.subr.bf16.mxu0 0
      %511 = vmatpush1.bf16.msra.mxu0 0
      %512 = vmatprep.subr.bf16.mxu0 0
      %513 = vmatpush1.bf16.msra.mxu0 0
      %514 = vmatprep.mubr.bf16.mxu0 0
      %515 = vmatmul.mubr.bf16.gmra.mrb[0].mxu0 %v465
      %v516 = vpop.f32.mrb[0].mxu0
      %v517 = vadd.f32 0.0, %v516
      %v518 = vpop.f32.mrb[0].mxu0
      %v519 = vpop.f32.mrb[0].mxu0
      %v520 = vadd.f32 0.0, %v519
      %v521 = vpop.f32.mrb[0].mxu0
      %522 = vmatprep.mubr.bf16.mxu0 0
      %523 = vmatmul.mubr.bf16.gmra.mrb[0].mxu0 %v468
      %v524 = vpop.f32.mrb[0].mxu0
      %v525 = vadd.f32 0.0, %v524
      %v526 = vpop.f32.mrb[0].mxu0
      %v527 = vpop.f32.mrb[0].mxu0
      %v528 = vadd.f32 0.0, %v527
      %v529 = vpop.f32.mrb[0].mxu0
      %530 = vmatprep.mubr.bf16.mxu0 0
      %531 = vmatmul.mubr.bf16.gmra.mrb[0].mxu0 %v471
      %v532 = vpop.f32.mrb[0].mxu0
      %v533 = vadd.f32 0.0, %v532
      %v534 = vpop.f32.mrb[0].mxu0
      %v535 = vpop.f32.mrb[0].mxu0
      %v536 = vadd.f32 0.0, %v535
      %v537 = vpop.f32.mrb[0].mxu0
      %538 = vmatprep.mubr.bf16.mxu0 0
      %539 = vmatmul.mubr.bf16.gmra.mrb[0].mxu0 %v474
      %v540 = vpop.f32.mrb[0].mxu0
      %v541 = vadd.f32 0.0, %v540
      %v542 = vpop.f32.mrb[0].mxu0
      %v543 = vpop.f32.mrb[0].mxu0
      %v544 = vadd.f32 0.0, %v543
      %v545 = vpop.f32.mrb[0].mxu0
      %546 = vmatprep.mubr.bf16.mxu0 0
      %547 = vmatmul.mubr.bf16.gmra.mrb[0].mxu0 %v477
      %v548 = vpop.f32.mrb[0].mxu0
      %v549 = vadd.f32 0.0, %v548
      %v550 = vpop.f32.mrb[0].mxu0
      %v551 = vpop.f32.mrb[0].mxu0
      %v552 = vadd.f32 0.0, %v551
      %v553 = vpop.f32.mrb[0].mxu0
      %554 = vdwg.mxu0
      %v555 = vadd.f32 %v379, %v517
      %v556 = vadd.f32 %v380, %v520
      %v557 = vadd.f32 %v381, %v525
      %v558 = vadd.f32 %v382, %v528
      %v559 = vadd.f32 %v383, %v533
      %v560 = vadd.f32 %v384, %v536
      %v561 = vadd.f32 %v385, %v541
      %v562 = vadd.f32 %v386, %v544
      %v563 = vadd.f32 %v387, %v549
      %v564 = vadd.f32 %v388, %v552
      %565 = vst.msk [vmem:[#allocation2] sm:$0xff] %vm199, %v555
      %566 = vst.msk [vmem:[#allocation2 + $0x8] sm:$0xff] %vm199, %v556
      %567 = vst.msk [vmem:[#allocation2 + $0x10] sm:$0xff] %vm199, %v557
      %568 = vst.msk [vmem:[#allocation2 + $0x18] sm:$0xff] %vm199, %v558
      %569 = vst.msk [vmem:[#allocation2 + $0x20] sm:$0xff] %vm199, %v559
      %570 = vst.msk [vmem:[#allocation2 + $0x28] sm:$0xff] %vm199, %v560
      %571 = vst.msk [vmem:[#allocation2 + $0x30] sm:$0xff] %vm199, %v561
      %572 = vst.msk [vmem:[#allocation2 + $0x38] sm:$0xff] %vm199, %v562
      %573 = vst.msk [vmem:[#allocation2 + $0x40] sm:$0xff] %vm199, %v563
      %574 = vst.msk [vmem:[#allocation2 + $0x48] sm:$0xff] %vm199, %v564
      %v575 = vld [vmem:[%s192] sm:$0xe]
      %v576 = vld [vmem:[%s192 + $0x4] sm:$0xf]
      %v577 = vld [vmem:[%s192 + $0x8] sm:$0xf]
      %v578 = vld [vmem:[%s192 + $0xc] sm:$0xf]
      %v579 = vld [vmem:[%s192 + $0x10] sm:$0xf]
      %v580 = vld [vmem:[%s192 + $0x14] sm:$0xf]
      %v581 = vld [vmem:[%s192 + $0x18] sm:$0xf]
      %v582 = vld [vmem:[%s192 + $0x1c] sm:$0xf]
      %v583 = vld [vmem:[%s192 + $0x20] sm:$0xf]
      %v584 = vld [vmem:[%s192 + $0x24] sm:$0xf]
      %v585 = vld [vmem:[%s192 + $0x28] sm:$0x1]
      %v586 = vld [vmem:[#allocation2] sm:$0xff]
      %v587 = vld [vmem:[#allocation2 + $0x8] sm:$0xff]
      %v588 = vld [vmem:[#allocation2 + $0x10] sm:$0xff]
      %v589 = vld [vmem:[#allocation2 + $0x18] sm:$0xff]
      %v590 = vld [vmem:[#allocation2 + $0x20] sm:$0xff]
      %v591 = vld [vmem:[#allocation2 + $0x28] sm:$0xff]
      %v592 = vld [vmem:[#allocation2 + $0x30] sm:$0xff]
      %v593 = vld [vmem:[#allocation2 + $0x38] sm:$0xff]
      %v594 = vld [vmem:[#allocation2 + $0x40] sm:$0xff]
      %v595 = vld [vmem:[#allocation2 + $0x48] sm:$0xff]
      %s596 = scalar_lea.vmem %s1, 8
      %v597 = vld [vmem:[%s596] sm:$0xf]
      %v609 = vunpack.c.l.b16 %v575
      %v610 = vunpack.c.l.b16 %v576
      %v611 = vunpack.c.l.b16 %v577
      %v612 = vunpack.c.l.b16 %v578
      %v613 = vunpack.c.l.b16 %v579
      %v614 = vunpack.c.l.b16 %v580
      %v615 = vunpack.c.l.b16 %v581
      %v616 = vunpack.c.l.b16 %v582
      %v617 = vunpack.c.l.b16 %v583
      %v618 = vunpack.c.l.b16 %v584
      %v619 = vunpack.c.l.b16 %v585
      %v620 = vpack.c.b16 %v610, %v609
      %v621 = vpack.c.b16 %v612, %v611
      %v622 = vpack.c.b16 %v614, %v613
      %v623 = vpack.c.b16 %v616, %v615
      %v624 = vpack.c.b16 %v618, %v617
      %v625 = vpack.c.b16 %v619, %v619
      %vm626 = vcmask 1046528
      %v627 = vrot.slane %v620, 1
      %v628 = vrot.slane %v621, 1
      %v629 = vsel %vm626, %v627, %v628
      %v630 = vrot.slane %v622, 1
      %v631 = vsel %vm626, %v628, %v630
      %v632 = vrot.slane %v623, 1
      %v633 = vsel %vm626, %v630, %v632
      %v634 = vrot.slane %v624, 1
      %v635 = vsel %vm626, %v632, %v634
      %v636 = vrot.slane %v625, 1
      %v637 = vsel %vm626, %v634, %v636
      %v639 = vsel %vm199, %v629, 0
      %v642 = vsel %vm199, %v631, 0
      %v645 = vsel %vm199, %v633, 0
      %v648 = vsel %vm199, %v635, 0
      %v651 = vsel %vm199, %v637, 0
      %v654 = vsel %vm271, %v597, 0
      %656 = vmatprep.subr.bf16.mxu0 0
      %657 = vmatpush1.bf16.msra.mxu0 %v654
      %658 = vmatprep.subr.bf16.mxu0 0
      %659 = vmatpush1.bf16.msra.mxu0 0
      %660 = vmatprep.subr.bf16.mxu0 0
      %661 = vmatpush1.bf16.msra.mxu0 0
      %662 = vmatprep.subr.bf16.mxu0 0
      %663 = vmatpush1.bf16.msra.mxu0 0
      %664 = vmatprep.subr.bf16.mxu0 0
      %665 = vmatpush1.bf16.msra.mxu0 0
      %666 = vmatprep.subr.bf16.mxu0 0
      %667 = vmatpush1.bf16.msra.mxu0 0
      %668 = vmatprep.subr.bf16.mxu0 0
      %669 = vmatpush1.bf16.msra.mxu0 0
      %670 = vmatprep.subr.bf16.mxu0 0
      %671 = vmatpush1.bf16.msra.mxu0 0
      %672 = vmatprep.subr.bf16.mxu0 0
      %673 = vmatpush1.bf16.msra.mxu0 0
      %674 = vmatprep.subr.bf16.mxu0 0
      %675 = vmatpush1.bf16.msra.mxu0 0
      %676 = vmatprep.subr.bf16.mxu0 0
      %677 = vmatpush1.bf16.msra.mxu0 0
      %678 = vmatprep.subr.bf16.mxu0 0
      %679 = vmatpush1.bf16.msra.mxu0 0
      %680 = vmatprep.subr.bf16.mxu0 0
      %681 = vmatpush1.bf16.msra.mxu0 0
      %682 = vmatprep.subr.bf16.mxu0 0
      %683 = vmatpush1.bf16.msra.mxu0 0
      %684 = vmatprep.subr.bf16.mxu0 0
      %685 = vmatpush1.bf16.msra.mxu0 0
      %686 = vmatprep.subr.bf16.mxu0 0
      %687 = vmatpush1.bf16.msra.mxu0 0
      %688 = vmatprep.mubr.bf16.mxu0 0
      %689 = vmatmul.mubr.bf16.gmra.mrb[0].mxu0 %v639
      %v690 = vpop.f32.mrb[0].mxu0
      %v691 = vadd.f32 0.0, %v690
      %v692 = vpop.f32.mrb[0].mxu0
      %v693 = vpop.f32.mrb[0].mxu0
      %v694 = vadd.f32 0.0, %v693
      %v695 = vpop.f32.mrb[0].mxu0
      %696 = vmatprep.mubr.bf16.mxu0 0
      %697 = vmatmul.mubr.bf16.gmra.mrb[0].mxu0 %v642
      %v698 = vpop.f32.mrb[0].mxu0
      %v699 = vadd.f32 0.0, %v698
      %v700 = vpop.f32.mrb[0].mxu0
      %v701 = vpop.f32.mrb[0].mxu0
      %v702 = vadd.f32 0.0, %v701
      %v703 = vpop.f32.mrb[0].mxu0
      %704 = vmatprep.mubr.bf16.mxu0 0
      %705 = vmatmul.mubr.bf16.gmra.mrb[0].mxu0 %v645
      %v706 = vpop.f32.mrb[0].mxu0
      %v707 = vadd.f32 0.0, %v706
      %v708 = vpop.f32.mrb[0].mxu0
      %v709 = vpop.f32.mrb[0].mxu0
      %v710 = vadd.f32 0.0, %v709
      %v711 = vpop.f32.mrb[0].mxu0
      %712 = vmatprep.mubr.bf16.mxu0 0
      %713 = vmatmul.mubr.bf16.gmra.mrb[0].mxu0 %v648
      %v714 = vpop.f32.mrb[0].mxu0
      %v715 = vadd.f32 0.0, %v714
      %v716 = vpop.f32.mrb[0].mxu0
      %v717 = vpop.f32.mrb[0].mxu0
      %v718 = vadd.f32 0.0, %v717
      %v719 = vpop.f32.mrb[0].mxu0
      %720 = vmatprep.mubr.bf16.mxu0 0
      %721 = vmatmul.mubr.bf16.gmra.mrb[0].mxu0 %v651
      %v722 = vpop.f32.mrb[0].mxu0
      %v723 = vadd.f32 0.0, %v722
      %v724 = vpop.f32.mrb[0].mxu0
      %v725 = vpop.f32.mrb[0].mxu0
      %v726 = vadd.f32 0.0, %v725
      %v727 = vpop.f32.mrb[0].mxu0
      %728 = vdwg.mxu0
      %v729 = vadd.f32 %v586, %v691
      %v730 = vadd.f32 %v587, %v694
      %v731 = vadd.f32 %v588, %v699
      %v732 = vadd.f32 %v589, %v702
      %v733 = vadd.f32 %v590, %v707
      %v734 = vadd.f32 %v591, %v710
      %v735 = vadd.f32 %v592, %v715
      %v736 = vadd.f32 %v593, %v718
      %v737 = vadd.f32 %v594, %v723
      %v738 = vadd.f32 %v595, %v726
      %739 = vst.msk [vmem:[#allocation2] sm:$0xff] %vm199, %v729
      %740 = vst.msk [vmem:[#allocation2 + $0x8] sm:$0xff] %vm199, %v730
      %741 = vst.msk [vmem:[#allocation2 + $0x10] sm:$0xff] %vm199, %v731
      %742 = vst.msk [vmem:[#allocation2 + $0x18] sm:$0xff] %vm199, %v732
      %743 = vst.msk [vmem:[#allocation2 + $0x20] sm:$0xff] %vm199, %v733
      %744 = vst.msk [vmem:[#allocation2 + $0x28] sm:$0xff] %vm199, %v734
      %745 = vst.msk [vmem:[#allocation2 + $0x30] sm:$0xff] %vm199, %v735
      %746 = vst.msk [vmem:[#allocation2 + $0x38] sm:$0xff] %vm199, %v736
      %747 = vst.msk [vmem:[#allocation2 + $0x40] sm:$0xff] %vm199, %v737
      %748 = vst.msk [vmem:[#allocation2 + $0x48] sm:$0xff] %vm199, %v738
      %v749 = vld [vmem:[%s192 + $0x4] sm:$0xe]
      %v750 = vld [vmem:[%s192 + $0x8] sm:$0xf]
      %v751 = vld [vmem:[%s192 + $0xc] sm:$0xf]
      %v752 = vld [vmem:[%s192 + $0x10] sm:$0xf]
      %v753 = vld [vmem:[%s192 + $0x14] sm:$0xf]
      %v754 = vld [vmem:[%s192 + $0x18] sm:$0xf]
      %v755 = vld [vmem:[%s192 + $0x1c] sm:$0xf]
      %v756 = vld [vmem:[%s192 + $0x20] sm:$0xf]
      %v757 = vld [vmem:[%s192 + $0x24] sm:$0xf]
      %v758 = vld [vmem:[%s192 + $0x28] sm:$0xf]
      %v759 = vld [vmem:[%s192 + $0x2c] sm:$0x1]
      %v760 = vld [vmem:[#allocation2] sm:$0xff]
      %v761 = vld [vmem:[#allocation2 + $0x8] sm:$0xff]
      %v762 = vld [vmem:[#allocation2 + $0x10] sm:$0xff]
      %v763 = vld [vmem:[#allocation2 + $0x18] sm:$0xff]
      %v764 = vld [vmem:[#allocation2 + $0x20] sm:$0xff]
      %v765 = vld [vmem:[#allocation2 + $0x28] sm:$0xff]
      %v766 = vld [vmem:[#allocation2 + $0x30] sm:$0xff]
      %v767 = vld [vmem:[#allocation2 + $0x38] sm:$0xff]
      %v768 = vld [vmem:[#allocation2 + $0x40] sm:$0xff]
      %v769 = vld [vmem:[#allocation2 + $0x48] sm:$0xff]
      %s770 = scalar_lea.vmem %s1, 12
      %v771 = vld [vmem:[%s770] sm:$0xf]
      %v783 = vunpack.c.l.b16 %v749
      %v784 = vunpack.c.l.b16 %v750
      %v785 = vunpack.c.l.b16 %v751
      %v786 = vunpack.c.l.b16 %v752
      %v787 = vunpack.c.l.b16 %v753
      %v788 = vunpack.c.l.b16 %v754
      %v789 = vunpack.c.l.b16 %v755
      %v790 = vunpack.c.l.b16 %v756
      %v791 = vunpack.c.l.b16 %v757
      %v792 = vunpack.c.l.b16 %v758
      %v793 = vunpack.c.l.b16 %v759
      %v794 = vpack.c.b16 %v784, %v783
      %v795 = vpack.c.b16 %v786, %v785
      %v796 = vpack.c.b16 %v788, %v787
      %v797 = vpack.c.b16 %v790, %v789
      %v798 = vpack.c.b16 %v792, %v791
      %v799 = vpack.c.b16 %v793, %v793
      %v800 = vrot.slane %v794, 1
      %v801 = vrot.slane %v795, 1
      %v802 = vsel %vm626, %v800, %v801
      %v803 = vrot.slane %v796, 1
      %v804 = vsel %vm626, %v801, %v803
      %v805 = vrot.slane %v797, 1
      %v806 = vsel %vm626, %v803, %v805
      %v807 = vrot.slane %v798, 1
      %v808 = vsel %vm626, %v805, %v807
      %v809 = vrot.slane %v799, 1
      %v810 = vsel %vm626, %v807, %v809
      %v812 = vsel %vm199, %v802, 0
      %v815 = vsel %vm199, %v804, 0
      %v818 = vsel %vm199, %v806, 0
      %v821 = vsel %vm199, %v808, 0
      %v824 = vsel %vm199, %v810, 0
      %v827 = vsel %vm271, %v771, 0
      %829 = vmatprep.subr.bf16.mxu0 0
      %830 = vmatpush1.bf16.msra.mxu0 %v827
      %831 = vmatprep.subr.bf16.mxu0 0
      %832 = vmatpush1.bf16.msra.mxu0 0
      %833 = vmatprep.subr.bf16.mxu0 0
      %834 = vmatpush1.bf16.msra.mxu0 0
      %835 = vmatprep.subr.bf16.mxu0 0
      %836 = vmatpush1.bf16.msra.mxu0 0
      %837 = vmatprep.subr.bf16.mxu0 0
      %838 = vmatpush1.bf16.msra.mxu0 0
      %839 = vmatprep.subr.bf16.mxu0 0
      %840 = vmatpush1.bf16.msra.mxu0 0
      %841 = vmatprep.subr.bf16.mxu0 0
      %842 = vmatpush1.bf16.msra.mxu0 0
      %843 = vmatprep.subr.bf16.mxu0 0
      %844 = vmatpush1.bf16.msra.mxu0 0
      %845 = vmatprep.subr.bf16.mxu0 0
      %846 = vmatpush1.bf16.msra.mxu0 0
      %847 = vmatprep.subr.bf16.mxu0 0
      %848 = vmatpush1.bf16.msra.mxu0 0
      %849 = vmatprep.subr.bf16.mxu0 0
      %850 = vmatpush1.bf16.msra.mxu0 0
      %851 = vmatprep.subr.bf16.mxu0 0
      %852 = vmatpush1.bf16.msra.mxu0 0
      %853 = vmatprep.subr.bf16.mxu0 0
      %854 = vmatpush1.bf16.msra.mxu0 0
      %855 = vmatprep.subr.bf16.mxu0 0
      %856 = vmatpush1.bf16.msra.mxu0 0
      %857 = vmatprep.subr.bf16.mxu0 0
      %858 = vmatpush1.bf16.msra.mxu0 0
      %859 = vmatprep.subr.bf16.mxu0 0
      %860 = vmatpush1.bf16.msra.mxu0 0
      %861 = vmatprep.mubr.bf16.mxu0 0
      %862 = vmatmul.mubr.bf16.gmra.mrb[0].mxu0 %v812
      %v863 = vpop.f32.mrb[0].mxu0
      %v864 = vadd.f32 0.0, %v863
      %v865 = vpop.f32.mrb[0].mxu0
      %v866 = vpop.f32.mrb[0].mxu0
      %v867 = vadd.f32 0.0, %v866
      %v868 = vpop.f32.mrb[0].mxu0
      %869 = vmatprep.mubr.bf16.mxu0 0
      %870 = vmatmul.mubr.bf16.gmra.mrb[0].mxu0 %v815
      %v871 = vpop.f32.mrb[0].mxu0
      %v872 = vadd.f32 0.0, %v871
      %v873 = vpop.f32.mrb[0].mxu0
      %v874 = vpop.f32.mrb[0].mxu0
      %v875 = vadd.f32 0.0, %v874
      %v876 = vpop.f32.mrb[0].mxu0
      %877 = vmatprep.mubr.bf16.mxu0 0
      %878 = vmatmul.mubr.bf16.gmra.mrb[0].mxu0 %v818
      %v879 = vpop.f32.mrb[0].mxu0
      %v880 = vadd.f32 0.0, %v879
      %v881 = vpop.f32.mrb[0].mxu0
      %v882 = vpop.f32.mrb[0].mxu0
      %v883 = vadd.f32 0.0, %v882
      %v884 = vpop.f32.mrb[0].mxu0
      %885 = vmatprep.mubr.bf16.mxu0 0
      %886 = vmatmul.mubr.bf16.gmra.mrb[0].mxu0 %v821
      %v887 = vpop.f32.mrb[0].mxu0
      %v888 = vadd.f32 0.0, %v887
      %v889 = vpop.f32.mrb[0].mxu0
      %v890 = vpop.f32.mrb[0].mxu0
      %v891 = vadd.f32 0.0, %v890
      %v892 = vpop.f32.mrb[0].mxu0
      %893 = vmatprep.mubr.bf16.mxu0 0
      %894 = vmatmul.mubr.bf16.gmra.mrb[0].mxu0 %v824
      %v895 = vpop.f32.mrb[0].mxu0
      %v896 = vadd.f32 0.0, %v895
      %v897 = vpop.f32.mrb[0].mxu0
      %v898 = vpop.f32.mrb[0].mxu0
      %v899 = vadd.f32 0.0, %v898
      %v900 = vpop.f32.mrb[0].mxu0
      %901 = vdwg.mxu0
      %v902 = vadd.f32 %v760, %v864
      %v903 = vadd.f32 %v761, %v867
      %v904 = vadd.f32 %v762, %v872
      %v905 = vadd.f32 %v763, %v875
      %v906 = vadd.f32 %v764, %v880
      %v907 = vadd.f32 %v765, %v883
      %v908 = vadd.f32 %v766, %v888
      %v909 = vadd.f32 %v767, %v891
      %v910 = vadd.f32 %v768, %v896
      %v911 = vadd.f32 %v769, %v899
      %912 = vst.msk [vmem:[#allocation2] sm:$0xff] %vm199, %v902
      %913 = vst.msk [vmem:[#allocation2 + $0x8] sm:$0xff] %vm199, %v903
      %914 = vst.msk [vmem:[#allocation2 + $0x10] sm:$0xff] %vm199, %v904
      %915 = vst.msk [vmem:[#allocation2 + $0x18] sm:$0xff] %vm199, %v905
      %916 = vst.msk [vmem:[#allocation2 + $0x20] sm:$0xff] %vm199, %v906
      %917 = vst.msk [vmem:[#allocation2 + $0x28] sm:$0xff] %vm199, %v907
      %918 = vst.msk [vmem:[#allocation2 + $0x30] sm:$0xff] %vm199, %v908
      %919 = vst.msk [vmem:[#allocation2 + $0x38] sm:$0xff] %vm199, %v909
      %920 = vst.msk [vmem:[#allocation2 + $0x40] sm:$0xff] %vm199, %v910
      %921 = vst.msk [vmem:[#allocation2 + $0x48] sm:$0xff] %vm199, %v911
      %v922 = vld [vmem:[%s192 + $0x4] sm:$0xe]
      %v923 = vld [vmem:[%s192 + $0x8] sm:$0xf]
      %v924 = vld [vmem:[%s192 + $0xc] sm:$0xf]
      %v925 = vld [vmem:[%s192 + $0x10] sm:$0xf]
      %v926 = vld [vmem:[%s192 + $0x14] sm:$0xf]
      %v927 = vld [vmem:[%s192 + $0x18] sm:$0xf]
      %v928 = vld [vmem:[%s192 + $0x1c] sm:$0xf]
      %v929 = vld [vmem:[%s192 + $0x20] sm:$0xf]
      %v930 = vld [vmem:[%s192 + $0x24] sm:$0xf]
      %v931 = vld [vmem:[%s192 + $0x28] sm:$0xf]
      %v932 = vld [vmem:[%s192 + $0x2c] sm:$0x3]
      %v933 = vld [vmem:[#allocation2] sm:$0xff]
      %v934 = vld [vmem:[#allocation2 + $0x8] sm:$0xff]
      %v935 = vld [vmem:[#allocation2 + $0x10] sm:$0xff]
      %v936 = vld [vmem:[#allocation2 + $0x18] sm:$0xff]
      %v937 = vld [vmem:[#allocation2 + $0x20] sm:$0xff]
      %v938 = vld [vmem:[#allocation2 + $0x28] sm:$0xff]
      %v939 = vld [vmem:[#allocation2 + $0x30] sm:$0xff]
      %v940 = vld [vmem:[#allocation2 + $0x38] sm:$0xff]
      %v941 = vld [vmem:[#allocation2 + $0x40] sm:$0xff]
      %v942 = vld [vmem:[#allocation2 + $0x48] sm:$0xff]
      %s943 = scalar_lea.vmem %s1, 16
      %v944 = vld [vmem:[%s943] sm:$0xf]
      %v956 = vunpack.c.l.b16 %v922
      %v957 = vunpack.c.l.b16 %v923
      %v958 = vunpack.c.l.b16 %v924
      %v959 = vunpack.c.l.b16 %v925
      %v960 = vunpack.c.l.b16 %v926
      %v961 = vunpack.c.l.b16 %v927
      %v962 = vunpack.c.l.b16 %v928
      %v963 = vunpack.c.l.b16 %v929
      %v964 = vunpack.c.l.b16 %v930
      %v965 = vunpack.c.l.b16 %v931
      %v966 = vunpack.c.l.b16 %v932
      %v967 = vpack.c.b16 %v957, %v956
      %v968 = vpack.c.b16 %v959, %v958
      %v969 = vpack.c.b16 %v961, %v960
      %v970 = vpack.c.b16 %v963, %v962
      %v971 = vpack.c.b16 %v965, %v964
      %v972 = vpack.c.b16 %v966, %v966
      %vm973 = vsmask.f32 6400
      %v975 = vshrl.u32 %v967, 16
      %v977 = vrot.slane %v975, 1
      %v978 = vshll.u32 %v967, 16
      %v980 = vrot.slane %v978, 2
      %v981 = vor.u32 %v977, %v980
      %v983 = vshrl.u32 %v968, 16
      %v985 = vrot.slane %v983, 1
      %v986 = vshll.u32 %v968, 16
      %v988 = vrot.slane %v986, 2
      %v989 = vor.u32 %v985, %v988
      %v990 = vsel %vm973, %v981, %v989
      %v992 = vshrl.u32 %v969, 16
      %v994 = vrot.slane %v992, 1
      %v995 = vshll.u32 %v969, 16
      %v997 = vrot.slane %v995, 2
      %v998 = vor.u32 %v994, %v997
      %v999 = vsel %vm973, %v989, %v998
      %v1001 = vshrl.u32 %v970, 16
      %v1003 = vrot.slane %v1001, 1
      %v1004 = vshll.u32 %v970, 16
      %v1006 = vrot.slane %v1004, 2
      %v1007 = vor.u32 %v1003, %v1006
      %v1008 = vsel %vm973, %v998, %v1007
      %v1010 = vshrl.u32 %v971, 16
      %v1012 = vrot.slane %v1010, 1
      %v1013 = vshll.u32 %v971, 16
      %v1015 = vrot.slane %v1013, 2
      %v1016 = vor.u32 %v1012, %v1015
      %v1017 = vsel %vm973, %v1007, %v1016
      %v1019 = vshrl.u32 %v972, 16
      %v1021 = vrot.slane %v1019, 1
      %v1022 = vshll.u32 %v972, 16
      %v1024 = vrot.slane %v1022, 2
      %v1025 = vor.u32 %v1021, %v1024
      %v1026 = vsel %vm973, %v1016, %v1025
      %v1028 = vsel %vm199, %v990, 0
      %v1031 = vsel %vm199, %v999, 0
      %v1034 = vsel %vm199, %v1008, 0
      %v1037 = vsel %vm199, %v1017, 0
      %v1040 = vsel %vm199, %v1026, 0
      %v1043 = vsel %vm271, %v944, 0
      %1045 = vmatprep.subr.bf16.mxu0 0
      %1046 = vmatpush1.bf16.msra.mxu0 %v1043
      %1047 = vmatprep.subr.bf16.mxu0 0
      %1048 = vmatpush1.bf16.msra.mxu0 0
      %1049 = vmatprep.subr.bf16.mxu0 0
      %1050 = vmatpush1.bf16.msra.mxu0 0
      %1051 = vmatprep.subr.bf16.mxu0 0
      %1052 = vmatpush1.bf16.msra.mxu0 0
      %1053 = vmatprep.subr.bf16.mxu0 0
      %1054 = vmatpush1.bf16.msra.mxu0 0
      %1055 = vmatprep.subr.bf16.mxu0 0
      %1056 = vmatpush1.bf16.msra.mxu0 0
      %1057 = vmatprep.subr.bf16.mxu0 0
      %1058 = vmatpush1.bf16.msra.mxu0 0
      %1059 = vmatprep.subr.bf16.mxu0 0
      %1060 = vmatpush1.bf16.msra.mxu0 0
      %1061 = vmatprep.subr.bf16.mxu0 0
      %1062 = vmatpush1.bf16.msra.mxu0 0
      %1063 = vmatprep.subr.bf16.mxu0 0
      %1064 = vmatpush1.bf16.msra.mxu0 0
      %1065 = vmatprep.subr.bf16.mxu0 0
      %1066 = vmatpush1.bf16.msra.mxu0 0
      %1067 = vmatprep.subr.bf16.mxu0 0
      %1068 = vmatpush1.bf16.msra.mxu0 0
      %1069 = vmatprep.subr.bf16.mxu0 0
      %1070 = vmatpush1.bf16.msra.mxu0 0
      %1071 = vmatprep.subr.bf16.mxu0 0
      %1072 = vmatpush1.bf16.msra.mxu0 0
      %1073 = vmatprep.subr.bf16.mxu0 0
      %1074 = vmatpush1.bf16.msra.mxu0 0
      %1075 = vmatprep.subr.bf16.mxu0 0
      %1076 = vmatpush1.bf16.msra.mxu0 0
      %1077 = vmatprep.mubr.bf16.mxu0 0
      %1078 = vmatmul.mubr.bf16.gmra.mrb[0].mxu0 %v1028
      %v1079 = vpop.f32.mrb[0].mxu0
      %v1080 = vadd.f32 0.0, %v1079
      %v1081 = vpop.f32.mrb[0].mxu0
      %v1082 = vpop.f32.mrb[0].mxu0
      %v1083 = vadd.f32 0.0, %v1082
      %v1084 = vpop.f32.mrb[0].mxu0
      %1085 = vmatprep.mubr.bf16.mxu0 0
      %1086 = vmatmul.mubr.bf16.gmra.mrb[0].mxu0 %v1031
      %v1087 = vpop.f32.mrb[0].mxu0
      %v1088 = vadd.f32 0.0, %v1087
      %v1089 = vpop.f32.mrb[0].mxu0
      %v1090 = vpop.f32.mrb[0].mxu0
      %v1091 = vadd.f32 0.0, %v1090
      %v1092 = vpop.f32.mrb[0].mxu0
      %1093 = vmatprep.mubr.bf16.mxu0 0
      %1094 = vmatmul.mubr.bf16.gmra.mrb[0].mxu0 %v1034
      %v1095 = vpop.f32.mrb[0].mxu0
      %v1096 = vadd.f32 0.0, %v1095
      %v1097 = vpop.f32.mrb[0].mxu0
      %v1098 = vpop.f32.mrb[0].mxu0
      %v1099 = vadd.f32 0.0, %v1098
      %v1100 = vpop.f32.mrb[0].mxu0
      %1101 = vmatprep.mubr.bf16.mxu0 0
      %1102 = vmatmul.mubr.bf16.gmra.mrb[0].mxu0 %v1037
      %v1103 = vpop.f32.mrb[0].mxu0
      %v1104 = vadd.f32 0.0, %v1103
      %v1105 = vpop.f32.mrb[0].mxu0
      %v1106 = vpop.f32.mrb[0].mxu0
      %v1107 = vadd.f32 0.0, %v1106
      %v1108 = vpop.f32.mrb[0].mxu0
      %1109 = vmatprep.mubr.bf16.mxu0 0
      %1110 = vmatmul.mubr.bf16.gmra.mrb[0].mxu0 %v1040
      %v1111 = vpop.f32.mrb[0].mxu0
      %v1112 = vadd.f32 0.0, %v1111
      %v1113 = vpop.f32.mrb[0].mxu0
      %v1114 = vpop.f32.mrb[0].mxu0
      %v1115 = vadd.f32 0.0, %v1114
      %v1116 = vpop.f32.mrb[0].mxu0
      %1117 = vdwg.mxu0
      %v1118 = vadd.f32 %v933, %v1080
      %v1119 = vadd.f32 %v934, %v1083
      %v1120 = vadd.f32 %v935, %v1088
      %v1121 = vadd.f32 %v936, %v1091
      %v1122 = vadd.f32 %v937, %v1096
      %v1123 = vadd.f32 %v938, %v1099
      %v1124 = vadd.f32 %v939, %v1104
      %v1125 = vadd.f32 %v940, %v1107
      %v1126 = vadd.f32 %v941, %v1112
      %v1127 = vadd.f32 %v942, %v1115
      %1128 = vst.msk [vmem:[#allocation2] sm:$0xff] %vm199, %v1118
      %1129 = vst.msk [vmem:[#allocation2 + $0x8] sm:$0xff] %vm199, %v1119
      %1130 = vst.msk [vmem:[#allocation2 + $0x10] sm:$0xff] %vm199, %v1120
      %1131 = vst.msk [vmem:[#allocation2 + $0x18] sm:$0xff] %vm199, %v1121
      %1132 = vst.msk [vmem:[#allocation2 + $0x20] sm:$0xff] %vm199, %v1122
      %1133 = vst.msk [vmem:[#allocation2 + $0x28] sm:$0xff] %vm199, %v1123
      %1134 = vst.msk [vmem:[#allocation2 + $0x30] sm:$0xff] %vm199, %v1124
      %1135 = vst.msk [vmem:[#allocation2 + $0x38] sm:$0xff] %vm199, %v1125
      %1136 = vst.msk [vmem:[#allocation2 + $0x40] sm:$0xff] %vm199, %v1126
      %1137 = vst.msk [vmem:[#allocation2 + $0x48] sm:$0xff] %vm199, %v1127
      %v1138 = vld [vmem:[%s192 + $0x4] sm:$0xc]
      %v1139 = vld [vmem:[%s192 + $0x8] sm:$0xf]
      %v1140 = vld [vmem:[%s192 + $0xc] sm:$0xf]
      %v1141 = vld [vmem:[%s192 + $0x10] sm:$0xf]
      %v1142 = vld [vmem:[%s192 + $0x14] sm:$0xf]
      %v1143 = vld [vmem:[%s192 + $0x18] sm:$0xf]
      %v1144 = vld [vmem:[%s192 + $0x1c] sm:$0xf]
      %v1145 = vld [vmem:[%s192 + $0x20] sm:$0xf]
      %v1146 = vld [vmem:[%s192 + $0x24] sm:$0xf]
      %v1147 = vld [vmem:[%s192 + $0x28] sm:$0xf]
      %v1148 = vld [vmem:[%s192 + $0x2c] sm:$0x3]
      %v1149 = vld [vmem:[#allocation2] sm:$0xff]
      %v1150 = vld [vmem:[#allocation2 + $0x8] sm:$0xff]
      %v1151 = vld [vmem:[#allocation2 + $0x10] sm:$0xff]
      %v1152 = vld [vmem:[#allocation2 + $0x18] sm:$0xff]
      %v1153 = vld [vmem:[#allocation2 + $0x20] sm:$0xff]
      %v1154 = vld [vmem:[#allocation2 + $0x28] sm:$0xff]
      %v1155 = vld [vmem:[#allocation2 + $0x30] sm:$0xff]
      %v1156 = vld [vmem:[#allocation2 + $0x38] sm:$0xff]
      %v1157 = vld [vmem:[#allocation2 + $0x40] sm:$0xff]
      %v1158 = vld [vmem:[#allocation2 + $0x48] sm:$0xff]
      %s1159 = scalar_lea.vmem %s1, 20
      %v1160 = vld [vmem:[%s1159] sm:$0xf]
      %v1172 = vunpack.c.l.b16 %v1138
      %v1173 = vunpack.c.l.b16 %v1139
      %v1174 = vunpack.c.l.b16 %v1140
      %v1175 = vunpack.c.l.b16 %v1141
      %v1176 = vunpack.c.l.b16 %v1142
      %v1177 = vunpack.c.l.b16 %v1143
      %v1178 = vunpack.c.l.b16 %v1144
      %v1179 = vunpack.c.l.b16 %v1145
      %v1180 = vunpack.c.l.b16 %v1146
      %v1181 = vunpack.c.l.b16 %v1147
      %v1182 = vunpack.c.l.b16 %v1148
      %v1183 = vpack.c.b16 %v1173, %v1172
      %v1184 = vpack.c.b16 %v1175, %v1174
      %v1185 = vpack.c.b16 %v1177, %v1176
      %v1186 = vpack.c.b16 %v1179, %v1178
      %v1187 = vpack.c.b16 %v1181, %v1180
      %v1188 = vpack.c.b16 %v1182, %v1182
      %vm1189 = vcmask 1045504
      %v1190 = vrot.slane %v1183, 2
      %v1191 = vrot.slane %v1184, 2
      %v1192 = vsel %vm1189, %v1190, %v1191
      %v1193 = vrot.slane %v1185, 2
      %v1194 = vsel %vm1189, %v1191, %v1193
      %v1195 = vrot.slane %v1186, 2
      %v1196 = vsel %vm1189, %v1193, %v1195
      %v1197 = vrot.slane %v1187, 2
      %v1198 = vsel %vm1189, %v1195, %v1197
      %v1199 = vrot.slane %v1188, 2
      %v1200 = vsel %vm1189, %v1197, %v1199
      %v1202 = vsel %vm199, %v1192, 0
      %v1205 = vsel %vm199, %v1194, 0
      %v1208 = vsel %vm199, %v1196, 0
      %v1211 = vsel %vm199, %v1198, 0
      %v1214 = vsel %vm199, %v1200, 0
      %v1217 = vsel %vm271, %v1160, 0
      %1219 = vmatprep.subr.bf16.mxu0 0
      %1220 = vmatpush1.bf16.msra.mxu0 %v1217
      %1221 = vmatprep.subr.bf16.mxu0 0
      %1222 = vmatpush1.bf16.msra.mxu0 0
      %1223 = vmatprep.subr.bf16.mxu0 0
      %1224 = vmatpush1.bf16.msra.mxu0 0
      %1225 = vmatprep.subr.bf16.mxu0 0
      %1226 = vmatpush1.bf16.msra.mxu0 0
      %1227 = vmatprep.subr.bf16.mxu0 0
      %1228 = vmatpush1.bf16.msra.mxu0 0
      %1229 = vmatprep.subr.bf16.mxu0 0
      %1230 = vmatpush1.bf16.msra.mxu0 0
      %1231 = vmatprep.subr.bf16.mxu0 0
      %1232 = vmatpush1.bf16.msra.mxu0 0
      %1233 = vmatprep.subr.bf16.mxu0 0
      %1234 = vmatpush1.bf16.msra.mxu0 0
      %1235 = vmatprep.subr.bf16.mxu0 0
      %1236 = vmatpush1.bf16.msra.mxu0 0
      %1237 = vmatprep.subr.bf16.mxu0 0
      %1238 = vmatpush1.bf16.msra.mxu0 0
      %1239 = vmatprep.subr.bf16.mxu0 0
      %1240 = vmatpush1.bf16.msra.mxu0 0
      %1241 = vmatprep.subr.bf16.mxu0 0
      %1242 = vmatpush1.bf16.msra.mxu0 0
      %1243 = vmatprep.subr.bf16.mxu0 0
      %1244 = vmatpush1.bf16.msra.mxu0 0
      %1245 = vmatprep.subr.bf16.mxu0 0
      %1246 = vmatpush1.bf16.msra.mxu0 0
      %1247 = vmatprep.subr.bf16.mxu0 0
      %1248 = vmatpush1.bf16.msra.mxu0 0
      %1249 = vmatprep.subr.bf16.mxu0 0
      %1250 = vmatpush1.bf16.msra.mxu0 0
      %1251 = vmatprep.mubr.bf16.mxu0 0
      %1252 = vmatmul.mubr.bf16.gmra.mrb[0].mxu0 %v1202
      %v1253 = vpop.f32.mrb[0].mxu0
      %v1254 = vadd.f32 0.0, %v1253
      %v1255 = vpop.f32.mrb[0].mxu0
      %v1256 = vpop.f32.mrb[0].mxu0
      %v1257 = vadd.f32 0.0, %v1256
      %v1258 = vpop.f32.mrb[0].mxu0
      %1259 = vmatprep.mubr.bf16.mxu0 0
      %1260 = vmatmul.mubr.bf16.gmra.mrb[0].mxu0 %v1205
      %v1261 = vpop.f32.mrb[0].mxu0
      %v1262 = vadd.f32 0.0, %v1261
      %v1263 = vpop.f32.mrb[0].mxu0
      %v1264 = vpop.f32.mrb[0].mxu0
      %v1265 = vadd.f32 0.0, %v1264
      %v1266 = vpop.f32.mrb[0].mxu0
      %1267 = vmatprep.mubr.bf16.mxu0 0
      %1268 = vmatmul.mubr.bf16.gmra.mrb[0].mxu0 %v1208
      %v1269 = vpop.f32.mrb[0].mxu0
      %v1270 = vadd.f32 0.0, %v1269
      %v1271 = vpop.f32.mrb[0].mxu0
      %v1272 = vpop.f32.mrb[0].mxu0
      %v1273 = vadd.f32 0.0, %v1272
      %v1274 = vpop.f32.mrb[0].mxu0
      %1275 = vmatprep.mubr.bf16.mxu0 0
      %1276 = vmatmul.mubr.bf16.gmra.mrb[0].mxu0 %v1211
      %v1277 = vpop.f32.mrb[0].mxu0
      %v1278 = vadd.f32 0.0, %v1277
      %v1279 = vpop.f32.mrb[0].mxu0
      %v1280 = vpop.f32.mrb[0].mxu0
      %v1281 = vadd.f32 0.0, %v1280
      %v1282 = vpop.f32.mrb[0].mxu0
      %1283 = vmatprep.mubr.bf16.mxu0 0
      %1284 = vmatmul.mubr.bf16.gmra.mrb[0].mxu0 %v1214
      %v1285 = vpop.f32.mrb[0].mxu0
      %v1286 = vadd.f32 0.0, %v1285
      %v1287 = vpop.f32.mrb[0].mxu0
      %v1288 = vpop.f32.mrb[0].mxu0
      %v1289 = vadd.f32 0.0, %v1288
      %v1290 = vpop.f32.mrb[0].mxu0
      %1291 = vdwg.mxu0
      %v1292 = vadd.f32 %v1149, %v1254
      %v1293 = vadd.f32 %v1150, %v1257
      %v1294 = vadd.f32 %v1151, %v1262
      %v1295 = vadd.f32 %v1152, %v1265
      %v1296 = vadd.f32 %v1153, %v1270
      %v1297 = vadd.f32 %v1154, %v1273
      %v1298 = vadd.f32 %v1155, %v1278
      %v1299 = vadd.f32 %v1156, %v1281
      %v1300 = vadd.f32 %v1157, %v1286
      %v1301 = vadd.f32 %v1158, %v1289
      %1302 = vst.msk [vmem:[#allocation2] sm:$0xff] %vm199, %v1292
      %1303 = vst.msk [vmem:[#allocation2 + $0x8] sm:$0xff] %vm199, %v1293
      %1304 = vst.msk [vmem:[#allocation2 + $0x10] sm:$0xff] %vm199, %v1294
      %1305 = vst.msk [vmem:[#allocation2 + $0x18] sm:$0xff] %vm199, %v1295
      %1306 = vst.msk [vmem:[#allocation2 + $0x20] sm:$0xff] %vm199, %v1296
      %1307 = vst.msk [vmem:[#allocation2 + $0x28] sm:$0xff] %vm199, %v1297
      %1308 = vst.msk [vmem:[#allocation2 + $0x30] sm:$0xff] %vm199, %v1298
      %1309 = vst.msk [vmem:[#allocation2 + $0x38] sm:$0xff] %vm199, %v1299
      %1310 = vst.msk [vmem:[#allocation2 + $0x40] sm:$0xff] %vm199, %v1300
      %1311 = vst.msk [vmem:[#allocation2 + $0x48] sm:$0xff] %vm199, %v1301
      %v1312 = vld [vmem:[%s192 + $0x8] sm:$0xc]
      %v1313 = vld [vmem:[%s192 + $0xc] sm:$0xf]
      %v1314 = vld [vmem:[%s192 + $0x10] sm:$0xf]
      %v1315 = vld [vmem:[%s192 + $0x14] sm:$0xf]
      %v1316 = vld [vmem:[%s192 + $0x18] sm:$0xf]
      %v1317 = vld [vmem:[%s192 + $0x1c] sm:$0xf]
      %v1318 = vld [vmem:[%s192 + $0x20] sm:$0xf]
      %v1319 = vld [vmem:[%s192 + $0x24] sm:$0xf]
      %v1320 = vld [vmem:[%s192 + $0x28] sm:$0xf]
      %v1321 = vld [vmem:[%s192 + $0x2c] sm:$0xf]
      %v1322 = vld [vmem:[%s192 + $0x30] sm:$0x3]
      %v1323 = vld [vmem:[#allocation2] sm:$0xff]
      %v1324 = vld [vmem:[#allocation2 + $0x8] sm:$0xff]
      %v1325 = vld [vmem:[#allocation2 + $0x10] sm:$0xff]
      %v1326 = vld [vmem:[#allocation2 + $0x18] sm:$0xff]
      %v1327 = vld [vmem:[#allocation2 + $0x20] sm:$0xff]
      %v1328 = vld [vmem:[#allocation2 + $0x28] sm:$0xff]
      %v1329 = vld [vmem:[#allocation2 + $0x30] sm:$0xff]
      %v1330 = vld [vmem:[#allocation2 + $0x38] sm:$0xff]
      %v1331 = vld [vmem:[#allocation2 + $0x40] sm:$0xff]
      %v1332 = vld [vmem:[#allocation2 + $0x48] sm:$0xff]
      %s1333 = scalar_lea.vmem %s1, 24
      %v1334 = vld [vmem:[%s1333] sm:$0xf]
      %v1346 = vunpack.c.l.b16 %v1312
      %v1347 = vunpack.c.l.b16 %v1313
      %v1348 = vunpack.c.l.b16 %v1314
      %v1349 = vunpack.c.l.b16 %v1315
      %v1350 = vunpack.c.l.b16 %v1316
      %v1351 = vunpack.c.l.b16 %v1317
      %v1352 = vunpack.c.l.b16 %v1318
      %v1353 = vunpack.c.l.b16 %v1319
      %v1354 = vunpack.c.l.b16 %v1320
      %v1355 = vunpack.c.l.b16 %v1321
      %v1356 = vunpack.c.l.b16 %v1322
      %v1357 = vpack.c.b16 %v1347, %v1346
      %v1358 = vpack.c.b16 %v1349, %v1348
      %v1359 = vpack.c.b16 %v1351, %v1350
      %v1360 = vpack.c.b16 %v1353, %v1352
      %v1361 = vpack.c.b16 %v1355, %v1354
      %v1362 = vpack.c.b16 %v1356, %v1356
      %v1363 = vrot.slane %v1357, 2
      %v1364 = vrot.slane %v1358, 2
      %v1365 = vsel %vm1189, %v1363, %v1364
      %v1366 = vrot.slane %v1359, 2
      %v1367 = vsel %vm1189, %v1364, %v1366
      %v1368 = vrot.slane %v1360, 2
      %v1369 = vsel %vm1189, %v1366, %v1368
      %v1370 = vrot.slane %v1361, 2
      %v1371 = vsel %vm1189, %v1368, %v1370
      %v1372 = vrot.slane %v1362, 2
      %v1373 = vsel %vm1189, %v1370, %v1372
      %v1375 = vsel %vm199, %v1365, 0
      %v1378 = vsel %vm199, %v1367, 0
      %v1381 = vsel %vm199, %v1369, 0
      %v1384 = vsel %vm199, %v1371, 0
      %v1387 = vsel %vm199, %v1373, 0
      %v1390 = vsel %vm271, %v1334, 0
      %1392 = vmatprep.subr.bf16.mxu0 0
      %1393 = vmatpush1.bf16.msra.mxu0 %v1390
      %1394 = vmatprep.subr.bf16.mxu0 0
      %1395 = vmatpush1.bf16.msra.mxu0 0
      %1396 = vmatprep.subr.bf16.mxu0 0
      %1397 = vmatpush1.bf16.msra.mxu0 0
      %1398 = vmatprep.subr.bf16.mxu0 0
      %1399 = vmatpush1.bf16.msra.mxu0 0
      %1400 = vmatprep.subr.bf16.mxu0 0
      %1401 = vmatpush1.bf16.msra.mxu0 0
      %1402 = vmatprep.subr.bf16.mxu0 0
      %1403 = vmatpush1.bf16.msra.mxu0 0
      %1404 = vmatprep.subr.bf16.mxu0 0
      %1405 = vmatpush1.bf16.msra.mxu0 0
      %1406 = vmatprep.subr.bf16.mxu0 0
      %1407 = vmatpush1.bf16.msra.mxu0 0
      %1408 = vmatprep.subr.bf16.mxu0 0
      %1409 = vmatpush1.bf16.msra.mxu0 0
      %1410 = vmatprep.subr.bf16.mxu0 0
      %1411 = vmatpush1.bf16.msra.mxu0 0
      %1412 = vmatprep.subr.bf16.mxu0 0
      %1413 = vmatpush1.bf16.msra.mxu0 0
      %1414 = vmatprep.subr.bf16.mxu0 0
      %1415 = vmatpush1.bf16.msra.mxu0 0
      %1416 = vmatprep.subr.bf16.mxu0 0
      %1417 = vmatpush1.bf16.msra.mxu0 0
      %1418 = vmatprep.subr.bf16.mxu0 0
      %1419 = vmatpush1.bf16.msra.mxu0 0
      %1420 = vmatprep.subr.bf16.mxu0 0
      %1421 = vmatpush1.bf16.msra.mxu0 0
      %1422 = vmatprep.subr.bf16.mxu0 0
      %1423 = vmatpush1.bf16.msra.mxu0 0
      %1424 = vmatprep.mubr.bf16.mxu0 0
      %1425 = vmatmul.mubr.bf16.gmra.mrb[0].mxu0 %v1375
      %v1426 = vpop.f32.mrb[0].mxu0
      %v1427 = vadd.f32 0.0, %v1426
      %v1428 = vpop.f32.mrb[0].mxu0
      %v1429 = vpop.f32.mrb[0].mxu0
      %v1430 = vadd.f32 0.0, %v1429
      %v1431 = vpop.f32.mrb[0].mxu0
      %1432 = vmatprep.mubr.bf16.mxu0 0
      %1433 = vmatmul.mubr.bf16.gmra.mrb[0].mxu0 %v1378
      %v1434 = vpop.f32.mrb[0].mxu0
      %v1435 = vadd.f32 0.0, %v1434
      %v1436 = vpop.f32.mrb[0].mxu0
      %v1437 = vpop.f32.mrb[0].mxu0
      %v1438 = vadd.f32 0.0, %v1437
      %v1439 = vpop.f32.mrb[0].mxu0
      %1440 = vmatprep.mubr.bf16.mxu0 0
      %1441 = vmatmul.mubr.bf16.gmra.mrb[0].mxu0 %v1381
      %v1442 = vpop.f32.mrb[0].mxu0
      %v1443 = vadd.f32 0.0, %v1442
      %v1444 = vpop.f32.mrb[0].mxu0
      %v1445 = vpop.f32.mrb[0].mxu0
      %v1446 = vadd.f32 0.0, %v1445
      %v1447 = vpop.f32.mrb[0].mxu0
      %1448 = vmatprep.mubr.bf16.mxu0 0
      %1449 = vmatmul.mubr.bf16.gmra.mrb[0].mxu0 %v1384
      %v1450 = vpop.f32.mrb[0].mxu0
      %v1451 = vadd.f32 0.0, %v1450
      %v1452 = vpop.f32.mrb[0].mxu0
      %v1453 = vpop.f32.mrb[0].mxu0
      %v1454 = vadd.f32 0.0, %v1453
      %v1455 = vpop.f32.mrb[0].mxu0
      %1456 = vmatprep.mubr.bf16.mxu0 0
      %1457 = vmatmul.mubr.bf16.gmra.mrb[0].mxu0 %v1387
      %v1458 = vpop.f32.mrb[0].mxu0
      %v1459 = vadd.f32 0.0, %v1458
      %v1460 = vpop.f32.mrb[0].mxu0
      %v1461 = vpop.f32.mrb[0].mxu0
      %v1462 = vadd.f32 0.0, %v1461
      %v1463 = vpop.f32.mrb[0].mxu0
      %1464 = vdwg.mxu0
      %v1465 = vadd.f32 %v1323, %v1427
      %v1466 = vadd.f32 %v1324, %v1430
      %v1467 = vadd.f32 %v1325, %v1435
      %v1468 = vadd.f32 %v1326, %v1438
      %v1469 = vadd.f32 %v1327, %v1443
      %v1470 = vadd.f32 %v1328, %v1446
      %v1471 = vadd.f32 %v1329, %v1451
      %v1472 = vadd.f32 %v1330, %v1454
      %v1473 = vadd.f32 %v1331, %v1459
      %v1474 = vadd.f32 %v1332, %v1462
      %1475 = vst.msk [vmem:[#allocation2] sm:$0xff] %vm199, %v1465
      %1476 = vst.msk [vmem:[#allocation2 + $0x8] sm:$0xff] %vm199, %v1466
      %1477 = vst.msk [vmem:[#allocation2 + $0x10] sm:$0xff] %vm199, %v1467
      %1478 = vst.msk [vmem:[#allocation2 + $0x18] sm:$0xff] %vm199, %v1468
      %1479 = vst.msk [vmem:[#allocation2 + $0x20] sm:$0xff] %vm199, %v1469
      %1480 = vst.msk [vmem:[#allocation2 + $0x28] sm:$0xff] %vm199, %v1470
      %1481 = vst.msk [vmem:[#allocation2 + $0x30] sm:$0xff] %vm199, %v1471
      %1482 = vst.msk [vmem:[#allocation2 + $0x38] sm:$0xff] %vm199, %v1472
      %1483 = vst.msk [vmem:[#allocation2 + $0x40] sm:$0xff] %vm199, %v1473
      %1484 = vst.msk [vmem:[#allocation2 + $0x48] sm:$0xff] %vm199, %v1474
      %v1485 = vld [vmem:[%s192 + $0x8] sm:$0xc]
      %v1486 = vld [vmem:[%s192 + $0xc] sm:$0xf]
      %v1487 = vld [vmem:[%s192 + $0x10] sm:$0xf]
      %v1488 = vld [vmem:[%s192 + $0x14] sm:$0xf]
      %v1489 = vld [vmem:[%s192 + $0x18] sm:$0xf]
      %v1490 = vld [vmem:[%s192 + $0x1c] sm:$0xf]
      %v1491 = vld [vmem:[%s192 + $0x20] sm:$0xf]
      %v1492 = vld [vmem:[%s192 + $0x24] sm:$0xf]
      %v1493 = vld [vmem:[%s192 + $0x28] sm:$0xf]
      %v1494 = vld [vmem:[%s192 + $0x2c] sm:$0xf]
      %v1495 = vld [vmem:[%s192 + $0x30] sm:$0x7]
      %v1496 = vld [vmem:[#allocation2] sm:$0xff]
      %v1497 = vld [vmem:[#allocation2 + $0x8] sm:$0xff]
      %v1498 = vld [vmem:[#allocation2 + $0x10] sm:$0xff]
      %v1499 = vld [vmem:[#allocation2 + $0x18] sm:$0xff]
      %v1500 = vld [vmem:[#allocation2 + $0x20] sm:$0xff]
      %v1501 = vld [vmem:[#allocation2 + $0x28] sm:$0xff]
      %v1502 = vld [vmem:[#allocation2 + $0x30] sm:$0xff]
      %v1503 = vld [vmem:[#allocation2 + $0x38] sm:$0xff]
      %v1504 = vld [vmem:[#allocation2 + $0x40] sm:$0xff]
      %v1505 = vld [vmem:[#allocation2 + $0x48] sm:$0xff]
      %s1506 = scalar_lea.vmem %s1, 28
      %v1507 = vld [vmem:[%s1506] sm:$0xf]
      %v1519 = vunpack.c.l.b16 %v1485
      %v1520 = vunpack.c.l.b16 %v1486
      %v1521 = vunpack.c.l.b16 %v1487
      %v1522 = vunpack.c.l.b16 %v1488
      %v1523 = vunpack.c.l.b16 %v1489
      %v1524 = vunpack.c.l.b16 %v1490
      %v1525 = vunpack.c.l.b16 %v1491
      %v1526 = vunpack.c.l.b16 %v1492
      %v1527 = vunpack.c.l.b16 %v1493
      %v1528 = vunpack.c.l.b16 %v1494
      %v1529 = vunpack.c.l.b16 %v1495
      %v1530 = vpack.c.b16 %v1520, %v1519
      %v1531 = vpack.c.b16 %v1522, %v1521
      %v1532 = vpack.c.b16 %v1524, %v1523
      %v1533 = vpack.c.b16 %v1526, %v1525
      %v1534 = vpack.c.b16 %v1528, %v1527
      %v1535 = vpack.c.b16 %v1529, %v1529
      %vm1536 = vsmask.f32 5376
      %v1538 = vshrl.u32 %v1530, 16
      %v1540 = vrot.slane %v1538, 2
      %v1541 = vshll.u32 %v1530, 16
      %v1543 = vrot.slane %v1541, 3
      %v1544 = vor.u32 %v1540, %v1543
      %v1546 = vshrl.u32 %v1531, 16
      %v1548 = vrot.slane %v1546, 2
      %v1549 = vshll.u32 %v1531, 16
      %v1551 = vrot.slane %v1549, 3
      %v1552 = vor.u32 %v1548, %v1551
      %v1553 = vsel %vm1536, %v1544, %v1552
      %v1555 = vshrl.u32 %v1532, 16
      %v1557 = vrot.slane %v1555, 2
      %v1558 = vshll.u32 %v1532, 16
      %v1560 = vrot.slane %v1558, 3
      %v1561 = vor.u32 %v1557, %v1560
      %v1562 = vsel %vm1536, %v1552, %v1561
      %v1564 = vshrl.u32 %v1533, 16
      %v1566 = vrot.slane %v1564, 2
      %v1567 = vshll.u32 %v1533, 16
      %v1569 = vrot.slane %v1567, 3
      %v1570 = vor.u32 %v1566, %v1569
      %v1571 = vsel %vm1536, %v1561, %v1570
      %v1573 = vshrl.u32 %v1534, 16
      %v1575 = vrot.slane %v1573, 2
      %v1576 = vshll.u32 %v1534, 16
      %v1578 = vrot.slane %v1576, 3
      %v1579 = vor.u32 %v1575, %v1578
      %v1580 = vsel %vm1536, %v1570, %v1579
      %v1582 = vshrl.u32 %v1535, 16
      %v1584 = vrot.slane %v1582, 2
      %v1585 = vshll.u32 %v1535, 16
      %v1587 = vrot.slane %v1585, 3
      %v1588 = vor.u32 %v1584, %v1587
      %v1589 = vsel %vm1536, %v1579, %v1588
      %v1591 = vsel %vm199, %v1553, 0
      %v1594 = vsel %vm199, %v1562, 0
      %v1597 = vsel %vm199, %v1571, 0
      %v1600 = vsel %vm199, %v1580, 0
      %v1603 = vsel %vm199, %v1589, 0
      %v1606 = vsel %vm271, %v1507, 0
      %1608 = vmatprep.subr.bf16.mxu0 0
      %1609 = vmatpush1.bf16.msra.mxu0 %v1606
      %1610 = vmatprep.subr.bf16.mxu0 0
      %1611 = vmatpush1.bf16.msra.mxu0 0
      %1612 = vmatprep.subr.bf16.mxu0 0
      %1613 = vmatpush1.bf16.msra.mxu0 0
      %1614 = vmatprep.subr.bf16.mxu0 0
      %1615 = vmatpush1.bf16.msra.mxu0 0
      %1616 = vmatprep.subr.bf16.mxu0 0
      %1617 = vmatpush1.bf16.msra.mxu0 0
      %1618 = vmatprep.subr.bf16.mxu0 0
      %1619 = vmatpush1.bf16.msra.mxu0 0
      %1620 = vmatprep.subr.bf16.mxu0 0
      %1621 = vmatpush1.bf16.msra.mxu0 0
      %1622 = vmatprep.subr.bf16.mxu0 0
      %1623 = vmatpush1.bf16.msra.mxu0 0
      %1624 = vmatprep.subr.bf16.mxu0 0
      %1625 = vmatpush1.bf16.msra.mxu0 0
      %1626 = vmatprep.subr.bf16.mxu0 0
      %1627 = vmatpush1.bf16.msra.mxu0 0
      %1628 = vmatprep.subr.bf16.mxu0 0
      %1629 = vmatpush1.bf16.msra.mxu0 0
      %1630 = vmatprep.subr.bf16.mxu0 0
      %1631 = vmatpush1.bf16.msra.mxu0 0
      %1632 = vmatprep.subr.bf16.mxu0 0
      %1633 = vmatpush1.bf16.msra.mxu0 0
      %1634 = vmatprep.subr.bf16.mxu0 0
      %1635 = vmatpush1.bf16.msra.mxu0 0
      %1636 = vmatprep.subr.bf16.mxu0 0
      %1637 = vmatpush1.bf16.msra.mxu0 0
      %1638 = vmatprep.subr.bf16.mxu0 0
      %1639 = vmatpush1.bf16.msra.mxu0 0
      %1640 = vmatprep.mubr.bf16.mxu0 0
      %1641 = vmatmul.mubr.bf16.gmra.mrb[0].mxu0 %v1591
      %v1642 = vpop.f32.mrb[0].mxu0
      %v1643 = vadd.f32 0.0, %v1642
      %v1644 = vpop.f32.mrb[0].mxu0
      %v1645 = vpop.f32.mrb[0].mxu0
      %v1646 = vadd.f32 0.0, %v1645
      %v1647 = vpop.f32.mrb[0].mxu0
      %1648 = vmatprep.mubr.bf16.mxu0 0
      %1649 = vmatmul.mubr.bf16.gmra.mrb[0].mxu0 %v1594
      %v1650 = vpop.f32.mrb[0].mxu0
      %v1651 = vadd.f32 0.0, %v1650
      %v1652 = vpop.f32.mrb[0].mxu0
      %v1653 = vpop.f32.mrb[0].mxu0
      %v1654 = vadd.f32 0.0, %v1653
      %v1655 = vpop.f32.mrb[0].mxu0
      %1656 = vmatprep.mubr.bf16.mxu0 0
      %1657 = vmatmul.mubr.bf16.gmra.mrb[0].mxu0 %v1597
      %v1658 = vpop.f32.mrb[0].mxu0
      %v1659 = vadd.f32 0.0, %v1658
      %v1660 = vpop.f32.mrb[0].mxu0
      %v1661 = vpop.f32.mrb[0].mxu0
      %v1662 = vadd.f32 0.0, %v1661
      %v1663 = vpop.f32.mrb[0].mxu0
      %1664 = vmatprep.mubr.bf16.mxu0 0
      %1665 = vmatmul.mubr.bf16.gmra.mrb[0].mxu0 %v1600
      %v1666 = vpop.f32.mrb[0].mxu0
      %v1667 = vadd.f32 0.0, %v1666
      %v1668 = vpop.f32.mrb[0].mxu0
      %v1669 = vpop.f32.mrb[0].mxu0
      %v1670 = vadd.f32 0.0, %v1669
      %v1671 = vpop.f32.mrb[0].mxu0
      %1672 = vmatprep.mubr.bf16.mxu0 0
      %1673 = vmatmul.mubr.bf16.gmra.mrb[0].mxu0 %v1603
      %v1674 = vpop.f32.mrb[0].mxu0
      %v1675 = vadd.f32 0.0, %v1674
      %v1676 = vpop.f32.mrb[0].mxu0
      %v1677 = vpop.f32.mrb[0].mxu0
      %v1678 = vadd.f32 0.0, %v1677
      %v1679 = vpop.f32.mrb[0].mxu0
      %1680 = vdwg.mxu0
      %v1681 = vadd.f32 %v1496, %v1643
      %v1682 = vadd.f32 %v1497, %v1646
      %v1683 = vadd.f32 %v1498, %v1651
      %v1684 = vadd.f32 %v1499, %v1654
      %v1685 = vadd.f32 %v1500, %v1659
      %v1686 = vadd.f32 %v1501, %v1662
      %v1687 = vadd.f32 %v1502, %v1667
      %v1688 = vadd.f32 %v1503, %v1670
      %v1689 = vadd.f32 %v1504, %v1675
      %v1690 = vadd.f32 %v1505, %v1678
      %1691 = vst.msk [vmem:[#allocation2] sm:$0xff] %vm199, %v1681
      %1692 = vst.msk [vmem:[#allocation2 + $0x8] sm:$0xff] %vm199, %v1682
      %1693 = vst.msk [vmem:[#allocation2 + $0x10] sm:$0xff] %vm199, %v1683
      %1694 = vst.msk [vmem:[#allocation2 + $0x18] sm:$0xff] %vm199, %v1684
      %1695 = vst.msk [vmem:[#allocation2 + $0x20] sm:$0xff] %vm199, %v1685
      %1696 = vst.msk [vmem:[#allocation2 + $0x28] sm:$0xff] %vm199, %v1686
      %1697 = vst.msk [vmem:[#allocation2 + $0x30] sm:$0xff] %vm199, %v1687
      %1698 = vst.msk [vmem:[#allocation2 + $0x38] sm:$0xff] %vm199, %v1688
      %1699 = vst.msk [vmem:[#allocation2 + $0x40] sm:$0xff] %vm199, %v1689
      %1700 = vst.msk [vmem:[#allocation2 + $0x48] sm:$0xff] %vm199, %v1690
      %v1701 = vld [vmem:[%s192 + $0x8] sm:$0x8]
      %v1702 = vld [vmem:[%s192 + $0xc] sm:$0xf]
      %v1703 = vld [vmem:[%s192 + $0x10] sm:$0xf]
      %v1704 = vld [vmem:[%s192 + $0x14] sm:$0xf]
      %v1705 = vld [vmem:[%s192 + $0x18] sm:$0xf]
      %v1706 = vld [vmem:[%s192 + $0x1c] sm:$0xf]
      %v1707 = vld [vmem:[%s192 + $0x20] sm:$0xf]
      %v1708 = vld [vmem:[%s192 + $0x24] sm:$0xf]
      %v1709 = vld [vmem:[%s192 + $0x28] sm:$0xf]
      %v1710 = vld [vmem:[%s192 + $0x2c] sm:$0xf]
      %v1711 = vld [vmem:[%s192 + $0x30] sm:$0x7]
      %v1712 = vld [vmem:[#allocation2] sm:$0xff]
      %v1713 = vld [vmem:[#allocation2 + $0x8] sm:$0xff]
      %v1714 = vld [vmem:[#allocation2 + $0x10] sm:$0xff]
      %v1715 = vld [vmem:[#allocation2 + $0x18] sm:$0xff]
      %v1716 = vld [vmem:[#allocation2 + $0x20] sm:$0xff]
      %v1717 = vld [vmem:[#allocation2 + $0x28] sm:$0xff]
      %v1718 = vld [vmem:[#allocation2 + $0x30] sm:$0xff]
      %v1719 = vld [vmem:[#allocation2 + $0x38] sm:$0xff]
      %v1720 = vld [vmem:[#allocation2 + $0x40] sm:$0xff]
      %v1721 = vld [vmem:[#allocation2 + $0x48] sm:$0xff]
      %s1722 = scalar_lea.vmem %s1, 32
      %v1723 = vld [vmem:[%s1722] sm:$0xf]
      %v1735 = vunpack.c.l.b16 %v1701
      %v1736 = vunpack.c.l.b16 %v1702
      %v1737 = vunpack.c.l.b16 %v1703
      %v1738 = vunpack.c.l.b16 %v1704
      %v1739 = vunpack.c.l.b16 %v1705
      %v1740 = vunpack.c.l.b16 %v1706
      %v1741 = vunpack.c.l.b16 %v1707
      %v1742 = vunpack.c.l.b16 %v1708
      %v1743 = vunpack.c.l.b16 %v1709
      %v1744 = vunpack.c.l.b16 %v1710
      %v1745 = vunpack.c.l.b16 %v1711
      %v1746 = vpack.c.b16 %v1736, %v1735
      %v1747 = vpack.c.b16 %v1738, %v1737
      %v1748 = vpack.c.b16 %v1740, %v1739
      %v1749 = vpack.c.b16 %v1742, %v1741
      %v1750 = vpack.c.b16 %v1744, %v1743
      %v1751 = vpack.c.b16 %v1745, %v1745
      %vm1752 = vcmask 1044480
      %v1753 = vrot.slane %v1746, 3
      %v1754 = vrot.slane %v1747, 3
      %v1755 = vsel %vm1752, %v1753, %v1754
      %v1756 = vrot.slane %v1748, 3
      %v1757 = vsel %vm1752, %v1754, %v1756
      %v1758 = vrot.slane %v1749, 3
      %v1759 = vsel %vm1752, %v1756, %v1758
      %v1760 = vrot.slane %v1750, 3
      %v1761 = vsel %vm1752, %v1758, %v1760
      %v1762 = vrot.slane %v1751, 3
      %v1763 = vsel %vm1752, %v1760, %v1762
      %v1765 = vsel %vm199, %v1755, 0
      %v1768 = vsel %vm199, %v1757, 0
      %v1771 = vsel %vm199, %v1759, 0
      %v1774 = vsel %vm199, %v1761, 0
      %v1777 = vsel %vm199, %v1763, 0
      %v1780 = vsel %vm271, %v1723, 0
      %1782 = vmatprep.subr.bf16.mxu0 0
      %1783 = vmatpush1.bf16.msra.mxu0 %v1780
      %1784 = vmatprep.subr.bf16.mxu0 0
      %1785 = vmatpush1.bf16.msra.mxu0 0
      %1786 = vmatprep.subr.bf16.mxu0 0
      %1787 = vmatpush1.bf16.msra.mxu0 0
      %1788 = vmatprep.subr.bf16.mxu0 0
      %1789 = vmatpush1.bf16.msra.mxu0 0
      %1790 = vmatprep.subr.bf16.mxu0 0
      %1791 = vmatpush1.bf16.msra.mxu0 0
      %1792 = vmatprep.subr.bf16.mxu0 0
      %1793 = vmatpush1.bf16.msra.mxu0 0
      %1794 = vmatprep.subr.bf16.mxu0 0
      %1795 = vmatpush1.bf16.msra.mxu0 0
      %1796 = vmatprep.subr.bf16.mxu0 0
      %1797 = vmatpush1.bf16.msra.mxu0 0
      %1798 = vmatprep.subr.bf16.mxu0 0
      %1799 = vmatpush1.bf16.msra.mxu0 0
      %1800 = vmatprep.subr.bf16.mxu0 0
      %1801 = vmatpush1.bf16.msra.mxu0 0
      %1802 = vmatprep.subr.bf16.mxu0 0
      %1803 = vmatpush1.bf16.msra.mxu0 0
      %1804 = vmatprep.subr.bf16.mxu0 0
      %1805 = vmatpush1.bf16.msra.mxu0 0
      %1806 = vmatprep.subr.bf16.mxu0 0
      %1807 = vmatpush1.bf16.msra.mxu0 0
      %1808 = vmatprep.subr.bf16.mxu0 0
      %1809 = vmatpush1.bf16.msra.mxu0 0
      %1810 = vmatprep.subr.bf16.mxu0 0
      %1811 = vmatpush1.bf16.msra.mxu0 0
      %1812 = vmatprep.subr.bf16.mxu0 0
      %1813 = vmatpush1.bf16.msra.mxu0 0
      %1814 = vmatprep.mubr.bf16.mxu0 0
      %1815 = vmatmul.mubr.bf16.gmra.mrb[0].mxu0 %v1765
      %v1816 = vpop.f32.mrb[0].mxu0
      %v1817 = vadd.f32 0.0, %v1816
      %v1818 = vpop.f32.mrb[0].mxu0
      %v1819 = vpop.f32.mrb[0].mxu0
      %v1820 = vadd.f32 0.0, %v1819
      %v1821 = vpop.f32.mrb[0].mxu0
      %1822 = vmatprep.mubr.bf16.mxu0 0
      %1823 = vmatmul.mubr.bf16.gmra.mrb[0].mxu0 %v1768
      %v1824 = vpop.f32.mrb[0].mxu0
      %v1825 = vadd.f32 0.0, %v1824
      %v1826 = vpop.f32.mrb[0].mxu0
      %v1827 = vpop.f32.mrb[0].mxu0
      %v1828 = vadd.f32 0.0, %v1827
      %v1829 = vpop.f32.mrb[0].mxu0
      %1830 = vmatprep.mubr.bf16.mxu0 0
      %1831 = vmatmul.mubr.bf16.gmra.mrb[0].mxu0 %v1771
      %v1832 = vpop.f32.mrb[0].mxu0
      %v1833 = vadd.f32 0.0, %v1832
      %v1834 = vpop.f32.mrb[0].mxu0
      %v1835 = vpop.f32.mrb[0].mxu0
      %v1836 = vadd.f32 0.0, %v1835
      %v1837 = vpop.f32.mrb[0].mxu0
      %1838 = vmatprep.mubr.bf16.mxu0 0
      %1839 = vmatmul.mubr.bf16.gmra.mrb[0].mxu0 %v1774
      %v1840 = vpop.f32.mrb[0].mxu0
      %v1841 = vadd.f32 0.0, %v1840
      %v1842 = vpop.f32.mrb[0].mxu0
      %v1843 = vpop.f32.mrb[0].mxu0
      %v1844 = vadd.f32 0.0, %v1843
      %v1845 = vpop.f32.mrb[0].mxu0
      %1846 = vmatprep.mubr.bf16.mxu0 0
      %1847 = vmatmul.mubr.bf16.gmra.mrb[0].mxu0 %v1777
      %v1848 = vpop.f32.mrb[0].mxu0
      %v1849 = vadd.f32 0.0, %v1848
      %v1850 = vpop.f32.mrb[0].mxu0
      %v1851 = vpop.f32.mrb[0].mxu0
      %v1852 = vadd.f32 0.0, %v1851
      %v1853 = vpop.f32.mrb[0].mxu0
      %1854 = vdwg.mxu0
      %v1855 = vadd.f32 %v1712, %v1817
      %v1856 = vadd.f32 %v1713, %v1820
      %v1857 = vadd.f32 %v1714, %v1825
      %v1858 = vadd.f32 %v1715, %v1828
      %v1859 = vadd.f32 %v1716, %v1833
      %v1860 = vadd.f32 %v1717, %v1836
      %v1861 = vadd.f32 %v1718, %v1841
      %v1862 = vadd.f32 %v1719, %v1844
      %v1863 = vadd.f32 %v1720, %v1849
      %v1864 = vadd.f32 %v1721, %v1852
      %1865 = vst.msk [vmem:[#allocation2] sm:$0xff] %vm199, %v1855
      %1866 = vst.msk [vmem:[#allocation2 + $0x8] sm:$0xff] %vm199, %v1856
      %1867 = vst.msk [vmem:[#allocation2 + $0x10] sm:$0xff] %vm199, %v1857
      %1868 = vst.msk [vmem:[#allocation2 + $0x18] sm:$0xff] %vm199, %v1858
      %1869 = vst.msk [vmem:[#allocation2 + $0x20] sm:$0xff] %vm199, %v1859
      %1870 = vst.msk [vmem:[#allocation2 + $0x28] sm:$0xff] %vm199, %v1860
      %1871 = vst.msk [vmem:[#allocation2 + $0x30] sm:$0xff] %vm199, %v1861
      %1872 = vst.msk [vmem:[#allocation2 + $0x38] sm:$0xff] %vm199, %v1862
      %1873 = vst.msk [vmem:[#allocation2 + $0x40] sm:$0xff] %vm199, %v1863
      %1874 = vst.msk [vmem:[#allocation2 + $0x48] sm:$0xff] %vm199, %v1864
      %v1875 = vld [vmem:[#allocation2] sm:$0xff]
      %v1876 = vld [vmem:[#allocation2 + $0x8] sm:$0xff]
      %v1877 = vld [vmem:[#allocation2 + $0x10] sm:$0xff]
      %v1878 = vld [vmem:[#allocation2 + $0x18] sm:$0xff]
      %v1879 = vld [vmem:[#allocation2 + $0x20] sm:$0xff]
      %v1880 = vld [vmem:[#allocation2 + $0x28] sm:$0xff]
      %v1881 = vld [vmem:[#allocation2 + $0x30] sm:$0xff]
      %v1882 = vld [vmem:[#allocation2 + $0x38] sm:$0xff]
      %v1883 = vld [vmem:[#allocation2 + $0x40] sm:$0xff]
      %v1884 = vld [vmem:[#allocation2 + $0x48] sm:$0xff]
      %v1885 = vld [vmem:[%s2] sm:$0x1]
      %v1887 = vlaneseq
      %v1888 = vshrl.u32 %v1887, 7
      %v1889 = vsub.s32 0, %v1888
      %v1890 = vrot.slane %v1885, %v1889
      %v1892 = vmul.f32 %v1875, %v1890
      %v1893 = vmul.f32 %v1876, %v1890
      %v1894 = vmul.f32 %v1877, %v1890
      %v1895 = vmul.f32 %v1878, %v1890
      %v1896 = vmul.f32 %v1879, %v1890
      %v1897 = vmul.f32 %v1880, %v1890
      %v1898 = vmul.f32 %v1881, %v1890
      %v1899 = vmul.f32 %v1882, %v1890
      %v1900 = vmul.f32 %v1883, %v1890
      %v1901 = vmul.f32 %v1884, %v1890
      %v1902 = vld [vmem:[%s3] sm:$0x1]
      %v1904 = vlaneseq
      %v1905 = vshrl.u32 %v1904, 7
      %v1906 = vsub.s32 0, %v1905
      %v1907 = vrot.slane %v1902, %v1906
      %v1909 = vadd.f32 %v1892, %v1907
      %v1910 = vadd.f32 %v1893, %v1907
      %v1911 = vadd.f32 %v1894, %v1907
      %v1912 = vadd.f32 %v1895, %v1907
      %v1913 = vadd.f32 %v1896, %v1907
      %v1914 = vadd.f32 %v1897, %v1907
      %v1915 = vadd.f32 %v1898, %v1907
      %v1916 = vadd.f32 %v1899, %v1907
      %v1917 = vadd.f32 %v1900, %v1907
      %v1918 = vadd.f32 %v1901, %v1907
      %v1919 = vmax.f32 %v1909, 0.0
      %v1920 = vmax.f32 %v1910, 0.0
      %v1921 = vmax.f32 %v1911, 0.0
      %v1922 = vmax.f32 %v1912, 0.0
      %v1923 = vmax.f32 %v1913, 0.0
      %v1924 = vmax.f32 %v1914, 0.0
      %v1925 = vmax.f32 %v1915, 0.0
      %v1926 = vmax.f32 %v1916, 0.0
      %v1927 = vmax.f32 %v1917, 0.0
      %v1928 = vmax.f32 %v1918, 0.0
      %v1929 = vpack.c.bf16 %v1920, %v1919
      %v1930 = vpack.c.bf16 %v1922, %v1921
      %v1931 = vpack.c.bf16 %v1924, %v1923
      %v1932 = vpack.c.bf16 %v1926, %v1925
      %v1933 = vpack.c.bf16 %v1928, %v1927
      %v1939 = vunpack.c.l.b16 %v1929
      %v1940 = vunpack.c.h.b16 %v1929
      %v1941 = vunpack.c.l.b16 %v1930
      %v1942 = vunpack.c.h.b16 %v1930
      %v1943 = vunpack.c.l.b16 %v1931
      %v1944 = vunpack.c.h.b16 %v1931
      %v1945 = vunpack.c.l.b16 %v1932
      %v1946 = vunpack.c.h.b16 %v1932
      %v1947 = vunpack.c.l.b16 %v1933
      %v1948 = vunpack.c.h.b16 %v1933
      %v1949 = vpack.c.b16 %v1939, %v1939
      %v1950 = vpack.c.b16 %v1940, %v1940
      %v1951 = vpack.c.b16 %v1941, %v1941
      %v1952 = vpack.c.b16 %v1942, %v1942
      %v1953 = vpack.c.b16 %v1943, %v1943
      %v1954 = vpack.c.b16 %v1944, %v1944
      %v1955 = vpack.c.b16 %v1945, %v1945
      %v1956 = vpack.c.b16 %v1946, %v1946
      %v1957 = vpack.c.b16 %v1947, %v1947
      %v1958 = vpack.c.b16 %v1948, %v1948
      %vm1969 = vcmask 60416
      %1970 = vst.msk [vmem:[%s197] sm:$0xf] %vm1969, %v1949
      %1971 = vst.msk [vmem:[%s197 + $0x4] sm:$0xf] %vm1969, %v1950
      %1972 = vst.msk [vmem:[%s197 + $0x8] sm:$0xf] %vm1969, %v1951
      %1973 = vst.msk [vmem:[%s197 + $0xc] sm:$0xf] %vm1969, %v1952
      %1974 = vst.msk [vmem:[%s197 + $0x10] sm:$0xf] %vm1969, %v1953
      %1975 = vst.msk [vmem:[%s197 + $0x14] sm:$0xf] %vm1969, %v1954
      %1976 = vst.msk [vmem:[%s197 + $0x18] sm:$0xf] %vm1969, %v1955
      %1977 = vst.msk [vmem:[%s197 + $0x1c] sm:$0xf] %vm1969, %v1956
      %1978 = vst.msk [vmem:[%s197 + $0x20] sm:$0xf] %vm1969, %v1957
      %1979 = vst.msk [vmem:[%s197 + $0x24] sm:$0xf] %vm1969, %v1958
      %p1980 = scmp.lt.s32.totalorder %s15, 1
      %s1981 = scalar_select %p1980, %s15, 1
      %s1982 = smul.addr %s1981, 10
      %s1983 = smul.addr %s1982, 4
      %s1984 = scalar_lea.vmem %s4, %s1983
      // Predicated region
      $region37: #{_lambda_.12} parent=35 // pred_check
        %p1985 = pneg %p122
      $region38: #{_lambda_.12} parent=35 // pred_check_branch
        %1987 = sbr.rel (%p1985) target = $region40
      $region39: #{_lambda_.12} parent=35 // pred_region
        _
      $region40: #{_lambda_.12} parent=35 // pred_fallthru
        _
    $region36: #{_lambda_.12} parent=5 // pred_fallthru
      _
    %p1988 = scmp.le.s32.totalorder 2, %s10
    // Predicated region
    $region41: #{_lambda_.12} parent=5 // pred_check
      %p1989 = pneg %p1988
    $region42: #{_lambda_.12} parent=5 // pred_check_branch
      %1991 = sbr.rel (%p1989) target = $region44
    $region43: #{_lambda_.12} parent=5 // pred_region
      %s1992 = ssub.s32 %s10, 2
      // Predicated region
      $region45: #{_lambda_.12} parent=43 // pred_check
        %p1993 = pneg %p128
      $region46: #{_lambda_.12} parent=43 // pred_check_branch
        %1995 = sbr.rel (%p1993) target = $region48
      $region47: #{_lambda_.12} parent=43 // pred_region
        %p1996 = scmp.lt.s32.totalorder %s16, 1
        %s1997 = scalar_select %p1996, %s16, 1
        %s1998 = smul.addr %s1997, 10
        %s1999 = smul.addr %s1998, 4
        %s2000 = scalar_lea.vmem %s4, %s1999
      $region48: #{_lambda_.12} parent=43 // pred_fallthru
        _
    $region44: #{_lambda_.12} parent=5 // pred_fallthru
      _
  $region6: #{_lambda_.12} parent=0 // loop_footer
    %s14 = sadd.s32 1, %s10
  $region7: #{_lambda_.12} parent=0 // loop_footer_branch
    %9 = sbr.rel target = $region3
  $region8: #{_lambda_.12} parent=0 // loop_exit
    _

</llo_original>
